<compile_context>
chip_gen: v7x
topology: tpu7x:2x2x1
jax: 0.10.0
libtpu: 0.0.40
codegen_flags: <defaults>
</compile_context>

<pallas_src>
import functools

import jax
import jax.numpy as jnp
from jax import lax
from jax.experimental import pallas as pl
from jax.experimental.pallas import tpu as pltpu

# Dimensions implied by the PyTorch module.
H1, W1 = 40, 100      # input / conv1 spatial
H2, W2 = 20, 50       # after first MaxPool2d(2)
H3, W3 = 10, 25       # after second MaxPool2d(2)
C1, C2 = 8, 16        # conv channel counts
HIDDEN = 64
NCP = 128             # lane-padded logits width (lane-dense output store)

KW1 = W1 + 2          # 102: zero-padded input row length
K1 = 3 * KW1          # 306: conv1 contraction dim (3 kh rows side by side)
N1 = C1 * W1          # 800: conv1 output lanes, lane = co*100 + w
K2 = 3 * N1           # 2400: conv2 contraction dim ([row i-1 | row i | row i+1])
N2 = C2 * W2          # 800: conv2 output lanes, lane = co*50 + w
NQ = H3 * HIDDEN      # 640

# DEFAULT precision = single/low-pass bf16 MXU (perf-review ask).  Set to
# lax.Precision.HIGHEST if bit-accurate f32 matmuls are required.
DOT_PRECISION = None

_dot = functools.partial(jnp.dot, precision=DOT_PRECISION,
                         preferred_element_type=jnp.float32)


# ------------------------------- kernel -----------------------------------
def _wakeword_kernel(ae_ref, ao_ref, w1b_ref, b1_ref, w2b_ref, b2_ref,
                     mnf_ref, mnl_ref, w1a_ref, qm_ref, srow_ref, tsum_ref,
                     fc1b_ref, fc2w_ref, fc2b_ref, out_ref):
    """One batch tile of BT images; all arrays are 2-D with R = BT*20 rows."""
    f32 = jnp.float32

    # ---- Conv1 (1->8, 3x3, pad 1) + ReLU + MaxPool over rows ---------------
    # a_even / a_odd hold the 3 kh input rows for even / odd conv1 output rows
    # (im2col built in the wrapper), so the pool1 row pairing is just an
    # element-wise max and the batch stays folded into the MXU M dim.
    band1 = w1b_ref[...]
    b1 = b1_ref[...]
    ye = jnp.maximum(_dot(ae_ref[...], band1) + b1, 0.0)        # rows 2i
    yo = jnp.maximum(_dot(ao_ref[...], band1) + b1, 0.0)        # rows 2i+1
    p1 = jnp.maximum(ye, yo)                                    # (R, 800)
    # pool1 over columns: max with the +1 lane neighbour.  Only even
    # in-channel offsets are consumed downstream (the conv2 band matrix has
    # zero rows at odd offsets), so channel-boundary / wrap lanes are harmless.
    p1 = jnp.maximum(p1, jnp.concatenate([p1[:, 1:], p1[:, :1]], axis=1))

    # ---- Conv2 (8->16, 3x3, pad 1) as a single MXU dot ----------------------
    # K = 3*800 lanes: [row i-1 | row i | row i+1] of p1, zero-masked at image
    # boundaries.  The (2400, 800) band matrix performs the kw shifts, the
    # 8->16 channel mix and the pool1 even-column selection in one shot.
    zrow = jnp.zeros((1, p1.shape[1]), f32)
    t_up = jnp.concatenate([zrow, p1[:-1, :]], axis=0) * mnf_ref[...]
    t_dn = jnp.concatenate([p1[1:, :], zrow], axis=0) * mnl_ref[...]
    c2in = jnp.concatenate([t_up, p1, t_dn], axis=1)            # (R, 2400)
    y2 = jnp.maximum(_dot(c2in, w2b_ref[...]) + b2_ref[...], 0.0)   # (R, 800)

    # ---- MaxPool2d(2) #2 -----------------------------------------------------
    y2 = jnp.maximum(y2, jnp.concatenate([y2[:, 1:], y2[:, :1]], axis=1))  # cols
    y2 = jnp.maximum(y2, jnp.concatenate([y2[1:, :], y2[:1, :]], axis=0))  # rows

    # ---- Flatten + Linear(4000 -> 64) + ReLU ---------------------------------
    # q[r, m*64+n] contracts pooled row r against the fc1 weights of flat row
    # m; the mask keeps only r == 2m within each image, the S dot sums the 20
    # rows of every image and the T dot folds the 10 surviving 64-wide blocks.
    q = _dot(y2, w1a_ref[...]) * qm_ref[...]                    # (R, 640)
    hq = _dot(srow_ref[...], q)                                 # (BT, 640)
    h = jnp.maximum(_dot(hq, tsum_ref[...]) + fc1b_ref[...], 0.0)   # (BT, 64)

    # ---- Linear(64 -> num_classes), lane-padded to 128 -----------------------
    logits = _dot(h, fc2w_ref[...]) + fc2b_ref[...]             # (BT, 128)
    out_ref[0] = logits.astype(out_ref.dtype)


# --------------------------- weight table builders -------------------------
def _conv1_band(w1):
    """(306, 800): band[kh*102 + c, co*100 + w] = conv1_w[co, 0, kh, c - w]."""
    f32 = jnp.float32
    c = jnp.arange(KW1)[:, None]
    w = jnp.arange(W1)[None, :]
    shift = jnp.stack([(c == w + kw) for kw in range(3)]).astype(f32)  # (3,102,100)
    blocks = [jnp.einsum('kcw,ok->cow', shift, w1[:, 0, kh, :].astype(f32)
                         ).reshape(KW1, N1) for kh in range(3)]
    return jnp.concatenate(blocks, axis=0)


def _conv2_band(w2):
    """(2400, 800): rows (kh, ci, u), cols (co, w); nonzero where
    u == 2*(w + kw - 1), value conv2_w[co, ci, kh, kw]  (odd u rows are zero,
    which also kills the un-pooled odd columns of the pool1 output)."""
    f32 = jnp.float32
    u = jnp.arange(2 * W2)[:, None]
    w = jnp.arange(W2)[None, :]
    sel = jnp.stack([((u == 2 * (w + kw - 1)) & (w + kw >= 1) & (w + kw <= W2))
                     for kw in range(3)]).astype(f32)                  # (3,100,50)
    blocks = [jnp.einsum('kuw,oik->iuow', sel, w2[:, :, kh, :].astype(f32)
                         ).reshape(C1 * 2 * W2, N2) for kh in range(3)]
    return jnp.concatenate(blocks, axis=0)


def _fc1_weights(fc1_w):
    """(800, 640): W[co*50 + 2*j, m*64 + n] = fc1_w[n, co*250 + m*25 + j];
    zeros at odd in-channel offsets fold pool2's even-column selection in."""
    f32 = jnp.float32
    t = fc1_w.astype(f32).reshape(HIDDEN, C2, H3, W3)        # (n, co, m, j)
    t = jnp.transpose(t, (1, 3, 2, 0))                       # (co, j, m, n)
    w = jnp.zeros((C2, W2, H3, HIDDEN), f32).at[:, 0::2, :, :].set(t)
    return w.reshape(N2, NQ)


# ------------------------------- wrapper -----------------------------------
def wakeword_cnn_forward(x, params):
    f32 = jnp.float32
    B = x.shape[0]
    nc = params['fc2_w'].shape[0]
    assert x.shape[1:] == (1, H1, W1) and nc <= NCP

    # Batch tiling: BT images per grid step (M = BT*20 rows per conv dot).
    # Aim for >= 2 grid steps so the "parallel" batch axis can land on both
    # v7x TensorCores; BT stays even so (BT*20, .) blocks are sublane-aligned.
    BT = min(16, max(1, -(-B // 2)))
    BT += BT % 2
    n_steps = -(-B // BT)
    Bpad = n_steps * BT
    R = BT * H2

    xs = x.astype(f32)[:, 0, :, :]                           # (B, 40, 100)
    if Bpad != B:
        xs = jnp.concatenate([xs, jnp.zeros((Bpad - B, H1, W1), f32)], axis=0)
    xp = jnp.pad(xs, ((0, 0), (1, 1), (1, 1)))               # (Bpad, 42, 102)
    # Even / odd conv1 output rows h = 2i / 2i+1 need padded rows (h, h+1, h+2).
    a_even = jnp.concatenate(
        [xp[:, 0:H1:2, :], xp[:, 1:H1 + 1:2, :], xp[:, 2:H1 + 2:2, :]],
        axis=-1).reshape(Bpad * H2, K1)
    a_odd = jnp.concatenate(
        [xp[:, 1:H1 + 1:2, :], xp[:, 2:H1 + 2:2, :], xp[:, 3:H1 + 3:2, :]],
        axis=-1).reshape(Bpad * H2, K1)

    # Grid-invariant weight tables (VMEM-resident across the whole grid).
    w1band = _conv1_band(params['conv1_w'].astype(f32))
    b1row = jnp.repeat(params['conv1_b'].astype(f32), W1).reshape(1, N1)
    w2band = _conv2_band(params['conv2_w'].astype(f32))
    b2row = jnp.repeat(params['conv2_b'].astype(f32), W2).reshape(1, N2)
    w1all = _fc1_weights(params['fc1_w'])
    fc1b = params['fc1_b'].astype(f32).reshape(1, HIDDEN)
    fc2w = jnp.zeros((HIDDEN, NCP), f32).at[:, :nc].set(params['fc2_w'].T.astype(f32))
    fc2b = jnp.zeros((1, NCP), f32).at[:, :nc].set(params['fc2_b'].astype(f32)[None, :])

    # Per-row helpers (depend only on r % 20 and r // 20 within one tile).
    r = jnp.arange(R)
    mnf = (r % H2 != 0).astype(f32)[:, None]                 # not first row of image
    mnl = (r % H2 != H2 - 1).astype(f32)[:, None]            # not last row of image
    qmask = jnp.repeat((r[:, None] % H2 == 2 * jnp.arange(H3)[None, :]).astype(f32),
                       HIDDEN, axis=1)                       # (R, 640)
    srow = (jnp.arange(BT)[:, None] == r[None, :] // H2).astype(f32)   # (BT, R)
    tsum = jnp.tile(jnp.eye(HIDDEN, dtype=f32), (H3, 1))     # (640, 64)

    def const(shape):
        return pl.BlockSpec(shape, lambda s, _n=len(shape): (0,) * _n)

    out = pl.pallas_call(
        _wakeword_kernel,
        out_shape=jax.ShapeDtypeStruct((n_steps, BT, NCP), f32),
        grid=(n_steps,),
        in_specs=[
            pl.BlockSpec((R, K1), lambda s: (s, 0)),         # a_even
            pl.BlockSpec((R, K1), lambda s: (s, 0)),         # a_odd
            const((K1, N1)),                                 # conv1 band matrix
            const((1, N1)),                                  # conv1 bias row
            const((K2, N2)),                                 # conv2 band matrix
            const((1, N2)),                                  # conv2 bias row
            const((R, 1)),                                   # mask: not first row
            const((R, 1)),                                   # mask: not last row
            const((N2, NQ)),                                 # fc1 weights
            const((R, NQ)),                                  # fc1 row mask
            const((BT, R)),                                  # per-image row sum
            const((NQ, HIDDEN)),                             # 64-block fold
            const((1, HIDDEN)),                              # fc1 bias
            const((HIDDEN, NCP)),                            # fc2 weights (padded)
            const((1, NCP)),                                 # fc2 bias (padded)
        ],
        out_specs=pl.BlockSpec((1, BT, NCP), lambda s: (s, 0, 0)),
        compiler_params=pltpu.CompilerParams(
            dimension_semantics=("parallel",),
            # ~13 MB of weight tables (double buffered) plus a few MB of
            # per-tile activations; fits v7x's 64 MiB/TC with headroom and is
            # far below v5e/v6e's 128 MiB.
            # TODO(synk): single-buffer the constant-index weight BlockSpecs
            # (pipeline_mode=pl.Buffered(1)) to reclaim ~13 MB on v7x.
            vmem_limit_bytes=48 * 1024 * 1024),
    )(a_even, a_odd, w1band, b1row, w2band, b2row, mnf, mnl,
      w1all, qmask, srow, tsum, fc1b, fc2w, fc2b)
    return out.reshape(Bpad, NCP)[:B, :nc]


# ---------------------- pure-JAX reference (for check) ---------------------
def reference_forward(x, p):
    hp = lax.Precision.HIGHEST
    dn = ('NCHW', 'OIHW', 'NCHW')
    y = lax.conv_general_dilated(x, p['conv1_w'], (1, 1), ((1, 1), (1, 1)),
                                 dimension_numbers=dn, precision=hp)
    y = jnp.maximum(y + p['conv1_b'][None, :, None, None], 0.0)
    y = lax.reduce_window(y, -jnp.inf, lax.max, (1, 1, 2, 2), (1, 1, 2, 2), 'VALID')
    y = lax.conv_general_dilated(y, p['conv2_w'], (1, 1), ((1, 1), (1, 1)),
                                 dimension_numbers=dn, precision=hp)
    y = jnp.maximum(y + p['conv2_b'][None, :, None, None], 0.0)
    y = lax.reduce_window(y, -jnp.inf, lax.max, (1, 1, 2, 2), (1, 1, 2, 2), 'VALID')
    y = y.reshape(y.shape[0], -1)                                  # (B, 4000)
    y = jnp.maximum(jnp.dot(y, p['fc1_w'].T, precision=hp) + p['fc1_b'], 0.0)
    return jnp.dot(y, p['fc2_w'].T, precision=hp) + p['fc2_b']


if __name__ == "__main__":
    key = jax.random.PRNGKey(0)
    ks = jax.random.split(key, 9)
    B, num_classes = 2, 4

    x = jax.random.normal(ks[0], (B, 1, H1, W1), jnp.float32)
    params = {
        'conv1_w': 0.20 * jax.random.normal(ks[1], (C1, 1, 3, 3), jnp.float32),
        'conv1_b': 0.10 * jax.random.normal(ks[2], (C1,), jnp.float32),
        'conv2_w': 0.10 * jax.random.normal(ks[3], (C2, C1, 3, 3), jnp.float32),
        'conv2_b': 0.10 * jax.random.normal(ks[4], (C2,), jnp.float32),
        'fc1_w': 0.02 * jax.random.normal(ks[5], (HIDDEN, C2 * H3 * W3), jnp.float32),
        'fc1_b': 0.05 * jax.random.normal(ks[6], (HIDDEN,), jnp.float32),
        'fc2_w': 0.10 * jax.random.normal(ks[7], (num_classes, HIDDEN), jnp.float32),
        'fc2_b': 0.10 * jax.random.normal(ks[8], (num_classes,), jnp.float32),
    }

    out = wakeword_cnn_forward(x, params)
    out = jax.block_until_ready(out)

    ref = reference_forward(x, params)
    assert out.shape == (B, num_classes)
    assert bool(jnp.all(jnp.isfinite(out)))
    # DEFAULT-precision (bf16 MXU) dots vs a HIGHEST-precision f32 reference.
    assert bool(jnp.allclose(out, ref, rtol=2e-2, atol=2e-2)), (out, ref)
    print("KERNEL_OK")
</pallas_src>

<mosaic_0001>
module attributes {stable_mosaic.version = 11 : i64} {
  func.func @_wakeword_kernel(%arg0: i32, %arg1: memref<40x306xf32, #tpu.memory_space<vmem>>, %arg2: memref<40x306xf32, #tpu.memory_space<vmem>>, %arg3: memref<306x800xf32, #tpu.memory_space<vmem>>, %arg4: memref<1x800xf32, #tpu.memory_space<vmem>>, %arg5: memref<2400x800xf32, #tpu.memory_space<vmem>>, %arg6: memref<1x800xf32, #tpu.memory_space<vmem>>, %arg7: memref<40x1xf32, #tpu.memory_space<vmem>>, %arg8: memref<40x1xf32, #tpu.memory_space<vmem>>, %arg9: memref<800x640xf32, #tpu.memory_space<vmem>>, %arg10: memref<40x640xf32, #tpu.memory_space<vmem>>, %arg11: memref<2x40xf32, #tpu.memory_space<vmem>>, %arg12: memref<640x64xf32, #tpu.memory_space<vmem>>, %arg13: memref<1x64xf32, #tpu.memory_space<vmem>>, %arg14: memref<64x128xf32, #tpu.memory_space<vmem>>, %arg15: memref<1x128xf32, #tpu.memory_space<vmem>>, %arg16: memref<1x2x128xf32, #tpu.memory_space<vmem>>) attributes {dimension_semantics = [#tpu.dimension_semantics<parallel>], iteration_bounds = array<i64: 1>, scalar_prefetch = 0 : i64, scratch_operands = 0 : i64, tpu.core_type = #tpu.core_type<tc>, window_params = [{transform_indices = @transform_0, window_bounds = array<i64: 40, 306>}, {transform_indices = @transform_1, window_bounds = array<i64: 40, 306>}, {pipeline_mode = #tpu.pipeline_mode<synchronous>, transform_indices = @transform_2, window_bounds = array<i64: 306, 800>}, {pipeline_mode = #tpu.pipeline_mode<synchronous>, transform_indices = @transform_3, window_bounds = array<i64: 1, 800>}, {pipeline_mode = #tpu.pipeline_mode<synchronous>, transform_indices = @transform_4, window_bounds = array<i64: 2400, 800>}, {pipeline_mode = #tpu.pipeline_mode<synchronous>, transform_indices = @transform_5, window_bounds = array<i64: 1, 800>}, {pipeline_mode = #tpu.pipeline_mode<synchronous>, transform_indices = @transform_6, window_bounds = array<i64: 40, 1>}, {pipeline_mode = #tpu.pipeline_mode<synchronous>, transform_indices = @transform_7, window_bounds = array<i64: 40, 1>}, {pipeline_mode = #tpu.pipeline_mode<synchronous>, transform_indices = @transform_8, window_bounds = array<i64: 800, 640>}, {pipeline_mode = #tpu.pipeline_mode<synchronous>, transform_indices = @transform_9, window_bounds = array<i64: 40, 640>}, {pipeline_mode = #tpu.pipeline_mode<synchronous>, transform_indices = @transform_10, window_bounds = array<i64: 2, 40>}, {pipeline_mode = #tpu.pipeline_mode<synchronous>, transform_indices = @transform_11, window_bounds = array<i64: 640, 64>}, {pipeline_mode = #tpu.pipeline_mode<synchronous>, transform_indices = @transform_12, window_bounds = array<i64: 1, 64>}, {pipeline_mode = #tpu.pipeline_mode<synchronous>, transform_indices = @transform_13, window_bounds = array<i64: 64, 128>}, {pipeline_mode = #tpu.pipeline_mode<synchronous>, transform_indices = @transform_14, window_bounds = array<i64: 1, 128>}, {transform_indices = @transform_15, window_bounds = array<i64: 1, 2, 128>}]} {
    %c0 = arith.constant 0 : index
    %c0_0 = arith.constant 0 : index
    %0 = vector.load %arg3[%c0, %c0_0] : memref<306x800xf32, #tpu.memory_space<vmem>>, vector<306x800xf32>
    %c0_1 = arith.constant 0 : index
    %c0_2 = arith.constant 0 : index
    %1 = vector.load %arg4[%c0_1, %c0_2] : memref<1x800xf32, #tpu.memory_space<vmem>>, vector<1x800xf32>
    %c0_3 = arith.constant 0 : index
    %c0_4 = arith.constant 0 : index
    %2 = vector.load %arg1[%c0_3, %c0_4] : memref<40x306xf32, #tpu.memory_space<vmem>>, vector<40x306xf32>
    %cst = arith.constant dense<0.000000e+00> : vector<40x800xf32>
    %3 = tpu.matmul %2, %0, %cst {dimension_numbers = #tpu.dot_dimension_numbers<[1], [0], [0], [1], [0, 0, 1, 1], [], []>} : vector<40x306xf32>, vector<306x800xf32>, vector<40x800xf32> -> vector<40x800xf32>
    %4 = vector.broadcast %1 : vector<1x800xf32> to vector<40x800xf32>
    %5 = arith.addf %3, %4 : vector<40x800xf32>
    %cst_5 = arith.constant 0.000000e+00 : f32
    %6 = vector.broadcast %cst_5 : f32 to vector<40x800xf32>
    %7 = arith.maximumf %5, %6 : vector<40x800xf32>
    %c0_6 = arith.constant 0 : index
    %c0_7 = arith.constant 0 : index
    %8 = vector.load %arg2[%c0_6, %c0_7] : memref<40x306xf32, #tpu.memory_space<vmem>>, vector<40x306xf32>
    %cst_8 = arith.constant dense<0.000000e+00> : vector<40x800xf32>
    %9 = tpu.matmul %8, %0, %cst_8 {dimension_numbers = #tpu.dot_dimension_numbers<[1], [0], [0], [1], [0, 0, 1, 1], [], []>} : vector<40x306xf32>, vector<306x800xf32>, vector<40x800xf32> -> vector<40x800xf32>
    %10 = vector.broadcast %1 : vector<1x800xf32> to vector<40x800xf32>
    %11 = arith.addf %9, %10 : vector<40x800xf32>
    %cst_9 = arith.constant 0.000000e+00 : f32
    %12 = vector.broadcast %cst_9 : f32 to vector<40x800xf32>
    %13 = arith.maximumf %11, %12 : vector<40x800xf32>
    %14 = arith.maximumf %7, %13 : vector<40x800xf32>
    %15 = vector.extract_strided_slice %14 {offsets = [0, 1], sizes = [40, 799], strides = [1, 1]} : vector<40x800xf32> to vector<40x799xf32>
    %16 = vector.extract_strided_slice %14 {offsets = [0, 0], sizes = [40, 1], strides = [1, 1]} : vector<40x800xf32> to vector<40x1xf32>
    %17 = tpu.concatenate %15, %16 in 1 : vector<40x799xf32>, vector<40x1xf32> -> vector<40x800xf32>
    %18 = arith.maximumf %14, %17 : vector<40x800xf32>
    %cst_10 = arith.constant 0.000000e+00 : f32
    %19 = vector.broadcast %cst_10 : f32 to vector<1x800xf32>
    %20 = vector.extract_strided_slice %18 {offsets = [0, 0], sizes = [39, 800], strides = [1, 1]} : vector<40x800xf32> to vector<39x800xf32>
    %21 = tpu.concatenate %19, %20 in 0 : vector<1x800xf32>, vector<39x800xf32> -> vector<40x800xf32>
    %c0_11 = arith.constant 0 : index
    %c0_12 = arith.constant 0 : index
    %22 = vector.load %arg7[%c0_11, %c0_12] : memref<40x1xf32, #tpu.memory_space<vmem>>, vector<40x1xf32>
    %23 = vector.broadcast %22 : vector<40x1xf32> to vector<40x800xf32>
    %24 = arith.mulf %21, %23 : vector<40x800xf32>
    %25 = vector.extract_strided_slice %18 {offsets = [1, 0], sizes = [39, 800], strides = [1, 1]} : vector<40x800xf32> to vector<39x800xf32>
    %26 = tpu.concatenate %25, %19 in 0 : vector<39x800xf32>, vector<1x800xf32> -> vector<40x800xf32>
    %c0_13 = arith.constant 0 : index
    %c0_14 = arith.constant 0 : index
    %27 = vector.load %arg8[%c0_13, %c0_14] : memref<40x1xf32, #tpu.memory_space<vmem>>, vector<40x1xf32>
    %28 = vector.broadcast %27 : vector<40x1xf32> to vector<40x800xf32>
    %29 = arith.mulf %26, %28 : vector<40x800xf32>
    %30 = tpu.concatenate %24, %18, %29 in 1 : vector<40x800xf32>, vector<40x800xf32>, vector<40x800xf32> -> vector<40x2400xf32>
    %c0_15 = arith.constant 0 : index
    %c0_16 = arith.constant 0 : index
    %31 = vector.load %arg5[%c0_15, %c0_16] : memref<2400x800xf32, #tpu.memory_space<vmem>>, vector<2400x800xf32>
    %cst_17 = arith.constant dense<0.000000e+00> : vector<40x800xf32>
    %32 = tpu.matmul %30, %31, %cst_17 {dimension_numbers = #tpu.dot_dimension_numbers<[1], [0], [0], [1], [0, 0, 1, 1], [], []>} : vector<40x2400xf32>, vector<2400x800xf32>, vector<40x800xf32> -> vector<40x800xf32>
    %c0_18 = arith.constant 0 : index
    %c0_19 = arith.constant 0 : index
    %33 = vector.load %arg6[%c0_18, %c0_19] : memref<1x800xf32, #tpu.memory_space<vmem>>, vector<1x800xf32>
    %34 = vector.broadcast %33 : vector<1x800xf32> to vector<40x800xf32>
    %35 = arith.addf %32, %34 : vector<40x800xf32>
    %cst_20 = arith.constant 0.000000e+00 : f32
    %36 = vector.broadcast %cst_20 : f32 to vector<40x800xf32>
    %37 = arith.maximumf %35, %36 : vector<40x800xf32>
    %38 = vector.extract_strided_slice %37 {offsets = [0, 1], sizes = [40, 799], strides = [1, 1]} : vector<40x800xf32> to vector<40x799xf32>
    %39 = vector.extract_strided_slice %37 {offsets = [0, 0], sizes = [40, 1], strides = [1, 1]} : vector<40x800xf32> to vector<40x1xf32>
    %40 = tpu.concatenate %38, %39 in 1 : vector<40x799xf32>, vector<40x1xf32> -> vector<40x800xf32>
    %41 = arith.maximumf %37, %40 : vector<40x800xf32>
    %42 = vector.extract_strided_slice %41 {offsets = [1, 0], sizes = [39, 800], strides = [1, 1]} : vector<40x800xf32> to vector<39x800xf32>
    %43 = vector.extract_strided_slice %41 {offsets = [0, 0], sizes = [1, 800], strides = [1, 1]} : vector<40x800xf32> to vector<1x800xf32>
    %44 = tpu.concatenate %42, %43 in 0 : vector<39x800xf32>, vector<1x800xf32> -> vector<40x800xf32>
    %45 = arith.maximumf %41, %44 : vector<40x800xf32>
    %c0_21 = arith.constant 0 : index
    %c0_22 = arith.constant 0 : index
    %46 = vector.load %arg9[%c0_21, %c0_22] : memref<800x640xf32, #tpu.memory_space<vmem>>, vector<800x640xf32>
    %cst_23 = arith.constant dense<0.000000e+00> : vector<40x640xf32>
    %47 = tpu.matmul %45, %46, %cst_23 {dimension_numbers = #tpu.dot_dimension_numbers<[1], [0], [0], [1], [0, 0, 1, 1], [], []>} : vector<40x800xf32>, vector<800x640xf32>, vector<40x640xf32> -> vector<40x640xf32>
    %c0_24 = arith.constant 0 : index
    %c0_25 = arith.constant 0 : index
    %48 = vector.load %arg10[%c0_24, %c0_25] : memref<40x640xf32, #tpu.memory_space<vmem>>, vector<40x640xf32>
    %49 = arith.mulf %47, %48 : vector<40x640xf32>
    %c0_26 = arith.constant 0 : index
    %c0_27 = arith.constant 0 : index
    %50 = vector.load %arg11[%c0_26, %c0_27] : memref<2x40xf32, #tpu.memory_space<vmem>>, vector<2x40xf32>
    %cst_28 = arith.constant dense<0.000000e+00> : vector<2x640xf32>
    %51 = tpu.matmul %50, %49, %cst_28 {dimension_numbers = #tpu.dot_dimension_numbers<[1], [0], [0], [1], [0, 0, 1, 1], [], []>} : vector<2x40xf32>, vector<40x640xf32>, vector<2x640xf32> -> vector<2x640xf32>
    %c0_29 = arith.constant 0 : index
    %c0_30 = arith.constant 0 : index
    %52 = vector.load %arg12[%c0_29, %c0_30] : memref<640x64xf32, #tpu.memory_space<vmem>>, vector<640x64xf32>
    %cst_31 = arith.constant dense<0.000000e+00> : vector<2x64xf32>
    %53 = tpu.matmul %51, %52, %cst_31 {dimension_numbers = #tpu.dot_dimension_numbers<[1], [0], [0], [1], [0, 0, 1, 1], [], []>} : vector<2x640xf32>, vector<640x64xf32>, vector<2x64xf32> -> vector<2x64xf32>
    %c0_32 = arith.constant 0 : index
    %c0_33 = arith.constant 0 : index
    %54 = vector.load %arg13[%c0_32, %c0_33] : memref<1x64xf32, #tpu.memory_space<vmem>>, vector<1x64xf32>
    %55 = vector.broadcast %54 : vector<1x64xf32> to vector<2x64xf32>
    %56 = arith.addf %53, %55 : vector<2x64xf32>
    %cst_34 = arith.constant 0.000000e+00 : f32
    %57 = vector.broadcast %cst_34 : f32 to vector<2x64xf32>
    %58 = arith.maximumf %56, %57 : vector<2x64xf32>
    %c0_35 = arith.constant 0 : index
    %c0_36 = arith.constant 0 : index
    %59 = vector.load %arg14[%c0_35, %c0_36] : memref<64x128xf32, #tpu.memory_space<vmem>>, vector<64x128xf32>
    %cst_37 = arith.constant dense<0.000000e+00> : vector<2x128xf32>
    %60 = tpu.matmul %58, %59, %cst_37 {dimension_numbers = #tpu.dot_dimension_numbers<[1], [0], [0], [1], [0, 0, 1, 1], [], []>} : vector<2x64xf32>, vector<64x128xf32>, vector<2x128xf32> -> vector<2x128xf32>
    %c0_38 = arith.constant 0 : index
    %c0_39 = arith.constant 0 : index
    %61 = vector.load %arg15[%c0_38, %c0_39] : memref<1x128xf32, #tpu.memory_space<vmem>>, vector<1x128xf32>
    %62 = vector.broadcast %61 : vector<1x128xf32> to vector<2x128xf32>
    %63 = arith.addf %60, %62 : vector<2x128xf32>
    %c0_40 = arith.constant 0 : index
    %c0_41 = arith.constant 0 : index
    %c0_42 = arith.constant 0 : index
    %64 = vector.load %arg16[%c0_40, %c0_41, %c0_42] : memref<1x2x128xf32, #tpu.memory_space<vmem>>, vector<1x2x128xf32>
    %65 = vector.shape_cast %64 : vector<1x2x128xf32> to vector<2x128xf32>
    %66 = vector.shape_cast %63 : vector<2x128xf32> to vector<1x2x128xf32>
    tpu.vector_store %arg16[%c0_40, %c0_41, %c0_42], %66 {strides = array<i32>} : memref<1x2x128xf32, #tpu.memory_space<vmem>>, vector<1x2x128xf32>,
    return
  }
  func.func @transform_0(%arg0: i32) -> (i32, i32) {
    %c0_i32 = arith.constant 0 : i32
    %c0_i32_0 = arith.constant 0 : i32
    return %arg0, %c0_i32 : i32, i32
  }
  func.func @transform_1(%arg0: i32) -> (i32, i32) {
    %c0_i32 = arith.constant 0 : i32
    %c0_i32_0 = arith.constant 0 : i32
    return %arg0, %c0_i32 : i32, i32
  }
  func.func @transform_2(%arg0: i32) -> (i32, i32) {
    %c0_i32 = arith.constant 0 : i32
    %c0_i32_0 = arith.constant 0 : i32
    %c0_i32_1 = arith.constant 0 : i32
    return %c0_i32, %c0_i32_0 : i32, i32
  }
  func.func @transform_3(%arg0: i32) -> (i32, i32) {
    %c0_i32 = arith.constant 0 : i32
    %c0_i32_0 = arith.constant 0 : i32
    %c0_i32_1 = arith.constant 0 : i32
    return %c0_i32, %c0_i32_0 : i32, i32
  }
  func.func @transform_4(%arg0: i32) -> (i32, i32) {
    %c0_i32 = arith.constant 0 : i32
    %c0_i32_0 = arith.constant 0 : i32
    %c0_i32_1 = arith.constant 0 : i32
    return %c0_i32, %c0_i32_0 : i32, i32
  }
  func.func @transform_5(%arg0: i32) -> (i32, i32) {
    %c0_i32 = arith.constant 0 : i32
    %c0_i32_0 = arith.constant 0 : i32
    %c0_i32_1 = arith.constant 0 : i32
    return %c0_i32, %c0_i32_0 : i32, i32
  }
  func.func @transform_6(%arg0: i32) -> (i32, i32) {
    %c0_i32 = arith.constant 0 : i32
    %c0_i32_0 = arith.constant 0 : i32
    %c0_i32_1 = arith.constant 0 : i32
    return %c0_i32, %c0_i32_0 : i32, i32
  }
  func.func @transform_7(%arg0: i32) -> (i32, i32) {
    %c0_i32 = arith.constant 0 : i32
    %c0_i32_0 = arith.constant 0 : i32
    %c0_i32_1 = arith.constant 0 : i32
    return %c0_i32, %c0_i32_0 : i32, i32
  }
  func.func @transform_8(%arg0: i32) -> (i32, i32) {
    %c0_i32 = arith.constant 0 : i32
    %c0_i32_0 = arith.constant 0 : i32
    %c0_i32_1 = arith.constant 0 : i32
    return %c0_i32, %c0_i32_0 : i32, i32
  }
  func.func @transform_9(%arg0: i32) -> (i32, i32) {
    %c0_i32 = arith.constant 0 : i32
    %c0_i32_0 = arith.constant 0 : i32
    %c0_i32_1 = arith.constant 0 : i32
    return %c0_i32, %c0_i32_0 : i32, i32
  }
  func.func @transform_10(%arg0: i32) -> (i32, i32) {
    %c0_i32 = arith.constant 0 : i32
    %c0_i32_0 = arith.constant 0 : i32
    %c0_i32_1 = arith.constant 0 : i32
    return %c0_i32, %c0_i32_0 : i32, i32
  }
  func.func @transform_11(%arg0: i32) -> (i32, i32) {
    %c0_i32 = arith.constant 0 : i32
    %c0_i32_0 = arith.constant 0 : i32
    %c0_i32_1 = arith.constant 0 : i32
    return %c0_i32, %c0_i32_0 : i32, i32
  }
  func.func @transform_12(%arg0: i32) -> (i32, i32) {
    %c0_i32 = arith.constant 0 : i32
    %c0_i32_0 = arith.constant 0 : i32
    %c0_i32_1 = arith.constant 0 : i32
    return %c0_i32, %c0_i32_0 : i32, i32
  }
  func.func @transform_13(%arg0: i32) -> (i32, i32) {
    %c0_i32 = arith.constant 0 : i32
    %c0_i32_0 = arith.constant 0 : i32
    %c0_i32_1 = arith.constant 0 : i32
    return %c0_i32, %c0_i32_0 : i32, i32
  }
  func.func @transform_14(%arg0: i32) -> (i32, i32) {
    %c0_i32 = arith.constant 0 : i32
    %c0_i32_0 = arith.constant 0 : i32
    %c0_i32_1 = arith.constant 0 : i32
    return %c0_i32, %c0_i32_0 : i32, i32
  }
  func.func @transform_15(%arg0: i32) -> (i32, i32, i32) {
    %c0_i32 = arith.constant 0 : i32
    %c0_i32_0 = arith.constant 0 : i32
    %c0_i32_1 = arith.constant 0 : i32
    return %arg0, %c0_i32, %c0_i32_0 : i32, i32, i32
  }
}

</mosaic_0001>

<llo_original>
// kernel: tpu_custom_call.1
$region0: #{tpu_custom_call.1}
  #allocation0 [shape = 'u32[]', space=smem, size = 0x4, offset = 0x4, fixed_abs, tag = 'smem constant byte address 0x4 - core index']
  #allocation1 [shape = 'u32[144,128]{1,0:T(1,128)}', space=vmem, size = 0x12000, scoped, tag = 'internal scratch']
  %s0 = inlined_call_operand.vmem [shape: f32[40,306], index: 0, kind: input, shape index: {}]
  %s1 = inlined_call_operand.vmem [shape: f32[40,306], index: 1, kind: input, shape index: {}]
  %s2 = inlined_call_operand.vmem [shape: f32[306,800], index: 2, kind: input, shape index: {}]
  %s3 = inlined_call_operand.vmem [shape: f32[1,800], index: 3, kind: input, shape index: {}]
  %s4 = inlined_call_operand.vmem [shape: f32[2400,800], index: 4, kind: input, shape index: {}]
  %s5 = inlined_call_operand.vmem [shape: f32[1,800], index: 5, kind: input, shape index: {}]
  %s6 = inlined_call_operand.vmem [shape: f32[40,1], index: 6, kind: input, shape index: {}]
  %s7 = inlined_call_operand.vmem [shape: f32[40,1], index: 7, kind: input, shape index: {}]
  %s8 = inlined_call_operand.vmem [shape: f32[800,640], index: 8, kind: input, shape index: {}]
  %s9 = inlined_call_operand.vmem [shape: f32[40,640], index: 9, kind: input, shape index: {}]
  %s10 = inlined_call_operand.vmem [shape: f32[2,40], index: 10, kind: input, shape index: {}]
  %s11 = inlined_call_operand.vmem [shape: f32[640,64], index: 11, kind: input, shape index: {}]
  %s12 = inlined_call_operand.vmem [shape: f32[1,64], index: 12, kind: input, shape index: {}]
  %s13 = inlined_call_operand.vmem [shape: f32[64,128], index: 13, kind: input, shape index: {}]
  %s14 = inlined_call_operand.vmem [shape: f32[1,128], index: 14, kind: input, shape index: {}]
  %s15 = inlined_call_operand.hbm [shape: f32[1,2,128], index: 15, kind: output, shape index: {}]
  %s16 = sld [smem:[#allocation0]]
  $region70: #{tpu_custom_call.1} parent=0
    _
  %s18 = ssub.s32 1, %s16
  %s19 = scalar_select 0, %s18, %s16
  $region1: #{tpu_custom_call.1} parent=0
    #allocation2 [shape = 'u8[1024]{0}', space=vmem, size = 0x400, scoped, tag = 'output window, operand 0, single buffered']
    #allocation3 [shape = 's32[1]{0}', space=sflag, size = 0x4, scoped, tag = 'scoped memory for tpu_custom_call.1']
    %20 = vsyncpa [#allocation3], 0
    // Predicated region
    $region2: #{tpu_custom_call.1} parent=1 // pred_check
      _
    $region3: #{tpu_custom_call.1} parent=1 // pred_check_branch
      %22 = sbr.rel (0) target = $region5
    $region4: #{tpu_custom_call.1} parent=1 // pred_region
      _
    $region5: #{tpu_custom_call.1} parent=1 // pred_fallthru
      _
    // Predicated region
    $region6: #{tpu_custom_call.1} parent=1 // pred_check
      _
    $region7: #{tpu_custom_call.1} parent=1 // pred_check_branch
      %24 = sbr.rel (0) target = $region9
    $region8: #{tpu_custom_call.1} parent=1 // pred_region
      _
    $region9: #{tpu_custom_call.1} parent=1 // pred_fallthru
      _
    // Predicated region
    $region10: #{tpu_custom_call.1} parent=1 // pred_check
      _
    $region11: #{tpu_custom_call.1} parent=1 // pred_check_branch
      %26 = sbr.rel (0) target = $region13
    $region12: #{tpu_custom_call.1} parent=1 // pred_region
      _
    $region13: #{tpu_custom_call.1} parent=1 // pred_fallthru
      _
    // Predicated region
    $region14: #{tpu_custom_call.1} parent=1 // pred_check
      _
    $region15: #{tpu_custom_call.1} parent=1 // pred_check_branch
      %28 = sbr.rel (0) target = $region17
    $region16: #{tpu_custom_call.1} parent=1 // pred_region
      _
    $region17: #{tpu_custom_call.1} parent=1 // pred_fallthru
      _
    // Predicated region
    $region18: #{tpu_custom_call.1} parent=1 // pred_check
      _
    $region19: #{tpu_custom_call.1} parent=1 // pred_check_branch
      %30 = sbr.rel (0) target = $region21
    $region20: #{tpu_custom_call.1} parent=1 // pred_region
      _
    $region21: #{tpu_custom_call.1} parent=1 // pred_fallthru
      _
    // Predicated region
    $region22: #{tpu_custom_call.1} parent=1 // pred_check
      _
    $region23: #{tpu_custom_call.1} parent=1 // pred_check_branch
      %32 = sbr.rel (0) target = $region25
    $region24: #{tpu_custom_call.1} parent=1 // pred_region
      _
    $region25: #{tpu_custom_call.1} parent=1 // pred_fallthru
      _
    // Predicated region
    $region26: #{tpu_custom_call.1} parent=1 // pred_check
      _
    $region27: #{tpu_custom_call.1} parent=1 // pred_check_branch
      %34 = sbr.rel (0) target = $region29
    $region28: #{tpu_custom_call.1} parent=1 // pred_region
      _
    $region29: #{tpu_custom_call.1} parent=1 // pred_fallthru
      _
    // Predicated region
    $region30: #{tpu_custom_call.1} parent=1 // pred_check
      _
    $region31: #{tpu_custom_call.1} parent=1 // pred_check_branch
      %36 = sbr.rel (0) target = $region33
    $region32: #{tpu_custom_call.1} parent=1 // pred_region
      _
    $region33: #{tpu_custom_call.1} parent=1 // pred_fallthru
      _
    // Predicated region
    $region34: #{tpu_custom_call.1} parent=1 // pred_check
      _
    $region35: #{tpu_custom_call.1} parent=1 // pred_check_branch
      %38 = sbr.rel (0) target = $region37
    $region36: #{tpu_custom_call.1} parent=1 // pred_region
      _
    $region37: #{tpu_custom_call.1} parent=1 // pred_fallthru
      _
    // Predicated region
    $region38: #{tpu_custom_call.1} parent=1 // pred_check
      _
    $region39: #{tpu_custom_call.1} parent=1 // pred_check_branch
      %40 = sbr.rel (0) target = $region41
    $region40: #{tpu_custom_call.1} parent=1 // pred_region
      _
    $region41: #{tpu_custom_call.1} parent=1 // pred_fallthru
      _
    // Predicated region
    $region42: #{tpu_custom_call.1} parent=1 // pred_check
      _
    $region43: #{tpu_custom_call.1} parent=1 // pred_check_branch
      %42 = sbr.rel (0) target = $region45
    $region44: #{tpu_custom_call.1} parent=1 // pred_region
      _
    $region45: #{tpu_custom_call.1} parent=1 // pred_fallthru
      _
    // Predicated region
    $region46: #{tpu_custom_call.1} parent=1 // pred_check
      _
    $region47: #{tpu_custom_call.1} parent=1 // pred_check_branch
      %44 = sbr.rel (0) target = $region49
    $region48: #{tpu_custom_call.1} parent=1 // pred_region
      _
    $region49: #{tpu_custom_call.1} parent=1 // pred_fallthru
      _
    // Predicated region
    $region50: #{tpu_custom_call.1} parent=1 // pred_check
      _
    $region51: #{tpu_custom_call.1} parent=1 // pred_check_branch
      %46 = sbr.rel (0) target = $region53
    $region52: #{tpu_custom_call.1} parent=1 // pred_region
      _
    $region53: #{tpu_custom_call.1} parent=1 // pred_fallthru
      _
    // Predicated region
    $region54: #{tpu_custom_call.1} parent=1 // pred_check
      _
    $region55: #{tpu_custom_call.1} parent=1 // pred_check_branch
      %48 = sbr.rel (0) target = $region57
    $region56: #{tpu_custom_call.1} parent=1 // pred_region
      _
    $region57: #{tpu_custom_call.1} parent=1 // pred_fallthru
      _
    // Predicated region
    $region58: #{tpu_custom_call.1} parent=1 // pred_check
      _
    $region59: #{tpu_custom_call.1} parent=1 // pred_check_branch
      %50 = sbr.rel (0) target = $region61
    $region60: #{tpu_custom_call.1} parent=1 // pred_region
      _
    $region61: #{tpu_custom_call.1} parent=1 // pred_fallthru
      _
    %v51 = vld [vmem:[%s2] sm:$0xff]
    %v52 = vld [vmem:[%s2 + $0x8] sm:$0xff]
    %v53 = vld [vmem:[%s2 + $0x10] sm:$0xff]
    %v54 = vld [vmem:[%s2 + $0x18] sm:$0xff]
    %v55 = vld [vmem:[%s2 + $0x20] sm:$0xff]
    %v56 = vld [vmem:[%s2 + $0x28] sm:$0xff]
    %v57 = vld [vmem:[%s2 + $0x30] sm:$0xff]
    %v58 = vld [vmem:[%s2 + $0x38] sm:$0xff]
    %v59 = vld [vmem:[%s2 + $0x40] sm:$0xff]
    %v60 = vld [vmem:[%s2 + $0x48] sm:$0xff]
    %v61 = vld [vmem:[%s2 + $0x50] sm:$0xff]
    %v62 = vld [vmem:[%s2 + $0x58] sm:$0xff]
    %v63 = vld [vmem:[%s2 + $0x60] sm:$0xff]
    %v64 = vld [vmem:[%s2 + $0x68] sm:$0xff]
    %v65 = vld [vmem:[%s2 + $0x70] sm:$0xff]
    %v66 = vld [vmem:[%s2 + $0x78] sm:$0xff]
    %v67 = vld [vmem:[%s2 + $0x80] sm:$0xff]
    %v68 = vld [vmem:[%s2 + $0x88] sm:$0xff]
    %v69 = vld [vmem:[%s2 + $0x90] sm:$0xff]
    %v70 = vld [vmem:[%s2 + $0x98] sm:$0xff]
    %v71 = vld [vmem:[%s2 + $0xa0] sm:$0xff]
    %v72 = vld [vmem:[%s2 + $0xa8] sm:$0xff]
    %v73 = vld [vmem:[%s2 + $0xb0] sm:$0xff]
    %v74 = vld [vmem:[%s2 + $0xb8] sm:$0xff]
    %v75 = vld [vmem:[%s2 + $0xc0] sm:$0xff]
    %v76 = vld [vmem:[%s2 + $0xc8] sm:$0xff]
    %v77 = vld [vmem:[%s2 + $0xd0] sm:$0xff]
    %v78 = vld [vmem:[%s2 + $0xd8] sm:$0xff]
    %v79 = vld [vmem:[%s2 + $0xe0] sm:$0xff]
    %v80 = vld [vmem:[%s2 + $0xe8] sm:$0xff]
    %v81 = vld [vmem:[%s2 + $0xf0] sm:$0xff]
    %v82 = vld [vmem:[%s2 + $0xf8] sm:$0xff]
    %v83 = vld [vmem:[%s2 + $0x100] sm:$0xff]
    %v84 = vld [vmem:[%s2 + $0x108] sm:$0xff]
    %v85 = vld [vmem:[%s2 + $0x110] sm:$0xff]
    %v86 = vld [vmem:[%s2 + $0x118] sm:$0xff]
    %v87 = vld [vmem:[%s2 + $0x120] sm:$0xff]
    %v88 = vld [vmem:[%s2 + $0x128] sm:$0xff]
    %v89 = vld [vmem:[%s2 + $0x130] sm:$0xff]
    %v90 = vld [vmem:[%s2 + $0x138] sm:$0xff]
    %v91 = vld [vmem:[%s2 + $0x140] sm:$0xff]
    %v92 = vld [vmem:[%s2 + $0x148] sm:$0xff]
    %v93 = vld [vmem:[%s2 + $0x150] sm:$0xff]
    %v94 = vld [vmem:[%s2 + $0x158] sm:$0xff]
    %v95 = vld [vmem:[%s2 + $0x160] sm:$0xff]
    %v96 = vld [vmem:[%s2 + $0x168] sm:$0xff]
    %v97 = vld [vmem:[%s2 + $0x170] sm:$0xff]
    %v98 = vld [vmem:[%s2 + $0x178] sm:$0xff]
    %v99 = vld [vmem:[%s2 + $0x180] sm:$0xff]
    %v100 = vld [vmem:[%s2 + $0x188] sm:$0xff]
    %v101 = vld [vmem:[%s2 + $0x190] sm:$0xff]
    %v102 = vld [vmem:[%s2 + $0x198] sm:$0xff]
    %v103 = vld [vmem:[%s2 + $0x1a0] sm:$0xff]
    %v104 = vld [vmem:[%s2 + $0x1a8] sm:$0xff]
    %v105 = vld [vmem:[%s2 + $0x1b0] sm:$0xff]
    %v106 = vld [vmem:[%s2 + $0x1b8] sm:$0xff]
    %v107 = vld [vmem:[%s2 + $0x1c0] sm:$0xff]
    %v108 = vld [vmem:[%s2 + $0x1c8] sm:$0xff]
    %v109 = vld [vmem:[%s2 + $0x1d0] sm:$0xff]
    %v110 = vld [vmem:[%s2 + $0x1d8] sm:$0xff]
    %v111 = vld [vmem:[%s2 + $0x1e0] sm:$0xff]
    %v112 = vld [vmem:[%s2 + $0x1e8] sm:$0xff]
    %v113 = vld [vmem:[%s2 + $0x1f0] sm:$0xff]
    %v114 = vld [vmem:[%s2 + $0x1f8] sm:$0xff]
    %v115 = vld [vmem:[%s2 + $0x200] sm:$0xff]
    %v116 = vld [vmem:[%s2 + $0x208] sm:$0xff]
    %v117 = vld [vmem:[%s2 + $0x210] sm:$0xff]
    %v118 = vld [vmem:[%s2 + $0x218] sm:$0xff]
    %v119 = vld [vmem:[%s2 + $0x220] sm:$0xff]
    %v120 = vld [vmem:[%s2 + $0x228] sm:$0xff]
    %v121 = vld [vmem:[%s2 + $0x230] sm:$0xff]
    %v122 = vld [vmem:[%s2 + $0x238] sm:$0xff]
    %v123 = vld [vmem:[%s2 + $0x240] sm:$0xff]
    %v124 = vld [vmem:[%s2 + $0x248] sm:$0xff]
    %v125 = vld [vmem:[%s2 + $0x250] sm:$0xff]
    %v126 = vld [vmem:[%s2 + $0x258] sm:$0xff]
    %v127 = vld [vmem:[%s2 + $0x260] sm:$0xff]
    %v128 = vld [vmem:[%s2 + $0x268] sm:$0xff]
    %v129 = vld [vmem:[%s2 + $0x270] sm:$0xff]
    %v130 = vld [vmem:[%s2 + $0x278] sm:$0xff]
    %v131 = vld [vmem:[%s2 + $0x280] sm:$0xff]
    %v132 = vld [vmem:[%s2 + $0x288] sm:$0xff]
    %v133 = vld [vmem:[%s2 + $0x290] sm:$0xff]
    %v134 = vld [vmem:[%s2 + $0x298] sm:$0xff]
    %v135 = vld [vmem:[%s2 + $0x2a0] sm:$0xff]
    %v136 = vld [vmem:[%s2 + $0x2a8] sm:$0xff]
    %v137 = vld [vmem:[%s2 + $0x2b0] sm:$0xff]
    %v138 = vld [vmem:[%s2 + $0x2b8] sm:$0xff]
    %v139 = vld [vmem:[%s2 + $0x2c0] sm:$0xff]
    %v140 = vld [vmem:[%s2 + $0x2c8] sm:$0xff]
    %v141 = vld [vmem:[%s2 + $0x2d0] sm:$0xff]
    %v142 = vld [vmem:[%s2 + $0x2d8] sm:$0xff]
    %v143 = vld [vmem:[%s2 + $0x2e0] sm:$0xff]
    %v144 = vld [vmem:[%s2 + $0x2e8] sm:$0xff]
    %v145 = vld [vmem:[%s2 + $0x2f0] sm:$0xff]
    %v146 = vld [vmem:[%s2 + $0x2f8] sm:$0xff]
    %v147 = vld [vmem:[%s2 + $0x300] sm:$0xff]
    %v148 = vld [vmem:[%s2 + $0x308] sm:$0xff]
    %v149 = vld [vmem:[%s2 + $0x310] sm:$0xff]
    %v150 = vld [vmem:[%s2 + $0x318] sm:$0xff]
    %v151 = vld [vmem:[%s2 + $0x320] sm:$0xff]
    %v152 = vld [vmem:[%s2 + $0x328] sm:$0xff]
    %v153 = vld [vmem:[%s2 + $0x330] sm:$0xff]
    %v154 = vld [vmem:[%s2 + $0x338] sm:$0xff]
    %v155 = vld [vmem:[%s2 + $0x340] sm:$0xff]
    %v156 = vld [vmem:[%s2 + $0x348] sm:$0xff]
    %v157 = vld [vmem:[%s2 + $0x350] sm:$0xff]
    %v158 = vld [vmem:[%s2 + $0x358] sm:$0xff]
    %v159 = vld [vmem:[%s2 + $0x360] sm:$0xff]
    %v160 = vld [vmem:[%s2 + $0x368] sm:$0xff]
    %v161 = vld [vmem:[%s2 + $0x370] sm:$0xff]
    %v162 = vld [vmem:[%s2 + $0x378] sm:$0xff]
    %v163 = vld [vmem:[%s2 + $0x380] sm:$0xff]
    %v164 = vld [vmem:[%s2 + $0x388] sm:$0xff]
    %v165 = vld [vmem:[%s2 + $0x390] sm:$0xff]
    %v166 = vld [vmem:[%s2 + $0x398] sm:$0xff]
    %v167 = vld [vmem:[%s2 + $0x3a0] sm:$0xff]
    %v168 = vld [vmem:[%s2 + $0x3a8] sm:$0xff]
    %v169 = vld [vmem:[%s2 + $0x3b0] sm:$0xff]
    %v170 = vld [vmem:[%s2 + $0x3b8] sm:$0xff]
    %v171 = vld [vmem:[%s2 + $0x3c0] sm:$0xff]
    %v172 = vld [vmem:[%s2 + $0x3c8] sm:$0xff]
    %v173 = vld [vmem:[%s2 + $0x3d0] sm:$0xff]
    %v174 = vld [vmem:[%s2 + $0x3d8] sm:$0xff]
    %v175 = vld [vmem:[%s2 + $0x3e0] sm:$0xff]
    %v176 = vld [vmem:[%s2 + $0x3e8] sm:$0xff]
    %v177 = vld [vmem:[%s2 + $0x3f0] sm:$0xff]
    %v178 = vld [vmem:[%s2 + $0x3f8] sm:$0xff]
    %v179 = vld [vmem:[%s2 + $0x400] sm:$0xff]
    %v180 = vld [vmem:[%s2 + $0x408] sm:$0xff]
    %v181 = vld [vmem:[%s2 + $0x410] sm:$0xff]
    %v182 = vld [vmem:[%s2 + $0x418] sm:$0xff]
    %v183 = vld [vmem:[%s2 + $0x420] sm:$0xff]
    %v184 = vld [vmem:[%s2 + $0x428] sm:$0xff]
    %v185 = vld [vmem:[%s2 + $0x430] sm:$0xff]
    %v186 = vld [vmem:[%s2 + $0x438] sm:$0xff]
    %v187 = vld [vmem:[%s2 + $0x440] sm:$0xff]
    %v188 = vld [vmem:[%s2 + $0x448] sm:$0xff]
    %v189 = vld [vmem:[%s2 + $0x450] sm:$0xff]
    %v190 = vld [vmem:[%s2 + $0x458] sm:$0xff]
    %v191 = vld [vmem:[%s2 + $0x460] sm:$0xff]
    %v192 = vld [vmem:[%s2 + $0x468] sm:$0xff]
    %v193 = vld [vmem:[%s2 + $0x470] sm:$0xff]
    %v194 = vld [vmem:[%s2 + $0x478] sm:$0xff]
    %v195 = vld [vmem:[%s2 + $0x480] sm:$0xff]
    %v196 = vld [vmem:[%s2 + $0x488] sm:$0xff]
    %v197 = vld [vmem:[%s2 + $0x490] sm:$0xff]
    %v198 = vld [vmem:[%s2 + $0x498] sm:$0xff]
    %v199 = vld [vmem:[%s2 + $0x4a0] sm:$0xff]
    %v200 = vld [vmem:[%s2 + $0x4a8] sm:$0xff]
    %v201 = vld [vmem:[%s2 + $0x4b0] sm:$0xff]
    %v202 = vld [vmem:[%s2 + $0x4b8] sm:$0xff]
    %v203 = vld [vmem:[%s2 + $0x4c0] sm:$0xff]
    %v204 = vld [vmem:[%s2 + $0x4c8] sm:$0xff]
    %v205 = vld [vmem:[%s2 + $0x4d0] sm:$0xff]
    %v206 = vld [vmem:[%s2 + $0x4d8] sm:$0xff]
    %v207 = vld [vmem:[%s2 + $0x4e0] sm:$0xff]
    %v208 = vld [vmem:[%s2 + $0x4e8] sm:$0xff]
    %v209 = vld [vmem:[%s2 + $0x4f0] sm:$0xff]
    %v210 = vld [vmem:[%s2 + $0x4f8] sm:$0xff]
    %v211 = vld [vmem:[%s2 + $0x500] sm:$0xff]
    %v212 = vld [vmem:[%s2 + $0x508] sm:$0xff]
    %v213 = vld [vmem:[%s2 + $0x510] sm:$0xff]
    %v214 = vld [vmem:[%s2 + $0x518] sm:$0xff]
    %v215 = vld [vmem:[%s2 + $0x520] sm:$0xff]
    %v216 = vld [vmem:[%s2 + $0x528] sm:$0xff]
    %v217 = vld [vmem:[%s2 + $0x530] sm:$0xff]
    %v218 = vld [vmem:[%s2 + $0x538] sm:$0xff]
    %v219 = vld [vmem:[%s2 + $0x540] sm:$0xff]
    %v220 = vld [vmem:[%s2 + $0x548] sm:$0xff]
    %v221 = vld [vmem:[%s2 + $0x550] sm:$0xff]
    %v222 = vld [vmem:[%s2 + $0x558] sm:$0xff]
    %v223 = vld [vmem:[%s2 + $0x560] sm:$0xff]
    %v224 = vld [vmem:[%s2 + $0x568] sm:$0xff]
    %v225 = vld [vmem:[%s2 + $0x570] sm:$0xff]
    %v226 = vld [vmem:[%s2 + $0x578] sm:$0xff]
    %v227 = vld [vmem:[%s2 + $0x580] sm:$0xff]
    %v228 = vld [vmem:[%s2 + $0x588] sm:$0xff]
    %v229 = vld [vmem:[%s2 + $0x590] sm:$0xff]
    %v230 = vld [vmem:[%s2 + $0x598] sm:$0xff]
    %v231 = vld [vmem:[%s2 + $0x5a0] sm:$0xff]
    %v232 = vld [vmem:[%s2 + $0x5a8] sm:$0xff]
    %v233 = vld [vmem:[%s2 + $0x5b0] sm:$0xff]
    %v234 = vld [vmem:[%s2 + $0x5b8] sm:$0xff]
    %v235 = vld [vmem:[%s2 + $0x5c0] sm:$0xff]
    %v236 = vld [vmem:[%s2 + $0x5c8] sm:$0xff]
    %v237 = vld [vmem:[%s2 + $0x5d0] sm:$0xff]
    %v238 = vld [vmem:[%s2 + $0x5d8] sm:$0xff]
    %v239 = vld [vmem:[%s2 + $0x5e0] sm:$0xff]
    %v240 = vld [vmem:[%s2 + $0x5e8] sm:$0xff]
    %v241 = vld [vmem:[%s2 + $0x5f0] sm:$0xff]
    %v242 = vld [vmem:[%s2 + $0x5f8] sm:$0xff]
    %v243 = vld [vmem:[%s2 + $0x600] sm:$0xff]
    %v244 = vld [vmem:[%s2 + $0x608] sm:$0xff]
    %v245 = vld [vmem:[%s2 + $0x610] sm:$0xff]
    %v246 = vld [vmem:[%s2 + $0x618] sm:$0xff]
    %v247 = vld [vmem:[%s2 + $0x620] sm:$0xff]
    %v248 = vld [vmem:[%s2 + $0x628] sm:$0xff]
    %v249 = vld [vmem:[%s2 + $0x630] sm:$0xff]
    %v250 = vld [vmem:[%s2 + $0x638] sm:$0xff]
    %v251 = vld [vmem:[%s2 + $0x640] sm:$0xff]
    %v252 = vld [vmem:[%s2 + $0x648] sm:$0xff]
    %v253 = vld [vmem:[%s2 + $0x650] sm:$0xff]
    %v254 = vld [vmem:[%s2 + $0x658] sm:$0xff]
    %v255 = vld [vmem:[%s2 + $0x660] sm:$0xff]
    %v256 = vld [vmem:[%s2 + $0x668] sm:$0xff]
    %v257 = vld [vmem:[%s2 + $0x670] sm:$0xff]
    %v258 = vld [vmem:[%s2 + $0x678] sm:$0xff]
    %v259 = vld [vmem:[%s2 + $0x680] sm:$0xff]
    %v260 = vld [vmem:[%s2 + $0x688] sm:$0xff]
    %v261 = vld [vmem:[%s2 + $0x690] sm:$0xff]
    %v262 = vld [vmem:[%s2 + $0x698] sm:$0xff]
    %v263 = vld [vmem:[%s2 + $0x6a0] sm:$0xff]
    %v264 = vld [vmem:[%s2 + $0x6a8] sm:$0xff]
    %v265 = vld [vmem:[%s2 + $0x6b0] sm:$0xff]
    %v266 = vld [vmem:[%s2 + $0x6b8] sm:$0xff]
    %v267 = vld [vmem:[%s2 + $0x6c0] sm:$0xff]
    %v268 = vld [vmem:[%s2 + $0x6c8] sm:$0xff]
    %v269 = vld [vmem:[%s2 + $0x6d0] sm:$0xff]
    %v270 = vld [vmem:[%s2 + $0x6d8] sm:$0xff]
    %v271 = vld [vmem:[%s2 + $0x6e0] sm:$0xff]
    %v272 = vld [vmem:[%s2 + $0x6e8] sm:$0xff]
    %v273 = vld [vmem:[%s2 + $0x6f0] sm:$0xff]
    %v274 = vld [vmem:[%s2 + $0x6f8] sm:$0xff]
    %v275 = vld [vmem:[%s2 + $0x700] sm:$0xff]
    %v276 = vld [vmem:[%s2 + $0x708] sm:$0xff]
    %v277 = vld [vmem:[%s2 + $0x710] sm:$0xff]
    %v278 = vld [vmem:[%s2 + $0x718] sm:$0xff]
    %v279 = vld [vmem:[%s2 + $0x720] sm:$0xff]
    %v280 = vld [vmem:[%s2 + $0x728] sm:$0xff]
    %v281 = vld [vmem:[%s2 + $0x730] sm:$0xff]
    %v282 = vld [vmem:[%s2 + $0x738] sm:$0xff]
    %v283 = vld [vmem:[%s2 + $0x740] sm:$0xff]
    %v284 = vld [vmem:[%s2 + $0x748] sm:$0xff]
    %v285 = vld [vmem:[%s2 + $0x750] sm:$0xff]
    %v286 = vld [vmem:[%s2 + $0x758] sm:$0xff]
    %v287 = vld [vmem:[%s2 + $0x760] sm:$0xff]
    %v288 = vld [vmem:[%s2 + $0x768] sm:$0xff]
    %v289 = vld [vmem:[%s2 + $0x770] sm:$0xff]
    %v290 = vld [vmem:[%s2 + $0x778] sm:$0xff]
    %v291 = vld [vmem:[%s2 + $0x780] sm:$0xff]
    %v292 = vld [vmem:[%s2 + $0x788] sm:$0xff]
    %v293 = vld [vmem:[%s2 + $0x790] sm:$0xff]
    %v294 = vld [vmem:[%s2 + $0x798] sm:$0xff]
    %v295 = vld [vmem:[%s2 + $0x7a0] sm:$0xff]
    %v296 = vld [vmem:[%s2 + $0x7a8] sm:$0xff]
    %v297 = vld [vmem:[%s2 + $0x7b0] sm:$0xff]
    %v298 = vld [vmem:[%s2 + $0x7b8] sm:$0xff]
    %v299 = vld [vmem:[%s2 + $0x7c0] sm:$0xff]
    %v300 = vld [vmem:[%s2 + $0x7c8] sm:$0xff]
    %v301 = vld [vmem:[%s2 + $0x7d0] sm:$0xff]
    %v302 = vld [vmem:[%s2 + $0x7d8] sm:$0xff]
    %v303 = vld [vmem:[%s2 + $0x7e0] sm:$0xff]
    %v304 = vld [vmem:[%s2 + $0x7e8] sm:$0xff]
    %v305 = vld [vmem:[%s2 + $0x7f0] sm:$0xff]
    %v306 = vld [vmem:[%s2 + $0x7f8] sm:$0xff]
    %v307 = vld [vmem:[%s2 + $0x800] sm:$0xff]
    %v308 = vld [vmem:[%s2 + $0x808] sm:$0xff]
    %v309 = vld [vmem:[%s2 + $0x810] sm:$0xff]
    %v310 = vld [vmem:[%s2 + $0x818] sm:$0xff]
    %v311 = vld [vmem:[%s2 + $0x820] sm:$0xff]
    %v312 = vld [vmem:[%s2 + $0x828] sm:$0xff]
    %v313 = vld [vmem:[%s2 + $0x830] sm:$0xff]
    %v314 = vld [vmem:[%s2 + $0x838] sm:$0xff]
    %v315 = vld [vmem:[%s2 + $0x840] sm:$0xff]
    %v316 = vld [vmem:[%s2 + $0x848] sm:$0xff]
    %v317 = vld [vmem:[%s2 + $0x850] sm:$0x3]
    %v318 = vld [vmem:[%s2 + $0x858] sm:$0x3]
    %v319 = vld [vmem:[%s2 + $0x860] sm:$0x3]
    %v320 = vld [vmem:[%s2 + $0x868] sm:$0x3]
    %v321 = vld [vmem:[%s2 + $0x870] sm:$0x3]
    %v322 = vld [vmem:[%s2 + $0x878] sm:$0x3]
    %v323 = vld [vmem:[%s2 + $0x880] sm:$0x3]
    %v324 = vld [vmem:[%s3] sm:$0x7f]
    %v325 = vld [vmem:[%s0] sm:$0xff]
    %v326 = vld [vmem:[%s0 + $0x8] sm:$0xff]
    %v327 = vld [vmem:[%s0 + $0x10] sm:$0xff]
    %v328 = vld [vmem:[%s0 + $0x18] sm:$0xff]
    %v329 = vld [vmem:[%s0 + $0x20] sm:$0xff]
    %v330 = vld [vmem:[%s0 + $0x28] sm:$0xff]
    %v331 = vld [vmem:[%s0 + $0x30] sm:$0xff]
    %v332 = vld [vmem:[%s0 + $0x38] sm:$0xff]
    %v333 = vld [vmem:[%s0 + $0x40] sm:$0xff]
    %v334 = vld [vmem:[%s0 + $0x48] sm:$0xff]
    %v335 = vld [vmem:[%s0 + $0x50] sm:$0xff]
    %v336 = vld [vmem:[%s0 + $0x58] sm:$0xff]
    %v337 = vld [vmem:[%s0 + $0x60] sm:$0xff]
    %v338 = vld [vmem:[%s0 + $0x68] sm:$0xff]
    %v339 = vld [vmem:[%s0 + $0x70] sm:$0xff]
    %v341 = vlaneseq
    %v342 = vshrl.u32 %v341, 7
    %v343 = vsub.s32 0, %v342
    %v344 = vrot.slane %v324, %v343
    %v345 = vlaneseq
    %v346 = vshrl.u32 %v345, 7
    %v347 = vsub.s32 1, %v346
    %v348 = vrot.slane %v324, %v347
    %v349 = vlaneseq
    %v350 = vshrl.u32 %v349, 7
    %v351 = vsub.s32 2, %v350
    %v352 = vrot.slane %v324, %v351
    %v353 = vlaneseq
    %v354 = vshrl.u32 %v353, 7
    %v355 = vsub.s32 3, %v354
    %v356 = vrot.slane %v324, %v355
    %v357 = vlaneseq
    %v358 = vshrl.u32 %v357, 7
    %v359 = vsub.s32 4, %v358
    %v360 = vrot.slane %v324, %v359
    %v361 = vlaneseq
    %v362 = vshrl.u32 %v361, 7
    %v363 = vsub.s32 5, %v362
    %v364 = vrot.slane %v324, %v363
    %v365 = vlaneseq
    %v366 = vshrl.u32 %v365, 7
    %v367 = vsub.s32 6, %v366
    %v368 = vrot.slane %v324, %v367
    %vm376 = vcmask 408576
    %v378 = vsel %vm376, %v327, 0
    %v381 = vsel %vm376, %v330, 0
    %v384 = vsel %vm376, %v333, 0
    %v387 = vsel %vm376, %v336, 0
    %v390 = vsel %vm376, %v339, 0
    %vm392 = vcmask 1041408
    %v394 = vsel %vm392, %v317, 0
    %v397 = vsel %vm392, %v318, 0
    %v400 = vsel %vm392, %v319, 0
    %v403 = vsel %vm392, %v320, 0
    %v406 = vsel %vm392, %v321, 0
    %v409 = vsel %vm392, %v322, 0
    %v412 = vsel %vm392, %v323, 0
    %414 = vmatprep.subr.mxu0 %v52
    %415 = vmatpush1.msra.mxu0 %v51
    %416 = vmatprep.subr.mxu0 %v59
    %417 = vmatpush1.msra.mxu0 %v58
    %418 = vmatprep.subr.mxu0 %v66
    %419 = vmatpush1.msra.mxu0 %v65
    %420 = vmatprep.subr.mxu0 %v73
    %421 = vmatpush1.msra.mxu0 %v72
    %422 = vmatprep.subr.mxu0 %v80
    %423 = vmatpush1.msra.mxu0 %v79
    %424 = vmatprep.subr.mxu0 %v87
    %425 = vmatpush1.msra.mxu0 %v86
    %426 = vmatprep.subr.mxu0 %v94
    %427 = vmatpush1.msra.mxu0 %v93
    %428 = vmatprep.subr.mxu0 %v101
    %429 = vmatpush1.msra.mxu0 %v100
    %430 = vmatprep.subr.mxu0 %v108
    %431 = vmatpush1.msra.mxu0 %v107
    %432 = vmatprep.subr.mxu0 %v115
    %433 = vmatpush1.msra.mxu0 %v114
    %434 = vmatprep.subr.mxu0 %v122
    %435 = vmatpush1.msra.mxu0 %v121
    %436 = vmatprep.subr.mxu0 %v129
    %437 = vmatpush1.msra.mxu0 %v128
    %438 = vmatprep.subr.mxu0 %v136
    %439 = vmatpush1.msra.mxu0 %v135
    %440 = vmatprep.subr.mxu0 %v143
    %441 = vmatpush1.msra.mxu0 %v142
    %442 = vmatprep.subr.mxu0 %v150
    %443 = vmatpush1.msra.mxu0 %v149
    %444 = vmatprep.subr.mxu0 %v157
    %445 = vmatpush1.msra.mxu0 %v156
    %446 = vmatprep.subr.mxu0 %v164
    %447 = vmatpush1.msra.mxu0 %v163
    %448 = vmatprep.subr.mxu0 %v171
    %449 = vmatpush1.msra.mxu0 %v170
    %450 = vmatprep.subr.mxu0 %v178
    %451 = vmatpush1.msra.mxu0 %v177
    %452 = vmatprep.subr.mxu0 %v185
    %453 = vmatpush1.msra.mxu0 %v184
    %454 = vmatprep.subr.mxu0 %v192
    %455 = vmatpush1.msra.mxu0 %v191
    %456 = vmatprep.subr.mxu0 %v199
    %457 = vmatpush1.msra.mxu0 %v198
    %458 = vmatprep.subr.mxu0 %v206
    %459 = vmatpush1.msra.mxu0 %v205
    %460 = vmatprep.subr.mxu0 %v213
    %461 = vmatpush1.msra.mxu0 %v212
    %462 = vmatprep.subr.mxu0 %v220
    %463 = vmatpush1.msra.mxu0 %v219
    %464 = vmatprep.subr.mxu0 %v227
    %465 = vmatpush1.msra.mxu0 %v226
    %466 = vmatprep.subr.mxu0 %v234
    %467 = vmatpush1.msra.mxu0 %v233
    %468 = vmatprep.subr.mxu0 %v241
    %469 = vmatpush1.msra.mxu0 %v240
    %470 = vmatprep.subr.mxu0 %v248
    %471 = vmatpush1.msra.mxu0 %v247
    %472 = vmatprep.subr.mxu0 %v255
    %473 = vmatpush1.msra.mxu0 %v254
    %474 = vmatprep.subr.mxu0 %v262
    %475 = vmatpush1.msra.mxu0 %v261
    %476 = vmatprep.subr.mxu0 %v269
    %477 = vmatpush1.msra.mxu0 %v268
    %478 = vmatprep.mubr.f32.mxu0 %v326
    %479 = vmatmul.mubr.f32.gmra.mrb[0].mxu0 %v325
    %v480 = vpop.f32.mrb[0].mxu0
    %v481 = vadd.f32 %v344, %v480
    %v482 = vpop.f32.mrb[0].mxu0
    %v483 = vadd.f32 %v348, %v482
    %484 = vmatprep.mubr.f32.mxu0 %v329
    %485 = vmatmul.mubr.f32.gmra.mrb[0].mxu0 %v328
    %v486 = vpop.f32.mrb[0].mxu0
    %v487 = vadd.f32 %v344, %v486
    %v488 = vpop.f32.mrb[0].mxu0
    %v489 = vadd.f32 %v348, %v488
    %490 = vmatprep.mubr.f32.mxu0 %v332
    %491 = vmatmul.mubr.f32.gmra.mrb[0].mxu0 %v331
    %v492 = vpop.f32.mrb[0].mxu0
    %v493 = vadd.f32 %v344, %v492
    %v494 = vpop.f32.mrb[0].mxu0
    %v495 = vadd.f32 %v348, %v494
    %496 = vmatprep.mubr.f32.mxu0 %v335
    %497 = vmatmul.mubr.f32.gmra.mrb[0].mxu0 %v334
    %v498 = vpop.f32.mrb[0].mxu0
    %v499 = vadd.f32 %v344, %v498
    %v500 = vpop.f32.mrb[0].mxu0
    %v501 = vadd.f32 %v348, %v500
    %502 = vmatprep.mubr.f32.mxu0 %v338
    %503 = vmatmul.mubr.f32.gmra.mrb[0].mxu0 %v337
    %v504 = vpop.f32.mrb[0].mxu0
    %v505 = vadd.f32 %v344, %v504
    %v506 = vpop.f32.mrb[0].mxu0
    %v507 = vadd.f32 %v348, %v506
    %508 = vdwg.mxu0
    %509 = vmatprep.subr.mxu0 %v276
    %510 = vmatpush1.msra.mxu0 %v275
    %511 = vmatprep.subr.mxu0 %v283
    %512 = vmatpush1.msra.mxu0 %v282
    %513 = vmatprep.subr.mxu0 %v290
    %514 = vmatpush1.msra.mxu0 %v289
    %515 = vmatprep.subr.mxu0 %v297
    %516 = vmatpush1.msra.mxu0 %v296
    %517 = vmatprep.subr.mxu0 %v304
    %518 = vmatpush1.msra.mxu0 %v303
    %519 = vmatprep.subr.mxu0 %v311
    %520 = vmatpush1.msra.mxu0 %v310
    %521 = vmatprep.subr.mxu0 %v397
    %522 = vmatpush1.msra.mxu0 %v394
    %523 = vmatprep.subr.mxu0 0.0
    %524 = vmatpush1.msra.mxu0 0.0
    %525 = vmatprep.subr.mxu0 0.0
    %526 = vmatpush1.msra.mxu0 0.0
    %527 = vmatprep.subr.mxu0 0.0
    %528 = vmatpush1.msra.mxu0 0.0
    %529 = vmatprep.subr.mxu0 0.0
    %530 = vmatpush1.msra.mxu0 0.0
    %531 = vmatprep.subr.mxu0 0.0
    %532 = vmatpush1.msra.mxu0 0.0
    %533 = vmatprep.subr.mxu0 0.0
    %534 = vmatpush1.msra.mxu0 0.0
    %535 = vmatprep.subr.mxu0 0.0
    %536 = vmatpush1.msra.mxu0 0.0
    %537 = vmatprep.subr.mxu0 0.0
    %538 = vmatpush1.msra.mxu0 0.0
    %539 = vmatprep.subr.mxu0 0.0
    %540 = vmatpush1.msra.mxu0 0.0
    %541 = vmatprep.subr.mxu0 0.0
    %542 = vmatpush1.msra.mxu0 0.0
    %543 = vmatprep.subr.mxu0 0.0
    %544 = vmatpush1.msra.mxu0 0.0
    %545 = vmatprep.subr.mxu0 0.0
    %546 = vmatpush1.msra.mxu0 0.0
    %547 = vmatprep.subr.mxu0 0.0
    %548 = vmatpush1.msra.mxu0 0.0
    %549 = vmatprep.subr.mxu0 0.0
    %550 = vmatpush1.msra.mxu0 0.0
    %551 = vmatprep.subr.mxu0 0.0
    %552 = vmatpush1.msra.mxu0 0.0
    %553 = vmatprep.subr.mxu0 0.0
    %554 = vmatpush1.msra.mxu0 0.0
    %555 = vmatprep.subr.mxu0 0.0
    %556 = vmatpush1.msra.mxu0 0.0
    %557 = vmatprep.subr.mxu0 0.0
    %558 = vmatpush1.msra.mxu0 0.0
    %559 = vmatprep.subr.mxu0 0.0
    %560 = vmatpush1.msra.mxu0 0.0
    %561 = vmatprep.subr.mxu0 0.0
    %562 = vmatpush1.msra.mxu0 0.0
    %563 = vmatprep.subr.mxu0 0.0
    %564 = vmatpush1.msra.mxu0 0.0
    %565 = vmatprep.subr.mxu0 0.0
    %566 = vmatpush1.msra.mxu0 0.0
    %567 = vmatprep.subr.mxu0 0.0
    %568 = vmatpush1.msra.mxu0 0.0
    %569 = vmatprep.subr.mxu0 0.0
    %570 = vmatpush1.msra.mxu0 0.0
    %571 = vmatprep.subr.mxu0 0.0
    %572 = vmatpush1.msra.mxu0 0.0
    %573 = vmatprep.mubr.f32.mxu0 0.0
    %574 = vmatmul.mubr.f32.gmra.mrb[0].mxu0 %v378
    %v575 = vpop.f32.mrb[0].mxu0
    %v576 = vadd.f32 %v481, %v575
    %v577 = vpop.f32.mrb[0].mxu0
    %v578 = vadd.f32 %v483, %v577
    %579 = vmatprep.mubr.f32.mxu0 0.0
    %580 = vmatmul.mubr.f32.gmra.mrb[0].mxu0 %v381
    %v581 = vpop.f32.mrb[0].mxu0
    %v582 = vadd.f32 %v487, %v581
    %v583 = vpop.f32.mrb[0].mxu0
    %v584 = vadd.f32 %v489, %v583
    %585 = vmatprep.mubr.f32.mxu0 0.0
    %586 = vmatmul.mubr.f32.gmra.mrb[0].mxu0 %v384
    %v587 = vpop.f32.mrb[0].mxu0
    %v588 = vadd.f32 %v493, %v587
    %v589 = vpop.f32.mrb[0].mxu0
    %v590 = vadd.f32 %v495, %v589
    %591 = vmatprep.mubr.f32.mxu0 0.0
    %592 = vmatmul.mubr.f32.gmra.mrb[0].mxu0 %v387
    %v593 = vpop.f32.mrb[0].mxu0
    %v594 = vadd.f32 %v499, %v593
    %v595 = vpop.f32.mrb[0].mxu0
    %v596 = vadd.f32 %v501, %v595
    %597 = vmatprep.mubr.f32.mxu0 0.0
    %598 = vmatmul.mubr.f32.gmra.mrb[0].mxu0 %v390
    %v599 = vpop.f32.mrb[0].mxu0
    %v600 = vadd.f32 %v505, %v599
    %v601 = vpop.f32.mrb[0].mxu0
    %v602 = vadd.f32 %v507, %v601
    %603 = vdwg.mxu0
    %604 = vmatprep.subr.mxu0 %v54
    %605 = vmatpush1.msra.mxu0 %v53
    %606 = vmatprep.subr.mxu0 %v61
    %607 = vmatpush1.msra.mxu0 %v60
    %608 = vmatprep.subr.mxu0 %v68
    %609 = vmatpush1.msra.mxu0 %v67
    %610 = vmatprep.subr.mxu0 %v75
    %611 = vmatpush1.msra.mxu0 %v74
    %612 = vmatprep.subr.mxu0 %v82
    %613 = vmatpush1.msra.mxu0 %v81
    %614 = vmatprep.subr.mxu0 %v89
    %615 = vmatpush1.msra.mxu0 %v88
    %616 = vmatprep.subr.mxu0 %v96
    %617 = vmatpush1.msra.mxu0 %v95
    %618 = vmatprep.subr.mxu0 %v103
    %619 = vmatpush1.msra.mxu0 %v102
    %620 = vmatprep.subr.mxu0 %v110
    %621 = vmatpush1.msra.mxu0 %v109
    %622 = vmatprep.subr.mxu0 %v117
    %623 = vmatpush1.msra.mxu0 %v116
    %624 = vmatprep.subr.mxu0 %v124
    %625 = vmatpush1.msra.mxu0 %v123
    %626 = vmatprep.subr.mxu0 %v131
    %627 = vmatpush1.msra.mxu0 %v130
    %628 = vmatprep.subr.mxu0 %v138
    %629 = vmatpush1.msra.mxu0 %v137
    %630 = vmatprep.subr.mxu0 %v145
    %631 = vmatpush1.msra.mxu0 %v144
    %632 = vmatprep.subr.mxu0 %v152
    %633 = vmatpush1.msra.mxu0 %v151
    %634 = vmatprep.subr.mxu0 %v159
    %635 = vmatpush1.msra.mxu0 %v158
    %636 = vmatprep.subr.mxu0 %v166
    %637 = vmatpush1.msra.mxu0 %v165
    %638 = vmatprep.subr.mxu0 %v173
    %639 = vmatpush1.msra.mxu0 %v172
    %640 = vmatprep.subr.mxu0 %v180
    %641 = vmatpush1.msra.mxu0 %v179
    %642 = vmatprep.subr.mxu0 %v187
    %643 = vmatpush1.msra.mxu0 %v186
    %644 = vmatprep.subr.mxu0 %v194
    %645 = vmatpush1.msra.mxu0 %v193
    %646 = vmatprep.subr.mxu0 %v201
    %647 = vmatpush1.msra.mxu0 %v200
    %648 = vmatprep.subr.mxu0 %v208
    %649 = vmatpush1.msra.mxu0 %v207
    %650 = vmatprep.subr.mxu0 %v215
    %651 = vmatpush1.msra.mxu0 %v214
    %652 = vmatprep.subr.mxu0 %v222
    %653 = vmatpush1.msra.mxu0 %v221
    %654 = vmatprep.subr.mxu0 %v229
    %655 = vmatpush1.msra.mxu0 %v228
    %656 = vmatprep.subr.mxu0 %v236
    %657 = vmatpush1.msra.mxu0 %v235
    %658 = vmatprep.subr.mxu0 %v243
    %659 = vmatpush1.msra.mxu0 %v242
    %660 = vmatprep.subr.mxu0 %v250
    %661 = vmatpush1.msra.mxu0 %v249
    %662 = vmatprep.subr.mxu0 %v257
    %663 = vmatpush1.msra.mxu0 %v256
    %664 = vmatprep.subr.mxu0 %v264
    %665 = vmatpush1.msra.mxu0 %v263
    %666 = vmatprep.subr.mxu0 %v271
    %667 = vmatpush1.msra.mxu0 %v270
    %668 = vmatprep.mubr.f32.mxu0 %v326
    %669 = vmatmul.mubr.f32.gmra.mrb[0].mxu0 %v325
    %v670 = vpop.f32.mrb[0].mxu0
    %v671 = vadd.f32 %v352, %v670
    %v672 = vpop.f32.mrb[0].mxu0
    %v673 = vadd.f32 %v356, %v672
    %674 = vmatprep.mubr.f32.mxu0 %v329
    %675 = vmatmul.mubr.f32.gmra.mrb[0].mxu0 %v328
    %v676 = vpop.f32.mrb[0].mxu0
    %v677 = vadd.f32 %v352, %v676
    %v678 = vpop.f32.mrb[0].mxu0
    %v679 = vadd.f32 %v356, %v678
    %680 = vmatprep.mubr.f32.mxu0 %v332
    %681 = vmatmul.mubr.f32.gmra.mrb[0].mxu0 %v331
    %v682 = vpop.f32.mrb[0].mxu0
    %v683 = vadd.f32 %v352, %v682
    %v684 = vpop.f32.mrb[0].mxu0
    %v685 = vadd.f32 %v356, %v684
    %686 = vmatprep.mubr.f32.mxu0 %v335
    %687 = vmatmul.mubr.f32.gmra.mrb[0].mxu0 %v334
    %v688 = vpop.f32.mrb[0].mxu0
    %v689 = vadd.f32 %v352, %v688
    %v690 = vpop.f32.mrb[0].mxu0
    %v691 = vadd.f32 %v356, %v690
    %692 = vmatprep.mubr.f32.mxu0 %v338
    %693 = vmatmul.mubr.f32.gmra.mrb[0].mxu0 %v337
    %v694 = vpop.f32.mrb[0].mxu0
    %v695 = vadd.f32 %v352, %v694
    %v696 = vpop.f32.mrb[0].mxu0
    %v697 = vadd.f32 %v356, %v696
    %698 = vdwg.mxu0
    %699 = vmatprep.subr.mxu0 %v278
    %700 = vmatpush1.msra.mxu0 %v277
    %701 = vmatprep.subr.mxu0 %v285
    %702 = vmatpush1.msra.mxu0 %v284
    %703 = vmatprep.subr.mxu0 %v292
    %704 = vmatpush1.msra.mxu0 %v291
    %705 = vmatprep.subr.mxu0 %v299
    %706 = vmatpush1.msra.mxu0 %v298
    %707 = vmatprep.subr.mxu0 %v306
    %708 = vmatpush1.msra.mxu0 %v305
    %709 = vmatprep.subr.mxu0 %v313
    %710 = vmatpush1.msra.mxu0 %v312
    %711 = vmatprep.subr.mxu0 %v403
    %712 = vmatpush1.msra.mxu0 %v400
    %713 = vmatprep.subr.mxu0 0.0
    %714 = vmatpush1.msra.mxu0 0.0
    %715 = vmatprep.subr.mxu0 0.0
    %716 = vmatpush1.msra.mxu0 0.0
    %717 = vmatprep.subr.mxu0 0.0
    %718 = vmatpush1.msra.mxu0 0.0
    %719 = vmatprep.subr.mxu0 0.0
    %720 = vmatpush1.msra.mxu0 0.0
    %721 = vmatprep.subr.mxu0 0.0
    %722 = vmatpush1.msra.mxu0 0.0
    %723 = vmatprep.subr.mxu0 0.0
    %724 = vmatpush1.msra.mxu0 0.0
    %725 = vmatprep.subr.mxu0 0.0
    %726 = vmatpush1.msra.mxu0 0.0
    %727 = vmatprep.subr.mxu0 0.0
    %728 = vmatpush1.msra.mxu0 0.0
    %729 = vmatprep.subr.mxu0 0.0
    %730 = vmatpush1.msra.mxu0 0.0
    %731 = vmatprep.subr.mxu0 0.0
    %732 = vmatpush1.msra.mxu0 0.0
    %733 = vmatprep.subr.mxu0 0.0
    %734 = vmatpush1.msra.mxu0 0.0
    %735 = vmatprep.subr.mxu0 0.0
    %736 = vmatpush1.msra.mxu0 0.0
    %737 = vmatprep.subr.mxu0 0.0
    %738 = vmatpush1.msra.mxu0 0.0
    %739 = vmatprep.subr.mxu0 0.0
    %740 = vmatpush1.msra.mxu0 0.0
    %741 = vmatprep.subr.mxu0 0.0
    %742 = vmatpush1.msra.mxu0 0.0
    %743 = vmatprep.subr.mxu0 0.0
    %744 = vmatpush1.msra.mxu0 0.0
    %745 = vmatprep.subr.mxu0 0.0
    %746 = vmatpush1.msra.mxu0 0.0
    %747 = vmatprep.subr.mxu0 0.0
    %748 = vmatpush1.msra.mxu0 0.0
    %749 = vmatprep.subr.mxu0 0.0
    %750 = vmatpush1.msra.mxu0 0.0
    %751 = vmatprep.subr.mxu0 0.0
    %752 = vmatpush1.msra.mxu0 0.0
    %753 = vmatprep.subr.mxu0 0.0
    %754 = vmatpush1.msra.mxu0 0.0
    %755 = vmatprep.subr.mxu0 0.0
    %756 = vmatpush1.msra.mxu0 0.0
    %757 = vmatprep.subr.mxu0 0.0
    %758 = vmatpush1.msra.mxu0 0.0
    %759 = vmatprep.subr.mxu0 0.0
    %760 = vmatpush1.msra.mxu0 0.0
    %761 = vmatprep.subr.mxu0 0.0
    %762 = vmatpush1.msra.mxu0 0.0
    %763 = vmatprep.mubr.f32.mxu0 0.0
    %764 = vmatmul.mubr.f32.gmra.mrb[0].mxu0 %v378
    %v765 = vpop.f32.mrb[0].mxu0
    %v766 = vadd.f32 %v671, %v765
    %v767 = vpop.f32.mrb[0].mxu0
    %v768 = vadd.f32 %v673, %v767
    %769 = vmatprep.mubr.f32.mxu0 0.0
    %770 = vmatmul.mubr.f32.gmra.mrb[0].mxu0 %v381
    %v771 = vpop.f32.mrb[0].mxu0
    %v772 = vadd.f32 %v677, %v771
    %v773 = vpop.f32.mrb[0].mxu0
    %v774 = vadd.f32 %v679, %v773
    %775 = vmatprep.mubr.f32.mxu0 0.0
    %776 = vmatmul.mubr.f32.gmra.mrb[0].mxu0 %v384
    %v777 = vpop.f32.mrb[0].mxu0
    %v778 = vadd.f32 %v683, %v777
    %v779 = vpop.f32.mrb[0].mxu0
    %v780 = vadd.f32 %v685, %v779
    %781 = vmatprep.mubr.f32.mxu0 0.0
    %782 = vmatmul.mubr.f32.gmra.mrb[0].mxu0 %v387
    %v783 = vpop.f32.mrb[0].mxu0
    %v784 = vadd.f32 %v689, %v783
    %v785 = vpop.f32.mrb[0].mxu0
    %v786 = vadd.f32 %v691, %v785
    %787 = vmatprep.mubr.f32.mxu0 0.0
    %788 = vmatmul.mubr.f32.gmra.mrb[0].mxu0 %v390
    %v789 = vpop.f32.mrb[0].mxu0
    %v790 = vadd.f32 %v695, %v789
    %v791 = vpop.f32.mrb[0].mxu0
    %v792 = vadd.f32 %v697, %v791
    %793 = vdwg.mxu0
    %794 = vmatprep.subr.mxu0 %v56
    %795 = vmatpush1.msra.mxu0 %v55
    %796 = vmatprep.subr.mxu0 %v63
    %797 = vmatpush1.msra.mxu0 %v62
    %798 = vmatprep.subr.mxu0 %v70
    %799 = vmatpush1.msra.mxu0 %v69
    %800 = vmatprep.subr.mxu0 %v77
    %801 = vmatpush1.msra.mxu0 %v76
    %802 = vmatprep.subr.mxu0 %v84
    %803 = vmatpush1.msra.mxu0 %v83
    %804 = vmatprep.subr.mxu0 %v91
    %805 = vmatpush1.msra.mxu0 %v90
    %806 = vmatprep.subr.mxu0 %v98
    %807 = vmatpush1.msra.mxu0 %v97
    %808 = vmatprep.subr.mxu0 %v105
    %809 = vmatpush1.msra.mxu0 %v104
    %810 = vmatprep.subr.mxu0 %v112
    %811 = vmatpush1.msra.mxu0 %v111
    %812 = vmatprep.subr.mxu0 %v119
    %813 = vmatpush1.msra.mxu0 %v118
    %814 = vmatprep.subr.mxu0 %v126
    %815 = vmatpush1.msra.mxu0 %v125
    %816 = vmatprep.subr.mxu0 %v133
    %817 = vmatpush1.msra.mxu0 %v132
    %818 = vmatprep.subr.mxu0 %v140
    %819 = vmatpush1.msra.mxu0 %v139
    %820 = vmatprep.subr.mxu0 %v147
    %821 = vmatpush1.msra.mxu0 %v146
    %822 = vmatprep.subr.mxu0 %v154
    %823 = vmatpush1.msra.mxu0 %v153
    %824 = vmatprep.subr.mxu0 %v161
    %825 = vmatpush1.msra.mxu0 %v160
    %826 = vmatprep.subr.mxu0 %v168
    %827 = vmatpush1.msra.mxu0 %v167
    %828 = vmatprep.subr.mxu0 %v175
    %829 = vmatpush1.msra.mxu0 %v174
    %830 = vmatprep.subr.mxu0 %v182
    %831 = vmatpush1.msra.mxu0 %v181
    %832 = vmatprep.subr.mxu0 %v189
    %833 = vmatpush1.msra.mxu0 %v188
    %834 = vmatprep.subr.mxu0 %v196
    %835 = vmatpush1.msra.mxu0 %v195
    %836 = vmatprep.subr.mxu0 %v203
    %837 = vmatpush1.msra.mxu0 %v202
    %838 = vmatprep.subr.mxu0 %v210
    %839 = vmatpush1.msra.mxu0 %v209
    %840 = vmatprep.subr.mxu0 %v217
    %841 = vmatpush1.msra.mxu0 %v216
    %842 = vmatprep.subr.mxu0 %v224
    %843 = vmatpush1.msra.mxu0 %v223
    %844 = vmatprep.subr.mxu0 %v231
    %845 = vmatpush1.msra.mxu0 %v230
    %846 = vmatprep.subr.mxu0 %v238
    %847 = vmatpush1.msra.mxu0 %v237
    %848 = vmatprep.subr.mxu0 %v245
    %849 = vmatpush1.msra.mxu0 %v244
    %850 = vmatprep.subr.mxu0 %v252
    %851 = vmatpush1.msra.mxu0 %v251
    %852 = vmatprep.subr.mxu0 %v259
    %853 = vmatpush1.msra.mxu0 %v258
    %854 = vmatprep.subr.mxu0 %v266
    %855 = vmatpush1.msra.mxu0 %v265
    %856 = vmatprep.subr.mxu0 %v273
    %857 = vmatpush1.msra.mxu0 %v272
    %858 = vmatprep.mubr.f32.mxu0 %v326
    %859 = vmatmul.mubr.f32.gmra.mrb[0].mxu0 %v325
    %v860 = vpop.f32.mrb[0].mxu0
    %v861 = vadd.f32 %v360, %v860
    %v862 = vpop.f32.mrb[0].mxu0
    %v863 = vadd.f32 %v364, %v862
    %864 = vmatprep.mubr.f32.mxu0 %v329
    %865 = vmatmul.mubr.f32.gmra.mrb[0].mxu0 %v328
    %v866 = vpop.f32.mrb[0].mxu0
    %v867 = vadd.f32 %v360, %v866
    %v868 = vpop.f32.mrb[0].mxu0
    %v869 = vadd.f32 %v364, %v868
    %870 = vmatprep.mubr.f32.mxu0 %v332
    %871 = vmatmul.mubr.f32.gmra.mrb[0].mxu0 %v331
    %v872 = vpop.f32.mrb[0].mxu0
    %v873 = vadd.f32 %v360, %v872
    %v874 = vpop.f32.mrb[0].mxu0
    %v875 = vadd.f32 %v364, %v874
    %876 = vmatprep.mubr.f32.mxu0 %v335
    %877 = vmatmul.mubr.f32.gmra.mrb[0].mxu0 %v334
    %v878 = vpop.f32.mrb[0].mxu0
    %v879 = vadd.f32 %v360, %v878
    %v880 = vpop.f32.mrb[0].mxu0
    %v881 = vadd.f32 %v364, %v880
    %882 = vmatprep.mubr.f32.mxu0 %v338
    %883 = vmatmul.mubr.f32.gmra.mrb[0].mxu0 %v337
    %v884 = vpop.f32.mrb[0].mxu0
    %v885 = vadd.f32 %v360, %v884
    %v886 = vpop.f32.mrb[0].mxu0
    %v887 = vadd.f32 %v364, %v886
    %888 = vdwg.mxu0
    %889 = vmatprep.subr.mxu0 %v280
    %890 = vmatpush1.msra.mxu0 %v279
    %891 = vmatprep.subr.mxu0 %v287
    %892 = vmatpush1.msra.mxu0 %v286
    %893 = vmatprep.subr.mxu0 %v294
    %894 = vmatpush1.msra.mxu0 %v293
    %895 = vmatprep.subr.mxu0 %v301
    %896 = vmatpush1.msra.mxu0 %v300
    %897 = vmatprep.subr.mxu0 %v308
    %898 = vmatpush1.msra.mxu0 %v307
    %899 = vmatprep.subr.mxu0 %v315
    %900 = vmatpush1.msra.mxu0 %v314
    %901 = vmatprep.subr.mxu0 %v409
    %902 = vmatpush1.msra.mxu0 %v406
    %903 = vmatprep.subr.mxu0 0.0
    %904 = vmatpush1.msra.mxu0 0.0
    %905 = vmatprep.subr.mxu0 0.0
    %906 = vmatpush1.msra.mxu0 0.0
    %907 = vmatprep.subr.mxu0 0.0
    %908 = vmatpush1.msra.mxu0 0.0
    %909 = vmatprep.subr.mxu0 0.0
    %910 = vmatpush1.msra.mxu0 0.0
    %911 = vmatprep.subr.mxu0 0.0
    %912 = vmatpush1.msra.mxu0 0.0
    %913 = vmatprep.subr.mxu0 0.0
    %914 = vmatpush1.msra.mxu0 0.0
    %915 = vmatprep.subr.mxu0 0.0
    %916 = vmatpush1.msra.mxu0 0.0
    %917 = vmatprep.subr.mxu0 0.0
    %918 = vmatpush1.msra.mxu0 0.0
    %919 = vmatprep.subr.mxu0 0.0
    %920 = vmatpush1.msra.mxu0 0.0
    %921 = vmatprep.subr.mxu0 0.0
    %922 = vmatpush1.msra.mxu0 0.0
    %923 = vmatprep.subr.mxu0 0.0
    %924 = vmatpush1.msra.mxu0 0.0
    %925 = vmatprep.subr.mxu0 0.0
    %926 = vmatpush1.msra.mxu0 0.0
    %927 = vmatprep.subr.mxu0 0.0
    %928 = vmatpush1.msra.mxu0 0.0
    %929 = vmatprep.subr.mxu0 0.0
    %930 = vmatpush1.msra.mxu0 0.0
    %931 = vmatprep.subr.mxu0 0.0
    %932 = vmatpush1.msra.mxu0 0.0
    %933 = vmatprep.subr.mxu0 0.0
    %934 = vmatpush1.msra.mxu0 0.0
    %935 = vmatprep.subr.mxu0 0.0
    %936 = vmatpush1.msra.mxu0 0.0
    %937 = vmatprep.subr.mxu0 0.0
    %938 = vmatpush1.msra.mxu0 0.0
    %939 = vmatprep.subr.mxu0 0.0
    %940 = vmatpush1.msra.mxu0 0.0
    %941 = vmatprep.subr.mxu0 0.0
    %942 = vmatpush1.msra.mxu0 0.0
    %943 = vmatprep.subr.mxu0 0.0
    %944 = vmatpush1.msra.mxu0 0.0
    %945 = vmatprep.subr.mxu0 0.0
    %946 = vmatpush1.msra.mxu0 0.0
    %947 = vmatprep.subr.mxu0 0.0
    %948 = vmatpush1.msra.mxu0 0.0
    %949 = vmatprep.subr.mxu0 0.0
    %950 = vmatpush1.msra.mxu0 0.0
    %951 = vmatprep.subr.mxu0 0.0
    %952 = vmatpush1.msra.mxu0 0.0
    %953 = vmatprep.mubr.f32.mxu0 0.0
    %954 = vmatmul.mubr.f32.gmra.mrb[0].mxu0 %v378
    %v955 = vpop.f32.mrb[0].mxu0
    %v956 = vadd.f32 %v861, %v955
    %v957 = vpop.f32.mrb[0].mxu0
    %v958 = vadd.f32 %v863, %v957
    %959 = vmatprep.mubr.f32.mxu0 0.0
    %960 = vmatmul.mubr.f32.gmra.mrb[0].mxu0 %v381
    %v961 = vpop.f32.mrb[0].mxu0
    %v962 = vadd.f32 %v867, %v961
    %v963 = vpop.f32.mrb[0].mxu0
    %v964 = vadd.f32 %v869, %v963
    %965 = vmatprep.mubr.f32.mxu0 0.0
    %966 = vmatmul.mubr.f32.gmra.mrb[0].mxu0 %v384
    %v967 = vpop.f32.mrb[0].mxu0
    %v968 = vadd.f32 %v873, %v967
    %v969 = vpop.f32.mrb[0].mxu0
    %v970 = vadd.f32 %v875, %v969
    %971 = vmatprep.mubr.f32.mxu0 0.0
    %972 = vmatmul.mubr.f32.gmra.mrb[0].mxu0 %v387
    %v973 = vpop.f32.mrb[0].mxu0
    %v974 = vadd.f32 %v879, %v973
    %v975 = vpop.f32.mrb[0].mxu0
    %v976 = vadd.f32 %v881, %v975
    %977 = vmatprep.mubr.f32.mxu0 0.0
    %978 = vmatmul.mubr.f32.gmra.mrb[0].mxu0 %v390
    %v979 = vpop.f32.mrb[0].mxu0
    %v980 = vadd.f32 %v885, %v979
    %v981 = vpop.f32.mrb[0].mxu0
    %v982 = vadd.f32 %v887, %v981
    %983 = vdwg.mxu0
    %984 = vmatprep.subr.mxu0 0.0
    %985 = vmatpush1.msra.mxu0 %v57
    %986 = vmatprep.subr.mxu0 0.0
    %987 = vmatpush1.msra.mxu0 %v64
    %988 = vmatprep.subr.mxu0 0.0
    %989 = vmatpush1.msra.mxu0 %v71
    %990 = vmatprep.subr.mxu0 0.0
    %991 = vmatpush1.msra.mxu0 %v78
    %992 = vmatprep.subr.mxu0 0.0
    %993 = vmatpush1.msra.mxu0 %v85
    %994 = vmatprep.subr.mxu0 0.0
    %995 = vmatpush1.msra.mxu0 %v92
    %996 = vmatprep.subr.mxu0 0.0
    %997 = vmatpush1.msra.mxu0 %v99
    %998 = vmatprep.subr.mxu0 0.0
    %999 = vmatpush1.msra.mxu0 %v106
    %1000 = vmatprep.subr.mxu0 0.0
    %1001 = vmatpush1.msra.mxu0 %v113
    %1002 = vmatprep.subr.mxu0 0.0
    %1003 = vmatpush1.msra.mxu0 %v120
    %1004 = vmatprep.subr.mxu0 0.0
    %1005 = vmatpush1.msra.mxu0 %v127
    %1006 = vmatprep.subr.mxu0 0.0
    %1007 = vmatpush1.msra.mxu0 %v134
    %1008 = vmatprep.subr.mxu0 0.0
    %1009 = vmatpush1.msra.mxu0 %v141
    %1010 = vmatprep.subr.mxu0 0.0
    %1011 = vmatpush1.msra.mxu0 %v148
    %1012 = vmatprep.subr.mxu0 0.0
    %1013 = vmatpush1.msra.mxu0 %v155
    %1014 = vmatprep.subr.mxu0 0.0
    %1015 = vmatpush1.msra.mxu0 %v162
    %1016 = vmatprep.subr.mxu0 0.0
    %1017 = vmatpush1.msra.mxu0 %v169
    %1018 = vmatprep.subr.mxu0 0.0
    %1019 = vmatpush1.msra.mxu0 %v176
    %1020 = vmatprep.subr.mxu0 0.0
    %1021 = vmatpush1.msra.mxu0 %v183
    %1022 = vmatprep.subr.mxu0 0.0
    %1023 = vmatpush1.msra.mxu0 %v190
    %1024 = vmatprep.subr.mxu0 0.0
    %1025 = vmatpush1.msra.mxu0 %v197
    %1026 = vmatprep.subr.mxu0 0.0
    %1027 = vmatpush1.msra.mxu0 %v204
    %1028 = vmatprep.subr.mxu0 0.0
    %1029 = vmatpush1.msra.mxu0 %v211
    %1030 = vmatprep.subr.mxu0 0.0
    %1031 = vmatpush1.msra.mxu0 %v218
    %1032 = vmatprep.subr.mxu0 0.0
    %1033 = vmatpush1.msra.mxu0 %v225
    %1034 = vmatprep.subr.mxu0 0.0
    %1035 = vmatpush1.msra.mxu0 %v232
    %1036 = vmatprep.subr.mxu0 0.0
    %1037 = vmatpush1.msra.mxu0 %v239
    %1038 = vmatprep.subr.mxu0 0.0
    %1039 = vmatpush1.msra.mxu0 %v246
    %1040 = vmatprep.subr.mxu0 0.0
    %1041 = vmatpush1.msra.mxu0 %v253
    %1042 = vmatprep.subr.mxu0 0.0
    %1043 = vmatpush1.msra.mxu0 %v260
    %1044 = vmatprep.subr.mxu0 0.0
    %1045 = vmatpush1.msra.mxu0 %v267
    %1046 = vmatprep.subr.mxu0 0.0
    %1047 = vmatpush1.msra.mxu0 %v274
    %1048 = vmatprep.mubr.f32.mxu0 %v326
    %1049 = vmatmul.mubr.f32.gmra.mrb[0].mxu0 %v325
    %v1050 = vpop.f32.mrb[0].mxu0
    %v1051 = vadd.f32 %v368, %v1050
    %v1052 = vpop.f32.mrb[0].mxu0
    %1053 = vmatprep.mubr.f32.mxu0 %v329
    %1054 = vmatmul.mubr.f32.gmra.mrb[0].mxu0 %v328
    %v1055 = vpop.f32.mrb[0].mxu0
    %v1056 = vadd.f32 %v368, %v1055
    %v1057 = vpop.f32.mrb[0].mxu0
    %1058 = vmatprep.mubr.f32.mxu0 %v332
    %1059 = vmatmul.mubr.f32.gmra.mrb[0].mxu0 %v331
    %v1060 = vpop.f32.mrb[0].mxu0
    %v1061 = vadd.f32 %v368, %v1060
    %v1062 = vpop.f32.mrb[0].mxu0
    %1063 = vmatprep.mubr.f32.mxu0 %v335
    %1064 = vmatmul.mubr.f32.gmra.mrb[0].mxu0 %v334
    %v1065 = vpop.f32.mrb[0].mxu0
    %v1066 = vadd.f32 %v368, %v1065
    %v1067 = vpop.f32.mrb[0].mxu0
    %1068 = vmatprep.mubr.f32.mxu0 %v338
    %1069 = vmatmul.mubr.f32.gmra.mrb[0].mxu0 %v337
    %v1070 = vpop.f32.mrb[0].mxu0
    %v1071 = vadd.f32 %v368, %v1070
    %v1072 = vpop.f32.mrb[0].mxu0
    %1073 = vdwg.mxu0
    %1074 = vmatprep.subr.mxu0 0.0
    %1075 = vmatpush1.msra.mxu0 %v281
    %1076 = vmatprep.subr.mxu0 0.0
    %1077 = vmatpush1.msra.mxu0 %v288
    %1078 = vmatprep.subr.mxu0 0.0
    %1079 = vmatpush1.msra.mxu0 %v295
    %1080 = vmatprep.subr.mxu0 0.0
    %1081 = vmatpush1.msra.mxu0 %v302
    %1082 = vmatprep.subr.mxu0 0.0
    %1083 = vmatpush1.msra.mxu0 %v309
    %1084 = vmatprep.subr.mxu0 0.0
    %1085 = vmatpush1.msra.mxu0 %v316
    %1086 = vmatprep.subr.mxu0 0.0
    %1087 = vmatpush1.msra.mxu0 %v412
    %1088 = vmatprep.subr.mxu0 0.0
    %1089 = vmatpush1.msra.mxu0 0.0
    %1090 = vmatprep.subr.mxu0 0.0
    %1091 = vmatpush1.msra.mxu0 0.0
    %1092 = vmatprep.subr.mxu0 0.0
    %1093 = vmatpush1.msra.mxu0 0.0
    %1094 = vmatprep.subr.mxu0 0.0
    %1095 = vmatpush1.msra.mxu0 0.0
    %1096 = vmatprep.subr.mxu0 0.0
    %1097 = vmatpush1.msra.mxu0 0.0
    %1098 = vmatprep.subr.mxu0 0.0
    %1099 = vmatpush1.msra.mxu0 0.0
    %1100 = vmatprep.subr.mxu0 0.0
    %1101 = vmatpush1.msra.mxu0 0.0
    %1102 = vmatprep.subr.mxu0 0.0
    %1103 = vmatpush1.msra.mxu0 0.0
    %1104 = vmatprep.subr.mxu0 0.0
    %1105 = vmatpush1.msra.mxu0 0.0
    %1106 = vmatprep.subr.mxu0 0.0
    %1107 = vmatpush1.msra.mxu0 0.0
    %1108 = vmatprep.subr.mxu0 0.0
    %1109 = vmatpush1.msra.mxu0 0.0
    %1110 = vmatprep.subr.mxu0 0.0
    %1111 = vmatpush1.msra.mxu0 0.0
    %1112 = vmatprep.subr.mxu0 0.0
    %1113 = vmatpush1.msra.mxu0 0.0
    %1114 = vmatprep.subr.mxu0 0.0
    %1115 = vmatpush1.msra.mxu0 0.0
    %1116 = vmatprep.subr.mxu0 0.0
    %1117 = vmatpush1.msra.mxu0 0.0
    %1118 = vmatprep.subr.mxu0 0.0
    %1119 = vmatpush1.msra.mxu0 0.0
    %1120 = vmatprep.subr.mxu0 0.0
    %1121 = vmatpush1.msra.mxu0 0.0
    %1122 = vmatprep.subr.mxu0 0.0
    %1123 = vmatpush1.msra.mxu0 0.0
    %1124 = vmatprep.subr.mxu0 0.0
    %1125 = vmatpush1.msra.mxu0 0.0
    %1126 = vmatprep.subr.mxu0 0.0
    %1127 = vmatpush1.msra.mxu0 0.0
    %1128 = vmatprep.subr.mxu0 0.0
    %1129 = vmatpush1.msra.mxu0 0.0
    %1130 = vmatprep.subr.mxu0 0.0
    %1131 = vmatpush1.msra.mxu0 0.0
    %1132 = vmatprep.subr.mxu0 0.0
    %1133 = vmatpush1.msra.mxu0 0.0
    %1134 = vmatprep.subr.mxu0 0.0
    %1135 = vmatpush1.msra.mxu0 0.0
    %1136 = vmatprep.subr.mxu0 0.0
    %1137 = vmatpush1.msra.mxu0 0.0
    %1138 = vmatprep.mubr.f32.mxu0 0.0
    %1139 = vmatmul.mubr.f32.gmra.mrb[0].mxu0 %v378
    %v1140 = vpop.f32.mrb[0].mxu0
    %v1141 = vadd.f32 %v1051, %v1140
    %v1142 = vpop.f32.mrb[0].mxu0
    %1143 = vmatprep.mubr.f32.mxu0 0.0
    %1144 = vmatmul.mubr.f32.gmra.mrb[0].mxu0 %v381
    %v1145 = vpop.f32.mrb[0].mxu0
    %v1146 = vadd.f32 %v1056, %v1145
    %v1147 = vpop.f32.mrb[0].mxu0
    %1148 = vmatprep.mubr.f32.mxu0 0.0
    %1149 = vmatmul.mubr.f32.gmra.mrb[0].mxu0 %v384
    %v1150 = vpop.f32.mrb[0].mxu0
    %v1151 = vadd.f32 %v1061, %v1150
    %v1152 = vpop.f32.mrb[0].mxu0
    %1153 = vmatprep.mubr.f32.mxu0 0.0
    %1154 = vmatmul.mubr.f32.gmra.mrb[0].mxu0 %v387
    %v1155 = vpop.f32.mrb[0].mxu0
    %v1156 = vadd.f32 %v1066, %v1155
    %v1157 = vpop.f32.mrb[0].mxu0
    %1158 = vmatprep.mubr.f32.mxu0 0.0
    %1159 = vmatmul.mubr.f32.gmra.mrb[0].mxu0 %v390
    %v1160 = vpop.f32.mrb[0].mxu0
    %v1161 = vadd.f32 %v1071, %v1160
    %v1162 = vpop.f32.mrb[0].mxu0
    %1163 = vdwg.mxu0
    %v1164 = vmax.f32 %v576, 0.0
    %v1165 = vmax.f32 %v578, 0.0
    %v1166 = vmax.f32 %v766, 0.0
    %v1167 = vmax.f32 %v768, 0.0
    %v1168 = vmax.f32 %v956, 0.0
    %v1169 = vmax.f32 %v958, 0.0
    %v1170 = vmax.f32 %v1141, 0.0
    %v1171 = vmax.f32 %v582, 0.0
    %v1172 = vmax.f32 %v584, 0.0
    %v1173 = vmax.f32 %v772, 0.0
    %v1174 = vmax.f32 %v774, 0.0
    %v1175 = vmax.f32 %v962, 0.0
    %v1176 = vmax.f32 %v964, 0.0
    %v1177 = vmax.f32 %v1146, 0.0
    %v1178 = vmax.f32 %v588, 0.0
    %v1179 = vmax.f32 %v590, 0.0
    %v1180 = vmax.f32 %v778, 0.0
    %v1181 = vmax.f32 %v780, 0.0
    %v1182 = vmax.f32 %v968, 0.0
    %v1183 = vmax.f32 %v970, 0.0
    %v1184 = vmax.f32 %v1151, 0.0
    %v1185 = vmax.f32 %v594, 0.0
    %v1186 = vmax.f32 %v596, 0.0
    %v1187 = vmax.f32 %v784, 0.0
    %v1188 = vmax.f32 %v786, 0.0
    %v1189 = vmax.f32 %v974, 0.0
    %v1190 = vmax.f32 %v976, 0.0
    %v1191 = vmax.f32 %v1156, 0.0
    %v1192 = vmax.f32 %v600, 0.0
    %v1193 = vmax.f32 %v602, 0.0
    %v1194 = vmax.f32 %v790, 0.0
    %v1195 = vmax.f32 %v792, 0.0
    %v1196 = vmax.f32 %v980, 0.0
    %v1197 = vmax.f32 %v982, 0.0
    %v1198 = vmax.f32 %v1161, 0.0
    %v1199 = vld [vmem:[%s1] sm:$0xff]
    %v1200 = vld [vmem:[%s1 + $0x8] sm:$0xff]
    %v1201 = vld [vmem:[%s1 + $0x10] sm:$0xff]
    %v1202 = vld [vmem:[%s1 + $0x18] sm:$0xff]
    %v1203 = vld [vmem:[%s1 + $0x20] sm:$0xff]
    %v1204 = vld [vmem:[%s1 + $0x28] sm:$0xff]
    %v1205 = vld [vmem:[%s1 + $0x30] sm:$0xff]
    %v1206 = vld [vmem:[%s1 + $0x38] sm:$0xff]
    %v1207 = vld [vmem:[%s1 + $0x40] sm:$0xff]
    %v1208 = vld [vmem:[%s1 + $0x48] sm:$0xff]
    %v1209 = vld [vmem:[%s1 + $0x50] sm:$0xff]
    %v1210 = vld [vmem:[%s1 + $0x58] sm:$0xff]
    %v1211 = vld [vmem:[%s1 + $0x60] sm:$0xff]
    %v1212 = vld [vmem:[%s1 + $0x68] sm:$0xff]
    %v1213 = vld [vmem:[%s1 + $0x70] sm:$0xff]
    %v1215 = vsel %vm376, %v1201, 0
    %v1218 = vsel %vm376, %v1204, 0
    %v1221 = vsel %vm376, %v1207, 0
    %v1224 = vsel %vm376, %v1210, 0
    %v1227 = vsel %vm376, %v1213, 0
    %1229 = vmatprep.subr.mxu0 %v52
    %1230 = vmatpush1.msra.mxu0 %v51
    %1231 = vmatprep.subr.mxu0 %v59
    %1232 = vmatpush1.msra.mxu0 %v58
    %1233 = vmatprep.subr.mxu0 %v66
    %1234 = vmatpush1.msra.mxu0 %v65
    %1235 = vmatprep.subr.mxu0 %v73
    %1236 = vmatpush1.msra.mxu0 %v72
    %1237 = vmatprep.subr.mxu0 %v80
    %1238 = vmatpush1.msra.mxu0 %v79
    %1239 = vmatprep.subr.mxu0 %v87
    %1240 = vmatpush1.msra.mxu0 %v86
    %1241 = vmatprep.subr.mxu0 %v94
    %1242 = vmatpush1.msra.mxu0 %v93
    %1243 = vmatprep.subr.mxu0 %v101
    %1244 = vmatpush1.msra.mxu0 %v100
    %1245 = vmatprep.subr.mxu0 %v108
    %1246 = vmatpush1.msra.mxu0 %v107
    %1247 = vmatprep.subr.mxu0 %v115
    %1248 = vmatpush1.msra.mxu0 %v114
    %1249 = vmatprep.subr.mxu0 %v122
    %1250 = vmatpush1.msra.mxu0 %v121
    %1251 = vmatprep.subr.mxu0 %v129
    %1252 = vmatpush1.msra.mxu0 %v128
    %1253 = vmatprep.subr.mxu0 %v136
    %1254 = vmatpush1.msra.mxu0 %v135
    %1255 = vmatprep.subr.mxu0 %v143
    %1256 = vmatpush1.msra.mxu0 %v142
    %1257 = vmatprep.subr.mxu0 %v150
    %1258 = vmatpush1.msra.mxu0 %v149
    %1259 = vmatprep.subr.mxu0 %v157
    %1260 = vmatpush1.msra.mxu0 %v156
    %1261 = vmatprep.subr.mxu0 %v164
    %1262 = vmatpush1.msra.mxu0 %v163
    %1263 = vmatprep.subr.mxu0 %v171
    %1264 = vmatpush1.msra.mxu0 %v170
    %1265 = vmatprep.subr.mxu0 %v178
    %1266 = vmatpush1.msra.mxu0 %v177
    %1267 = vmatprep.subr.mxu0 %v185
    %1268 = vmatpush1.msra.mxu0 %v184
    %1269 = vmatprep.subr.mxu0 %v192
    %1270 = vmatpush1.msra.mxu0 %v191
    %1271 = vmatprep.subr.mxu0 %v199
    %1272 = vmatpush1.msra.mxu0 %v198
    %1273 = vmatprep.subr.mxu0 %v206
    %1274 = vmatpush1.msra.mxu0 %v205
    %1275 = vmatprep.subr.mxu0 %v213
    %1276 = vmatpush1.msra.mxu0 %v212
    %1277 = vmatprep.subr.mxu0 %v220
    %1278 = vmatpush1.msra.mxu0 %v219
    %1279 = vmatprep.subr.mxu0 %v227
    %1280 = vmatpush1.msra.mxu0 %v226
    %1281 = vmatprep.subr.mxu0 %v234
    %1282 = vmatpush1.msra.mxu0 %v233
    %1283 = vmatprep.subr.mxu0 %v241
    %1284 = vmatpush1.msra.mxu0 %v240
    %1285 = vmatprep.subr.mxu0 %v248
    %1286 = vmatpush1.msra.mxu0 %v247
    %1287 = vmatprep.subr.mxu0 %v255
    %1288 = vmatpush1.msra.mxu0 %v254
    %1289 = vmatprep.subr.mxu0 %v262
    %1290 = vmatpush1.msra.mxu0 %v261
    %1291 = vmatprep.subr.mxu0 %v269
    %1292 = vmatpush1.msra.mxu0 %v268
    %1293 = vmatprep.mubr.f32.mxu0 %v1200
    %1294 = vmatmul.mubr.f32.gmra.mrb[0].mxu0 %v1199
    %v1295 = vpop.f32.mrb[0].mxu0
    %v1296 = vadd.f32 %v344, %v1295
    %v1297 = vpop.f32.mrb[0].mxu0
    %v1298 = vadd.f32 %v348, %v1297
    %1299 = vmatprep.mubr.f32.mxu0 %v1203
    %1300 = vmatmul.mubr.f32.gmra.mrb[0].mxu0 %v1202
    %v1301 = vpop.f32.mrb[0].mxu0
    %v1302 = vadd.f32 %v344, %v1301
    %v1303 = vpop.f32.mrb[0].mxu0
    %v1304 = vadd.f32 %v348, %v1303
    %1305 = vmatprep.mubr.f32.mxu0 %v1206
    %1306 = vmatmul.mubr.f32.gmra.mrb[0].mxu0 %v1205
    %v1307 = vpop.f32.mrb[0].mxu0
    %v1308 = vadd.f32 %v344, %v1307
    %v1309 = vpop.f32.mrb[0].mxu0
    %v1310 = vadd.f32 %v348, %v1309
    %1311 = vmatprep.mubr.f32.mxu0 %v1209
    %1312 = vmatmul.mubr.f32.gmra.mrb[0].mxu0 %v1208
    %v1313 = vpop.f32.mrb[0].mxu0
    %v1314 = vadd.f32 %v344, %v1313
    %v1315 = vpop.f32.mrb[0].mxu0
    %v1316 = vadd.f32 %v348, %v1315
    %1317 = vmatprep.mubr.f32.mxu0 %v1212
    %1318 = vmatmul.mubr.f32.gmra.mrb[0].mxu0 %v1211
    %v1319 = vpop.f32.mrb[0].mxu0
    %v1320 = vadd.f32 %v344, %v1319
    %v1321 = vpop.f32.mrb[0].mxu0
    %v1322 = vadd.f32 %v348, %v1321
    %1323 = vdwg.mxu0
    %1324 = vmatprep.subr.mxu0 %v276
    %1325 = vmatpush1.msra.mxu0 %v275
    %1326 = vmatprep.subr.mxu0 %v283
    %1327 = vmatpush1.msra.mxu0 %v282
    %1328 = vmatprep.subr.mxu0 %v290
    %1329 = vmatpush1.msra.mxu0 %v289
    %1330 = vmatprep.subr.mxu0 %v297
    %1331 = vmatpush1.msra.mxu0 %v296
    %1332 = vmatprep.subr.mxu0 %v304
    %1333 = vmatpush1.msra.mxu0 %v303
    %1334 = vmatprep.subr.mxu0 %v311
    %1335 = vmatpush1.msra.mxu0 %v310
    %1336 = vmatprep.subr.mxu0 %v397
    %1337 = vmatpush1.msra.mxu0 %v394
    %1338 = vmatprep.subr.mxu0 0.0
    %1339 = vmatpush1.msra.mxu0 0.0
    %1340 = vmatprep.subr.mxu0 0.0
    %1341 = vmatpush1.msra.mxu0 0.0
    %1342 = vmatprep.subr.mxu0 0.0
    %1343 = vmatpush1.msra.mxu0 0.0
    %1344 = vmatprep.subr.mxu0 0.0
    %1345 = vmatpush1.msra.mxu0 0.0
    %1346 = vmatprep.subr.mxu0 0.0
    %1347 = vmatpush1.msra.mxu0 0.0
    %1348 = vmatprep.subr.mxu0 0.0
    %1349 = vmatpush1.msra.mxu0 0.0
    %1350 = vmatprep.subr.mxu0 0.0
    %1351 = vmatpush1.msra.mxu0 0.0
    %1352 = vmatprep.subr.mxu0 0.0
    %1353 = vmatpush1.msra.mxu0 0.0
    %1354 = vmatprep.subr.mxu0 0.0
    %1355 = vmatpush1.msra.mxu0 0.0
    %1356 = vmatprep.subr.mxu0 0.0
    %1357 = vmatpush1.msra.mxu0 0.0
    %1358 = vmatprep.subr.mxu0 0.0
    %1359 = vmatpush1.msra.mxu0 0.0
    %1360 = vmatprep.subr.mxu0 0.0
    %1361 = vmatpush1.msra.mxu0 0.0
    %1362 = vmatprep.subr.mxu0 0.0
    %1363 = vmatpush1.msra.mxu0 0.0
    %1364 = vmatprep.subr.mxu0 0.0
    %1365 = vmatpush1.msra.mxu0 0.0
    %1366 = vmatprep.subr.mxu0 0.0
    %1367 = vmatpush1.msra.mxu0 0.0
    %1368 = vmatprep.subr.mxu0 0.0
    %1369 = vmatpush1.msra.mxu0 0.0
    %1370 = vmatprep.subr.mxu0 0.0
    %1371 = vmatpush1.msra.mxu0 0.0
    %1372 = vmatprep.subr.mxu0 0.0
    %1373 = vmatpush1.msra.mxu0 0.0
    %1374 = vmatprep.subr.mxu0 0.0
    %1375 = vmatpush1.msra.mxu0 0.0
    %1376 = vmatprep.subr.mxu0 0.0
    %1377 = vmatpush1.msra.mxu0 0.0
    %1378 = vmatprep.subr.mxu0 0.0
    %1379 = vmatpush1.msra.mxu0 0.0
    %1380 = vmatprep.subr.mxu0 0.0
    %1381 = vmatpush1.msra.mxu0 0.0
    %1382 = vmatprep.subr.mxu0 0.0
    %1383 = vmatpush1.msra.mxu0 0.0
    %1384 = vmatprep.subr.mxu0 0.0
    %1385 = vmatpush1.msra.mxu0 0.0
    %1386 = vmatprep.subr.mxu0 0.0
    %1387 = vmatpush1.msra.mxu0 0.0
    %1388 = vmatprep.mubr.f32.mxu0 0.0
    %1389 = vmatmul.mubr.f32.gmra.mrb[0].mxu0 %v1215
    %v1390 = vpop.f32.mrb[0].mxu0
    %v1391 = vadd.f32 %v1296, %v1390
    %v1392 = vpop.f32.mrb[0].mxu0
    %v1393 = vadd.f32 %v1298, %v1392
    %1394 = vmatprep.mubr.f32.mxu0 0.0
    %1395 = vmatmul.mubr.f32.gmra.mrb[0].mxu0 %v1218
    %v1396 = vpop.f32.mrb[0].mxu0
    %v1397 = vadd.f32 %v1302, %v1396
    %v1398 = vpop.f32.mrb[0].mxu0
    %v1399 = vadd.f32 %v1304, %v1398
    %1400 = vmatprep.mubr.f32.mxu0 0.0
    %1401 = vmatmul.mubr.f32.gmra.mrb[0].mxu0 %v1221
    %v1402 = vpop.f32.mrb[0].mxu0
    %v1403 = vadd.f32 %v1308, %v1402
    %v1404 = vpop.f32.mrb[0].mxu0
    %v1405 = vadd.f32 %v1310, %v1404
    %1406 = vmatprep.mubr.f32.mxu0 0.0
    %1407 = vmatmul.mubr.f32.gmra.mrb[0].mxu0 %v1224
    %v1408 = vpop.f32.mrb[0].mxu0
    %v1409 = vadd.f32 %v1314, %v1408
    %v1410 = vpop.f32.mrb[0].mxu0
    %v1411 = vadd.f32 %v1316, %v1410
    %1412 = vmatprep.mubr.f32.mxu0 0.0
    %1413 = vmatmul.mubr.f32.gmra.mrb[0].mxu0 %v1227
    %v1414 = vpop.f32.mrb[0].mxu0
    %v1415 = vadd.f32 %v1320, %v1414
    %v1416 = vpop.f32.mrb[0].mxu0
    %v1417 = vadd.f32 %v1322, %v1416
    %1418 = vdwg.mxu0
    %1419 = vmatprep.subr.mxu0 %v54
    %1420 = vmatpush1.msra.mxu0 %v53
    %1421 = vmatprep.subr.mxu0 %v61
    %1422 = vmatpush1.msra.mxu0 %v60
    %1423 = vmatprep.subr.mxu0 %v68
    %1424 = vmatpush1.msra.mxu0 %v67
    %1425 = vmatprep.subr.mxu0 %v75
    %1426 = vmatpush1.msra.mxu0 %v74
    %1427 = vmatprep.subr.mxu0 %v82
    %1428 = vmatpush1.msra.mxu0 %v81
    %1429 = vmatprep.subr.mxu0 %v89
    %1430 = vmatpush1.msra.mxu0 %v88
    %1431 = vmatprep.subr.mxu0 %v96
    %1432 = vmatpush1.msra.mxu0 %v95
    %1433 = vmatprep.subr.mxu0 %v103
    %1434 = vmatpush1.msra.mxu0 %v102
    %1435 = vmatprep.subr.mxu0 %v110
    %1436 = vmatpush1.msra.mxu0 %v109
    %1437 = vmatprep.subr.mxu0 %v117
    %1438 = vmatpush1.msra.mxu0 %v116
    %1439 = vmatprep.subr.mxu0 %v124
    %1440 = vmatpush1.msra.mxu0 %v123
    %1441 = vmatprep.subr.mxu0 %v131
    %1442 = vmatpush1.msra.mxu0 %v130
    %1443 = vmatprep.subr.mxu0 %v138
    %1444 = vmatpush1.msra.mxu0 %v137
    %1445 = vmatprep.subr.mxu0 %v145
    %1446 = vmatpush1.msra.mxu0 %v144
    %1447 = vmatprep.subr.mxu0 %v152
    %1448 = vmatpush1.msra.mxu0 %v151
    %1449 = vmatprep.subr.mxu0 %v159
    %1450 = vmatpush1.msra.mxu0 %v158
    %1451 = vmatprep.subr.mxu0 %v166
    %1452 = vmatpush1.msra.mxu0 %v165
    %1453 = vmatprep.subr.mxu0 %v173
    %1454 = vmatpush1.msra.mxu0 %v172
    %1455 = vmatprep.subr.mxu0 %v180
    %1456 = vmatpush1.msra.mxu0 %v179
    %1457 = vmatprep.subr.mxu0 %v187
    %1458 = vmatpush1.msra.mxu0 %v186
    %1459 = vmatprep.subr.mxu0 %v194
    %1460 = vmatpush1.msra.mxu0 %v193
    %1461 = vmatprep.subr.mxu0 %v201
    %1462 = vmatpush1.msra.mxu0 %v200
    %1463 = vmatprep.subr.mxu0 %v208
    %1464 = vmatpush1.msra.mxu0 %v207
    %1465 = vmatprep.subr.mxu0 %v215
    %1466 = vmatpush1.msra.mxu0 %v214
    %1467 = vmatprep.subr.mxu0 %v222
    %1468 = vmatpush1.msra.mxu0 %v221
    %1469 = vmatprep.subr.mxu0 %v229
    %1470 = vmatpush1.msra.mxu0 %v228
    %1471 = vmatprep.subr.mxu0 %v236
    %1472 = vmatpush1.msra.mxu0 %v235
    %1473 = vmatprep.subr.mxu0 %v243
    %1474 = vmatpush1.msra.mxu0 %v242
    %1475 = vmatprep.subr.mxu0 %v250
    %1476 = vmatpush1.msra.mxu0 %v249
    %1477 = vmatprep.subr.mxu0 %v257
    %1478 = vmatpush1.msra.mxu0 %v256
    %1479 = vmatprep.subr.mxu0 %v264
    %1480 = vmatpush1.msra.mxu0 %v263
    %1481 = vmatprep.subr.mxu0 %v271
    %1482 = vmatpush1.msra.mxu0 %v270
    %1483 = vmatprep.mubr.f32.mxu0 %v1200
    %1484 = vmatmul.mubr.f32.gmra.mrb[0].mxu0 %v1199
    %v1485 = vpop.f32.mrb[0].mxu0
    %v1486 = vadd.f32 %v352, %v1485
    %v1487 = vpop.f32.mrb[0].mxu0
    %v1488 = vadd.f32 %v356, %v1487
    %1489 = vmatprep.mubr.f32.mxu0 %v1203
    %1490 = vmatmul.mubr.f32.gmra.mrb[0].mxu0 %v1202
    %v1491 = vpop.f32.mrb[0].mxu0
    %v1492 = vadd.f32 %v352, %v1491
    %v1493 = vpop.f32.mrb[0].mxu0
    %v1494 = vadd.f32 %v356, %v1493
    %1495 = vmatprep.mubr.f32.mxu0 %v1206
    %1496 = vmatmul.mubr.f32.gmra.mrb[0].mxu0 %v1205
    %v1497 = vpop.f32.mrb[0].mxu0
    %v1498 = vadd.f32 %v352, %v1497
    %v1499 = vpop.f32.mrb[0].mxu0
    %v1500 = vadd.f32 %v356, %v1499
    %1501 = vmatprep.mubr.f32.mxu0 %v1209
    %1502 = vmatmul.mubr.f32.gmra.mrb[0].mxu0 %v1208
    %v1503 = vpop.f32.mrb[0].mxu0
    %v1504 = vadd.f32 %v352, %v1503
    %v1505 = vpop.f32.mrb[0].mxu0
    %v1506 = vadd.f32 %v356, %v1505
    %1507 = vmatprep.mubr.f32.mxu0 %v1212
    %1508 = vmatmul.mubr.f32.gmra.mrb[0].mxu0 %v1211
    %v1509 = vpop.f32.mrb[0].mxu0
    %v1510 = vadd.f32 %v352, %v1509
    %v1511 = vpop.f32.mrb[0].mxu0
    %v1512 = vadd.f32 %v356, %v1511
    %1513 = vdwg.mxu0
    %1514 = vmatprep.subr.mxu0 %v278
    %1515 = vmatpush1.msra.mxu0 %v277
    %1516 = vmatprep.subr.mxu0 %v285
    %1517 = vmatpush1.msra.mxu0 %v284
    %1518 = vmatprep.subr.mxu0 %v292
    %1519 = vmatpush1.msra.mxu0 %v291
    %1520 = vmatprep.subr.mxu0 %v299
    %1521 = vmatpush1.msra.mxu0 %v298
    %1522 = vmatprep.subr.mxu0 %v306
    %1523 = vmatpush1.msra.mxu0 %v305
    %1524 = vmatprep.subr.mxu0 %v313
    %1525 = vmatpush1.msra.mxu0 %v312
    %1526 = vmatprep.subr.mxu0 %v403
    %1527 = vmatpush1.msra.mxu0 %v400
    %1528 = vmatprep.subr.mxu0 0.0
    %1529 = vmatpush1.msra.mxu0 0.0
    %1530 = vmatprep.subr.mxu0 0.0
    %1531 = vmatpush1.msra.mxu0 0.0
    %1532 = vmatprep.subr.mxu0 0.0
    %1533 = vmatpush1.msra.mxu0 0.0
    %1534 = vmatprep.subr.mxu0 0.0
    %1535 = vmatpush1.msra.mxu0 0.0
    %1536 = vmatprep.subr.mxu0 0.0
    %1537 = vmatpush1.msra.mxu0 0.0
    %1538 = vmatprep.subr.mxu0 0.0
    %1539 = vmatpush1.msra.mxu0 0.0
    %1540 = vmatprep.subr.mxu0 0.0
    %1541 = vmatpush1.msra.mxu0 0.0
    %1542 = vmatprep.subr.mxu0 0.0
    %1543 = vmatpush1.msra.mxu0 0.0
    %1544 = vmatprep.subr.mxu0 0.0
    %1545 = vmatpush1.msra.mxu0 0.0
    %1546 = vmatprep.subr.mxu0 0.0
    %1547 = vmatpush1.msra.mxu0 0.0
    %1548 = vmatprep.subr.mxu0 0.0
    %1549 = vmatpush1.msra.mxu0 0.0
    %1550 = vmatprep.subr.mxu0 0.0
    %1551 = vmatpush1.msra.mxu0 0.0
    %1552 = vmatprep.subr.mxu0 0.0
    %1553 = vmatpush1.msra.mxu0 0.0
    %1554 = vmatprep.subr.mxu0 0.0
    %1555 = vmatpush1.msra.mxu0 0.0
    %1556 = vmatprep.subr.mxu0 0.0
    %1557 = vmatpush1.msra.mxu0 0.0
    %1558 = vmatprep.subr.mxu0 0.0
    %1559 = vmatpush1.msra.mxu0 0.0
    %1560 = vmatprep.subr.mxu0 0.0
    %1561 = vmatpush1.msra.mxu0 0.0
    %1562 = vmatprep.subr.mxu0 0.0
    %1563 = vmatpush1.msra.mxu0 0.0
    %1564 = vmatprep.subr.mxu0 0.0
    %1565 = vmatpush1.msra.mxu0 0.0
    %1566 = vmatprep.subr.mxu0 0.0
    %1567 = vmatpush1.msra.mxu0 0.0
    %1568 = vmatprep.subr.mxu0 0.0
    %1569 = vmatpush1.msra.mxu0 0.0
    %1570 = vmatprep.subr.mxu0 0.0
    %1571 = vmatpush1.msra.mxu0 0.0
    %1572 = vmatprep.subr.mxu0 0.0
    %1573 = vmatpush1.msra.mxu0 0.0
    %1574 = vmatprep.subr.mxu0 0.0
    %1575 = vmatpush1.msra.mxu0 0.0
    %1576 = vmatprep.subr.mxu0 0.0
    %1577 = vmatpush1.msra.mxu0 0.0
    %1578 = vmatprep.mubr.f32.mxu0 0.0
    %1579 = vmatmul.mubr.f32.gmra.mrb[0].mxu0 %v1215
    %v1580 = vpop.f32.mrb[0].mxu0
    %v1581 = vadd.f32 %v1486, %v1580
    %v1582 = vpop.f32.mrb[0].mxu0
    %v1583 = vadd.f32 %v1488, %v1582
    %1584 = vmatprep.mubr.f32.mxu0 0.0
    %1585 = vmatmul.mubr.f32.gmra.mrb[0].mxu0 %v1218
    %v1586 = vpop.f32.mrb[0].mxu0
    %v1587 = vadd.f32 %v1492, %v1586
    %v1588 = vpop.f32.mrb[0].mxu0
    %v1589 = vadd.f32 %v1494, %v1588
    %1590 = vmatprep.mubr.f32.mxu0 0.0
    %1591 = vmatmul.mubr.f32.gmra.mrb[0].mxu0 %v1221
    %v1592 = vpop.f32.mrb[0].mxu0
    %v1593 = vadd.f32 %v1498, %v1592
    %v1594 = vpop.f32.mrb[0].mxu0
    %v1595 = vadd.f32 %v1500, %v1594
    %1596 = vmatprep.mubr.f32.mxu0 0.0
    %1597 = vmatmul.mubr.f32.gmra.mrb[0].mxu0 %v1224
    %v1598 = vpop.f32.mrb[0].mxu0
    %v1599 = vadd.f32 %v1504, %v1598
    %v1600 = vpop.f32.mrb[0].mxu0
    %v1601 = vadd.f32 %v1506, %v1600
    %1602 = vmatprep.mubr.f32.mxu0 0.0
    %1603 = vmatmul.mubr.f32.gmra.mrb[0].mxu0 %v1227
    %v1604 = vpop.f32.mrb[0].mxu0
    %v1605 = vadd.f32 %v1510, %v1604
    %v1606 = vpop.f32.mrb[0].mxu0
    %v1607 = vadd.f32 %v1512, %v1606
    %1608 = vdwg.mxu0
    %1609 = vmatprep.subr.mxu0 %v56
    %1610 = vmatpush1.msra.mxu0 %v55
    %1611 = vmatprep.subr.mxu0 %v63
    %1612 = vmatpush1.msra.mxu0 %v62
    %1613 = vmatprep.subr.mxu0 %v70
    %1614 = vmatpush1.msra.mxu0 %v69
    %1615 = vmatprep.subr.mxu0 %v77
    %1616 = vmatpush1.msra.mxu0 %v76
    %1617 = vmatprep.subr.mxu0 %v84
    %1618 = vmatpush1.msra.mxu0 %v83
    %1619 = vmatprep.subr.mxu0 %v91
    %1620 = vmatpush1.msra.mxu0 %v90
    %1621 = vmatprep.subr.mxu0 %v98
    %1622 = vmatpush1.msra.mxu0 %v97
    %1623 = vmatprep.subr.mxu0 %v105
    %1624 = vmatpush1.msra.mxu0 %v104
    %1625 = vmatprep.subr.mxu0 %v112
    %1626 = vmatpush1.msra.mxu0 %v111
    %1627 = vmatprep.subr.mxu0 %v119
    %1628 = vmatpush1.msra.mxu0 %v118
    %1629 = vmatprep.subr.mxu0 %v126
    %1630 = vmatpush1.msra.mxu0 %v125
    %1631 = vmatprep.subr.mxu0 %v133
    %1632 = vmatpush1.msra.mxu0 %v132
    %1633 = vmatprep.subr.mxu0 %v140
    %1634 = vmatpush1.msra.mxu0 %v139
    %1635 = vmatprep.subr.mxu0 %v147
    %1636 = vmatpush1.msra.mxu0 %v146
    %1637 = vmatprep.subr.mxu0 %v154
    %1638 = vmatpush1.msra.mxu0 %v153
    %1639 = vmatprep.subr.mxu0 %v161
    %1640 = vmatpush1.msra.mxu0 %v160
    %1641 = vmatprep.subr.mxu0 %v168
    %1642 = vmatpush1.msra.mxu0 %v167
    %1643 = vmatprep.subr.mxu0 %v175
    %1644 = vmatpush1.msra.mxu0 %v174
    %1645 = vmatprep.subr.mxu0 %v182
    %1646 = vmatpush1.msra.mxu0 %v181
    %1647 = vmatprep.subr.mxu0 %v189
    %1648 = vmatpush1.msra.mxu0 %v188
    %1649 = vmatprep.subr.mxu0 %v196
    %1650 = vmatpush1.msra.mxu0 %v195
    %1651 = vmatprep.subr.mxu0 %v203
    %1652 = vmatpush1.msra.mxu0 %v202
    %1653 = vmatprep.subr.mxu0 %v210
    %1654 = vmatpush1.msra.mxu0 %v209
    %1655 = vmatprep.subr.mxu0 %v217
    %1656 = vmatpush1.msra.mxu0 %v216
    %1657 = vmatprep.subr.mxu0 %v224
    %1658 = vmatpush1.msra.mxu0 %v223
    %1659 = vmatprep.subr.mxu0 %v231
    %1660 = vmatpush1.msra.mxu0 %v230
    %1661 = vmatprep.subr.mxu0 %v238
    %1662 = vmatpush1.msra.mxu0 %v237
    %1663 = vmatprep.subr.mxu0 %v245
    %1664 = vmatpush1.msra.mxu0 %v244
    %1665 = vmatprep.subr.mxu0 %v252
    %1666 = vmatpush1.msra.mxu0 %v251
    %1667 = vmatprep.subr.mxu0 %v259
    %1668 = vmatpush1.msra.mxu0 %v258
    %1669 = vmatprep.subr.mxu0 %v266
    %1670 = vmatpush1.msra.mxu0 %v265
    %1671 = vmatprep.subr.mxu0 %v273
    %1672 = vmatpush1.msra.mxu0 %v272
    %1673 = vmatprep.mubr.f32.mxu0 %v1200
    %1674 = vmatmul.mubr.f32.gmra.mrb[0].mxu0 %v1199
    %v1675 = vpop.f32.mrb[0].mxu0
    %v1676 = vadd.f32 %v360, %v1675
    %v1677 = vpop.f32.mrb[0].mxu0
    %v1678 = vadd.f32 %v364, %v1677
    %1679 = vmatprep.mubr.f32.mxu0 %v1203
    %1680 = vmatmul.mubr.f32.gmra.mrb[0].mxu0 %v1202
    %v1681 = vpop.f32.mrb[0].mxu0
    %v1682 = vadd.f32 %v360, %v1681
    %v1683 = vpop.f32.mrb[0].mxu0
    %v1684 = vadd.f32 %v364, %v1683
    %1685 = vmatprep.mubr.f32.mxu0 %v1206
    %1686 = vmatmul.mubr.f32.gmra.mrb[0].mxu0 %v1205
    %v1687 = vpop.f32.mrb[0].mxu0
    %v1688 = vadd.f32 %v360, %v1687
    %v1689 = vpop.f32.mrb[0].mxu0
    %v1690 = vadd.f32 %v364, %v1689
    %1691 = vmatprep.mubr.f32.mxu0 %v1209
    %1692 = vmatmul.mubr.f32.gmra.mrb[0].mxu0 %v1208
    %v1693 = vpop.f32.mrb[0].mxu0
    %v1694 = vadd.f32 %v360, %v1693
    %v1695 = vpop.f32.mrb[0].mxu0
    %v1696 = vadd.f32 %v364, %v1695
    %1697 = vmatprep.mubr.f32.mxu0 %v1212
    %1698 = vmatmul.mubr.f32.gmra.mrb[0].mxu0 %v1211
    %v1699 = vpop.f32.mrb[0].mxu0
    %v1700 = vadd.f32 %v360, %v1699
    %v1701 = vpop.f32.mrb[0].mxu0
    %v1702 = vadd.f32 %v364, %v1701
    %1703 = vdwg.mxu0
    %1704 = vmatprep.subr.mxu0 %v280
    %1705 = vmatpush1.msra.mxu0 %v279
    %1706 = vmatprep.subr.mxu0 %v287
    %1707 = vmatpush1.msra.mxu0 %v286
    %1708 = vmatprep.subr.mxu0 %v294
    %1709 = vmatpush1.msra.mxu0 %v293
    %1710 = vmatprep.subr.mxu0 %v301
    %1711 = vmatpush1.msra.mxu0 %v300
    %1712 = vmatprep.subr.mxu0 %v308
    %1713 = vmatpush1.msra.mxu0 %v307
    %1714 = vmatprep.subr.mxu0 %v315
    %1715 = vmatpush1.msra.mxu0 %v314
    %1716 = vmatprep.subr.mxu0 %v409
    %1717 = vmatpush1.msra.mxu0 %v406
    %1718 = vmatprep.subr.mxu0 0.0
    %1719 = vmatpush1.msra.mxu0 0.0
    %1720 = vmatprep.subr.mxu0 0.0
    %1721 = vmatpush1.msra.mxu0 0.0
    %1722 = vmatprep.subr.mxu0 0.0
    %1723 = vmatpush1.msra.mxu0 0.0
    %1724 = vmatprep.subr.mxu0 0.0
    %1725 = vmatpush1.msra.mxu0 0.0
    %1726 = vmatprep.subr.mxu0 0.0
    %1727 = vmatpush1.msra.mxu0 0.0
    %1728 = vmatprep.subr.mxu0 0.0
    %1729 = vmatpush1.msra.mxu0 0.0
    %1730 = vmatprep.subr.mxu0 0.0
    %1731 = vmatpush1.msra.mxu0 0.0
    %1732 = vmatprep.subr.mxu0 0.0
    %1733 = vmatpush1.msra.mxu0 0.0
    %1734 = vmatprep.subr.mxu0 0.0
    %1735 = vmatpush1.msra.mxu0 0.0
    %1736 = vmatprep.subr.mxu0 0.0
    %1737 = vmatpush1.msra.mxu0 0.0
    %1738 = vmatprep.subr.mxu0 0.0
    %1739 = vmatpush1.msra.mxu0 0.0
    %1740 = vmatprep.subr.mxu0 0.0
    %1741 = vmatpush1.msra.mxu0 0.0
    %1742 = vmatprep.subr.mxu0 0.0
    %1743 = vmatpush1.msra.mxu0 0.0
    %1744 = vmatprep.subr.mxu0 0.0
    %1745 = vmatpush1.msra.mxu0 0.0
    %1746 = vmatprep.subr.mxu0 0.0
    %1747 = vmatpush1.msra.mxu0 0.0
    %1748 = vmatprep.subr.mxu0 0.0
    %1749 = vmatpush1.msra.mxu0 0.0
    %1750 = vmatprep.subr.mxu0 0.0
    %1751 = vmatpush1.msra.mxu0 0.0
    %1752 = vmatprep.subr.mxu0 0.0
    %1753 = vmatpush1.msra.mxu0 0.0
    %1754 = vmatprep.subr.mxu0 0.0
    %1755 = vmatpush1.msra.mxu0 0.0
    %1756 = vmatprep.subr.mxu0 0.0
    %1757 = vmatpush1.msra.mxu0 0.0
    %1758 = vmatprep.subr.mxu0 0.0
    %1759 = vmatpush1.msra.mxu0 0.0
    %1760 = vmatprep.subr.mxu0 0.0
    %1761 = vmatpush1.msra.mxu0 0.0
    %1762 = vmatprep.subr.mxu0 0.0
    %1763 = vmatpush1.msra.mxu0 0.0
    %1764 = vmatprep.subr.mxu0 0.0
    %1765 = vmatpush1.msra.mxu0 0.0
    %1766 = vmatprep.subr.mxu0 0.0
    %1767 = vmatpush1.msra.mxu0 0.0
    %1768 = vmatprep.mubr.f32.mxu0 0.0
    %1769 = vmatmul.mubr.f32.gmra.mrb[0].mxu0 %v1215
    %v1770 = vpop.f32.mrb[0].mxu0
    %v1771 = vadd.f32 %v1676, %v1770
    %v1772 = vpop.f32.mrb[0].mxu0
    %v1773 = vadd.f32 %v1678, %v1772
    %1774 = vmatprep.mubr.f32.mxu0 0.0
    %1775 = vmatmul.mubr.f32.gmra.mrb[0].mxu0 %v1218
    %v1776 = vpop.f32.mrb[0].mxu0
    %v1777 = vadd.f32 %v1682, %v1776
    %v1778 = vpop.f32.mrb[0].mxu0
    %v1779 = vadd.f32 %v1684, %v1778
    %1780 = vmatprep.mubr.f32.mxu0 0.0
    %1781 = vmatmul.mubr.f32.gmra.mrb[0].mxu0 %v1221
    %v1782 = vpop.f32.mrb[0].mxu0
    %v1783 = vadd.f32 %v1688, %v1782
    %v1784 = vpop.f32.mrb[0].mxu0
    %v1785 = vadd.f32 %v1690, %v1784
    %1786 = vmatprep.mubr.f32.mxu0 0.0
    %1787 = vmatmul.mubr.f32.gmra.mrb[0].mxu0 %v1224
    %v1788 = vpop.f32.mrb[0].mxu0
    %v1789 = vadd.f32 %v1694, %v1788
    %v1790 = vpop.f32.mrb[0].mxu0
    %v1791 = vadd.f32 %v1696, %v1790
    %1792 = vmatprep.mubr.f32.mxu0 0.0
    %1793 = vmatmul.mubr.f32.gmra.mrb[0].mxu0 %v1227
    %v1794 = vpop.f32.mrb[0].mxu0
    %v1795 = vadd.f32 %v1700, %v1794
    %v1796 = vpop.f32.mrb[0].mxu0
    %v1797 = vadd.f32 %v1702, %v1796
    %1798 = vdwg.mxu0
    %1799 = vmatprep.subr.mxu0 0.0
    %1800 = vmatpush1.msra.mxu0 %v57
    %1801 = vmatprep.subr.mxu0 0.0
    %1802 = vmatpush1.msra.mxu0 %v64
    %1803 = vmatprep.subr.mxu0 0.0
    %1804 = vmatpush1.msra.mxu0 %v71
    %1805 = vmatprep.subr.mxu0 0.0
    %1806 = vmatpush1.msra.mxu0 %v78
    %1807 = vmatprep.subr.mxu0 0.0
    %1808 = vmatpush1.msra.mxu0 %v85
    %1809 = vmatprep.subr.mxu0 0.0
    %1810 = vmatpush1.msra.mxu0 %v92
    %1811 = vmatprep.subr.mxu0 0.0
    %1812 = vmatpush1.msra.mxu0 %v99
    %1813 = vmatprep.subr.mxu0 0.0
    %1814 = vmatpush1.msra.mxu0 %v106
    %1815 = vmatprep.subr.mxu0 0.0
    %1816 = vmatpush1.msra.mxu0 %v113
    %1817 = vmatprep.subr.mxu0 0.0
    %1818 = vmatpush1.msra.mxu0 %v120
    %1819 = vmatprep.subr.mxu0 0.0
    %1820 = vmatpush1.msra.mxu0 %v127
    %1821 = vmatprep.subr.mxu0 0.0
    %1822 = vmatpush1.msra.mxu0 %v134
    %1823 = vmatprep.subr.mxu0 0.0
    %1824 = vmatpush1.msra.mxu0 %v141
    %1825 = vmatprep.subr.mxu0 0.0
    %1826 = vmatpush1.msra.mxu0 %v148
    %1827 = vmatprep.subr.mxu0 0.0
    %1828 = vmatpush1.msra.mxu0 %v155
    %1829 = vmatprep.subr.mxu0 0.0
    %1830 = vmatpush1.msra.mxu0 %v162
    %1831 = vmatprep.subr.mxu0 0.0
    %1832 = vmatpush1.msra.mxu0 %v169
    %1833 = vmatprep.subr.mxu0 0.0
    %1834 = vmatpush1.msra.mxu0 %v176
    %1835 = vmatprep.subr.mxu0 0.0
    %1836 = vmatpush1.msra.mxu0 %v183
    %1837 = vmatprep.subr.mxu0 0.0
    %1838 = vmatpush1.msra.mxu0 %v190
    %1839 = vmatprep.subr.mxu0 0.0
    %1840 = vmatpush1.msra.mxu0 %v197
    %1841 = vmatprep.subr.mxu0 0.0
    %1842 = vmatpush1.msra.mxu0 %v204
    %1843 = vmatprep.subr.mxu0 0.0
    %1844 = vmatpush1.msra.mxu0 %v211
    %1845 = vmatprep.subr.mxu0 0.0
    %1846 = vmatpush1.msra.mxu0 %v218
    %1847 = vmatprep.subr.mxu0 0.0
    %1848 = vmatpush1.msra.mxu0 %v225
    %1849 = vmatprep.subr.mxu0 0.0
    %1850 = vmatpush1.msra.mxu0 %v232
    %1851 = vmatprep.subr.mxu0 0.0
    %1852 = vmatpush1.msra.mxu0 %v239
    %1853 = vmatprep.subr.mxu0 0.0
    %1854 = vmatpush1.msra.mxu0 %v246
    %1855 = vmatprep.subr.mxu0 0.0
    %1856 = vmatpush1.msra.mxu0 %v253
    %1857 = vmatprep.subr.mxu0 0.0
    %1858 = vmatpush1.msra.mxu0 %v260
    %1859 = vmatprep.subr.mxu0 0.0
    %1860 = vmatpush1.msra.mxu0 %v267
    %1861 = vmatprep.subr.mxu0 0.0
    %1862 = vmatpush1.msra.mxu0 %v274
    %1863 = vmatprep.mubr.f32.mxu0 %v1200
    %1864 = vmatmul.mubr.f32.gmra.mrb[0].mxu0 %v1199
    %v1865 = vpop.f32.mrb[0].mxu0
    %v1866 = vadd.f32 %v368, %v1865
    %v1867 = vpop.f32.mrb[0].mxu0
    %1868 = vmatprep.mubr.f32.mxu0 %v1203
    %1869 = vmatmul.mubr.f32.gmra.mrb[0].mxu0 %v1202
    %v1870 = vpop.f32.mrb[0].mxu0
    %v1871 = vadd.f32 %v368, %v1870
    %v1872 = vpop.f32.mrb[0].mxu0
    %1873 = vmatprep.mubr.f32.mxu0 %v1206
    %1874 = vmatmul.mubr.f32.gmra.mrb[0].mxu0 %v1205
    %v1875 = vpop.f32.mrb[0].mxu0
    %v1876 = vadd.f32 %v368, %v1875
    %v1877 = vpop.f32.mrb[0].mxu0
    %1878 = vmatprep.mubr.f32.mxu0 %v1209
    %1879 = vmatmul.mubr.f32.gmra.mrb[0].mxu0 %v1208
    %v1880 = vpop.f32.mrb[0].mxu0
    %v1881 = vadd.f32 %v368, %v1880
    %v1882 = vpop.f32.mrb[0].mxu0
    %1883 = vmatprep.mubr.f32.mxu0 %v1212
    %1884 = vmatmul.mubr.f32.gmra.mrb[0].mxu0 %v1211
    %v1885 = vpop.f32.mrb[0].mxu0
    %v1886 = vadd.f32 %v368, %v1885
    %v1887 = vpop.f32.mrb[0].mxu0
    %1888 = vdwg.mxu0
    %1889 = vmatprep.subr.mxu0 0.0
    %1890 = vmatpush1.msra.mxu0 %v281
    %1891 = vmatprep.subr.mxu0 0.0
    %1892 = vmatpush1.msra.mxu0 %v288
    %1893 = vmatprep.subr.mxu0 0.0
    %1894 = vmatpush1.msra.mxu0 %v295
    %1895 = vmatprep.subr.mxu0 0.0
    %1896 = vmatpush1.msra.mxu0 %v302
    %1897 = vmatprep.subr.mxu0 0.0
    %1898 = vmatpush1.msra.mxu0 %v309
    %1899 = vmatprep.subr.mxu0 0.0
    %1900 = vmatpush1.msra.mxu0 %v316
    %1901 = vmatprep.subr.mxu0 0.0
    %1902 = vmatpush1.msra.mxu0 %v412
    %1903 = vmatprep.subr.mxu0 0.0
    %1904 = vmatpush1.msra.mxu0 0.0
    %1905 = vmatprep.subr.mxu0 0.0
    %1906 = vmatpush1.msra.mxu0 0.0
    %1907 = vmatprep.subr.mxu0 0.0
    %1908 = vmatpush1.msra.mxu0 0.0
    %1909 = vmatprep.subr.mxu0 0.0
    %1910 = vmatpush1.msra.mxu0 0.0
    %1911 = vmatprep.subr.mxu0 0.0
    %1912 = vmatpush1.msra.mxu0 0.0
    %1913 = vmatprep.subr.mxu0 0.0
    %1914 = vmatpush1.msra.mxu0 0.0
    %1915 = vmatprep.subr.mxu0 0.0
    %1916 = vmatpush1.msra.mxu0 0.0
    %1917 = vmatprep.subr.mxu0 0.0
    %1918 = vmatpush1.msra.mxu0 0.0
    %1919 = vmatprep.subr.mxu0 0.0
    %1920 = vmatpush1.msra.mxu0 0.0
    %1921 = vmatprep.subr.mxu0 0.0
    %1922 = vmatpush1.msra.mxu0 0.0
    %1923 = vmatprep.subr.mxu0 0.0
    %1924 = vmatpush1.msra.mxu0 0.0
    %1925 = vmatprep.subr.mxu0 0.0
    %1926 = vmatpush1.msra.mxu0 0.0
    %1927 = vmatprep.subr.mxu0 0.0
    %1928 = vmatpush1.msra.mxu0 0.0
    %1929 = vmatprep.subr.mxu0 0.0
    %1930 = vmatpush1.msra.mxu0 0.0
    %1931 = vmatprep.subr.mxu0 0.0
    %1932 = vmatpush1.msra.mxu0 0.0
    %1933 = vmatprep.subr.mxu0 0.0
    %1934 = vmatpush1.msra.mxu0 0.0
    %1935 = vmatprep.subr.mxu0 0.0
    %1936 = vmatpush1.msra.mxu0 0.0
    %1937 = vmatprep.subr.mxu0 0.0
    %1938 = vmatpush1.msra.mxu0 0.0
    %1939 = vmatprep.subr.mxu0 0.0
    %1940 = vmatpush1.msra.mxu0 0.0
    %1941 = vmatprep.subr.mxu0 0.0
    %1942 = vmatpush1.msra.mxu0 0.0
    %1943 = vmatprep.subr.mxu0 0.0
    %1944 = vmatpush1.msra.mxu0 0.0
    %1945 = vmatprep.subr.mxu0 0.0
    %1946 = vmatpush1.msra.mxu0 0.0
    %1947 = vmatprep.subr.mxu0 0.0
    %1948 = vmatpush1.msra.mxu0 0.0
    %1949 = vmatprep.subr.mxu0 0.0
    %1950 = vmatpush1.msra.mxu0 0.0
    %1951 = vmatprep.subr.mxu0 0.0
    %1952 = vmatpush1.msra.mxu0 0.0
    %1953 = vmatprep.mubr.f32.mxu0 0.0
    %1954 = vmatmul.mubr.f32.gmra.mrb[0].mxu0 %v1215
    %v1955 = vpop.f32.mrb[0].mxu0
    %v1956 = vadd.f32 %v1866, %v1955
    %v1957 = vpop.f32.mrb[0].mxu0
    %1958 = vmatprep.mubr.f32.mxu0 0.0
    %1959 = vmatmul.mubr.f32.gmra.mrb[0].mxu0 %v1218
    %v1960 = vpop.f32.mrb[0].mxu0
    %v1961 = vadd.f32 %v1871, %v1960
    %v1962 = vpop.f32.mrb[0].mxu0
    %1963 = vmatprep.mubr.f32.mxu0 0.0
    %1964 = vmatmul.mubr.f32.gmra.mrb[0].mxu0 %v1221
    %v1965 = vpop.f32.mrb[0].mxu0
    %v1966 = vadd.f32 %v1876, %v1965
    %v1967 = vpop.f32.mrb[0].mxu0
    %1968 = vmatprep.mubr.f32.mxu0 0.0
    %1969 = vmatmul.mubr.f32.gmra.mrb[0].mxu0 %v1224
    %v1970 = vpop.f32.mrb[0].mxu0
    %v1971 = vadd.f32 %v1881, %v1970
    %v1972 = vpop.f32.mrb[0].mxu0
    %1973 = vmatprep.mubr.f32.mxu0 0.0
    %1974 = vmatmul.mubr.f32.gmra.mrb[0].mxu0 %v1227
    %v1975 = vpop.f32.mrb[0].mxu0
    %v1976 = vadd.f32 %v1886, %v1975
    %v1977 = vpop.f32.mrb[0].mxu0
    %1978 = vdwg.mxu0
    %v1979 = vmax.f32 %v1391, 0.0
    %v1980 = vmax.f32 %v1393, 0.0
    %v1981 = vmax.f32 %v1581, 0.0
    %v1982 = vmax.f32 %v1583, 0.0
    %v1983 = vmax.f32 %v1771, 0.0
    %v1984 = vmax.f32 %v1773, 0.0
    %v1985 = vmax.f32 %v1956, 0.0
    %v1986 = vmax.f32 %v1397, 0.0
    %v1987 = vmax.f32 %v1399, 0.0
    %v1988 = vmax.f32 %v1587, 0.0
    %v1989 = vmax.f32 %v1589, 0.0
    %v1990 = vmax.f32 %v1777, 0.0
    %v1991 = vmax.f32 %v1779, 0.0
    %v1992 = vmax.f32 %v1961, 0.0
    %v1993 = vmax.f32 %v1403, 0.0
    %v1994 = vmax.f32 %v1405, 0.0
    %v1995 = vmax.f32 %v1593, 0.0
    %v1996 = vmax.f32 %v1595, 0.0
    %v1997 = vmax.f32 %v1783, 0.0
    %v1998 = vmax.f32 %v1785, 0.0
    %v1999 = vmax.f32 %v1966, 0.0
    %v2000 = vmax.f32 %v1409, 0.0
    %v2001 = vmax.f32 %v1411, 0.0
    %v2002 = vmax.f32 %v1599, 0.0
    %v2003 = vmax.f32 %v1601, 0.0
    %v2004 = vmax.f32 %v1789, 0.0
    %v2005 = vmax.f32 %v1791, 0.0
    %v2006 = vmax.f32 %v1971, 0.0
    %v2007 = vmax.f32 %v1415, 0.0
    %v2008 = vmax.f32 %v1417, 0.0
    %v2009 = vmax.f32 %v1605, 0.0
    %v2010 = vmax.f32 %v1607, 0.0
    %v2011 = vmax.f32 %v1795, 0.0
    %v2012 = vmax.f32 %v1797, 0.0
    %v2013 = vmax.f32 %v1976, 0.0
    %v2014 = vmax.f32 %v1164, %v1979
    %v2015 = vmax.f32 %v1165, %v1980
    %v2016 = vmax.f32 %v1166, %v1981
    %v2017 = vmax.f32 %v1167, %v1982
    %v2018 = vmax.f32 %v1168, %v1983
    %v2019 = vmax.f32 %v1169, %v1984
    %v2020 = vmax.f32 %v1170, %v1985
    %v2021 = vmax.f32 %v1171, %v1986
    %v2022 = vmax.f32 %v1172, %v1987
    %v2023 = vmax.f32 %v1173, %v1988
    %v2024 = vmax.f32 %v1174, %v1989
    %v2025 = vmax.f32 %v1175, %v1990
    %v2026 = vmax.f32 %v1176, %v1991
    %v2027 = vmax.f32 %v1177, %v1992
    %v2028 = vmax.f32 %v1178, %v1993
    %v2029 = vmax.f32 %v1179, %v1994
    %v2030 = vmax.f32 %v1180, %v1995
    %v2031 = vmax.f32 %v1181, %v1996
    %v2032 = vmax.f32 %v1182, %v1997
    %v2033 = vmax.f32 %v1183, %v1998
    %v2034 = vmax.f32 %v1184, %v1999
    %v2035 = vmax.f32 %v1185, %v2000
    %v2036 = vmax.f32 %v1186, %v2001
    %v2037 = vmax.f32 %v1187, %v2002
    %v2038 = vmax.f32 %v1188, %v2003
    %v2039 = vmax.f32 %v1189, %v2004
    %v2040 = vmax.f32 %v1190, %v2005
    %v2041 = vmax.f32 %v1191, %v2006
    %v2042 = vmax.f32 %v1192, %v2007
    %v2043 = vmax.f32 %v1193, %v2008
    %v2044 = vmax.f32 %v1194, %v2009
    %v2045 = vmax.f32 %v1195, %v2010
    %v2046 = vmax.f32 %v1196, %v2011
    %v2047 = vmax.f32 %v1197, %v2012
    %v2048 = vmax.f32 %v1198, %v2013
    %2084 = vrot.lane.b32.xlu0 %v2014, 127
    %v2085 = vpop.permute.xlu0 %2084
    %2086 = vrot.lane.b32.xlu0 %v2015, 127
    %v2087 = vpop.permute.xlu0 %2086
    %2088 = vrot.lane.b32.xlu0 %v2016, 127
    %v2089 = vpop.permute.xlu0 %2088
    %2090 = vrot.lane.b32.xlu0 %v2017, 127
    %v2091 = vpop.permute.xlu0 %2090
    %2092 = vrot.lane.b32.xlu0 %v2018, 127
    %v2093 = vpop.permute.xlu0 %2092
    %2094 = vrot.lane.b32.xlu0 %v2019, 127
    %v2095 = vpop.permute.xlu0 %2094
    %2096 = vrot.lane.b32.xlu0 %v2020, 127
    %v2097 = vpop.permute.xlu0 %2096
    %2098 = vrot.lane.b32.xlu0 %v2021, 127
    %v2099 = vpop.permute.xlu0 %2098
    %2100 = vrot.lane.b32.xlu0 %v2022, 127
    %v2101 = vpop.permute.xlu0 %2100
    %2102 = vrot.lane.b32.xlu0 %v2023, 127
    %v2103 = vpop.permute.xlu0 %2102
    %2104 = vrot.lane.b32.xlu0 %v2024, 127
    %v2105 = vpop.permute.xlu0 %2104
    %2106 = vrot.lane.b32.xlu0 %v2025, 127
    %v2107 = vpop.permute.xlu0 %2106
    %2108 = vrot.lane.b32.xlu0 %v2026, 127
    %v2109 = vpop.permute.xlu0 %2108
    %2110 = vrot.lane.b32.xlu0 %v2027, 127
    %v2111 = vpop.permute.xlu0 %2110
    %2112 = vrot.lane.b32.xlu0 %v2028, 127
    %v2113 = vpop.permute.xlu0 %2112
    %2114 = vrot.lane.b32.xlu0 %v2029, 127
    %v2115 = vpop.permute.xlu0 %2114
    %2116 = vrot.lane.b32.xlu0 %v2030, 127
    %v2117 = vpop.permute.xlu0 %2116
    %2118 = vrot.lane.b32.xlu0 %v2031, 127
    %v2119 = vpop.permute.xlu0 %2118
    %2120 = vrot.lane.b32.xlu0 %v2032, 127
    %v2121 = vpop.permute.xlu0 %2120
    %2122 = vrot.lane.b32.xlu0 %v2033, 127
    %v2123 = vpop.permute.xlu0 %2122
    %2124 = vrot.lane.b32.xlu0 %v2034, 127
    %v2125 = vpop.permute.xlu0 %2124
    %2126 = vrot.lane.b32.xlu0 %v2035, 127
    %v2127 = vpop.permute.xlu0 %2126
    %2128 = vrot.lane.b32.xlu0 %v2036, 127
    %v2129 = vpop.permute.xlu0 %2128
    %2130 = vrot.lane.b32.xlu0 %v2037, 127
    %v2131 = vpop.permute.xlu0 %2130
    %2132 = vrot.lane.b32.xlu0 %v2038, 127
    %v2133 = vpop.permute.xlu0 %2132
    %2134 = vrot.lane.b32.xlu0 %v2039, 127
    %v2135 = vpop.permute.xlu0 %2134
    %2136 = vrot.lane.b32.xlu0 %v2040, 127
    %v2137 = vpop.permute.xlu0 %2136
    %2138 = vrot.lane.b32.xlu0 %v2041, 127
    %v2139 = vpop.permute.xlu0 %2138
    %2140 = vrot.lane.b32.xlu0 %v2042, 127
    %v2141 = vpop.permute.xlu0 %2140
    %2142 = vrot.lane.b32.xlu0 %v2043, 127
    %v2143 = vpop.permute.xlu0 %2142
    %2144 = vrot.lane.b32.xlu0 %v2044, 127
    %v2145 = vpop.permute.xlu0 %2144
    %2146 = vrot.lane.b32.xlu0 %v2045, 127
    %v2147 = vpop.permute.xlu0 %2146
    %2148 = vrot.lane.b32.xlu0 %v2046, 127
    %v2149 = vpop.permute.xlu0 %2148
    %2150 = vrot.lane.b32.xlu0 %v2047, 127
    %v2151 = vpop.permute.xlu0 %2150
    %2152 = vrot.lane.b32.xlu0 %v2048, 127
    %v2153 = vpop.permute.xlu0 %2152
    %vm2154 = vcmask 1039360
    %v2155 = vsel %vm2154, %v2085, %v2087
    %v2156 = vsel %vm2154, %v2087, %v2089
    %v2157 = vsel %vm2154, %v2089, %v2091
    %v2158 = vsel %vm2154, %v2091, %v2093
    %v2159 = vsel %vm2154, %v2093, %v2095
    %v2160 = vsel %vm2154, %v2095, %v2097
    %v2161 = vsel %vm2154, %v2099, %v2101
    %v2162 = vsel %vm2154, %v2101, %v2103
    %v2163 = vsel %vm2154, %v2103, %v2105
    %v2164 = vsel %vm2154, %v2105, %v2107
    %v2165 = vsel %vm2154, %v2107, %v2109
    %v2166 = vsel %vm2154, %v2109, %v2111
    %v2167 = vsel %vm2154, %v2113, %v2115
    %v2168 = vsel %vm2154, %v2115, %v2117
    %v2169 = vsel %vm2154, %v2117, %v2119
    %v2170 = vsel %vm2154, %v2119, %v2121
    %v2171 = vsel %vm2154, %v2121, %v2123
    %v2172 = vsel %vm2154, %v2123, %v2125
    %v2173 = vsel %vm2154, %v2127, %v2129
    %v2174 = vsel %vm2154, %v2129, %v2131
    %v2175 = vsel %vm2154, %v2131, %v2133
    %v2176 = vsel %vm2154, %v2133, %v2135
    %v2177 = vsel %vm2154, %v2135, %v2137
    %v2178 = vsel %vm2154, %v2137, %v2139
    %v2179 = vsel %vm2154, %v2141, %v2143
    %v2180 = vsel %vm2154, %v2143, %v2145
    %v2181 = vsel %vm2154, %v2145, %v2147
    %v2182 = vsel %vm2154, %v2147, %v2149
    %v2183 = vsel %vm2154, %v2149, %v2151
    %v2184 = vsel %vm2154, %v2151, %v2153
    %2220 = vrot.lane.b32.xlu0 %v2014, 31
    %v2221 = vpop.permute.xlu0 %2220
    %2222 = vrot.lane.b32.xlu0 %v2021, 31
    %v2223 = vpop.permute.xlu0 %2222
    %2224 = vrot.lane.b32.xlu0 %v2028, 31
    %v2225 = vpop.permute.xlu0 %2224
    %2226 = vrot.lane.b32.xlu0 %v2035, 31
    %v2227 = vpop.permute.xlu0 %2226
    %2228 = vrot.lane.b32.xlu0 %v2042, 31
    %v2229 = vpop.permute.xlu0 %2228
    %vm2235 = vcmask 252928
    %v2236 = vsel %vm2235, %v2097, %v2221
    %v2237 = vsel %vm2235, %v2111, %v2223
    %v2238 = vsel %vm2235, %v2125, %v2225
    %v2239 = vsel %vm2235, %v2139, %v2227
    %v2240 = vsel %vm2235, %v2153, %v2229
    %v2241 = vmax.f32 %v2014, %v2155
    %v2242 = vmax.f32 %v2015, %v2156
    %v2243 = vmax.f32 %v2016, %v2157
    %v2244 = vmax.f32 %v2017, %v2158
    %v2245 = vmax.f32 %v2018, %v2159
    %v2246 = vmax.f32 %v2019, %v2160
    %v2247 = vmax.f32 %v2020, %v2236
    %v2248 = vmax.f32 %v2021, %v2161
    %v2249 = vmax.f32 %v2022, %v2162
    %v2250 = vmax.f32 %v2023, %v2163
    %v2251 = vmax.f32 %v2024, %v2164
    %v2252 = vmax.f32 %v2025, %v2165
    %v2253 = vmax.f32 %v2026, %v2166
    %v2254 = vmax.f32 %v2027, %v2237
    %v2255 = vmax.f32 %v2028, %v2167
    %v2256 = vmax.f32 %v2029, %v2168
    %v2257 = vmax.f32 %v2030, %v2169
    %v2258 = vmax.f32 %v2031, %v2170
    %v2259 = vmax.f32 %v2032, %v2171
    %v2260 = vmax.f32 %v2033, %v2172
    %v2261 = vmax.f32 %v2034, %v2238
    %v2262 = vmax.f32 %v2035, %v2173
    %v2263 = vmax.f32 %v2036, %v2174
    %v2264 = vmax.f32 %v2037, %v2175
    %v2265 = vmax.f32 %v2038, %v2176
    %v2266 = vmax.f32 %v2039, %v2177
    %v2267 = vmax.f32 %v2040, %v2178
    %v2268 = vmax.f32 %v2041, %v2239
    %v2269 = vmax.f32 %v2042, %v2179
    %v2270 = vmax.f32 %v2043, %v2180
    %v2271 = vmax.f32 %v2044, %v2181
    %v2272 = vmax.f32 %v2045, %v2182
    %v2273 = vmax.f32 %v2046, %v2183
    %v2274 = vmax.f32 %v2047, %v2184
    %v2275 = vmax.f32 %v2048, %v2240
    %vm2311 = vcmask 1040384
    %v2312 = vrot.slane %v2241, 7
    %v2313 = vrot.slane %v2242, 7
    %v2314 = vrot.slane %v2243, 7
    %v2315 = vrot.slane %v2244, 7
    %v2316 = vrot.slane %v2245, 7
    %v2317 = vrot.slane %v2246, 7
    %v2318 = vrot.slane %v2247, 7
    %v2319 = vrot.slane %v2248, 7
    %v2320 = vsel %vm2311, %v2312, %v2319
    %v2321 = vrot.slane %v2249, 7
    %v2322 = vsel %vm2311, %v2313, %v2321
    %v2323 = vrot.slane %v2250, 7
    %v2324 = vsel %vm2311, %v2314, %v2323
    %v2325 = vrot.slane %v2251, 7
    %v2326 = vsel %vm2311, %v2315, %v2325
    %v2327 = vrot.slane %v2252, 7
    %v2328 = vsel %vm2311, %v2316, %v2327
    %v2329 = vrot.slane %v2253, 7
    %v2330 = vsel %vm2311, %v2317, %v2329
    %v2331 = vrot.slane %v2254, 7
    %v2332 = vsel %vm2311, %v2318, %v2331
    %v2333 = vrot.slane %v2255, 7
    %v2334 = vsel %vm2311, %v2319, %v2333
    %v2335 = vrot.slane %v2256, 7
    %v2336 = vsel %vm2311, %v2321, %v2335
    %v2337 = vrot.slane %v2257, 7
    %v2338 = vsel %vm2311, %v2323, %v2337
    %v2339 = vrot.slane %v2258, 7
    %v2340 = vsel %vm2311, %v2325, %v2339
    %v2341 = vrot.slane %v2259, 7
    %v2342 = vsel %vm2311, %v2327, %v2341
    %v2343 = vrot.slane %v2260, 7
    %v2344 = vsel %vm2311, %v2329, %v2343
    %v2345 = vrot.slane %v2261, 7
    %v2346 = vsel %vm2311, %v2331, %v2345
    %v2347 = vrot.slane %v2262, 7
    %v2348 = vsel %vm2311, %v2333, %v2347
    %v2349 = vrot.slane %v2263, 7
    %v2350 = vsel %vm2311, %v2335, %v2349
    %v2351 = vrot.slane %v2264, 7
    %v2352 = vsel %vm2311, %v2337, %v2351
    %v2353 = vrot.slane %v2265, 7
    %v2354 = vsel %vm2311, %v2339, %v2353
    %v2355 = vrot.slane %v2266, 7
    %v2356 = vsel %vm2311, %v2341, %v2355
    %v2357 = vrot.slane %v2267, 7
    %v2358 = vsel %vm2311, %v2343, %v2357
    %v2359 = vrot.slane %v2268, 7
    %v2360 = vsel %vm2311, %v2345, %v2359
    %v2361 = vrot.slane %v2269, 7
    %v2362 = vsel %vm2311, %v2347, %v2361
    %v2363 = vrot.slane %v2270, 7
    %v2364 = vsel %vm2311, %v2349, %v2363
    %v2365 = vrot.slane %v2271, 7
    %v2366 = vsel %vm2311, %v2351, %v2365
    %v2367 = vrot.slane %v2272, 7
    %v2368 = vsel %vm2311, %v2353, %v2367
    %v2369 = vrot.slane %v2273, 7
    %v2370 = vsel %vm2311, %v2355, %v2369
    %v2371 = vrot.slane %v2274, 7
    %v2372 = vsel %vm2311, %v2357, %v2371
    %v2373 = vrot.slane %v2275, 7
    %v2374 = vsel %vm2311, %v2359, %v2373
    %v2410 = vsel %vm2311, 0.0, %v2312
    %v2411 = vsel %vm2311, 0.0, %v2313
    %v2412 = vsel %vm2311, 0.0, %v2314
    %v2413 = vsel %vm2311, 0.0, %v2315
    %v2414 = vsel %vm2311, 0.0, %v2316
    %v2415 = vsel %vm2311, 0.0, %v2317
    %v2416 = vsel %vm2311, 0.0, %v2318
    %v2417 = vld [vmem:[%s6] sm:$0xff]
    %v2418 = vld [vmem:[%s6 + $0x8] sm:$0xff]
    %v2419 = vld [vmem:[%s6 + $0x10] sm:$0xff]
    %v2420 = vld [vmem:[%s6 + $0x18] sm:$0xff]
    %v2421 = vld [vmem:[%s6 + $0x20] sm:$0xff]
    %2423 = vset.pattern.permute.xlu0 0
    %2424 = vperm.xlu0 %2423, %v2417
    %v2425 = vpop.permute.xlu0 %2424
    %2428 = vset.pattern.permute.xlu0 0
    %2429 = vperm.xlu0 %2428, %v2418
    %v2430 = vpop.permute.xlu0 %2429
    %2433 = vset.pattern.permute.xlu0 0
    %2434 = vperm.xlu0 %2433, %v2419
    %v2435 = vpop.permute.xlu0 %2434
    %2438 = vset.pattern.permute.xlu0 0
    %2439 = vperm.xlu0 %2438, %v2420
    %v2440 = vpop.permute.xlu0 %2439
    %2443 = vset.pattern.permute.xlu0 0
    %2444 = vperm.xlu0 %2443, %v2421
    %v2445 = vpop.permute.xlu0 %2444
    %v2447 = vmul.f32 %v2410, %v2425
    %v2448 = vmul.f32 %v2411, %v2425
    %v2449 = vmul.f32 %v2412, %v2425
    %v2450 = vmul.f32 %v2413, %v2425
    %v2451 = vmul.f32 %v2414, %v2425
    %v2452 = vmul.f32 %v2415, %v2425
    %v2453 = vmul.f32 %v2416, %v2425
    %v2454 = vmul.f32 %v2320, %v2430
    %v2455 = vmul.f32 %v2322, %v2430
    %v2456 = vmul.f32 %v2324, %v2430
    %v2457 = vmul.f32 %v2326, %v2430
    %v2458 = vmul.f32 %v2328, %v2430
    %v2459 = vmul.f32 %v2330, %v2430
    %v2460 = vmul.f32 %v2332, %v2430
    %v2461 = vmul.f32 %v2334, %v2435
    %v2462 = vmul.f32 %v2336, %v2435
    %v2463 = vmul.f32 %v2338, %v2435
    %v2464 = vmul.f32 %v2340, %v2435
    %v2465 = vmul.f32 %v2342, %v2435
    %v2466 = vmul.f32 %v2344, %v2435
    %v2467 = vmul.f32 %v2346, %v2435
    %v2468 = vmul.f32 %v2348, %v2440
    %v2469 = vmul.f32 %v2350, %v2440
    %v2470 = vmul.f32 %v2352, %v2440
    %v2471 = vmul.f32 %v2354, %v2440
    %v2472 = vmul.f32 %v2356, %v2440
    %v2473 = vmul.f32 %v2358, %v2440
    %v2474 = vmul.f32 %v2360, %v2440
    %v2475 = vmul.f32 %v2362, %v2445
    %v2476 = vmul.f32 %v2364, %v2445
    %v2477 = vmul.f32 %v2366, %v2445
    %v2478 = vmul.f32 %v2368, %v2445
    %v2479 = vmul.f32 %v2370, %v2445
    %v2480 = vmul.f32 %v2372, %v2445
    %v2481 = vmul.f32 %v2374, %v2445
    %vm2482 = vcmask 1046528
    %v2483 = vrot.slane %v2241, 1
    %v2484 = vrot.slane %v2248, 1
    %v2485 = vsel %vm2482, %v2483, %v2484
    %v2486 = vrot.slane %v2242, 1
    %v2487 = vrot.slane %v2249, 1
    %v2488 = vsel %vm2482, %v2486, %v2487
    %v2489 = vrot.slane %v2243, 1
    %v2490 = vrot.slane %v2250, 1
    %v2491 = vsel %vm2482, %v2489, %v2490
    %v2492 = vrot.slane %v2244, 1
    %v2493 = vrot.slane %v2251, 1
    %v2494 = vsel %vm2482, %v2492, %v2493
    %v2495 = vrot.slane %v2245, 1
    %v2496 = vrot.slane %v2252, 1
    %v2497 = vsel %vm2482, %v2495, %v2496
    %v2498 = vrot.slane %v2246, 1
    %v2499 = vrot.slane %v2253, 1
    %v2500 = vsel %vm2482, %v2498, %v2499
    %v2501 = vrot.slane %v2247, 1
    %v2502 = vrot.slane %v2254, 1
    %v2503 = vsel %vm2482, %v2501, %v2502
    %v2504 = vrot.slane %v2255, 1
    %v2505 = vsel %vm2482, %v2484, %v2504
    %v2506 = vrot.slane %v2256, 1
    %v2507 = vsel %vm2482, %v2487, %v2506
    %v2508 = vrot.slane %v2257, 1
    %v2509 = vsel %vm2482, %v2490, %v2508
    %v2510 = vrot.slane %v2258, 1
    %v2511 = vsel %vm2482, %v2493, %v2510
    %v2512 = vrot.slane %v2259, 1
    %v2513 = vsel %vm2482, %v2496, %v2512
    %v2514 = vrot.slane %v2260, 1
    %v2515 = vsel %vm2482, %v2499, %v2514
    %v2516 = vrot.slane %v2261, 1
    %v2517 = vsel %vm2482, %v2502, %v2516
    %v2518 = vrot.slane %v2262, 1
    %v2519 = vsel %vm2482, %v2504, %v2518
    %v2520 = vrot.slane %v2263, 1
    %v2521 = vsel %vm2482, %v2506, %v2520
    %v2522 = vrot.slane %v2264, 1
    %v2523 = vsel %vm2482, %v2508, %v2522
    %v2524 = vrot.slane %v2265, 1
    %v2525 = vsel %vm2482, %v2510, %v2524
    %v2526 = vrot.slane %v2266, 1
    %v2527 = vsel %vm2482, %v2512, %v2526
    %v2528 = vrot.slane %v2267, 1
    %v2529 = vsel %vm2482, %v2514, %v2528
    %v2530 = vrot.slane %v2268, 1
    %v2531 = vsel %vm2482, %v2516, %v2530
    %v2532 = vrot.slane %v2269, 1
    %v2533 = vsel %vm2482, %v2518, %v2532
    %v2534 = vrot.slane %v2270, 1
    %v2535 = vsel %vm2482, %v2520, %v2534
    %v2536 = vrot.slane %v2271, 1
    %v2537 = vsel %vm2482, %v2522, %v2536
    %v2538 = vrot.slane %v2272, 1
    %v2539 = vsel %vm2482, %v2524, %v2538
    %v2540 = vrot.slane %v2273, 1
    %v2541 = vsel %vm2482, %v2526, %v2540
    %v2542 = vrot.slane %v2274, 1
    %v2543 = vsel %vm2482, %v2528, %v2542
    %v2544 = vrot.slane %v2275, 1
    %v2545 = vsel %vm2482, %v2530, %v2544
    %v2581 = vsel %vm2482, %v2532, 0.0
    %v2582 = vsel %vm2482, %v2534, 0.0
    %v2583 = vsel %vm2482, %v2536, 0.0
    %v2584 = vsel %vm2482, %v2538, 0.0
    %v2585 = vsel %vm2482, %v2540, 0.0
    %v2586 = vsel %vm2482, %v2542, 0.0
    %v2587 = vsel %vm2482, %v2544, 0.0
    %v2588 = vld [vmem:[%s7] sm:$0xff]
    %v2589 = vld [vmem:[%s7 + $0x8] sm:$0xff]
    %v2590 = vld [vmem:[%s7 + $0x10] sm:$0xff]
    %v2591 = vld [vmem:[%s7 + $0x18] sm:$0xff]
    %v2592 = vld [vmem:[%s7 + $0x20] sm:$0xff]
    %2594 = vset.pattern.permute.xlu0 0
    %2595 = vperm.xlu0 %2594, %v2588
    %v2596 = vpop.permute.xlu0 %2595
    %2599 = vset.pattern.permute.xlu0 0
    %2600 = vperm.xlu0 %2599, %v2589
    %v2601 = vpop.permute.xlu0 %2600
    %2604 = vset.pattern.permute.xlu0 0
    %2605 = vperm.xlu0 %2604, %v2590
    %v2606 = vpop.permute.xlu0 %2605
    %2609 = vset.pattern.permute.xlu0 0
    %2610 = vperm.xlu0 %2609, %v2591
    %v2611 = vpop.permute.xlu0 %2610
    %2614 = vset.pattern.permute.xlu0 0
    %2615 = vperm.xlu0 %2614, %v2592
    %v2616 = vpop.permute.xlu0 %2615
    %v2618 = vmul.f32 %v2485, %v2596
    %v2619 = vmul.f32 %v2488, %v2596
    %v2620 = vmul.f32 %v2491, %v2596
    %v2621 = vmul.f32 %v2494, %v2596
    %v2622 = vmul.f32 %v2497, %v2596
    %v2623 = vmul.f32 %v2500, %v2596
    %v2624 = vmul.f32 %v2503, %v2596
    %v2625 = vmul.f32 %v2505, %v2601
    %v2626 = vmul.f32 %v2507, %v2601
    %v2627 = vmul.f32 %v2509, %v2601
    %v2628 = vmul.f32 %v2511, %v2601
    %v2629 = vmul.f32 %v2513, %v2601
    %v2630 = vmul.f32 %v2515, %v2601
    %v2631 = vmul.f32 %v2517, %v2601
    %v2632 = vmul.f32 %v2519, %v2606
    %v2633 = vmul.f32 %v2521, %v2606
    %v2634 = vmul.f32 %v2523, %v2606
    %v2635 = vmul.f32 %v2525, %v2606
    %v2636 = vmul.f32 %v2527, %v2606
    %v2637 = vmul.f32 %v2529, %v2606
    %v2638 = vmul.f32 %v2531, %v2606
    %v2639 = vmul.f32 %v2533, %v2611
    %v2640 = vmul.f32 %v2535, %v2611
    %v2641 = vmul.f32 %v2537, %v2611
    %v2642 = vmul.f32 %v2539, %v2611
    %v2643 = vmul.f32 %v2541, %v2611
    %v2644 = vmul.f32 %v2543, %v2611
    %v2645 = vmul.f32 %v2545, %v2611
    %v2646 = vmul.f32 %v2581, %v2616
    %v2647 = vmul.f32 %v2582, %v2616
    %v2648 = vmul.f32 %v2583, %v2616
    %v2649 = vmul.f32 %v2584, %v2616
    %v2650 = vmul.f32 %v2585, %v2616
    %v2651 = vmul.f32 %v2586, %v2616
    %v2652 = vmul.f32 %v2587, %v2616
    %2653 = vrot.lane.b32.xlu0 %v2241, 32
    %v2654 = vpop.permute.xlu0 %2653
    %2655 = vrot.lane.b32.xlu0 %v2242, 32
    %v2656 = vpop.permute.xlu0 %2655
    %2657 = vrot.lane.b32.xlu0 %v2243, 32
    %v2658 = vpop.permute.xlu0 %2657
    %2659 = vrot.lane.b32.xlu0 %v2244, 32
    %v2660 = vpop.permute.xlu0 %2659
    %2661 = vrot.lane.b32.xlu0 %v2245, 32
    %v2662 = vpop.permute.xlu0 %2661
    %2663 = vrot.lane.b32.xlu0 %v2246, 32
    %v2664 = vpop.permute.xlu0 %2663
    %2665 = vrot.lane.b32.xlu0 %v2247, 32
    %v2666 = vpop.permute.xlu0 %2665
    %2667 = vrot.lane.b32.xlu0 %v2248, 32
    %v2668 = vpop.permute.xlu0 %2667
    %2669 = vrot.lane.b32.xlu0 %v2249, 32
    %v2670 = vpop.permute.xlu0 %2669
    %2671 = vrot.lane.b32.xlu0 %v2250, 32
    %v2672 = vpop.permute.xlu0 %2671
    %2673 = vrot.lane.b32.xlu0 %v2251, 32
    %v2674 = vpop.permute.xlu0 %2673
    %2675 = vrot.lane.b32.xlu0 %v2252, 32
    %v2676 = vpop.permute.xlu0 %2675
    %2677 = vrot.lane.b32.xlu0 %v2253, 32
    %v2678 = vpop.permute.xlu0 %2677
    %2679 = vrot.lane.b32.xlu0 %v2254, 32
    %v2680 = vpop.permute.xlu0 %2679
    %2681 = vrot.lane.b32.xlu0 %v2255, 32
    %v2682 = vpop.permute.xlu0 %2681
    %2683 = vrot.lane.b32.xlu0 %v2256, 32
    %v2684 = vpop.permute.xlu0 %2683
    %2685 = vrot.lane.b32.xlu0 %v2257, 32
    %v2686 = vpop.permute.xlu0 %2685
    %2687 = vrot.lane.b32.xlu0 %v2258, 32
    %v2688 = vpop.permute.xlu0 %2687
    %2689 = vrot.lane.b32.xlu0 %v2259, 32
    %v2690 = vpop.permute.xlu0 %2689
    %2691 = vrot.lane.b32.xlu0 %v2260, 32
    %v2692 = vpop.permute.xlu0 %2691
    %2693 = vrot.lane.b32.xlu0 %v2261, 32
    %v2694 = vpop.permute.xlu0 %2693
    %2695 = vrot.lane.b32.xlu0 %v2262, 32
    %v2696 = vpop.permute.xlu0 %2695
    %2697 = vrot.lane.b32.xlu0 %v2263, 32
    %v2698 = vpop.permute.xlu0 %2697
    %2699 = vrot.lane.b32.xlu0 %v2264, 32
    %v2700 = vpop.permute.xlu0 %2699
    %2701 = vrot.lane.b32.xlu0 %v2265, 32
    %v2702 = vpop.permute.xlu0 %2701
    %2703 = vrot.lane.b32.xlu0 %v2266, 32
    %v2704 = vpop.permute.xlu0 %2703
    %2705 = vrot.lane.b32.xlu0 %v2267, 32
    %v2706 = vpop.permute.xlu0 %2705
    %2707 = vrot.lane.b32.xlu0 %v2268, 32
    %v2708 = vpop.permute.xlu0 %2707
    %2709 = vrot.lane.b32.xlu0 %v2269, 32
    %v2710 = vpop.permute.xlu0 %2709
    %2711 = vrot.lane.b32.xlu0 %v2270, 32
    %v2712 = vpop.permute.xlu0 %2711
    %2713 = vrot.lane.b32.xlu0 %v2271, 32
    %v2714 = vpop.permute.xlu0 %2713
    %2715 = vrot.lane.b32.xlu0 %v2272, 32
    %v2716 = vpop.permute.xlu0 %2715
    %2717 = vrot.lane.b32.xlu0 %v2273, 32
    %v2718 = vpop.permute.xlu0 %2717
    %2719 = vrot.lane.b32.xlu0 %v2274, 32
    %v2720 = vpop.permute.xlu0 %2719
    %2721 = vrot.lane.b32.xlu0 %v2275, 32
    %v2722 = vpop.permute.xlu0 %2721
    %vm2723 = vcmask 261120
    %v2724 = vsel %vm2723, %v2654, %v2656
    %v2725 = vsel %vm2723, %v2656, %v2658
    %v2726 = vsel %vm2723, %v2658, %v2660
    %v2727 = vsel %vm2723, %v2660, %v2662
    %v2728 = vsel %vm2723, %v2662, %v2664
    %v2729 = vsel %vm2723, %v2664, %v2666
    %v2730 = vsel %vm2723, %v2668, %v2670
    %v2731 = vsel %vm2723, %v2670, %v2672
    %v2732 = vsel %vm2723, %v2672, %v2674
    %v2733 = vsel %vm2723, %v2674, %v2676
    %v2734 = vsel %vm2723, %v2676, %v2678
    %v2735 = vsel %vm2723, %v2678, %v2680
    %v2736 = vsel %vm2723, %v2682, %v2684
    %v2737 = vsel %vm2723, %v2684, %v2686
    %v2738 = vsel %vm2723, %v2686, %v2688
    %v2739 = vsel %vm2723, %v2688, %v2690
    %v2740 = vsel %vm2723, %v2690, %v2692
    %v2741 = vsel %vm2723, %v2692, %v2694
    %v2742 = vsel %vm2723, %v2696, %v2698
    %v2743 = vsel %vm2723, %v2698, %v2700
    %v2744 = vsel %vm2723, %v2700, %v2702
    %v2745 = vsel %vm2723, %v2702, %v2704
    %v2746 = vsel %vm2723, %v2704, %v2706
    %v2747 = vsel %vm2723, %v2706, %v2708
    %v2748 = vsel %vm2723, %v2710, %v2712
    %v2749 = vsel %vm2723, %v2712, %v2714
    %v2750 = vsel %vm2723, %v2714, %v2716
    %v2751 = vsel %vm2723, %v2716, %v2718
    %v2752 = vsel %vm2723, %v2718, %v2720
    %v2753 = vsel %vm2723, %v2720, %v2722
    %2824 = vrot.lane.b32.xlu0 %v2618, 64
    %v2825 = vpop.permute.xlu0 %2824
    %2826 = vrot.lane.b32.xlu0 %v2619, 64
    %v2827 = vpop.permute.xlu0 %2826
    %2828 = vrot.lane.b32.xlu0 %v2620, 64
    %v2829 = vpop.permute.xlu0 %2828
    %2830 = vrot.lane.b32.xlu0 %v2621, 64
    %v2831 = vpop.permute.xlu0 %2830
    %2832 = vrot.lane.b32.xlu0 %v2622, 64
    %v2833 = vpop.permute.xlu0 %2832
    %2834 = vrot.lane.b32.xlu0 %v2623, 64
    %v2835 = vpop.permute.xlu0 %2834
    %2836 = vrot.lane.b32.xlu0 %v2624, 64
    %v2837 = vpop.permute.xlu0 %2836
    %2838 = vrot.lane.b32.xlu0 %v2625, 64
    %v2839 = vpop.permute.xlu0 %2838
    %2840 = vrot.lane.b32.xlu0 %v2626, 64
    %v2841 = vpop.permute.xlu0 %2840
    %2842 = vrot.lane.b32.xlu0 %v2627, 64
    %v2843 = vpop.permute.xlu0 %2842
    %2844 = vrot.lane.b32.xlu0 %v2628, 64
    %v2845 = vpop.permute.xlu0 %2844
    %2846 = vrot.lane.b32.xlu0 %v2629, 64
    %v2847 = vpop.permute.xlu0 %2846
    %2848 = vrot.lane.b32.xlu0 %v2630, 64
    %v2849 = vpop.permute.xlu0 %2848
    %2850 = vrot.lane.b32.xlu0 %v2631, 64
    %v2851 = vpop.permute.xlu0 %2850
    %2852 = vrot.lane.b32.xlu0 %v2632, 64
    %v2853 = vpop.permute.xlu0 %2852
    %2854 = vrot.lane.b32.xlu0 %v2633, 64
    %v2855 = vpop.permute.xlu0 %2854
    %2856 = vrot.lane.b32.xlu0 %v2634, 64
    %v2857 = vpop.permute.xlu0 %2856
    %2858 = vrot.lane.b32.xlu0 %v2635, 64
    %v2859 = vpop.permute.xlu0 %2858
    %2860 = vrot.lane.b32.xlu0 %v2636, 64
    %v2861 = vpop.permute.xlu0 %2860
    %2862 = vrot.lane.b32.xlu0 %v2637, 64
    %v2863 = vpop.permute.xlu0 %2862
    %2864 = vrot.lane.b32.xlu0 %v2638, 64
    %v2865 = vpop.permute.xlu0 %2864
    %2866 = vrot.lane.b32.xlu0 %v2639, 64
    %v2867 = vpop.permute.xlu0 %2866
    %2868 = vrot.lane.b32.xlu0 %v2640, 64
    %v2869 = vpop.permute.xlu0 %2868
    %2870 = vrot.lane.b32.xlu0 %v2641, 64
    %v2871 = vpop.permute.xlu0 %2870
    %2872 = vrot.lane.b32.xlu0 %v2642, 64
    %v2873 = vpop.permute.xlu0 %2872
    %2874 = vrot.lane.b32.xlu0 %v2643, 64
    %v2875 = vpop.permute.xlu0 %2874
    %2876 = vrot.lane.b32.xlu0 %v2644, 64
    %v2877 = vpop.permute.xlu0 %2876
    %2878 = vrot.lane.b32.xlu0 %v2645, 64
    %v2879 = vpop.permute.xlu0 %2878
    %2880 = vrot.lane.b32.xlu0 %v2646, 64
    %v2881 = vpop.permute.xlu0 %2880
    %2882 = vrot.lane.b32.xlu0 %v2647, 64
    %v2883 = vpop.permute.xlu0 %2882
    %2884 = vrot.lane.b32.xlu0 %v2648, 64
    %v2885 = vpop.permute.xlu0 %2884
    %2886 = vrot.lane.b32.xlu0 %v2649, 64
    %v2887 = vpop.permute.xlu0 %2886
    %2888 = vrot.lane.b32.xlu0 %v2650, 64
    %v2889 = vpop.permute.xlu0 %2888
    %2890 = vrot.lane.b32.xlu0 %v2651, 64
    %v2891 = vpop.permute.xlu0 %2890
    %2892 = vrot.lane.b32.xlu0 %v2652, 64
    %v2893 = vpop.permute.xlu0 %2892
    %vm2894 = vcmask 523264
    %v2895 = vsel %vm2894, %v2825, %v2827
    %v2896 = vsel %vm2894, %v2827, %v2829
    %v2897 = vsel %vm2894, %v2829, %v2831
    %v2898 = vsel %vm2894, %v2831, %v2833
    %v2899 = vsel %vm2894, %v2833, %v2835
    %v2900 = vsel %vm2894, %v2835, %v2837
    %v2901 = vsel %vm2894, %v2839, %v2841
    %v2902 = vsel %vm2894, %v2841, %v2843
    %v2903 = vsel %vm2894, %v2843, %v2845
    %v2904 = vsel %vm2894, %v2845, %v2847
    %v2905 = vsel %vm2894, %v2847, %v2849
    %v2906 = vsel %vm2894, %v2849, %v2851
    %v2907 = vsel %vm2894, %v2853, %v2855
    %v2908 = vsel %vm2894, %v2855, %v2857
    %v2909 = vsel %vm2894, %v2857, %v2859
    %v2910 = vsel %vm2894, %v2859, %v2861
    %v2911 = vsel %vm2894, %v2861, %v2863
    %v2912 = vsel %vm2894, %v2863, %v2865
    %v2913 = vsel %vm2894, %v2867, %v2869
    %v2914 = vsel %vm2894, %v2869, %v2871
    %v2915 = vsel %vm2894, %v2871, %v2873
    %v2916 = vsel %vm2894, %v2873, %v2875
    %v2917 = vsel %vm2894, %v2875, %v2877
    %v2918 = vsel %vm2894, %v2877, %v2879
    %v2919 = vsel %vm2894, %v2881, %v2883
    %v2920 = vsel %vm2894, %v2883, %v2885
    %v2921 = vsel %vm2894, %v2885, %v2887
    %v2922 = vsel %vm2894, %v2887, %v2889
    %v2923 = vsel %vm2894, %v2889, %v2891
    %v2924 = vsel %vm2894, %v2891, %v2893
    %v2955 = vsel %vm2723, %v2453, %v2654
    %v2956 = vsel %vm2723, %v2460, %v2668
    %v2957 = vsel %vm2723, %v2467, %v2682
    %v2958 = vsel %vm2723, %v2474, %v2696
    %v2959 = vsel %vm2723, %v2481, %v2710
    %v2960 = vsel %vm2894, %v2729, %v2825
    %v2961 = vsel %vm2894, %v2735, %v2839
    %v2962 = vsel %vm2894, %v2741, %v2853
    %v2963 = vsel %vm2894, %v2747, %v2867
    %v2964 = vsel %vm2894, %v2753, %v2881
    %v2965 = vld [vmem:[%s4] sm:$0xff]
    %v2966 = vld [vmem:[%s4 + $0x8] sm:$0xff]
    %v2967 = vld [vmem:[%s4 + $0x10] sm:$0xff]
    %v2968 = vld [vmem:[%s4 + $0x18] sm:$0xff]
    %v2969 = vld [vmem:[%s4 + $0x20] sm:$0xff]
    %v2970 = vld [vmem:[%s4 + $0x28] sm:$0xff]
    %v2971 = vld [vmem:[%s4 + $0x30] sm:$0xff]
    %v2972 = vld [vmem:[%s4 + $0x38] sm:$0xff]
    %v2973 = vld [vmem:[%s4 + $0x40] sm:$0xff]
    %v2974 = vld [vmem:[%s4 + $0x48] sm:$0xff]
    %v2975 = vld [vmem:[%s4 + $0x50] sm:$0xff]
    %v2976 = vld [vmem:[%s4 + $0x58] sm:$0xff]
    %v2977 = vld [vmem:[%s4 + $0x60] sm:$0xff]
    %v2978 = vld [vmem:[%s4 + $0x68] sm:$0xff]
    %v2979 = vld [vmem:[%s4 + $0x70] sm:$0xff]
    %v2980 = vld [vmem:[%s4 + $0x78] sm:$0xff]
    %v2981 = vld [vmem:[%s4 + $0x80] sm:$0xff]
    %v2982 = vld [vmem:[%s4 + $0x88] sm:$0xff]
    %v2983 = vld [vmem:[%s4 + $0x90] sm:$0xff]
    %v2984 = vld [vmem:[%s4 + $0x98] sm:$0xff]
    %v2985 = vld [vmem:[%s4 + $0xa0] sm:$0xff]
    %v2986 = vld [vmem:[%s4 + $0xa8] sm:$0xff]
    %v2987 = vld [vmem:[%s4 + $0xb0] sm:$0xff]
    %v2988 = vld [vmem:[%s4 + $0xb8] sm:$0xff]
    %v2989 = vld [vmem:[%s4 + $0xc0] sm:$0xff]
    %v2990 = vld [vmem:[%s4 + $0xc8] sm:$0xff]
    %v2991 = vld [vmem:[%s4 + $0xd0] sm:$0xff]
    %v2992 = vld [vmem:[%s4 + $0xd8] sm:$0xff]
    %v2993 = vld [vmem:[%s4 + $0xe0] sm:$0xff]
    %v2994 = vld [vmem:[%s4 + $0xe8] sm:$0xff]
    %v2995 = vld [vmem:[%s4 + $0xf0] sm:$0xff]
    %v2996 = vld [vmem:[%s4 + $0xf8] sm:$0xff]
    %v2997 = vld [vmem:[%s4 + $0x100] sm:$0xff]
    %v2998 = vld [vmem:[%s4 + $0x108] sm:$0xff]
    %v2999 = vld [vmem:[%s4 + $0x110] sm:$0xff]
    %v3000 = vld [vmem:[%s4 + $0x118] sm:$0xff]
    %v3001 = vld [vmem:[%s4 + $0x120] sm:$0xff]
    %v3002 = vld [vmem:[%s4 + $0x128] sm:$0xff]
    %v3003 = vld [vmem:[%s4 + $0x130] sm:$0xff]
    %v3004 = vld [vmem:[%s4 + $0x138] sm:$0xff]
    %v3005 = vld [vmem:[%s4 + $0x140] sm:$0xff]
    %v3006 = vld [vmem:[%s4 + $0x148] sm:$0xff]
    %v3007 = vld [vmem:[%s4 + $0x150] sm:$0xff]
    %v3008 = vld [vmem:[%s4 + $0x158] sm:$0xff]
    %v3009 = vld [vmem:[%s4 + $0x160] sm:$0xff]
    %v3010 = vld [vmem:[%s4 + $0x168] sm:$0xff]
    %v3011 = vld [vmem:[%s4 + $0x170] sm:$0xff]
    %v3012 = vld [vmem:[%s4 + $0x178] sm:$0xff]
    %v3013 = vld [vmem:[%s4 + $0x180] sm:$0xff]
    %v3014 = vld [vmem:[%s4 + $0x188] sm:$0xff]
    %v3015 = vld [vmem:[%s4 + $0x190] sm:$0xff]
    %v3016 = vld [vmem:[%s4 + $0x198] sm:$0xff]
    %v3017 = vld [vmem:[%s4 + $0x1a0] sm:$0xff]
    %v3018 = vld [vmem:[%s4 + $0x1a8] sm:$0xff]
    %v3019 = vld [vmem:[%s4 + $0x1b0] sm:$0xff]
    %v3020 = vld [vmem:[%s4 + $0x1b8] sm:$0xff]
    %v3021 = vld [vmem:[%s4 + $0x1c0] sm:$0xff]
    %v3022 = vld [vmem:[%s4 + $0x1c8] sm:$0xff]
    %v3023 = vld [vmem:[%s4 + $0x1d0] sm:$0xff]
    %v3024 = vld [vmem:[%s4 + $0x1d8] sm:$0xff]
    %v3025 = vld [vmem:[%s4 + $0x1e0] sm:$0xff]
    %v3026 = vld [vmem:[%s4 + $0x1e8] sm:$0xff]
    %v3027 = vld [vmem:[%s4 + $0x1f0] sm:$0xff]
    %v3028 = vld [vmem:[%s4 + $0x1f8] sm:$0xff]
    %v3029 = vld [vmem:[%s4 + $0x200] sm:$0xff]
    %v3030 = vld [vmem:[%s4 + $0x208] sm:$0xff]
    %v3031 = vld [vmem:[%s4 + $0x210] sm:$0xff]
    %v3032 = vld [vmem:[%s4 + $0x218] sm:$0xff]
    %v3033 = vld [vmem:[%s4 + $0x220] sm:$0xff]
    %v3034 = vld [vmem:[%s4 + $0x228] sm:$0xff]
    %v3035 = vld [vmem:[%s4 + $0x230] sm:$0xff]
    %v3036 = vld [vmem:[%s4 + $0x238] sm:$0xff]
    %v3037 = vld [vmem:[%s4 + $0x240] sm:$0xff]
    %v3038 = vld [vmem:[%s4 + $0x248] sm:$0xff]
    %v3039 = vld [vmem:[%s4 + $0x250] sm:$0xff]
    %v3040 = vld [vmem:[%s4 + $0x258] sm:$0xff]
    %v3041 = vld [vmem:[%s4 + $0x260] sm:$0xff]
    %v3042 = vld [vmem:[%s4 + $0x268] sm:$0xff]
    %v3043 = vld [vmem:[%s4 + $0x270] sm:$0xff]
    %v3044 = vld [vmem:[%s4 + $0x278] sm:$0xff]
    %v3045 = vld [vmem:[%s4 + $0x280] sm:$0xff]
    %v3046 = vld [vmem:[%s4 + $0x288] sm:$0xff]
    %v3047 = vld [vmem:[%s4 + $0x290] sm:$0xff]
    %v3048 = vld [vmem:[%s4 + $0x298] sm:$0xff]
    %v3049 = vld [vmem:[%s4 + $0x2a0] sm:$0xff]
    %v3050 = vld [vmem:[%s4 + $0x2a8] sm:$0xff]
    %v3051 = vld [vmem:[%s4 + $0x2b0] sm:$0xff]
    %v3052 = vld [vmem:[%s4 + $0x2b8] sm:$0xff]
    %v3053 = vld [vmem:[%s4 + $0x2c0] sm:$0xff]
    %v3054 = vld [vmem:[%s4 + $0x2c8] sm:$0xff]
    %v3055 = vld [vmem:[%s4 + $0x2d0] sm:$0xff]
    %v3056 = vld [vmem:[%s4 + $0x2d8] sm:$0xff]
    %v3057 = vld [vmem:[%s4 + $0x2e0] sm:$0xff]
    %v3058 = vld [vmem:[%s4 + $0x2e8] sm:$0xff]
    %v3059 = vld [vmem:[%s4 + $0x2f0] sm:$0xff]
    %v3060 = vld [vmem:[%s4 + $0x2f8] sm:$0xff]
    %v3061 = vld [vmem:[%s4 + $0x300] sm:$0xff]
    %v3062 = vld [vmem:[%s4 + $0x308] sm:$0xff]
    %v3063 = vld [vmem:[%s4 + $0x310] sm:$0xff]
    %v3064 = vld [vmem:[%s4 + $0x318] sm:$0xff]
    %v3065 = vld [vmem:[%s4 + $0x320] sm:$0xff]
    %v3066 = vld [vmem:[%s4 + $0x328] sm:$0xff]
    %v3067 = vld [vmem:[%s4 + $0x330] sm:$0xff]
    %v3068 = vld [vmem:[%s4 + $0x338] sm:$0xff]
    %v3069 = vld [vmem:[%s4 + $0x340] sm:$0xff]
    %v3070 = vld [vmem:[%s4 + $0x348] sm:$0xff]
    %v3071 = vld [vmem:[%s4 + $0x350] sm:$0xff]
    %v3072 = vld [vmem:[%s4 + $0x358] sm:$0xff]
    %v3073 = vld [vmem:[%s4 + $0x360] sm:$0xff]
    %v3074 = vld [vmem:[%s4 + $0x368] sm:$0xff]
    %v3075 = vld [vmem:[%s4 + $0x370] sm:$0xff]
    %v3076 = vld [vmem:[%s4 + $0x378] sm:$0xff]
    %v3077 = vld [vmem:[%s4 + $0x380] sm:$0xff]
    %v3078 = vld [vmem:[%s4 + $0x388] sm:$0xff]
    %v3079 = vld [vmem:[%s4 + $0x390] sm:$0xff]
    %v3080 = vld [vmem:[%s4 + $0x398] sm:$0xff]
    %v3081 = vld [vmem:[%s4 + $0x3a0] sm:$0xff]
    %v3082 = vld [vmem:[%s4 + $0x3a8] sm:$0xff]
    %v3083 = vld [vmem:[%s4 + $0x3b0] sm:$0xff]
    %v3084 = vld [vmem:[%s4 + $0x3b8] sm:$0xff]
    %v3085 = vld [vmem:[%s4 + $0x3c0] sm:$0xff]
    %v3086 = vld [vmem:[%s4 + $0x3c8] sm:$0xff]
    %v3087 = vld [vmem:[%s4 + $0x3d0] sm:$0xff]
    %v3088 = vld [vmem:[%s4 + $0x3d8] sm:$0xff]
    %v3089 = vld [vmem:[%s4 + $0x3e0] sm:$0xff]
    %v3090 = vld [vmem:[%s4 + $0x3e8] sm:$0xff]
    %v3091 = vld [vmem:[%s4 + $0x3f0] sm:$0xff]
    %v3092 = vld [vmem:[%s4 + $0x3f8] sm:$0xff]
    %v3093 = vld [vmem:[%s4 + $0x400] sm:$0xff]
    %v3094 = vld [vmem:[%s4 + $0x408] sm:$0xff]
    %v3095 = vld [vmem:[%s4 + $0x410] sm:$0xff]
    %v3096 = vld [vmem:[%s4 + $0x418] sm:$0xff]
    %v3097 = vld [vmem:[%s4 + $0x420] sm:$0xff]
    %v3098 = vld [vmem:[%s4 + $0x428] sm:$0xff]
    %v3099 = vld [vmem:[%s4 + $0x430] sm:$0xff]
    %v3100 = vld [vmem:[%s4 + $0x438] sm:$0xff]
    %v3101 = vld [vmem:[%s4 + $0x440] sm:$0xff]
    %v3102 = vld [vmem:[%s4 + $0x448] sm:$0xff]
    %v3103 = vld [vmem:[%s4 + $0x450] sm:$0xff]
    %v3104 = vld [vmem:[%s4 + $0x458] sm:$0xff]
    %v3105 = vld [vmem:[%s4 + $0x460] sm:$0xff]
    %v3106 = vld [vmem:[%s4 + $0x468] sm:$0xff]
    %v3107 = vld [vmem:[%s4 + $0x470] sm:$0xff]
    %v3108 = vld [vmem:[%s4 + $0x478] sm:$0xff]
    %v3109 = vld [vmem:[%s4 + $0x480] sm:$0xff]
    %v3110 = vld [vmem:[%s4 + $0x488] sm:$0xff]
    %v3111 = vld [vmem:[%s4 + $0x490] sm:$0xff]
    %v3112 = vld [vmem:[%s4 + $0x498] sm:$0xff]
    %v3113 = vld [vmem:[%s4 + $0x4a0] sm:$0xff]
    %v3114 = vld [vmem:[%s4 + $0x4a8] sm:$0xff]
    %v3115 = vld [vmem:[%s4 + $0x4b0] sm:$0xff]
    %v3116 = vld [vmem:[%s4 + $0x4b8] sm:$0xff]
    %v3117 = vld [vmem:[%s4 + $0x4c0] sm:$0xff]
    %v3118 = vld [vmem:[%s4 + $0x4c8] sm:$0xff]
    %v3119 = vld [vmem:[%s4 + $0x4d0] sm:$0xff]
    %v3120 = vld [vmem:[%s4 + $0x4d8] sm:$0xff]
    %v3121 = vld [vmem:[%s4 + $0x4e0] sm:$0xff]
    %v3122 = vld [vmem:[%s4 + $0x4e8] sm:$0xff]
    %v3123 = vld [vmem:[%s4 + $0x4f0] sm:$0xff]
    %v3124 = vld [vmem:[%s4 + $0x4f8] sm:$0xff]
    %v3125 = vld [vmem:[%s4 + $0x500] sm:$0xff]
    %v3126 = vld [vmem:[%s4 + $0x508] sm:$0xff]
    %v3127 = vld [vmem:[%s4 + $0x510] sm:$0xff]
    %v3128 = vld [vmem:[%s4 + $0x518] sm:$0xff]
    %v3129 = vld [vmem:[%s4 + $0x520] sm:$0xff]
    %v3130 = vld [vmem:[%s4 + $0x528] sm:$0xff]
    %v3131 = vld [vmem:[%s4 + $0x530] sm:$0xff]
    %v3132 = vld [vmem:[%s4 + $0x538] sm:$0xff]
    %v3133 = vld [vmem:[%s4 + $0x540] sm:$0xff]
    %v3134 = vld [vmem:[%s4 + $0x548] sm:$0xff]
    %v3135 = vld [vmem:[%s4 + $0x550] sm:$0xff]
    %v3136 = vld [vmem:[%s4 + $0x558] sm:$0xff]
    %v3137 = vld [vmem:[%s4 + $0x560] sm:$0xff]
    %v3138 = vld [vmem:[%s4 + $0x568] sm:$0xff]
    %v3139 = vld [vmem:[%s4 + $0x570] sm:$0xff]
    %v3140 = vld [vmem:[%s4 + $0x578] sm:$0xff]
    %v3141 = vld [vmem:[%s4 + $0x580] sm:$0xff]
    %v3142 = vld [vmem:[%s4 + $0x588] sm:$0xff]
    %v3143 = vld [vmem:[%s4 + $0x590] sm:$0xff]
    %v3144 = vld [vmem:[%s4 + $0x598] sm:$0xff]
    %v3145 = vld [vmem:[%s4 + $0x5a0] sm:$0xff]
    %v3146 = vld [vmem:[%s4 + $0x5a8] sm:$0xff]
    %v3147 = vld [vmem:[%s4 + $0x5b0] sm:$0xff]
    %v3148 = vld [vmem:[%s4 + $0x5b8] sm:$0xff]
    %v3149 = vld [vmem:[%s4 + $0x5c0] sm:$0xff]
    %v3150 = vld [vmem:[%s4 + $0x5c8] sm:$0xff]
    %v3151 = vld [vmem:[%s4 + $0x5d0] sm:$0xff]
    %v3152 = vld [vmem:[%s4 + $0x5d8] sm:$0xff]
    %v3153 = vld [vmem:[%s4 + $0x5e0] sm:$0xff]
    %v3154 = vld [vmem:[%s4 + $0x5e8] sm:$0xff]
    %v3155 = vld [vmem:[%s4 + $0x5f0] sm:$0xff]
    %v3156 = vld [vmem:[%s4 + $0x5f8] sm:$0xff]
    %v3157 = vld [vmem:[%s4 + $0x600] sm:$0xff]
    %v3158 = vld [vmem:[%s4 + $0x608] sm:$0xff]
    %v3159 = vld [vmem:[%s4 + $0x610] sm:$0xff]
    %v3160 = vld [vmem:[%s4 + $0x618] sm:$0xff]
    %v3161 = vld [vmem:[%s4 + $0x620] sm:$0xff]
    %v3162 = vld [vmem:[%s4 + $0x628] sm:$0xff]
    %v3163 = vld [vmem:[%s4 + $0x630] sm:$0xff]
    %v3164 = vld [vmem:[%s4 + $0x638] sm:$0xff]
    %v3165 = vld [vmem:[%s4 + $0x640] sm:$0xff]
    %v3166 = vld [vmem:[%s4 + $0x648] sm:$0xff]
    %v3167 = vld [vmem:[%s4 + $0x650] sm:$0xff]
    %v3168 = vld [vmem:[%s4 + $0x658] sm:$0xff]
    %v3169 = vld [vmem:[%s4 + $0x660] sm:$0xff]
    %v3170 = vld [vmem:[%s4 + $0x668] sm:$0xff]
    %v3171 = vld [vmem:[%s4 + $0x670] sm:$0xff]
    %v3172 = vld [vmem:[%s4 + $0x678] sm:$0xff]
    %v3173 = vld [vmem:[%s4 + $0x680] sm:$0xff]
    %v3174 = vld [vmem:[%s4 + $0x688] sm:$0xff]
    %v3175 = vld [vmem:[%s4 + $0x690] sm:$0xff]
    %v3176 = vld [vmem:[%s4 + $0x698] sm:$0xff]
    %v3177 = vld [vmem:[%s4 + $0x6a0] sm:$0xff]
    %v3178 = vld [vmem:[%s4 + $0x6a8] sm:$0xff]
    %v3179 = vld [vmem:[%s4 + $0x6b0] sm:$0xff]
    %v3180 = vld [vmem:[%s4 + $0x6b8] sm:$0xff]
    %v3181 = vld [vmem:[%s4 + $0x6c0] sm:$0xff]
    %v3182 = vld [vmem:[%s4 + $0x6c8] sm:$0xff]
    %v3183 = vld [vmem:[%s4 + $0x6d0] sm:$0xff]
    %v3184 = vld [vmem:[%s4 + $0x6d8] sm:$0xff]
    %v3185 = vld [vmem:[%s4 + $0x6e0] sm:$0xff]
    %v3186 = vld [vmem:[%s4 + $0x6e8] sm:$0xff]
    %v3187 = vld [vmem:[%s4 + $0x6f0] sm:$0xff]
    %v3188 = vld [vmem:[%s4 + $0x6f8] sm:$0xff]
    %v3189 = vld [vmem:[%s4 + $0x700] sm:$0xff]
    %v3190 = vld [vmem:[%s4 + $0x708] sm:$0xff]
    %v3191 = vld [vmem:[%s4 + $0x710] sm:$0xff]
    %v3192 = vld [vmem:[%s4 + $0x718] sm:$0xff]
    %v3193 = vld [vmem:[%s4 + $0x720] sm:$0xff]
    %v3194 = vld [vmem:[%s4 + $0x728] sm:$0xff]
    %v3195 = vld [vmem:[%s4 + $0x730] sm:$0xff]
    %v3196 = vld [vmem:[%s4 + $0x738] sm:$0xff]
    %v3197 = vld [vmem:[%s4 + $0x740] sm:$0xff]
    %v3198 = vld [vmem:[%s4 + $0x748] sm:$0xff]
    %v3199 = vld [vmem:[%s4 + $0x750] sm:$0xff]
    %v3200 = vld [vmem:[%s4 + $0x758] sm:$0xff]
    %v3201 = vld [vmem:[%s4 + $0x760] sm:$0xff]
    %v3202 = vld [vmem:[%s4 + $0x768] sm:$0xff]
    %v3203 = vld [vmem:[%s4 + $0x770] sm:$0xff]
    %v3204 = vld [vmem:[%s4 + $0x778] sm:$0xff]
    %v3205 = vld [vmem:[%s4 + $0x780] sm:$0xff]
    %v3206 = vld [vmem:[%s4 + $0x788] sm:$0xff]
    %v3207 = vld [vmem:[%s4 + $0x790] sm:$0xff]
    %v3208 = vld [vmem:[%s4 + $0x798] sm:$0xff]
    %v3209 = vld [vmem:[%s4 + $0x7a0] sm:$0xff]
    %v3210 = vld [vmem:[%s4 + $0x7a8] sm:$0xff]
    %v3211 = vld [vmem:[%s4 + $0x7b0] sm:$0xff]
    %v3212 = vld [vmem:[%s4 + $0x7b8] sm:$0xff]
    %v3213 = vld [vmem:[%s4 + $0x7c0] sm:$0xff]
    %v3214 = vld [vmem:[%s4 + $0x7c8] sm:$0xff]
    %v3215 = vld [vmem:[%s4 + $0x7d0] sm:$0xff]
    %v3216 = vld [vmem:[%s4 + $0x7d8] sm:$0xff]
    %v3217 = vld [vmem:[%s4 + $0x7e0] sm:$0xff]
    %v3218 = vld [vmem:[%s4 + $0x7e8] sm:$0xff]
    %v3219 = vld [vmem:[%s4 + $0x7f0] sm:$0xff]
    %v3220 = vld [vmem:[%s4 + $0x7f8] sm:$0xff]
    %v3221 = vld [vmem:[%s4 + $0x800] sm:$0xff]
    %v3222 = vld [vmem:[%s4 + $0x808] sm:$0xff]
    %v3223 = vld [vmem:[%s4 + $0x810] sm:$0xff]
    %v3224 = vld [vmem:[%s4 + $0x818] sm:$0xff]
    %v3225 = vld [vmem:[%s4 + $0x820] sm:$0xff]
    %v3226 = vld [vmem:[%s4 + $0x828] sm:$0xff]
    %v3227 = vld [vmem:[%s4 + $0x830] sm:$0xff]
    %v3228 = vld [vmem:[%s4 + $0x838] sm:$0xff]
    %v3229 = vld [vmem:[%s4 + $0x840] sm:$0xff]
    %v3230 = vld [vmem:[%s4 + $0x848] sm:$0xff]
    %v3231 = vld [vmem:[%s4 + $0x850] sm:$0xff]
    %v3232 = vld [vmem:[%s4 + $0x858] sm:$0xff]
    %v3233 = vld [vmem:[%s4 + $0x860] sm:$0xff]
    %v3234 = vld [vmem:[%s4 + $0x868] sm:$0xff]
    %v3235 = vld [vmem:[%s4 + $0x870] sm:$0xff]
    %v3236 = vld [vmem:[%s4 + $0x878] sm:$0xff]
    %v3237 = vld [vmem:[%s4 + $0x880] sm:$0xff]
    %v3238 = vld [vmem:[%s4 + $0x888] sm:$0xff]
    %v3239 = vld [vmem:[%s4 + $0x890] sm:$0xff]
    %v3240 = vld [vmem:[%s4 + $0x898] sm:$0xff]
    %v3241 = vld [vmem:[%s4 + $0x8a0] sm:$0xff]
    %v3242 = vld [vmem:[%s4 + $0x8a8] sm:$0xff]
    %v3243 = vld [vmem:[%s4 + $0x8b0] sm:$0xff]
    %v3244 = vld [vmem:[%s4 + $0x8b8] sm:$0xff]
    %v3245 = vld [vmem:[%s4 + $0x8c0] sm:$0xff]
    %v3246 = vld [vmem:[%s4 + $0x8c8] sm:$0xff]
    %v3247 = vld [vmem:[%s4 + $0x8d0] sm:$0xff]
    %v3248 = vld [vmem:[%s4 + $0x8d8] sm:$0xff]
    %v3249 = vld [vmem:[%s4 + $0x8e0] sm:$0xff]
    %v3250 = vld [vmem:[%s4 + $0x8e8] sm:$0xff]
    %v3251 = vld [vmem:[%s4 + $0x8f0] sm:$0xff]
    %v3252 = vld [vmem:[%s4 + $0x8f8] sm:$0xff]
    %v3253 = vld [vmem:[%s4 + $0x900] sm:$0xff]
    %v3254 = vld [vmem:[%s4 + $0x908] sm:$0xff]
    %v3255 = vld [vmem:[%s4 + $0x910] sm:$0xff]
    %v3256 = vld [vmem:[%s4 + $0x918] sm:$0xff]
    %v3257 = vld [vmem:[%s4 + $0x920] sm:$0xff]
    %v3258 = vld [vmem:[%s4 + $0x928] sm:$0xff]
    %v3259 = vld [vmem:[%s4 + $0x930] sm:$0xff]
    %v3260 = vld [vmem:[%s4 + $0x938] sm:$0xff]
    %v3261 = vld [vmem:[%s4 + $0x940] sm:$0xff]
    %v3262 = vld [vmem:[%s4 + $0x948] sm:$0xff]
    %v3263 = vld [vmem:[%s4 + $0x950] sm:$0xff]
    %v3264 = vld [vmem:[%s4 + $0x958] sm:$0xff]
    %v3265 = vld [vmem:[%s4 + $0x960] sm:$0xff]
    %v3266 = vld [vmem:[%s4 + $0x968] sm:$0xff]
    %v3267 = vld [vmem:[%s4 + $0x970] sm:$0xff]
    %v3268 = vld [vmem:[%s4 + $0x978] sm:$0xff]
    %v3269 = vld [vmem:[%s4 + $0x980] sm:$0xff]
    %v3270 = vld [vmem:[%s4 + $0x988] sm:$0xff]
    %v3271 = vld [vmem:[%s4 + $0x990] sm:$0xff]
    %v3272 = vld [vmem:[%s4 + $0x998] sm:$0xff]
    %v3273 = vld [vmem:[%s4 + $0x9a0] sm:$0xff]
    %v3274 = vld [vmem:[%s4 + $0x9a8] sm:$0xff]
    %v3275 = vld [vmem:[%s4 + $0x9b0] sm:$0xff]
    %v3276 = vld [vmem:[%s4 + $0x9b8] sm:$0xff]
    %v3277 = vld [vmem:[%s4 + $0x9c0] sm:$0xff]
    %v3278 = vld [vmem:[%s4 + $0x9c8] sm:$0xff]
    %v3279 = vld [vmem:[%s4 + $0x9d0] sm:$0xff]
    %v3280 = vld [vmem:[%s4 + $0x9d8] sm:$0xff]
    %v3281 = vld [vmem:[%s4 + $0x9e0] sm:$0xff]
    %v3282 = vld [vmem:[%s4 + $0x9e8] sm:$0xff]
    %v3283 = vld [vmem:[%s4 + $0x9f0] sm:$0xff]
    %v3284 = vld [vmem:[%s4 + $0x9f8] sm:$0xff]
    %v3285 = vld [vmem:[%s4 + $0xa00] sm:$0xff]
    %v3286 = vld [vmem:[%s4 + $0xa08] sm:$0xff]
    %v3287 = vld [vmem:[%s4 + $0xa10] sm:$0xff]
    %v3288 = vld [vmem:[%s4 + $0xa18] sm:$0xff]
    %v3289 = vld [vmem:[%s4 + $0xa20] sm:$0xff]
    %v3290 = vld [vmem:[%s4 + $0xa28] sm:$0xff]
    %v3291 = vld [vmem:[%s4 + $0xa30] sm:$0xff]
    %v3292 = vld [vmem:[%s4 + $0xa38] sm:$0xff]
    %v3293 = vld [vmem:[%s4 + $0xa40] sm:$0xff]
    %v3294 = vld [vmem:[%s4 + $0xa48] sm:$0xff]
    %v3295 = vld [vmem:[%s4 + $0xa50] sm:$0xff]
    %v3296 = vld [vmem:[%s4 + $0xa58] sm:$0xff]
    %v3297 = vld [vmem:[%s4 + $0xa60] sm:$0xff]
    %v3298 = vld [vmem:[%s4 + $0xa68] sm:$0xff]
    %v3299 = vld [vmem:[%s4 + $0xa70] sm:$0xff]
    %v3300 = vld [vmem:[%s4 + $0xa78] sm:$0xff]
    %v3301 = vld [vmem:[%s4 + $0xa80] sm:$0xff]
    %v3302 = vld [vmem:[%s4 + $0xa88] sm:$0xff]
    %v3303 = vld [vmem:[%s4 + $0xa90] sm:$0xff]
    %v3304 = vld [vmem:[%s4 + $0xa98] sm:$0xff]
    %v3305 = vld [vmem:[%s4 + $0xaa0] sm:$0xff]
    %v3306 = vld [vmem:[%s4 + $0xaa8] sm:$0xff]
    %v3307 = vld [vmem:[%s4 + $0xab0] sm:$0xff]
    %v3308 = vld [vmem:[%s4 + $0xab8] sm:$0xff]
    %v3309 = vld [vmem:[%s4 + $0xac0] sm:$0xff]
    %v3310 = vld [vmem:[%s4 + $0xac8] sm:$0xff]
    %v3311 = vld [vmem:[%s4 + $0xad0] sm:$0xff]
    %v3312 = vld [vmem:[%s4 + $0xad8] sm:$0xff]
    %v3313 = vld [vmem:[%s4 + $0xae0] sm:$0xff]
    %v3314 = vld [vmem:[%s4 + $0xae8] sm:$0xff]
    %v3315 = vld [vmem:[%s4 + $0xaf0] sm:$0xff]
    %v3316 = vld [vmem:[%s4 + $0xaf8] sm:$0xff]
    %v3317 = vld [vmem:[%s4 + $0xb00] sm:$0xff]
    %v3318 = vld [vmem:[%s4 + $0xb08] sm:$0xff]
    %v3319 = vld [vmem:[%s4 + $0xb10] sm:$0xff]
    %v3320 = vld [vmem:[%s4 + $0xb18] sm:$0xff]
    %v3321 = vld [vmem:[%s4 + $0xb20] sm:$0xff]
    %v3322 = vld [vmem:[%s4 + $0xb28] sm:$0xff]
    %v3323 = vld [vmem:[%s4 + $0xb30] sm:$0xff]
    %v3324 = vld [vmem:[%s4 + $0xb38] sm:$0xff]
    %v3325 = vld [vmem:[%s4 + $0xb40] sm:$0xff]
    %v3326 = vld [vmem:[%s4 + $0xb48] sm:$0xff]
    %v3327 = vld [vmem:[%s4 + $0xb50] sm:$0xff]
    %v3328 = vld [vmem:[%s4 + $0xb58] sm:$0xff]
    %v3329 = vld [vmem:[%s4 + $0xb60] sm:$0xff]
    %v3330 = vld [vmem:[%s4 + $0xb68] sm:$0xff]
    %v3331 = vld [vmem:[%s4 + $0xb70] sm:$0xff]
    %v3332 = vld [vmem:[%s4 + $0xb78] sm:$0xff]
    %v3333 = vld [vmem:[%s4 + $0xb80] sm:$0xff]
    %v3334 = vld [vmem:[%s4 + $0xb88] sm:$0xff]
    %v3335 = vld [vmem:[%s4 + $0xb90] sm:$0xff]
    %v3336 = vld [vmem:[%s4 + $0xb98] sm:$0xff]
    %v3337 = vld [vmem:[%s4 + $0xba0] sm:$0xff]
    %v3338 = vld [vmem:[%s4 + $0xba8] sm:$0xff]
    %v3339 = vld [vmem:[%s4 + $0xbb0] sm:$0xff]
    %v3340 = vld [vmem:[%s4 + $0xbb8] sm:$0xff]
    %v3341 = vld [vmem:[%s4 + $0xbc0] sm:$0xff]
    %v3342 = vld [vmem:[%s4 + $0xbc8] sm:$0xff]
    %v3343 = vld [vmem:[%s4 + $0xbd0] sm:$0xff]
    %v3344 = vld [vmem:[%s4 + $0xbd8] sm:$0xff]
    %v3345 = vld [vmem:[%s4 + $0xbe0] sm:$0xff]
    %v3346 = vld [vmem:[%s4 + $0xbe8] sm:$0xff]
    %v3347 = vld [vmem:[%s4 + $0xbf0] sm:$0xff]
    %v3348 = vld [vmem:[%s4 + $0xbf8] sm:$0xff]
    %v3349 = vld [vmem:[%s4 + $0xc00] sm:$0xff]
    %v3350 = vld [vmem:[%s4 + $0xc08] sm:$0xff]
    %v3351 = vld [vmem:[%s4 + $0xc10] sm:$0xff]
    %v3352 = vld [vmem:[%s4 + $0xc18] sm:$0xff]
    %v3353 = vld [vmem:[%s4 + $0xc20] sm:$0xff]
    %v3354 = vld [vmem:[%s4 + $0xc28] sm:$0xff]
    %v3355 = vld [vmem:[%s4 + $0xc30] sm:$0xff]
    %v3356 = vld [vmem:[%s4 + $0xc38] sm:$0xff]
    %v3357 = vld [vmem:[%s4 + $0xc40] sm:$0xff]
    %v3358 = vld [vmem:[%s4 + $0xc48] sm:$0xff]
    %v3359 = vld [vmem:[%s4 + $0xc50] sm:$0xff]
    %v3360 = vld [vmem:[%s4 + $0xc58] sm:$0xff]
    %v3361 = vld [vmem:[%s4 + $0xc60] sm:$0xff]
    %v3362 = vld [vmem:[%s4 + $0xc68] sm:$0xff]
    %v3363 = vld [vmem:[%s4 + $0xc70] sm:$0xff]
    %v3364 = vld [vmem:[%s4 + $0xc78] sm:$0xff]
    %v3365 = vld [vmem:[%s4 + $0xc80] sm:$0xff]
    %v3366 = vld [vmem:[%s4 + $0xc88] sm:$0xff]
    %v3367 = vld [vmem:[%s4 + $0xc90] sm:$0xff]
    %v3368 = vld [vmem:[%s4 + $0xc98] sm:$0xff]
    %v3369 = vld [vmem:[%s4 + $0xca0] sm:$0xff]
    %v3370 = vld [vmem:[%s4 + $0xca8] sm:$0xff]
    %v3371 = vld [vmem:[%s4 + $0xcb0] sm:$0xff]
    %v3372 = vld [vmem:[%s4 + $0xcb8] sm:$0xff]
    %v3373 = vld [vmem:[%s4 + $0xcc0] sm:$0xff]
    %v3374 = vld [vmem:[%s4 + $0xcc8] sm:$0xff]
    %v3375 = vld [vmem:[%s4 + $0xcd0] sm:$0xff]
    %v3376 = vld [vmem:[%s4 + $0xcd8] sm:$0xff]
    %v3377 = vld [vmem:[%s4 + $0xce0] sm:$0xff]
    %v3378 = vld [vmem:[%s4 + $0xce8] sm:$0xff]
    %v3379 = vld [vmem:[%s4 + $0xcf0] sm:$0xff]
    %v3380 = vld [vmem:[%s4 + $0xcf8] sm:$0xff]
    %v3381 = vld [vmem:[%s4 + $0xd00] sm:$0xff]
    %v3382 = vld [vmem:[%s4 + $0xd08] sm:$0xff]
    %v3383 = vld [vmem:[%s4 + $0xd10] sm:$0xff]
    %v3384 = vld [vmem:[%s4 + $0xd18] sm:$0xff]
    %v3385 = vld [vmem:[%s4 + $0xd20] sm:$0xff]
    %v3386 = vld [vmem:[%s4 + $0xd28] sm:$0xff]
    %v3387 = vld [vmem:[%s4 + $0xd30] sm:$0xff]
    %v3388 = vld [vmem:[%s4 + $0xd38] sm:$0xff]
    %v3389 = vld [vmem:[%s4 + $0xd40] sm:$0xff]
    %v3390 = vld [vmem:[%s4 + $0xd48] sm:$0xff]
    %v3391 = vld [vmem:[%s4 + $0xd50] sm:$0xff]
    %v3392 = vld [vmem:[%s4 + $0xd58] sm:$0xff]
    %v3393 = vld [vmem:[%s4 + $0xd60] sm:$0xff]
    %v3394 = vld [vmem:[%s4 + $0xd68] sm:$0xff]
    %v3395 = vld [vmem:[%s4 + $0xd70] sm:$0xff]
    %v3396 = vld [vmem:[%s4 + $0xd78] sm:$0xff]
    %v3397 = vld [vmem:[%s4 + $0xd80] sm:$0xff]
    %v3398 = vld [vmem:[%s4 + $0xd88] sm:$0xff]
    %v3399 = vld [vmem:[%s4 + $0xd90] sm:$0xff]
    %v3400 = vld [vmem:[%s4 + $0xd98] sm:$0xff]
    %v3401 = vld [vmem:[%s4 + $0xda0] sm:$0xff]
    %v3402 = vld [vmem:[%s4 + $0xda8] sm:$0xff]
    %v3403 = vld [vmem:[%s4 + $0xdb0] sm:$0xff]
    %v3404 = vld [vmem:[%s4 + $0xdb8] sm:$0xff]
    %v3405 = vld [vmem:[%s4 + $0xdc0] sm:$0xff]
    %v3406 = vld [vmem:[%s4 + $0xdc8] sm:$0xff]
    %v3407 = vld [vmem:[%s4 + $0xdd0] sm:$0xff]
    %v3408 = vld [vmem:[%s4 + $0xdd8] sm:$0xff]
    %v3409 = vld [vmem:[%s4 + $0xde0] sm:$0xff]
    %v3410 = vld [vmem:[%s4 + $0xde8] sm:$0xff]
    %v3411 = vld [vmem:[%s4 + $0xdf0] sm:$0xff]
    %v3412 = vld [vmem:[%s4 + $0xdf8] sm:$0xff]
    %v3413 = vld [vmem:[%s4 + $0xe00] sm:$0xff]
    %v3414 = vld [vmem:[%s4 + $0xe08] sm:$0xff]
    %v3415 = vld [vmem:[%s4 + $0xe10] sm:$0xff]
    %v3416 = vld [vmem:[%s4 + $0xe18] sm:$0xff]
    %v3417 = vld [vmem:[%s4 + $0xe20] sm:$0xff]
    %v3418 = vld [vmem:[%s4 + $0xe28] sm:$0xff]
    %v3419 = vld [vmem:[%s4 + $0xe30] sm:$0xff]
    %v3420 = vld [vmem:[%s4 + $0xe38] sm:$0xff]
    %v3421 = vld [vmem:[%s4 + $0xe40] sm:$0xff]
    %v3422 = vld [vmem:[%s4 + $0xe48] sm:$0xff]
    %v3423 = vld [vmem:[%s4 + $0xe50] sm:$0xff]
    %v3424 = vld [vmem:[%s4 + $0xe58] sm:$0xff]
    %v3425 = vld [vmem:[%s4 + $0xe60] sm:$0xff]
    %v3426 = vld [vmem:[%s4 + $0xe68] sm:$0xff]
    %v3427 = vld [vmem:[%s4 + $0xe70] sm:$0xff]
    %v3428 = vld [vmem:[%s4 + $0xe78] sm:$0xff]
    %v3429 = vld [vmem:[%s4 + $0xe80] sm:$0xff]
    %v3430 = vld [vmem:[%s4 + $0xe88] sm:$0xff]
    %v3431 = vld [vmem:[%s4 + $0xe90] sm:$0xff]
    %v3432 = vld [vmem:[%s4 + $0xe98] sm:$0xff]
    %v3433 = vld [vmem:[%s4 + $0xea0] sm:$0xff]
    %v3434 = vld [vmem:[%s4 + $0xea8] sm:$0xff]
    %v3435 = vld [vmem:[%s4 + $0xeb0] sm:$0xff]
    %v3436 = vld [vmem:[%s4 + $0xeb8] sm:$0xff]
    %v3437 = vld [vmem:[%s4 + $0xec0] sm:$0xff]
    %v3438 = vld [vmem:[%s4 + $0xec8] sm:$0xff]
    %v3439 = vld [vmem:[%s4 + $0xed0] sm:$0xff]
    %v3440 = vld [vmem:[%s4 + $0xed8] sm:$0xff]
    %v3441 = vld [vmem:[%s4 + $0xee0] sm:$0xff]
    %v3442 = vld [vmem:[%s4 + $0xee8] sm:$0xff]
    %v3443 = vld [vmem:[%s4 + $0xef0] sm:$0xff]
    %v3444 = vld [vmem:[%s4 + $0xef8] sm:$0xff]
    %v3445 = vld [vmem:[%s4 + $0xf00] sm:$0xff]
    %v3446 = vld [vmem:[%s4 + $0xf08] sm:$0xff]
    %v3447 = vld [vmem:[%s4 + $0xf10] sm:$0xff]
    %v3448 = vld [vmem:[%s4 + $0xf18] sm:$0xff]
    %v3449 = vld [vmem:[%s4 + $0xf20] sm:$0xff]
    %v3450 = vld [vmem:[%s4 + $0xf28] sm:$0xff]
    %v3451 = vld [vmem:[%s4 + $0xf30] sm:$0xff]
    %v3452 = vld [vmem:[%s4 + $0xf38] sm:$0xff]
    %v3453 = vld [vmem:[%s4 + $0xf40] sm:$0xff]
    %v3454 = vld [vmem:[%s4 + $0xf48] sm:$0xff]
    %v3455 = vld [vmem:[%s4 + $0xf50] sm:$0xff]
    %v3456 = vld [vmem:[%s4 + $0xf58] sm:$0xff]
    %v3457 = vld [vmem:[%s4 + $0xf60] sm:$0xff]
    %v3458 = vld [vmem:[%s4 + $0xf68] sm:$0xff]
    %v3459 = vld [vmem:[%s4 + $0xf70] sm:$0xff]
    %v3460 = vld [vmem:[%s4 + $0xf78] sm:$0xff]
    %v3461 = vld [vmem:[%s4 + $0xf80] sm:$0xff]
    %v3462 = vld [vmem:[%s4 + $0xf88] sm:$0xff]
    %v3463 = vld [vmem:[%s4 + $0xf90] sm:$0xff]
    %v3464 = vld [vmem:[%s4 + $0xf98] sm:$0xff]
    %v3465 = vld [vmem:[%s4 + $0xfa0] sm:$0xff]
    %v3466 = vld [vmem:[%s4 + $0xfa8] sm:$0xff]
    %v3467 = vld [vmem:[%s4 + $0xfb0] sm:$0xff]
    %v3468 = vld [vmem:[%s4 + $0xfb8] sm:$0xff]
    %v3469 = vld [vmem:[%s4 + $0xfc0] sm:$0xff]
    %v3470 = vld [vmem:[%s4 + $0xfc8] sm:$0xff]
    %v3471 = vld [vmem:[%s4 + $0xfd0] sm:$0xff]
    %v3472 = vld [vmem:[%s4 + $0xfd8] sm:$0xff]
    %v3473 = vld [vmem:[%s4 + $0xfe0] sm:$0xff]
    %v3474 = vld [vmem:[%s4 + $0xfe8] sm:$0xff]
    %v3475 = vld [vmem:[%s4 + $0xff0] sm:$0xff]
    %v3476 = vld [vmem:[%s4 + $0xff8] sm:$0xff]
    %v3477 = vld [vmem:[%s4 + $0x1000] sm:$0xff]
    %v3478 = vld [vmem:[%s4 + $0x1008] sm:$0xff]
    %v3479 = vld [vmem:[%s4 + $0x1010] sm:$0xff]
    %v3480 = vld [vmem:[%s4 + $0x1018] sm:$0xff]
    %v3481 = vld [vmem:[%s4 + $0x1020] sm:$0xff]
    %v3482 = vld [vmem:[%s4 + $0x1028] sm:$0xff]
    %v3483 = vld [vmem:[%s4 + $0x1030] sm:$0xff]
    %v3484 = vld [vmem:[%s4 + $0x1038] sm:$0xff]
    %v3485 = vld [vmem:[%s4 + $0x1040] sm:$0xff]
    %v3486 = vld [vmem:[%s4 + $0x1048] sm:$0xff]
    %v3487 = vld [vmem:[%s4 + $0x1050] sm:$0xff]
    %v3488 = vld [vmem:[%s4 + $0x1058] sm:$0xff]
    %v3489 = vld [vmem:[%s4 + $0x1060] sm:$0xff]
    %v3490 = vld [vmem:[%s4 + $0x1068] sm:$0xff]
    %v3491 = vld [vmem:[%s4 + $0x1070] sm:$0xff]
    %v3492 = vld [vmem:[%s4 + $0x1078] sm:$0xff]
    %v3493 = vld [vmem:[%s4 + $0x1080] sm:$0xff]
    %v3494 = vld [vmem:[%s4 + $0x1088] sm:$0xff]
    %v3495 = vld [vmem:[%s4 + $0x1090] sm:$0xff]
    %v3496 = vld [vmem:[%s4 + $0x1098] sm:$0xff]
    %v3497 = vld [vmem:[%s4 + $0x10a0] sm:$0xff]
    %v3498 = vld [vmem:[%s4 + $0x10a8] sm:$0xff]
    %v3499 = vld [vmem:[%s4 + $0x10b0] sm:$0xff]
    %v3500 = vld [vmem:[%s4 + $0x10b8] sm:$0xff]
    %v3501 = vld [vmem:[%s4 + $0x10c0] sm:$0xff]
    %v3502 = vld [vmem:[%s4 + $0x10c8] sm:$0xff]
    %v3503 = vld [vmem:[%s4 + $0x10d0] sm:$0xff]
    %v3504 = vld [vmem:[%s4 + $0x10d8] sm:$0xff]
    %v3505 = vld [vmem:[%s4 + $0x10e0] sm:$0xff]
    %v3506 = vld [vmem:[%s4 + $0x10e8] sm:$0xff]
    %v3507 = vld [vmem:[%s4 + $0x10f0] sm:$0xff]
    %v3508 = vld [vmem:[%s4 + $0x10f8] sm:$0xff]
    %v3509 = vld [vmem:[%s4 + $0x1100] sm:$0xff]
    %v3510 = vld [vmem:[%s4 + $0x1108] sm:$0xff]
    %v3511 = vld [vmem:[%s4 + $0x1110] sm:$0xff]
    %v3512 = vld [vmem:[%s4 + $0x1118] sm:$0xff]
    %v3513 = vld [vmem:[%s4 + $0x1120] sm:$0xff]
    %v3514 = vld [vmem:[%s4 + $0x1128] sm:$0xff]
    %v3515 = vld [vmem:[%s4 + $0x1130] sm:$0xff]
    %v3516 = vld [vmem:[%s4 + $0x1138] sm:$0xff]
    %v3517 = vld [vmem:[%s4 + $0x1140] sm:$0xff]
    %v3518 = vld [vmem:[%s4 + $0x1148] sm:$0xff]
    %v3519 = vld [vmem:[%s4 + $0x1150] sm:$0xff]
    %v3520 = vld [vmem:[%s4 + $0x1158] sm:$0xff]
    %v3521 = vld [vmem:[%s4 + $0x1160] sm:$0xff]
    %v3522 = vld [vmem:[%s4 + $0x1168] sm:$0xff]
    %v3523 = vld [vmem:[%s4 + $0x1170] sm:$0xff]
    %v3524 = vld [vmem:[%s4 + $0x1178] sm:$0xff]
    %v3525 = vld [vmem:[%s4 + $0x1180] sm:$0xff]
    %v3526 = vld [vmem:[%s4 + $0x1188] sm:$0xff]
    %v3527 = vld [vmem:[%s4 + $0x1190] sm:$0xff]
    %v3528 = vld [vmem:[%s4 + $0x1198] sm:$0xff]
    %v3529 = vld [vmem:[%s4 + $0x11a0] sm:$0xff]
    %v3530 = vld [vmem:[%s4 + $0x11a8] sm:$0xff]
    %v3531 = vld [vmem:[%s4 + $0x11b0] sm:$0xff]
    %v3532 = vld [vmem:[%s4 + $0x11b8] sm:$0xff]
    %v3533 = vld [vmem:[%s4 + $0x11c0] sm:$0xff]
    %v3534 = vld [vmem:[%s4 + $0x11c8] sm:$0xff]
    %v3535 = vld [vmem:[%s4 + $0x11d0] sm:$0xff]
    %v3536 = vld [vmem:[%s4 + $0x11d8] sm:$0xff]
    %v3537 = vld [vmem:[%s4 + $0x11e0] sm:$0xff]
    %v3538 = vld [vmem:[%s4 + $0x11e8] sm:$0xff]
    %v3539 = vld [vmem:[%s4 + $0x11f0] sm:$0xff]
    %v3540 = vld [vmem:[%s4 + $0x11f8] sm:$0xff]
    %v3541 = vld [vmem:[%s4 + $0x1200] sm:$0xff]
    %v3542 = vld [vmem:[%s4 + $0x1208] sm:$0xff]
    %v3543 = vld [vmem:[%s4 + $0x1210] sm:$0xff]
    %v3544 = vld [vmem:[%s4 + $0x1218] sm:$0xff]
    %v3545 = vld [vmem:[%s4 + $0x1220] sm:$0xff]
    %v3546 = vld [vmem:[%s4 + $0x1228] sm:$0xff]
    %v3547 = vld [vmem:[%s4 + $0x1230] sm:$0xff]
    %v3548 = vld [vmem:[%s4 + $0x1238] sm:$0xff]
    %v3549 = vld [vmem:[%s4 + $0x1240] sm:$0xff]
    %v3550 = vld [vmem:[%s4 + $0x1248] sm:$0xff]
    %v3551 = vld [vmem:[%s4 + $0x1250] sm:$0xff]
    %v3552 = vld [vmem:[%s4 + $0x1258] sm:$0xff]
    %v3553 = vld [vmem:[%s4 + $0x1260] sm:$0xff]
    %v3554 = vld [vmem:[%s4 + $0x1268] sm:$0xff]
    %v3555 = vld [vmem:[%s4 + $0x1270] sm:$0xff]
    %v3556 = vld [vmem:[%s4 + $0x1278] sm:$0xff]
    %v3557 = vld [vmem:[%s4 + $0x1280] sm:$0xff]
    %v3558 = vld [vmem:[%s4 + $0x1288] sm:$0xff]
    %v3559 = vld [vmem:[%s4 + $0x1290] sm:$0xff]
    %v3560 = vld [vmem:[%s4 + $0x1298] sm:$0xff]
    %v3561 = vld [vmem:[%s4 + $0x12a0] sm:$0xff]
    %v3562 = vld [vmem:[%s4 + $0x12a8] sm:$0xff]
    %v3563 = vld [vmem:[%s4 + $0x12b0] sm:$0xff]
    %v3564 = vld [vmem:[%s4 + $0x12b8] sm:$0xff]
    %v3565 = vld [vmem:[%s4 + $0x12c0] sm:$0xff]
    %v3566 = vld [vmem:[%s4 + $0x12c8] sm:$0xff]
    %v3567 = vld [vmem:[%s4 + $0x12d0] sm:$0xff]
    %v3568 = vld [vmem:[%s4 + $0x12d8] sm:$0xff]
    %v3569 = vld [vmem:[%s4 + $0x12e0] sm:$0xff]
    %v3570 = vld [vmem:[%s4 + $0x12e8] sm:$0xff]
    %v3571 = vld [vmem:[%s4 + $0x12f0] sm:$0xff]
    %v3572 = vld [vmem:[%s4 + $0x12f8] sm:$0xff]
    %v3573 = vld [vmem:[%s4 + $0x1300] sm:$0xff]
    %v3574 = vld [vmem:[%s4 + $0x1308] sm:$0xff]
    %v3575 = vld [vmem:[%s4 + $0x1310] sm:$0xff]
    %v3576 = vld [vmem:[%s4 + $0x1318] sm:$0xff]
    %v3577 = vld [vmem:[%s4 + $0x1320] sm:$0xff]
    %v3578 = vld [vmem:[%s4 + $0x1328] sm:$0xff]
    %v3579 = vld [vmem:[%s4 + $0x1330] sm:$0xff]
    %v3580 = vld [vmem:[%s4 + $0x1338] sm:$0xff]
    %v3581 = vld [vmem:[%s4 + $0x1340] sm:$0xff]
    %v3582 = vld [vmem:[%s4 + $0x1348] sm:$0xff]
    %v3583 = vld [vmem:[%s4 + $0x1350] sm:$0xff]
    %v3584 = vld [vmem:[%s4 + $0x1358] sm:$0xff]
    %v3585 = vld [vmem:[%s4 + $0x1360] sm:$0xff]
    %v3586 = vld [vmem:[%s4 + $0x1368] sm:$0xff]
    %v3587 = vld [vmem:[%s4 + $0x1370] sm:$0xff]
    %v3588 = vld [vmem:[%s4 + $0x1378] sm:$0xff]
    %v3589 = vld [vmem:[%s4 + $0x1380] sm:$0xff]
    %v3590 = vld [vmem:[%s4 + $0x1388] sm:$0xff]
    %v3591 = vld [vmem:[%s4 + $0x1390] sm:$0xff]
    %v3592 = vld [vmem:[%s4 + $0x1398] sm:$0xff]
    %v3593 = vld [vmem:[%s4 + $0x13a0] sm:$0xff]
    %v3594 = vld [vmem:[%s4 + $0x13a8] sm:$0xff]
    %v3595 = vld [vmem:[%s4 + $0x13b0] sm:$0xff]
    %v3596 = vld [vmem:[%s4 + $0x13b8] sm:$0xff]
    %v3597 = vld [vmem:[%s4 + $0x13c0] sm:$0xff]
    %v3598 = vld [vmem:[%s4 + $0x13c8] sm:$0xff]
    %v3599 = vld [vmem:[%s4 + $0x13d0] sm:$0xff]
    %v3600 = vld [vmem:[%s4 + $0x13d8] sm:$0xff]
    %v3601 = vld [vmem:[%s4 + $0x13e0] sm:$0xff]
    %v3602 = vld [vmem:[%s4 + $0x13e8] sm:$0xff]
    %v3603 = vld [vmem:[%s4 + $0x13f0] sm:$0xff]
    %v3604 = vld [vmem:[%s4 + $0x13f8] sm:$0xff]
    %v3605 = vld [vmem:[%s4 + $0x1400] sm:$0xff]
    %v3606 = vld [vmem:[%s4 + $0x1408] sm:$0xff]
    %v3607 = vld [vmem:[%s4 + $0x1410] sm:$0xff]
    %v3608 = vld [vmem:[%s4 + $0x1418] sm:$0xff]
    %v3609 = vld [vmem:[%s4 + $0x1420] sm:$0xff]
    %v3610 = vld [vmem:[%s4 + $0x1428] sm:$0xff]
    %v3611 = vld [vmem:[%s4 + $0x1430] sm:$0xff]
    %v3612 = vld [vmem:[%s4 + $0x1438] sm:$0xff]
    %v3613 = vld [vmem:[%s4 + $0x1440] sm:$0xff]
    %v3614 = vld [vmem:[%s4 + $0x1448] sm:$0xff]
    %v3615 = vld [vmem:[%s4 + $0x1450] sm:$0xff]
    %v3616 = vld [vmem:[%s4 + $0x1458] sm:$0xff]
    %v3617 = vld [vmem:[%s4 + $0x1460] sm:$0xff]
    %v3618 = vld [vmem:[%s4 + $0x1468] sm:$0xff]
    %v3619 = vld [vmem:[%s4 + $0x1470] sm:$0xff]
    %v3620 = vld [vmem:[%s4 + $0x1478] sm:$0xff]
    %v3621 = vld [vmem:[%s4 + $0x1480] sm:$0xff]
    %v3622 = vld [vmem:[%s4 + $0x1488] sm:$0xff]
    %v3623 = vld [vmem:[%s4 + $0x1490] sm:$0xff]
    %v3624 = vld [vmem:[%s4 + $0x1498] sm:$0xff]
    %v3625 = vld [vmem:[%s4 + $0x14a0] sm:$0xff]
    %v3626 = vld [vmem:[%s4 + $0x14a8] sm:$0xff]
    %v3627 = vld [vmem:[%s4 + $0x14b0] sm:$0xff]
    %v3628 = vld [vmem:[%s4 + $0x14b8] sm:$0xff]
    %v3629 = vld [vmem:[%s4 + $0x14c0] sm:$0xff]
    %v3630 = vld [vmem:[%s4 + $0x14c8] sm:$0xff]
    %v3631 = vld [vmem:[%s4 + $0x14d0] sm:$0xff]
    %v3632 = vld [vmem:[%s4 + $0x14d8] sm:$0xff]
    %v3633 = vld [vmem:[%s4 + $0x14e0] sm:$0xff]
    %v3634 = vld [vmem:[%s4 + $0x14e8] sm:$0xff]
    %v3635 = vld [vmem:[%s4 + $0x14f0] sm:$0xff]
    %v3636 = vld [vmem:[%s4 + $0x14f8] sm:$0xff]
    %v3637 = vld [vmem:[%s4 + $0x1500] sm:$0xff]
    %v3638 = vld [vmem:[%s4 + $0x1508] sm:$0xff]
    %v3639 = vld [vmem:[%s4 + $0x1510] sm:$0xff]
    %v3640 = vld [vmem:[%s4 + $0x1518] sm:$0xff]
    %v3641 = vld [vmem:[%s4 + $0x1520] sm:$0xff]
    %v3642 = vld [vmem:[%s4 + $0x1528] sm:$0xff]
    %v3643 = vld [vmem:[%s4 + $0x1530] sm:$0xff]
    %v3644 = vld [vmem:[%s4 + $0x1538] sm:$0xff]
    %v3645 = vld [vmem:[%s4 + $0x1540] sm:$0xff]
    %v3646 = vld [vmem:[%s4 + $0x1548] sm:$0xff]
    %v3647 = vld [vmem:[%s4 + $0x1550] sm:$0xff]
    %v3648 = vld [vmem:[%s4 + $0x1558] sm:$0xff]
    %v3649 = vld [vmem:[%s4 + $0x1560] sm:$0xff]
    %v3650 = vld [vmem:[%s4 + $0x1568] sm:$0xff]
    %v3651 = vld [vmem:[%s4 + $0x1570] sm:$0xff]
    %v3652 = vld [vmem:[%s4 + $0x1578] sm:$0xff]
    %v3653 = vld [vmem:[%s4 + $0x1580] sm:$0xff]
    %v3654 = vld [vmem:[%s4 + $0x1588] sm:$0xff]
    %v3655 = vld [vmem:[%s4 + $0x1590] sm:$0xff]
    %v3656 = vld [vmem:[%s4 + $0x1598] sm:$0xff]
    %v3657 = vld [vmem:[%s4 + $0x15a0] sm:$0xff]
    %v3658 = vld [vmem:[%s4 + $0x15a8] sm:$0xff]
    %v3659 = vld [vmem:[%s4 + $0x15b0] sm:$0xff]
    %v3660 = vld [vmem:[%s4 + $0x15b8] sm:$0xff]
    %v3661 = vld [vmem:[%s4 + $0x15c0] sm:$0xff]
    %v3662 = vld [vmem:[%s4 + $0x15c8] sm:$0xff]
    %v3663 = vld [vmem:[%s4 + $0x15d0] sm:$0xff]
    %v3664 = vld [vmem:[%s4 + $0x15d8] sm:$0xff]
    %v3665 = vld [vmem:[%s4 + $0x15e0] sm:$0xff]
    %v3666 = vld [vmem:[%s4 + $0x15e8] sm:$0xff]
    %v3667 = vld [vmem:[%s4 + $0x15f0] sm:$0xff]
    %v3668 = vld [vmem:[%s4 + $0x15f8] sm:$0xff]
    %v3669 = vld [vmem:[%s4 + $0x1600] sm:$0xff]
    %v3670 = vld [vmem:[%s4 + $0x1608] sm:$0xff]
    %v3671 = vld [vmem:[%s4 + $0x1610] sm:$0xff]
    %v3672 = vld [vmem:[%s4 + $0x1618] sm:$0xff]
    %v3673 = vld [vmem:[%s4 + $0x1620] sm:$0xff]
    %v3674 = vld [vmem:[%s4 + $0x1628] sm:$0xff]
    %v3675 = vld [vmem:[%s4 + $0x1630] sm:$0xff]
    %v3676 = vld [vmem:[%s4 + $0x1638] sm:$0xff]
    %v3677 = vld [vmem:[%s4 + $0x1640] sm:$0xff]
    %v3678 = vld [vmem:[%s4 + $0x1648] sm:$0xff]
    %v3679 = vld [vmem:[%s4 + $0x1650] sm:$0xff]
    %v3680 = vld [vmem:[%s4 + $0x1658] sm:$0xff]
    %v3681 = vld [vmem:[%s4 + $0x1660] sm:$0xff]
    %v3682 = vld [vmem:[%s4 + $0x1668] sm:$0xff]
    %v3683 = vld [vmem:[%s4 + $0x1670] sm:$0xff]
    %v3684 = vld [vmem:[%s4 + $0x1678] sm:$0xff]
    %v3685 = vld [vmem:[%s4 + $0x1680] sm:$0xff]
    %v3686 = vld [vmem:[%s4 + $0x1688] sm:$0xff]
    %v3687 = vld [vmem:[%s4 + $0x1690] sm:$0xff]
    %v3688 = vld [vmem:[%s4 + $0x1698] sm:$0xff]
    %v3689 = vld [vmem:[%s4 + $0x16a0] sm:$0xff]
    %v3690 = vld [vmem:[%s4 + $0x16a8] sm:$0xff]
    %v3691 = vld [vmem:[%s4 + $0x16b0] sm:$0xff]
    %v3692 = vld [vmem:[%s4 + $0x16b8] sm:$0xff]
    %v3693 = vld [vmem:[%s4 + $0x16c0] sm:$0xff]
    %v3694 = vld [vmem:[%s4 + $0x16c8] sm:$0xff]
    %v3695 = vld [vmem:[%s4 + $0x16d0] sm:$0xff]
    %v3696 = vld [vmem:[%s4 + $0x16d8] sm:$0xff]
    %v3697 = vld [vmem:[%s4 + $0x16e0] sm:$0xff]
    %v3698 = vld [vmem:[%s4 + $0x16e8] sm:$0xff]
    %v3699 = vld [vmem:[%s4 + $0x16f0] sm:$0xff]
    %v3700 = vld [vmem:[%s4 + $0x16f8] sm:$0xff]
    %v3701 = vld [vmem:[%s4 + $0x1700] sm:$0xff]
    %v3702 = vld [vmem:[%s4 + $0x1708] sm:$0xff]
    %v3703 = vld [vmem:[%s4 + $0x1710] sm:$0xff]
    %v3704 = vld [vmem:[%s4 + $0x1718] sm:$0xff]
    %v3705 = vld [vmem:[%s4 + $0x1720] sm:$0xff]
    %v3706 = vld [vmem:[%s4 + $0x1728] sm:$0xff]
    %v3707 = vld [vmem:[%s4 + $0x1730] sm:$0xff]
    %v3708 = vld [vmem:[%s4 + $0x1738] sm:$0xff]
    %v3709 = vld [vmem:[%s4 + $0x1740] sm:$0xff]
    %v3710 = vld [vmem:[%s4 + $0x1748] sm:$0xff]
    %v3711 = vld [vmem:[%s4 + $0x1750] sm:$0xff]
    %v3712 = vld [vmem:[%s4 + $0x1758] sm:$0xff]
    %v3713 = vld [vmem:[%s4 + $0x1760] sm:$0xff]
    %v3714 = vld [vmem:[%s4 + $0x1768] sm:$0xff]
    %v3715 = vld [vmem:[%s4 + $0x1770] sm:$0xff]
    %v3716 = vld [vmem:[%s4 + $0x1778] sm:$0xff]
    %v3717 = vld [vmem:[%s4 + $0x1780] sm:$0xff]
    %v3718 = vld [vmem:[%s4 + $0x1788] sm:$0xff]
    %v3719 = vld [vmem:[%s4 + $0x1790] sm:$0xff]
    %v3720 = vld [vmem:[%s4 + $0x1798] sm:$0xff]
    %v3721 = vld [vmem:[%s4 + $0x17a0] sm:$0xff]
    %v3722 = vld [vmem:[%s4 + $0x17a8] sm:$0xff]
    %v3723 = vld [vmem:[%s4 + $0x17b0] sm:$0xff]
    %v3724 = vld [vmem:[%s4 + $0x17b8] sm:$0xff]
    %v3725 = vld [vmem:[%s4 + $0x17c0] sm:$0xff]
    %v3726 = vld [vmem:[%s4 + $0x17c8] sm:$0xff]
    %v3727 = vld [vmem:[%s4 + $0x17d0] sm:$0xff]
    %v3728 = vld [vmem:[%s4 + $0x17d8] sm:$0xff]
    %v3729 = vld [vmem:[%s4 + $0x17e0] sm:$0xff]
    %v3730 = vld [vmem:[%s4 + $0x17e8] sm:$0xff]
    %v3731 = vld [vmem:[%s4 + $0x17f0] sm:$0xff]
    %v3732 = vld [vmem:[%s4 + $0x17f8] sm:$0xff]
    %v3733 = vld [vmem:[%s4 + $0x1800] sm:$0xff]
    %v3734 = vld [vmem:[%s4 + $0x1808] sm:$0xff]
    %v3735 = vld [vmem:[%s4 + $0x1810] sm:$0xff]
    %v3736 = vld [vmem:[%s4 + $0x1818] sm:$0xff]
    %v3737 = vld [vmem:[%s4 + $0x1820] sm:$0xff]
    %v3738 = vld [vmem:[%s4 + $0x1828] sm:$0xff]
    %v3739 = vld [vmem:[%s4 + $0x1830] sm:$0xff]
    %v3740 = vld [vmem:[%s4 + $0x1838] sm:$0xff]
    %v3741 = vld [vmem:[%s4 + $0x1840] sm:$0xff]
    %v3742 = vld [vmem:[%s4 + $0x1848] sm:$0xff]
    %v3743 = vld [vmem:[%s4 + $0x1850] sm:$0xff]
    %v3744 = vld [vmem:[%s4 + $0x1858] sm:$0xff]
    %v3745 = vld [vmem:[%s4 + $0x1860] sm:$0xff]
    %v3746 = vld [vmem:[%s4 + $0x1868] sm:$0xff]
    %v3747 = vld [vmem:[%s4 + $0x1870] sm:$0xff]
    %v3748 = vld [vmem:[%s4 + $0x1878] sm:$0xff]
    %v3749 = vld [vmem:[%s4 + $0x1880] sm:$0xff]
    %v3750 = vld [vmem:[%s4 + $0x1888] sm:$0xff]
    %v3751 = vld [vmem:[%s4 + $0x1890] sm:$0xff]
    %v3752 = vld [vmem:[%s4 + $0x1898] sm:$0xff]
    %v3753 = vld [vmem:[%s4 + $0x18a0] sm:$0xff]
    %v3754 = vld [vmem:[%s4 + $0x18a8] sm:$0xff]
    %v3755 = vld [vmem:[%s4 + $0x18b0] sm:$0xff]
    %v3756 = vld [vmem:[%s4 + $0x18b8] sm:$0xff]
    %v3757 = vld [vmem:[%s4 + $0x18c0] sm:$0xff]
    %v3758 = vld [vmem:[%s4 + $0x18c8] sm:$0xff]
    %v3759 = vld [vmem:[%s4 + $0x18d0] sm:$0xff]
    %v3760 = vld [vmem:[%s4 + $0x18d8] sm:$0xff]
    %v3761 = vld [vmem:[%s4 + $0x18e0] sm:$0xff]
    %v3762 = vld [vmem:[%s4 + $0x18e8] sm:$0xff]
    %v3763 = vld [vmem:[%s4 + $0x18f0] sm:$0xff]
    %v3764 = vld [vmem:[%s4 + $0x18f8] sm:$0xff]
    %v3765 = vld [vmem:[%s4 + $0x1900] sm:$0xff]
    %v3766 = vld [vmem:[%s4 + $0x1908] sm:$0xff]
    %v3767 = vld [vmem:[%s4 + $0x1910] sm:$0xff]
    %v3768 = vld [vmem:[%s4 + $0x1918] sm:$0xff]
    %v3769 = vld [vmem:[%s4 + $0x1920] sm:$0xff]
    %v3770 = vld [vmem:[%s4 + $0x1928] sm:$0xff]
    %v3771 = vld [vmem:[%s4 + $0x1930] sm:$0xff]
    %v3772 = vld [vmem:[%s4 + $0x1938] sm:$0xff]
    %v3773 = vld [vmem:[%s4 + $0x1940] sm:$0xff]
    %v3774 = vld [vmem:[%s4 + $0x1948] sm:$0xff]
    %v3775 = vld [vmem:[%s4 + $0x1950] sm:$0xff]
    %v3776 = vld [vmem:[%s4 + $0x1958] sm:$0xff]
    %v3777 = vld [vmem:[%s4 + $0x1960] sm:$0xff]
    %v3778 = vld [vmem:[%s4 + $0x1968] sm:$0xff]
    %v3779 = vld [vmem:[%s4 + $0x1970] sm:$0xff]
    %v3780 = vld [vmem:[%s4 + $0x1978] sm:$0xff]
    %v3781 = vld [vmem:[%s4 + $0x1980] sm:$0xff]
    %v3782 = vld [vmem:[%s4 + $0x1988] sm:$0xff]
    %v3783 = vld [vmem:[%s4 + $0x1990] sm:$0xff]
    %v3784 = vld [vmem:[%s4 + $0x1998] sm:$0xff]
    %v3785 = vld [vmem:[%s4 + $0x19a0] sm:$0xff]
    %v3786 = vld [vmem:[%s4 + $0x19a8] sm:$0xff]
    %v3787 = vld [vmem:[%s4 + $0x19b0] sm:$0xff]
    %v3788 = vld [vmem:[%s4 + $0x19b8] sm:$0xff]
    %v3789 = vld [vmem:[%s4 + $0x19c0] sm:$0xff]
    %v3790 = vld [vmem:[%s4 + $0x19c8] sm:$0xff]
    %v3791 = vld [vmem:[%s4 + $0x19d0] sm:$0xff]
    %v3792 = vld [vmem:[%s4 + $0x19d8] sm:$0xff]
    %v3793 = vld [vmem:[%s4 + $0x19e0] sm:$0xff]
    %v3794 = vld [vmem:[%s4 + $0x19e8] sm:$0xff]
    %v3795 = vld [vmem:[%s4 + $0x19f0] sm:$0xff]
    %v3796 = vld [vmem:[%s4 + $0x19f8] sm:$0xff]
    %v3797 = vld [vmem:[%s4 + $0x1a00] sm:$0xff]
    %v3798 = vld [vmem:[%s4 + $0x1a08] sm:$0xff]
    %v3799 = vld [vmem:[%s4 + $0x1a10] sm:$0xff]
    %v3800 = vld [vmem:[%s4 + $0x1a18] sm:$0xff]
    %v3801 = vld [vmem:[%s4 + $0x1a20] sm:$0xff]
    %v3802 = vld [vmem:[%s4 + $0x1a28] sm:$0xff]
    %v3803 = vld [vmem:[%s4 + $0x1a30] sm:$0xff]
    %v3804 = vld [vmem:[%s4 + $0x1a38] sm:$0xff]
    %v3805 = vld [vmem:[%s4 + $0x1a40] sm:$0xff]
    %v3806 = vld [vmem:[%s4 + $0x1a48] sm:$0xff]
    %v3807 = vld [vmem:[%s4 + $0x1a50] sm:$0xff]
    %v3808 = vld [vmem:[%s4 + $0x1a58] sm:$0xff]
    %v3809 = vld [vmem:[%s4 + $0x1a60] sm:$0xff]
    %v3810 = vld [vmem:[%s4 + $0x1a68] sm:$0xff]
    %v3811 = vld [vmem:[%s4 + $0x1a70] sm:$0xff]
    %v3812 = vld [vmem:[%s4 + $0x1a78] sm:$0xff]
    %v3813 = vld [vmem:[%s4 + $0x1a80] sm:$0xff]
    %v3814 = vld [vmem:[%s4 + $0x1a88] sm:$0xff]
    %v3815 = vld [vmem:[%s4 + $0x1a90] sm:$0xff]
    %v3816 = vld [vmem:[%s4 + $0x1a98] sm:$0xff]
    %v3817 = vld [vmem:[%s4 + $0x1aa0] sm:$0xff]
    %v3818 = vld [vmem:[%s4 + $0x1aa8] sm:$0xff]
    %v3819 = vld [vmem:[%s4 + $0x1ab0] sm:$0xff]
    %v3820 = vld [vmem:[%s4 + $0x1ab8] sm:$0xff]
    %v3821 = vld [vmem:[%s4 + $0x1ac0] sm:$0xff]
    %v3822 = vld [vmem:[%s4 + $0x1ac8] sm:$0xff]
    %v3823 = vld [vmem:[%s4 + $0x1ad0] sm:$0xff]
    %v3824 = vld [vmem:[%s4 + $0x1ad8] sm:$0xff]
    %v3825 = vld [vmem:[%s4 + $0x1ae0] sm:$0xff]
    %v3826 = vld [vmem:[%s4 + $0x1ae8] sm:$0xff]
    %v3827 = vld [vmem:[%s4 + $0x1af0] sm:$0xff]
    %v3828 = vld [vmem:[%s4 + $0x1af8] sm:$0xff]
    %v3829 = vld [vmem:[%s4 + $0x1b00] sm:$0xff]
    %v3830 = vld [vmem:[%s4 + $0x1b08] sm:$0xff]
    %v3831 = vld [vmem:[%s4 + $0x1b10] sm:$0xff]
    %v3832 = vld [vmem:[%s4 + $0x1b18] sm:$0xff]
    %v3833 = vld [vmem:[%s4 + $0x1b20] sm:$0xff]
    %v3834 = vld [vmem:[%s4 + $0x1b28] sm:$0xff]
    %v3835 = vld [vmem:[%s4 + $0x1b30] sm:$0xff]
    %v3836 = vld [vmem:[%s4 + $0x1b38] sm:$0xff]
    %v3837 = vld [vmem:[%s4 + $0x1b40] sm:$0xff]
    %v3838 = vld [vmem:[%s4 + $0x1b48] sm:$0xff]
    %v3839 = vld [vmem:[%s4 + $0x1b50] sm:$0xff]
    %v3840 = vld [vmem:[%s4 + $0x1b58] sm:$0xff]
    %v3841 = vld [vmem:[%s4 + $0x1b60] sm:$0xff]
    %v3842 = vld [vmem:[%s4 + $0x1b68] sm:$0xff]
    %v3843 = vld [vmem:[%s4 + $0x1b70] sm:$0xff]
    %v3844 = vld [vmem:[%s4 + $0x1b78] sm:$0xff]
    %v3845 = vld [vmem:[%s4 + $0x1b80] sm:$0xff]
    %v3846 = vld [vmem:[%s4 + $0x1b88] sm:$0xff]
    %v3847 = vld [vmem:[%s4 + $0x1b90] sm:$0xff]
    %v3848 = vld [vmem:[%s4 + $0x1b98] sm:$0xff]
    %v3849 = vld [vmem:[%s4 + $0x1ba0] sm:$0xff]
    %v3850 = vld [vmem:[%s4 + $0x1ba8] sm:$0xff]
    %v3851 = vld [vmem:[%s4 + $0x1bb0] sm:$0xff]
    %v3852 = vld [vmem:[%s4 + $0x1bb8] sm:$0xff]
    %v3853 = vld [vmem:[%s4 + $0x1bc0] sm:$0xff]
    %v3854 = vld [vmem:[%s4 + $0x1bc8] sm:$0xff]
    %v3855 = vld [vmem:[%s4 + $0x1bd0] sm:$0xff]
    %v3856 = vld [vmem:[%s4 + $0x1bd8] sm:$0xff]
    %v3857 = vld [vmem:[%s4 + $0x1be0] sm:$0xff]
    %v3858 = vld [vmem:[%s4 + $0x1be8] sm:$0xff]
    %v3859 = vld [vmem:[%s4 + $0x1bf0] sm:$0xff]
    %v3860 = vld [vmem:[%s4 + $0x1bf8] sm:$0xff]
    %v3861 = vld [vmem:[%s4 + $0x1c00] sm:$0xff]
    %v3862 = vld [vmem:[%s4 + $0x1c08] sm:$0xff]
    %v3863 = vld [vmem:[%s4 + $0x1c10] sm:$0xff]
    %v3864 = vld [vmem:[%s4 + $0x1c18] sm:$0xff]
    %v3865 = vld [vmem:[%s4 + $0x1c20] sm:$0xff]
    %v3866 = vld [vmem:[%s4 + $0x1c28] sm:$0xff]
    %v3867 = vld [vmem:[%s4 + $0x1c30] sm:$0xff]
    %v3868 = vld [vmem:[%s4 + $0x1c38] sm:$0xff]
    %v3869 = vld [vmem:[%s4 + $0x1c40] sm:$0xff]
    %v3870 = vld [vmem:[%s4 + $0x1c48] sm:$0xff]
    %v3871 = vld [vmem:[%s4 + $0x1c50] sm:$0xff]
    %v3872 = vld [vmem:[%s4 + $0x1c58] sm:$0xff]
    %v3873 = vld [vmem:[%s4 + $0x1c60] sm:$0xff]
    %v3874 = vld [vmem:[%s4 + $0x1c68] sm:$0xff]
    %v3875 = vld [vmem:[%s4 + $0x1c70] sm:$0xff]
    %v3876 = vld [vmem:[%s4 + $0x1c78] sm:$0xff]
    %v3877 = vld [vmem:[%s4 + $0x1c80] sm:$0xff]
    %v3878 = vld [vmem:[%s4 + $0x1c88] sm:$0xff]
    %v3879 = vld [vmem:[%s4 + $0x1c90] sm:$0xff]
    %v3880 = vld [vmem:[%s4 + $0x1c98] sm:$0xff]
    %v3881 = vld [vmem:[%s4 + $0x1ca0] sm:$0xff]
    %v3882 = vld [vmem:[%s4 + $0x1ca8] sm:$0xff]
    %v3883 = vld [vmem:[%s4 + $0x1cb0] sm:$0xff]
    %v3884 = vld [vmem:[%s4 + $0x1cb8] sm:$0xff]
    %v3885 = vld [vmem:[%s4 + $0x1cc0] sm:$0xff]
    %v3886 = vld [vmem:[%s4 + $0x1cc8] sm:$0xff]
    %v3887 = vld [vmem:[%s4 + $0x1cd0] sm:$0xff]
    %v3888 = vld [vmem:[%s4 + $0x1cd8] sm:$0xff]
    %v3889 = vld [vmem:[%s4 + $0x1ce0] sm:$0xff]
    %v3890 = vld [vmem:[%s4 + $0x1ce8] sm:$0xff]
    %v3891 = vld [vmem:[%s4 + $0x1cf0] sm:$0xff]
    %v3892 = vld [vmem:[%s4 + $0x1cf8] sm:$0xff]
    %v3893 = vld [vmem:[%s4 + $0x1d00] sm:$0xff]
    %v3894 = vld [vmem:[%s4 + $0x1d08] sm:$0xff]
    %v3895 = vld [vmem:[%s4 + $0x1d10] sm:$0xff]
    %v3896 = vld [vmem:[%s4 + $0x1d18] sm:$0xff]
    %v3897 = vld [vmem:[%s4 + $0x1d20] sm:$0xff]
    %v3898 = vld [vmem:[%s4 + $0x1d28] sm:$0xff]
    %v3899 = vld [vmem:[%s4 + $0x1d30] sm:$0xff]
    %v3900 = vld [vmem:[%s4 + $0x1d38] sm:$0xff]
    %v3901 = vld [vmem:[%s4 + $0x1d40] sm:$0xff]
    %v3902 = vld [vmem:[%s4 + $0x1d48] sm:$0xff]
    %v3903 = vld [vmem:[%s4 + $0x1d50] sm:$0xff]
    %v3904 = vld [vmem:[%s4 + $0x1d58] sm:$0xff]
    %v3905 = vld [vmem:[%s4 + $0x1d60] sm:$0xff]
    %v3906 = vld [vmem:[%s4 + $0x1d68] sm:$0xff]
    %v3907 = vld [vmem:[%s4 + $0x1d70] sm:$0xff]
    %v3908 = vld [vmem:[%s4 + $0x1d78] sm:$0xff]
    %v3909 = vld [vmem:[%s4 + $0x1d80] sm:$0xff]
    %v3910 = vld [vmem:[%s4 + $0x1d88] sm:$0xff]
    %v3911 = vld [vmem:[%s4 + $0x1d90] sm:$0xff]
    %v3912 = vld [vmem:[%s4 + $0x1d98] sm:$0xff]
    %v3913 = vld [vmem:[%s4 + $0x1da0] sm:$0xff]
    %v3914 = vld [vmem:[%s4 + $0x1da8] sm:$0xff]
    %v3915 = vld [vmem:[%s4 + $0x1db0] sm:$0xff]
    %v3916 = vld [vmem:[%s4 + $0x1db8] sm:$0xff]
    %v3917 = vld [vmem:[%s4 + $0x1dc0] sm:$0xff]
    %v3918 = vld [vmem:[%s4 + $0x1dc8] sm:$0xff]
    %v3919 = vld [vmem:[%s4 + $0x1dd0] sm:$0xff]
    %v3920 = vld [vmem:[%s4 + $0x1dd8] sm:$0xff]
    %v3921 = vld [vmem:[%s4 + $0x1de0] sm:$0xff]
    %v3922 = vld [vmem:[%s4 + $0x1de8] sm:$0xff]
    %v3923 = vld [vmem:[%s4 + $0x1df0] sm:$0xff]
    %v3924 = vld [vmem:[%s4 + $0x1df8] sm:$0xff]
    %v3925 = vld [vmem:[%s4 + $0x1e00] sm:$0xff]
    %v3926 = vld [vmem:[%s4 + $0x1e08] sm:$0xff]
    %v3927 = vld [vmem:[%s4 + $0x1e10] sm:$0xff]
    %v3928 = vld [vmem:[%s4 + $0x1e18] sm:$0xff]
    %v3929 = vld [vmem:[%s4 + $0x1e20] sm:$0xff]
    %v3930 = vld [vmem:[%s4 + $0x1e28] sm:$0xff]
    %v3931 = vld [vmem:[%s4 + $0x1e30] sm:$0xff]
    %v3932 = vld [vmem:[%s4 + $0x1e38] sm:$0xff]
    %v3933 = vld [vmem:[%s4 + $0x1e40] sm:$0xff]
    %v3934 = vld [vmem:[%s4 + $0x1e48] sm:$0xff]
    %v3935 = vld [vmem:[%s4 + $0x1e50] sm:$0xff]
    %v3936 = vld [vmem:[%s4 + $0x1e58] sm:$0xff]
    %v3937 = vld [vmem:[%s4 + $0x1e60] sm:$0xff]
    %v3938 = vld [vmem:[%s4 + $0x1e68] sm:$0xff]
    %v3939 = vld [vmem:[%s4 + $0x1e70] sm:$0xff]
    %v3940 = vld [vmem:[%s4 + $0x1e78] sm:$0xff]
    %v3941 = vld [vmem:[%s4 + $0x1e80] sm:$0xff]
    %v3942 = vld [vmem:[%s4 + $0x1e88] sm:$0xff]
    %v3943 = vld [vmem:[%s4 + $0x1e90] sm:$0xff]
    %v3944 = vld [vmem:[%s4 + $0x1e98] sm:$0xff]
    %v3945 = vld [vmem:[%s4 + $0x1ea0] sm:$0xff]
    %v3946 = vld [vmem:[%s4 + $0x1ea8] sm:$0xff]
    %v3947 = vld [vmem:[%s4 + $0x1eb0] sm:$0xff]
    %v3948 = vld [vmem:[%s4 + $0x1eb8] sm:$0xff]
    %v3949 = vld [vmem:[%s4 + $0x1ec0] sm:$0xff]
    %v3950 = vld [vmem:[%s4 + $0x1ec8] sm:$0xff]
    %v3951 = vld [vmem:[%s4 + $0x1ed0] sm:$0xff]
    %v3952 = vld [vmem:[%s4 + $0x1ed8] sm:$0xff]
    %v3953 = vld [vmem:[%s4 + $0x1ee0] sm:$0xff]
    %v3954 = vld [vmem:[%s4 + $0x1ee8] sm:$0xff]
    %v3955 = vld [vmem:[%s4 + $0x1ef0] sm:$0xff]
    %v3956 = vld [vmem:[%s4 + $0x1ef8] sm:$0xff]
    %v3957 = vld [vmem:[%s4 + $0x1f00] sm:$0xff]
    %v3958 = vld [vmem:[%s4 + $0x1f08] sm:$0xff]
    %v3959 = vld [vmem:[%s4 + $0x1f10] sm:$0xff]
    %v3960 = vld [vmem:[%s4 + $0x1f18] sm:$0xff]
    %v3961 = vld [vmem:[%s4 + $0x1f20] sm:$0xff]
    %v3962 = vld [vmem:[%s4 + $0x1f28] sm:$0xff]
    %v3963 = vld [vmem:[%s4 + $0x1f30] sm:$0xff]
    %v3964 = vld [vmem:[%s4 + $0x1f38] sm:$0xff]
    %v3965 = vld [vmem:[%s4 + $0x1f40] sm:$0xff]
    %v3966 = vld [vmem:[%s4 + $0x1f48] sm:$0xff]
    %v3967 = vld [vmem:[%s4 + $0x1f50] sm:$0xff]
    %v3968 = vld [vmem:[%s4 + $0x1f58] sm:$0xff]
    %v3969 = vld [vmem:[%s4 + $0x1f60] sm:$0xff]
    %v3970 = vld [vmem:[%s4 + $0x1f68] sm:$0xff]
    %v3971 = vld [vmem:[%s4 + $0x1f70] sm:$0xff]
    %v3972 = vld [vmem:[%s4 + $0x1f78] sm:$0xff]
    %v3973 = vld [vmem:[%s4 + $0x1f80] sm:$0xff]
    %v3974 = vld [vmem:[%s4 + $0x1f88] sm:$0xff]
    %v3975 = vld [vmem:[%s4 + $0x1f90] sm:$0xff]
    %v3976 = vld [vmem:[%s4 + $0x1f98] sm:$0xff]
    %v3977 = vld [vmem:[%s4 + $0x1fa0] sm:$0xff]
    %v3978 = vld [vmem:[%s4 + $0x1fa8] sm:$0xff]
    %v3979 = vld [vmem:[%s4 + $0x1fb0] sm:$0xff]
    %v3980 = vld [vmem:[%s4 + $0x1fb8] sm:$0xff]
    %v3981 = vld [vmem:[%s4 + $0x1fc0] sm:$0xff]
    %v3982 = vld [vmem:[%s4 + $0x1fc8] sm:$0xff]
    %v3983 = vld [vmem:[%s4 + $0x1fd0] sm:$0xff]
    %v3984 = vld [vmem:[%s4 + $0x1fd8] sm:$0xff]
    %v3985 = vld [vmem:[%s4 + $0x1fe0] sm:$0xff]
    %v3986 = vld [vmem:[%s4 + $0x1fe8] sm:$0xff]
    %v3987 = vld [vmem:[%s4 + $0x1ff0] sm:$0xff]
    %v3988 = vld [vmem:[%s4 + $0x1ff8] sm:$0xff]
    %v3989 = vld [vmem:[%s4 + $0x2000] sm:$0xff]
    %v3990 = vld [vmem:[%s4 + $0x2008] sm:$0xff]
    %v3991 = vld [vmem:[%s4 + $0x2010] sm:$0xff]
    %v3992 = vld [vmem:[%s4 + $0x2018] sm:$0xff]
    %v3993 = vld [vmem:[%s4 + $0x2020] sm:$0xff]
    %v3994 = vld [vmem:[%s4 + $0x2028] sm:$0xff]
    %v3995 = vld [vmem:[%s4 + $0x2030] sm:$0xff]
    %v3996 = vld [vmem:[%s4 + $0x2038] sm:$0xff]
    %v3997 = vld [vmem:[%s4 + $0x2040] sm:$0xff]
    %v3998 = vld [vmem:[%s4 + $0x2048] sm:$0xff]
    %v3999 = vld [vmem:[%s4 + $0x2050] sm:$0xff]
    %v4000 = vld [vmem:[%s4 + $0x2058] sm:$0xff]
    %v4001 = vld [vmem:[%s4 + $0x2060] sm:$0xff]
    %v4002 = vld [vmem:[%s4 + $0x2068] sm:$0xff]
    %v4003 = vld [vmem:[%s4 + $0x2070] sm:$0xff]
    %v4004 = vld [vmem:[%s4 + $0x2078] sm:$0xff]
    %v4005 = vld [vmem:[%s4 + $0x2080] sm:$0xff]
    %v4006 = vld [vmem:[%s4 + $0x2088] sm:$0xff]
    %v4007 = vld [vmem:[%s4 + $0x2090] sm:$0xff]
    %v4008 = vld [vmem:[%s4 + $0x2098] sm:$0xff]
    %v4009 = vld [vmem:[%s4 + $0x20a0] sm:$0xff]
    %v4010 = vld [vmem:[%s4 + $0x20a8] sm:$0xff]
    %v4011 = vld [vmem:[%s4 + $0x20b0] sm:$0xff]
    %v4012 = vld [vmem:[%s4 + $0x20b8] sm:$0xff]
    %v4013 = vld [vmem:[%s4 + $0x20c0] sm:$0xff]
    %v4014 = vld [vmem:[%s4 + $0x20c8] sm:$0xff]
    %v4015 = vld [vmem:[%s4 + $0x20d0] sm:$0xff]
    %v4016 = vld [vmem:[%s4 + $0x20d8] sm:$0xff]
    %v4017 = vld [vmem:[%s4 + $0x20e0] sm:$0xff]
    %v4018 = vld [vmem:[%s4 + $0x20e8] sm:$0xff]
    %v4019 = vld [vmem:[%s4 + $0x20f0] sm:$0xff]
    %v4020 = vld [vmem:[%s4 + $0x20f8] sm:$0xff]
    %v4021 = vld [vmem:[%s4 + $0x2100] sm:$0xff]
    %v4022 = vld [vmem:[%s4 + $0x2108] sm:$0xff]
    %v4023 = vld [vmem:[%s4 + $0x2110] sm:$0xff]
    %v4024 = vld [vmem:[%s4 + $0x2118] sm:$0xff]
    %v4025 = vld [vmem:[%s4 + $0x2120] sm:$0xff]
    %v4026 = vld [vmem:[%s4 + $0x2128] sm:$0xff]
    %v4027 = vld [vmem:[%s4 + $0x2130] sm:$0xff]
    %v4028 = vld [vmem:[%s4 + $0x2138] sm:$0xff]
    %v4029 = vld [vmem:[%s4 + $0x2140] sm:$0xff]
    %v4030 = vld [vmem:[%s4 + $0x2148] sm:$0xff]
    %v4031 = vld [vmem:[%s4 + $0x2150] sm:$0xff]
    %v4032 = vld [vmem:[%s4 + $0x2158] sm:$0xff]
    %v4033 = vld [vmem:[%s4 + $0x2160] sm:$0xff]
    %v4034 = vld [vmem:[%s4 + $0x2168] sm:$0xff]
    %v4035 = vld [vmem:[%s4 + $0x2170] sm:$0xff]
    %v4036 = vld [vmem:[%s4 + $0x2178] sm:$0xff]
    %v4037 = vld [vmem:[%s4 + $0x2180] sm:$0xff]
    %v4038 = vld [vmem:[%s4 + $0x2188] sm:$0xff]
    %v4039 = vld [vmem:[%s4 + $0x2190] sm:$0xff]
    %v4040 = vld [vmem:[%s4 + $0x2198] sm:$0xff]
    %v4041 = vld [vmem:[%s4 + $0x21a0] sm:$0xff]
    %v4042 = vld [vmem:[%s4 + $0x21a8] sm:$0xff]
    %v4043 = vld [vmem:[%s4 + $0x21b0] sm:$0xff]
    %v4044 = vld [vmem:[%s4 + $0x21b8] sm:$0xff]
    %v4045 = vld [vmem:[%s4 + $0x21c0] sm:$0xff]
    %v4046 = vld [vmem:[%s4 + $0x21c8] sm:$0xff]
    %v4047 = vld [vmem:[%s4 + $0x21d0] sm:$0xff]
    %v4048 = vld [vmem:[%s4 + $0x21d8] sm:$0xff]
    %v4049 = vld [vmem:[%s4 + $0x21e0] sm:$0xff]
    %v4050 = vld [vmem:[%s4 + $0x21e8] sm:$0xff]
    %v4051 = vld [vmem:[%s4 + $0x21f0] sm:$0xff]
    %v4052 = vld [vmem:[%s4 + $0x21f8] sm:$0xff]
    %v4053 = vld [vmem:[%s4 + $0x2200] sm:$0xff]
    %v4054 = vld [vmem:[%s4 + $0x2208] sm:$0xff]
    %v4055 = vld [vmem:[%s4 + $0x2210] sm:$0xff]
    %v4056 = vld [vmem:[%s4 + $0x2218] sm:$0xff]
    %v4057 = vld [vmem:[%s4 + $0x2220] sm:$0xff]
    %v4058 = vld [vmem:[%s4 + $0x2228] sm:$0xff]
    %v4059 = vld [vmem:[%s4 + $0x2230] sm:$0xff]
    %v4060 = vld [vmem:[%s4 + $0x2238] sm:$0xff]
    %v4061 = vld [vmem:[%s4 + $0x2240] sm:$0xff]
    %v4062 = vld [vmem:[%s4 + $0x2248] sm:$0xff]
    %v4063 = vld [vmem:[%s4 + $0x2250] sm:$0xff]
    %v4064 = vld [vmem:[%s4 + $0x2258] sm:$0xff]
    %v4065 = vld [vmem:[%s4 + $0x2260] sm:$0xff]
    %v4066 = vld [vmem:[%s4 + $0x2268] sm:$0xff]
    %v4067 = vld [vmem:[%s4 + $0x2270] sm:$0xff]
    %v4068 = vld [vmem:[%s4 + $0x2278] sm:$0xff]
    %v4069 = vld [vmem:[%s4 + $0x2280] sm:$0xff]
    %v4070 = vld [vmem:[%s4 + $0x2288] sm:$0xff]
    %v4071 = vld [vmem:[%s4 + $0x2290] sm:$0xff]
    %v4072 = vld [vmem:[%s4 + $0x2298] sm:$0xff]
    %v4073 = vld [vmem:[%s4 + $0x22a0] sm:$0xff]
    %v4074 = vld [vmem:[%s4 + $0x22a8] sm:$0xff]
    %v4075 = vld [vmem:[%s4 + $0x22b0] sm:$0xff]
    %v4076 = vld [vmem:[%s4 + $0x22b8] sm:$0xff]
    %v4077 = vld [vmem:[%s4 + $0x22c0] sm:$0xff]
    %v4078 = vld [vmem:[%s4 + $0x22c8] sm:$0xff]
    %v4079 = vld [vmem:[%s4 + $0x22d0] sm:$0xff]
    %v4080 = vld [vmem:[%s4 + $0x22d8] sm:$0xff]
    %v4081 = vld [vmem:[%s4 + $0x22e0] sm:$0xff]
    %v4082 = vld [vmem:[%s4 + $0x22e8] sm:$0xff]
    %v4083 = vld [vmem:[%s4 + $0x22f0] sm:$0xff]
    %v4084 = vld [vmem:[%s4 + $0x22f8] sm:$0xff]
    %v4085 = vld [vmem:[%s4 + $0x2300] sm:$0xff]
    %v4086 = vld [vmem:[%s4 + $0x2308] sm:$0xff]
    %v4087 = vld [vmem:[%s4 + $0x2310] sm:$0xff]
    %v4088 = vld [vmem:[%s4 + $0x2318] sm:$0xff]
    %v4089 = vld [vmem:[%s4 + $0x2320] sm:$0xff]
    %v4090 = vld [vmem:[%s4 + $0x2328] sm:$0xff]
    %v4091 = vld [vmem:[%s4 + $0x2330] sm:$0xff]
    %v4092 = vld [vmem:[%s4 + $0x2338] sm:$0xff]
    %v4093 = vld [vmem:[%s4 + $0x2340] sm:$0xff]
    %v4094 = vld [vmem:[%s4 + $0x2348] sm:$0xff]
    %v4095 = vld [vmem:[%s4 + $0x2350] sm:$0xff]
    %v4096 = vld [vmem:[%s4 + $0x2358] sm:$0xff]
    %v4097 = vld [vmem:[%s4 + $0x2360] sm:$0xff]
    %v4098 = vld [vmem:[%s4 + $0x2368] sm:$0xff]
    %v4099 = vld [vmem:[%s4 + $0x2370] sm:$0xff]
    %v4100 = vld [vmem:[%s4 + $0x2378] sm:$0xff]
    %v4101 = vld [vmem:[%s4 + $0x2380] sm:$0xff]
    %v4102 = vld [vmem:[%s4 + $0x2388] sm:$0xff]
    %v4103 = vld [vmem:[%s4 + $0x2390] sm:$0xff]
    %v4104 = vld [vmem:[%s4 + $0x2398] sm:$0xff]
    %v4105 = vld [vmem:[%s4 + $0x23a0] sm:$0xff]
    %v4106 = vld [vmem:[%s4 + $0x23a8] sm:$0xff]
    %v4107 = vld [vmem:[%s4 + $0x23b0] sm:$0xff]
    %v4108 = vld [vmem:[%s4 + $0x23b8] sm:$0xff]
    %v4109 = vld [vmem:[%s4 + $0x23c0] sm:$0xff]
    %v4110 = vld [vmem:[%s4 + $0x23c8] sm:$0xff]
    %v4111 = vld [vmem:[%s4 + $0x23d0] sm:$0xff]
    %v4112 = vld [vmem:[%s4 + $0x23d8] sm:$0xff]
    %v4113 = vld [vmem:[%s4 + $0x23e0] sm:$0xff]
    %v4114 = vld [vmem:[%s4 + $0x23e8] sm:$0xff]
    %v4115 = vld [vmem:[%s4 + $0x23f0] sm:$0xff]
    %v4116 = vld [vmem:[%s4 + $0x23f8] sm:$0xff]
    %v4117 = vld [vmem:[%s4 + $0x2400] sm:$0xff]
    %v4118 = vld [vmem:[%s4 + $0x2408] sm:$0xff]
    %v4119 = vld [vmem:[%s4 + $0x2410] sm:$0xff]
    %v4120 = vld [vmem:[%s4 + $0x2418] sm:$0xff]
    %v4121 = vld [vmem:[%s4 + $0x2420] sm:$0xff]
    %v4122 = vld [vmem:[%s4 + $0x2428] sm:$0xff]
    %v4123 = vld [vmem:[%s4 + $0x2430] sm:$0xff]
    %v4124 = vld [vmem:[%s4 + $0x2438] sm:$0xff]
    %v4125 = vld [vmem:[%s4 + $0x2440] sm:$0xff]
    %v4126 = vld [vmem:[%s4 + $0x2448] sm:$0xff]
    %v4127 = vld [vmem:[%s4 + $0x2450] sm:$0xff]
    %v4128 = vld [vmem:[%s4 + $0x2458] sm:$0xff]
    %v4129 = vld [vmem:[%s4 + $0x2460] sm:$0xff]
    %v4130 = vld [vmem:[%s4 + $0x2468] sm:$0xff]
    %v4131 = vld [vmem:[%s4 + $0x2470] sm:$0xff]
    %v4132 = vld [vmem:[%s4 + $0x2478] sm:$0xff]
    %v4133 = vld [vmem:[%s4 + $0x2480] sm:$0xff]
    %v4134 = vld [vmem:[%s4 + $0x2488] sm:$0xff]
    %v4135 = vld [vmem:[%s4 + $0x2490] sm:$0xff]
    %v4136 = vld [vmem:[%s4 + $0x2498] sm:$0xff]
    %v4137 = vld [vmem:[%s4 + $0x24a0] sm:$0xff]
    %v4138 = vld [vmem:[%s4 + $0x24a8] sm:$0xff]
    %v4139 = vld [vmem:[%s4 + $0x24b0] sm:$0xff]
    %v4140 = vld [vmem:[%s4 + $0x24b8] sm:$0xff]
    %v4141 = vld [vmem:[%s4 + $0x24c0] sm:$0xff]
    %v4142 = vld [vmem:[%s4 + $0x24c8] sm:$0xff]
    %v4143 = vld [vmem:[%s4 + $0x24d0] sm:$0xff]
    %v4144 = vld [vmem:[%s4 + $0x24d8] sm:$0xff]
    %v4145 = vld [vmem:[%s4 + $0x24e0] sm:$0xff]
    %v4146 = vld [vmem:[%s4 + $0x24e8] sm:$0xff]
    %v4147 = vld [vmem:[%s4 + $0x24f0] sm:$0xff]
    %v4148 = vld [vmem:[%s4 + $0x24f8] sm:$0xff]
    %v4149 = vld [vmem:[%s4 + $0x2500] sm:$0xff]
    %v4150 = vld [vmem:[%s4 + $0x2508] sm:$0xff]
    %v4151 = vld [vmem:[%s4 + $0x2510] sm:$0xff]
    %v4152 = vld [vmem:[%s4 + $0x2518] sm:$0xff]
    %v4153 = vld [vmem:[%s4 + $0x2520] sm:$0xff]
    %v4154 = vld [vmem:[%s4 + $0x2528] sm:$0xff]
    %v4155 = vld [vmem:[%s4 + $0x2530] sm:$0xff]
    %v4156 = vld [vmem:[%s4 + $0x2538] sm:$0xff]
    %v4157 = vld [vmem:[%s4 + $0x2540] sm:$0xff]
    %v4158 = vld [vmem:[%s4 + $0x2548] sm:$0xff]
    %v4159 = vld [vmem:[%s4 + $0x2550] sm:$0xff]
    %v4160 = vld [vmem:[%s4 + $0x2558] sm:$0xff]
    %v4161 = vld [vmem:[%s4 + $0x2560] sm:$0xff]
    %v4162 = vld [vmem:[%s4 + $0x2568] sm:$0xff]
    %v4163 = vld [vmem:[%s4 + $0x2570] sm:$0xff]
    %v4164 = vld [vmem:[%s4 + $0x2578] sm:$0xff]
    %v4165 = vld [vmem:[%s4 + $0x2580] sm:$0xff]
    %v4166 = vld [vmem:[%s4 + $0x2588] sm:$0xff]
    %v4167 = vld [vmem:[%s4 + $0x2590] sm:$0xff]
    %v4168 = vld [vmem:[%s4 + $0x2598] sm:$0xff]
    %v4169 = vld [vmem:[%s4 + $0x25a0] sm:$0xff]
    %v4170 = vld [vmem:[%s4 + $0x25a8] sm:$0xff]
    %v4171 = vld [vmem:[%s4 + $0x25b0] sm:$0xff]
    %v4172 = vld [vmem:[%s4 + $0x25b8] sm:$0xff]
    %v4173 = vld [vmem:[%s4 + $0x25c0] sm:$0xff]
    %v4174 = vld [vmem:[%s4 + $0x25c8] sm:$0xff]
    %v4175 = vld [vmem:[%s4 + $0x25d0] sm:$0xff]
    %v4176 = vld [vmem:[%s4 + $0x25d8] sm:$0xff]
    %v4177 = vld [vmem:[%s4 + $0x25e0] sm:$0xff]
    %v4178 = vld [vmem:[%s4 + $0x25e8] sm:$0xff]
    %v4179 = vld [vmem:[%s4 + $0x25f0] sm:$0xff]
    %v4180 = vld [vmem:[%s4 + $0x25f8] sm:$0xff]
    %v4181 = vld [vmem:[%s4 + $0x2600] sm:$0xff]
    %v4182 = vld [vmem:[%s4 + $0x2608] sm:$0xff]
    %v4183 = vld [vmem:[%s4 + $0x2610] sm:$0xff]
    %v4184 = vld [vmem:[%s4 + $0x2618] sm:$0xff]
    %v4185 = vld [vmem:[%s4 + $0x2620] sm:$0xff]
    %v4186 = vld [vmem:[%s4 + $0x2628] sm:$0xff]
    %v4187 = vld [vmem:[%s4 + $0x2630] sm:$0xff]
    %v4188 = vld [vmem:[%s4 + $0x2638] sm:$0xff]
    %v4189 = vld [vmem:[%s4 + $0x2640] sm:$0xff]
    %v4190 = vld [vmem:[%s4 + $0x2648] sm:$0xff]
    %v4191 = vld [vmem:[%s4 + $0x2650] sm:$0xff]
    %v4192 = vld [vmem:[%s4 + $0x2658] sm:$0xff]
    %v4193 = vld [vmem:[%s4 + $0x2660] sm:$0xff]
    %v4194 = vld [vmem:[%s4 + $0x2668] sm:$0xff]
    %v4195 = vld [vmem:[%s4 + $0x2670] sm:$0xff]
    %v4196 = vld [vmem:[%s4 + $0x2678] sm:$0xff]
    %v4197 = vld [vmem:[%s4 + $0x2680] sm:$0xff]
    %v4198 = vld [vmem:[%s4 + $0x2688] sm:$0xff]
    %v4199 = vld [vmem:[%s4 + $0x2690] sm:$0xff]
    %v4200 = vld [vmem:[%s4 + $0x2698] sm:$0xff]
    %v4201 = vld [vmem:[%s4 + $0x26a0] sm:$0xff]
    %v4202 = vld [vmem:[%s4 + $0x26a8] sm:$0xff]
    %v4203 = vld [vmem:[%s4 + $0x26b0] sm:$0xff]
    %v4204 = vld [vmem:[%s4 + $0x26b8] sm:$0xff]
    %v4205 = vld [vmem:[%s4 + $0x26c0] sm:$0xff]
    %v4206 = vld [vmem:[%s4 + $0x26c8] sm:$0xff]
    %v4207 = vld [vmem:[%s4 + $0x26d0] sm:$0xff]
    %v4208 = vld [vmem:[%s4 + $0x26d8] sm:$0xff]
    %v4209 = vld [vmem:[%s4 + $0x26e0] sm:$0xff]
    %v4210 = vld [vmem:[%s4 + $0x26e8] sm:$0xff]
    %v4211 = vld [vmem:[%s4 + $0x26f0] sm:$0xff]
    %v4212 = vld [vmem:[%s4 + $0x26f8] sm:$0xff]
    %v4213 = vld [vmem:[%s4 + $0x2700] sm:$0xff]
    %v4214 = vld [vmem:[%s4 + $0x2708] sm:$0xff]
    %v4215 = vld [vmem:[%s4 + $0x2710] sm:$0xff]
    %v4216 = vld [vmem:[%s4 + $0x2718] sm:$0xff]
    %v4217 = vld [vmem:[%s4 + $0x2720] sm:$0xff]
    %v4218 = vld [vmem:[%s4 + $0x2728] sm:$0xff]
    %v4219 = vld [vmem:[%s4 + $0x2730] sm:$0xff]
    %v4220 = vld [vmem:[%s4 + $0x2738] sm:$0xff]
    %v4221 = vld [vmem:[%s4 + $0x2740] sm:$0xff]
    %v4222 = vld [vmem:[%s4 + $0x2748] sm:$0xff]
    %v4223 = vld [vmem:[%s4 + $0x2750] sm:$0xff]
    %v4224 = vld [vmem:[%s4 + $0x2758] sm:$0xff]
    %v4225 = vld [vmem:[%s4 + $0x2760] sm:$0xff]
    %v4226 = vld [vmem:[%s4 + $0x2768] sm:$0xff]
    %v4227 = vld [vmem:[%s4 + $0x2770] sm:$0xff]
    %v4228 = vld [vmem:[%s4 + $0x2778] sm:$0xff]
    %v4229 = vld [vmem:[%s4 + $0x2780] sm:$0xff]
    %v4230 = vld [vmem:[%s4 + $0x2788] sm:$0xff]
    %v4231 = vld [vmem:[%s4 + $0x2790] sm:$0xff]
    %v4232 = vld [vmem:[%s4 + $0x2798] sm:$0xff]
    %v4233 = vld [vmem:[%s4 + $0x27a0] sm:$0xff]
    %v4234 = vld [vmem:[%s4 + $0x27a8] sm:$0xff]
    %v4235 = vld [vmem:[%s4 + $0x27b0] sm:$0xff]
    %v4236 = vld [vmem:[%s4 + $0x27b8] sm:$0xff]
    %v4237 = vld [vmem:[%s4 + $0x27c0] sm:$0xff]
    %v4238 = vld [vmem:[%s4 + $0x27c8] sm:$0xff]
    %v4239 = vld [vmem:[%s4 + $0x27d0] sm:$0xff]
    %v4240 = vld [vmem:[%s4 + $0x27d8] sm:$0xff]
    %v4241 = vld [vmem:[%s4 + $0x27e0] sm:$0xff]
    %v4242 = vld [vmem:[%s4 + $0x27e8] sm:$0xff]
    %v4243 = vld [vmem:[%s4 + $0x27f0] sm:$0xff]
    %v4244 = vld [vmem:[%s4 + $0x27f8] sm:$0xff]
    %v4245 = vld [vmem:[%s4 + $0x2800] sm:$0xff]
    %v4246 = vld [vmem:[%s4 + $0x2808] sm:$0xff]
    %v4247 = vld [vmem:[%s4 + $0x2810] sm:$0xff]
    %v4248 = vld [vmem:[%s4 + $0x2818] sm:$0xff]
    %v4249 = vld [vmem:[%s4 + $0x2820] sm:$0xff]
    %v4250 = vld [vmem:[%s4 + $0x2828] sm:$0xff]
    %v4251 = vld [vmem:[%s4 + $0x2830] sm:$0xff]
    %v4252 = vld [vmem:[%s4 + $0x2838] sm:$0xff]
    %v4253 = vld [vmem:[%s4 + $0x2840] sm:$0xff]
    %v4254 = vld [vmem:[%s4 + $0x2848] sm:$0xff]
    %v4255 = vld [vmem:[%s4 + $0x2850] sm:$0xff]
    %v4256 = vld [vmem:[%s4 + $0x2858] sm:$0xff]
    %v4257 = vld [vmem:[%s4 + $0x2860] sm:$0xff]
    %v4258 = vld [vmem:[%s4 + $0x2868] sm:$0xff]
    %v4259 = vld [vmem:[%s4 + $0x2870] sm:$0xff]
    %v4260 = vld [vmem:[%s4 + $0x2878] sm:$0xff]
    %v4261 = vld [vmem:[%s4 + $0x2880] sm:$0xff]
    %v4262 = vld [vmem:[%s4 + $0x2888] sm:$0xff]
    %v4263 = vld [vmem:[%s4 + $0x2890] sm:$0xff]
    %v4264 = vld [vmem:[%s4 + $0x2898] sm:$0xff]
    %v4265 = vld [vmem:[%s4 + $0x28a0] sm:$0xff]
    %v4266 = vld [vmem:[%s4 + $0x28a8] sm:$0xff]
    %v4267 = vld [vmem:[%s4 + $0x28b0] sm:$0xff]
    %v4268 = vld [vmem:[%s4 + $0x28b8] sm:$0xff]
    %v4269 = vld [vmem:[%s4 + $0x28c0] sm:$0xff]
    %v4270 = vld [vmem:[%s4 + $0x28c8] sm:$0xff]
    %v4271 = vld [vmem:[%s4 + $0x28d0] sm:$0xff]
    %v4272 = vld [vmem:[%s4 + $0x28d8] sm:$0xff]
    %v4273 = vld [vmem:[%s4 + $0x28e0] sm:$0xff]
    %v4274 = vld [vmem:[%s4 + $0x28e8] sm:$0xff]
    %v4275 = vld [vmem:[%s4 + $0x28f0] sm:$0xff]
    %v4276 = vld [vmem:[%s4 + $0x28f8] sm:$0xff]
    %v4277 = vld [vmem:[%s4 + $0x2900] sm:$0xff]
    %v4278 = vld [vmem:[%s4 + $0x2908] sm:$0xff]
    %v4279 = vld [vmem:[%s4 + $0x2910] sm:$0xff]
    %v4280 = vld [vmem:[%s4 + $0x2918] sm:$0xff]
    %v4281 = vld [vmem:[%s4 + $0x2920] sm:$0xff]
    %v4282 = vld [vmem:[%s4 + $0x2928] sm:$0xff]
    %v4283 = vld [vmem:[%s4 + $0x2930] sm:$0xff]
    %v4284 = vld [vmem:[%s4 + $0x2938] sm:$0xff]
    %v4285 = vld [vmem:[%s4 + $0x2940] sm:$0xff]
    %v4286 = vld [vmem:[%s4 + $0x2948] sm:$0xff]
    %v4287 = vld [vmem:[%s4 + $0x2950] sm:$0xff]
    %v4288 = vld [vmem:[%s4 + $0x2958] sm:$0xff]
    %v4289 = vld [vmem:[%s4 + $0x2960] sm:$0xff]
    %v4290 = vld [vmem:[%s4 + $0x2968] sm:$0xff]
    %v4291 = vld [vmem:[%s4 + $0x2970] sm:$0xff]
    %v4292 = vld [vmem:[%s4 + $0x2978] sm:$0xff]
    %v4293 = vld [vmem:[%s4 + $0x2980] sm:$0xff]
    %v4294 = vld [vmem:[%s4 + $0x2988] sm:$0xff]
    %v4295 = vld [vmem:[%s4 + $0x2990] sm:$0xff]
    %v4296 = vld [vmem:[%s4 + $0x2998] sm:$0xff]
    %v4297 = vld [vmem:[%s4 + $0x29a0] sm:$0xff]
    %v4298 = vld [vmem:[%s4 + $0x29a8] sm:$0xff]
    %v4299 = vld [vmem:[%s4 + $0x29b0] sm:$0xff]
    %v4300 = vld [vmem:[%s4 + $0x29b8] sm:$0xff]
    %v4301 = vld [vmem:[%s4 + $0x29c0] sm:$0xff]
    %v4302 = vld [vmem:[%s4 + $0x29c8] sm:$0xff]
    %v4303 = vld [vmem:[%s4 + $0x29d0] sm:$0xff]
    %v4304 = vld [vmem:[%s4 + $0x29d8] sm:$0xff]
    %v4305 = vld [vmem:[%s4 + $0x29e0] sm:$0xff]
    %v4306 = vld [vmem:[%s4 + $0x29e8] sm:$0xff]
    %v4307 = vld [vmem:[%s4 + $0x29f0] sm:$0xff]
    %v4308 = vld [vmem:[%s4 + $0x29f8] sm:$0xff]
    %v4309 = vld [vmem:[%s4 + $0x2a00] sm:$0xff]
    %v4310 = vld [vmem:[%s4 + $0x2a08] sm:$0xff]
    %v4311 = vld [vmem:[%s4 + $0x2a10] sm:$0xff]
    %v4312 = vld [vmem:[%s4 + $0x2a18] sm:$0xff]
    %v4313 = vld [vmem:[%s4 + $0x2a20] sm:$0xff]
    %v4314 = vld [vmem:[%s4 + $0x2a28] sm:$0xff]
    %v4315 = vld [vmem:[%s4 + $0x2a30] sm:$0xff]
    %v4316 = vld [vmem:[%s4 + $0x2a38] sm:$0xff]
    %v4317 = vld [vmem:[%s4 + $0x2a40] sm:$0xff]
    %v4318 = vld [vmem:[%s4 + $0x2a48] sm:$0xff]
    %v4319 = vld [vmem:[%s4 + $0x2a50] sm:$0xff]
    %v4320 = vld [vmem:[%s4 + $0x2a58] sm:$0xff]
    %v4321 = vld [vmem:[%s4 + $0x2a60] sm:$0xff]
    %v4322 = vld [vmem:[%s4 + $0x2a68] sm:$0xff]
    %v4323 = vld [vmem:[%s4 + $0x2a70] sm:$0xff]
    %v4324 = vld [vmem:[%s4 + $0x2a78] sm:$0xff]
    %v4325 = vld [vmem:[%s4 + $0x2a80] sm:$0xff]
    %v4326 = vld [vmem:[%s4 + $0x2a88] sm:$0xff]
    %v4327 = vld [vmem:[%s4 + $0x2a90] sm:$0xff]
    %v4328 = vld [vmem:[%s4 + $0x2a98] sm:$0xff]
    %v4329 = vld [vmem:[%s4 + $0x2aa0] sm:$0xff]
    %v4330 = vld [vmem:[%s4 + $0x2aa8] sm:$0xff]
    %v4331 = vld [vmem:[%s4 + $0x2ab0] sm:$0xff]
    %v4332 = vld [vmem:[%s4 + $0x2ab8] sm:$0xff]
    %v4333 = vld [vmem:[%s4 + $0x2ac0] sm:$0xff]
    %v4334 = vld [vmem:[%s4 + $0x2ac8] sm:$0xff]
    %v4335 = vld [vmem:[%s4 + $0x2ad0] sm:$0xff]
    %v4336 = vld [vmem:[%s4 + $0x2ad8] sm:$0xff]
    %v4337 = vld [vmem:[%s4 + $0x2ae0] sm:$0xff]
    %v4338 = vld [vmem:[%s4 + $0x2ae8] sm:$0xff]
    %v4339 = vld [vmem:[%s4 + $0x2af0] sm:$0xff]
    %v4340 = vld [vmem:[%s4 + $0x2af8] sm:$0xff]
    %v4341 = vld [vmem:[%s4 + $0x2b00] sm:$0xff]
    %v4342 = vld [vmem:[%s4 + $0x2b08] sm:$0xff]
    %v4343 = vld [vmem:[%s4 + $0x2b10] sm:$0xff]
    %v4344 = vld [vmem:[%s4 + $0x2b18] sm:$0xff]
    %v4345 = vld [vmem:[%s4 + $0x2b20] sm:$0xff]
    %v4346 = vld [vmem:[%s4 + $0x2b28] sm:$0xff]
    %v4347 = vld [vmem:[%s4 + $0x2b30] sm:$0xff]
    %v4348 = vld [vmem:[%s4 + $0x2b38] sm:$0xff]
    %v4349 = vld [vmem:[%s4 + $0x2b40] sm:$0xff]
    %v4350 = vld [vmem:[%s4 + $0x2b48] sm:$0xff]
    %v4351 = vld [vmem:[%s4 + $0x2b50] sm:$0xff]
    %v4352 = vld [vmem:[%s4 + $0x2b58] sm:$0xff]
    %v4353 = vld [vmem:[%s4 + $0x2b60] sm:$0xff]
    %v4354 = vld [vmem:[%s4 + $0x2b68] sm:$0xff]
    %v4355 = vld [vmem:[%s4 + $0x2b70] sm:$0xff]
    %v4356 = vld [vmem:[%s4 + $0x2b78] sm:$0xff]
    %v4357 = vld [vmem:[%s4 + $0x2b80] sm:$0xff]
    %v4358 = vld [vmem:[%s4 + $0x2b88] sm:$0xff]
    %v4359 = vld [vmem:[%s4 + $0x2b90] sm:$0xff]
    %v4360 = vld [vmem:[%s4 + $0x2b98] sm:$0xff]
    %v4361 = vld [vmem:[%s4 + $0x2ba0] sm:$0xff]
    %v4362 = vld [vmem:[%s4 + $0x2ba8] sm:$0xff]
    %v4363 = vld [vmem:[%s4 + $0x2bb0] sm:$0xff]
    %v4364 = vld [vmem:[%s4 + $0x2bb8] sm:$0xff]
    %v4365 = vld [vmem:[%s4 + $0x2bc0] sm:$0xff]
    %v4366 = vld [vmem:[%s4 + $0x2bc8] sm:$0xff]
    %v4367 = vld [vmem:[%s4 + $0x2bd0] sm:$0xff]
    %v4368 = vld [vmem:[%s4 + $0x2bd8] sm:$0xff]
    %v4369 = vld [vmem:[%s4 + $0x2be0] sm:$0xff]
    %v4370 = vld [vmem:[%s4 + $0x2be8] sm:$0xff]
    %v4371 = vld [vmem:[%s4 + $0x2bf0] sm:$0xff]
    %v4372 = vld [vmem:[%s4 + $0x2bf8] sm:$0xff]
    %v4373 = vld [vmem:[%s4 + $0x2c00] sm:$0xff]
    %v4374 = vld [vmem:[%s4 + $0x2c08] sm:$0xff]
    %v4375 = vld [vmem:[%s4 + $0x2c10] sm:$0xff]
    %v4376 = vld [vmem:[%s4 + $0x2c18] sm:$0xff]
    %v4377 = vld [vmem:[%s4 + $0x2c20] sm:$0xff]
    %v4378 = vld [vmem:[%s4 + $0x2c28] sm:$0xff]
    %v4379 = vld [vmem:[%s4 + $0x2c30] sm:$0xff]
    %v4380 = vld [vmem:[%s4 + $0x2c38] sm:$0xff]
    %v4381 = vld [vmem:[%s4 + $0x2c40] sm:$0xff]
    %v4382 = vld [vmem:[%s4 + $0x2c48] sm:$0xff]
    %v4383 = vld [vmem:[%s4 + $0x2c50] sm:$0xff]
    %v4384 = vld [vmem:[%s4 + $0x2c58] sm:$0xff]
    %v4385 = vld [vmem:[%s4 + $0x2c60] sm:$0xff]
    %v4386 = vld [vmem:[%s4 + $0x2c68] sm:$0xff]
    %v4387 = vld [vmem:[%s4 + $0x2c70] sm:$0xff]
    %v4388 = vld [vmem:[%s4 + $0x2c78] sm:$0xff]
    %v4389 = vld [vmem:[%s4 + $0x2c80] sm:$0xff]
    %v4390 = vld [vmem:[%s4 + $0x2c88] sm:$0xff]
    %v4391 = vld [vmem:[%s4 + $0x2c90] sm:$0xff]
    %v4392 = vld [vmem:[%s4 + $0x2c98] sm:$0xff]
    %v4393 = vld [vmem:[%s4 + $0x2ca0] sm:$0xff]
    %v4394 = vld [vmem:[%s4 + $0x2ca8] sm:$0xff]
    %v4395 = vld [vmem:[%s4 + $0x2cb0] sm:$0xff]
    %v4396 = vld [vmem:[%s4 + $0x2cb8] sm:$0xff]
    %v4397 = vld [vmem:[%s4 + $0x2cc0] sm:$0xff]
    %v4398 = vld [vmem:[%s4 + $0x2cc8] sm:$0xff]
    %v4399 = vld [vmem:[%s4 + $0x2cd0] sm:$0xff]
    %v4400 = vld [vmem:[%s4 + $0x2cd8] sm:$0xff]
    %v4401 = vld [vmem:[%s4 + $0x2ce0] sm:$0xff]
    %v4402 = vld [vmem:[%s4 + $0x2ce8] sm:$0xff]
    %v4403 = vld [vmem:[%s4 + $0x2cf0] sm:$0xff]
    %v4404 = vld [vmem:[%s4 + $0x2cf8] sm:$0xff]
    %v4405 = vld [vmem:[%s4 + $0x2d00] sm:$0xff]
    %v4406 = vld [vmem:[%s4 + $0x2d08] sm:$0xff]
    %v4407 = vld [vmem:[%s4 + $0x2d10] sm:$0xff]
    %v4408 = vld [vmem:[%s4 + $0x2d18] sm:$0xff]
    %v4409 = vld [vmem:[%s4 + $0x2d20] sm:$0xff]
    %v4410 = vld [vmem:[%s4 + $0x2d28] sm:$0xff]
    %v4411 = vld [vmem:[%s4 + $0x2d30] sm:$0xff]
    %v4412 = vld [vmem:[%s4 + $0x2d38] sm:$0xff]
    %v4413 = vld [vmem:[%s4 + $0x2d40] sm:$0xff]
    %v4414 = vld [vmem:[%s4 + $0x2d48] sm:$0xff]
    %v4415 = vld [vmem:[%s4 + $0x2d50] sm:$0xff]
    %v4416 = vld [vmem:[%s4 + $0x2d58] sm:$0xff]
    %v4417 = vld [vmem:[%s4 + $0x2d60] sm:$0xff]
    %v4418 = vld [vmem:[%s4 + $0x2d68] sm:$0xff]
    %v4419 = vld [vmem:[%s4 + $0x2d70] sm:$0xff]
    %v4420 = vld [vmem:[%s4 + $0x2d78] sm:$0xff]
    %v4421 = vld [vmem:[%s4 + $0x2d80] sm:$0xff]
    %v4422 = vld [vmem:[%s4 + $0x2d88] sm:$0xff]
    %v4423 = vld [vmem:[%s4 + $0x2d90] sm:$0xff]
    %v4424 = vld [vmem:[%s4 + $0x2d98] sm:$0xff]
    %v4425 = vld [vmem:[%s4 + $0x2da0] sm:$0xff]
    %v4426 = vld [vmem:[%s4 + $0x2da8] sm:$0xff]
    %v4427 = vld [vmem:[%s4 + $0x2db0] sm:$0xff]
    %v4428 = vld [vmem:[%s4 + $0x2db8] sm:$0xff]
    %v4429 = vld [vmem:[%s4 + $0x2dc0] sm:$0xff]
    %v4430 = vld [vmem:[%s4 + $0x2dc8] sm:$0xff]
    %v4431 = vld [vmem:[%s4 + $0x2dd0] sm:$0xff]
    %v4432 = vld [vmem:[%s4 + $0x2dd8] sm:$0xff]
    %v4433 = vld [vmem:[%s4 + $0x2de0] sm:$0xff]
    %v4434 = vld [vmem:[%s4 + $0x2de8] sm:$0xff]
    %v4435 = vld [vmem:[%s4 + $0x2df0] sm:$0xff]
    %v4436 = vld [vmem:[%s4 + $0x2df8] sm:$0xff]
    %v4437 = vld [vmem:[%s4 + $0x2e00] sm:$0xff]
    %v4438 = vld [vmem:[%s4 + $0x2e08] sm:$0xff]
    %v4439 = vld [vmem:[%s4 + $0x2e10] sm:$0xff]
    %v4440 = vld [vmem:[%s4 + $0x2e18] sm:$0xff]
    %v4441 = vld [vmem:[%s4 + $0x2e20] sm:$0xff]
    %v4442 = vld [vmem:[%s4 + $0x2e28] sm:$0xff]
    %v4443 = vld [vmem:[%s4 + $0x2e30] sm:$0xff]
    %v4444 = vld [vmem:[%s4 + $0x2e38] sm:$0xff]
    %v4445 = vld [vmem:[%s4 + $0x2e40] sm:$0xff]
    %v4446 = vld [vmem:[%s4 + $0x2e48] sm:$0xff]
    %v4447 = vld [vmem:[%s4 + $0x2e50] sm:$0xff]
    %v4448 = vld [vmem:[%s4 + $0x2e58] sm:$0xff]
    %v4449 = vld [vmem:[%s4 + $0x2e60] sm:$0xff]
    %v4450 = vld [vmem:[%s4 + $0x2e68] sm:$0xff]
    %v4451 = vld [vmem:[%s4 + $0x2e70] sm:$0xff]
    %v4452 = vld [vmem:[%s4 + $0x2e78] sm:$0xff]
    %v4453 = vld [vmem:[%s4 + $0x2e80] sm:$0xff]
    %v4454 = vld [vmem:[%s4 + $0x2e88] sm:$0xff]
    %v4455 = vld [vmem:[%s4 + $0x2e90] sm:$0xff]
    %v4456 = vld [vmem:[%s4 + $0x2e98] sm:$0xff]
    %v4457 = vld [vmem:[%s4 + $0x2ea0] sm:$0xff]
    %v4458 = vld [vmem:[%s4 + $0x2ea8] sm:$0xff]
    %v4459 = vld [vmem:[%s4 + $0x2eb0] sm:$0xff]
    %v4460 = vld [vmem:[%s4 + $0x2eb8] sm:$0xff]
    %v4461 = vld [vmem:[%s4 + $0x2ec0] sm:$0xff]
    %v4462 = vld [vmem:[%s4 + $0x2ec8] sm:$0xff]
    %v4463 = vld [vmem:[%s4 + $0x2ed0] sm:$0xff]
    %v4464 = vld [vmem:[%s4 + $0x2ed8] sm:$0xff]
    %v4465 = vld [vmem:[%s4 + $0x2ee0] sm:$0xff]
    %v4466 = vld [vmem:[%s4 + $0x2ee8] sm:$0xff]
    %v4467 = vld [vmem:[%s4 + $0x2ef0] sm:$0xff]
    %v4468 = vld [vmem:[%s4 + $0x2ef8] sm:$0xff]
    %v4469 = vld [vmem:[%s4 + $0x2f00] sm:$0xff]
    %v4470 = vld [vmem:[%s4 + $0x2f08] sm:$0xff]
    %v4471 = vld [vmem:[%s4 + $0x2f10] sm:$0xff]
    %v4472 = vld [vmem:[%s4 + $0x2f18] sm:$0xff]
    %v4473 = vld [vmem:[%s4 + $0x2f20] sm:$0xff]
    %v4474 = vld [vmem:[%s4 + $0x2f28] sm:$0xff]
    %v4475 = vld [vmem:[%s4 + $0x2f30] sm:$0xff]
    %v4476 = vld [vmem:[%s4 + $0x2f38] sm:$0xff]
    %v4477 = vld [vmem:[%s4 + $0x2f40] sm:$0xff]
    %v4478 = vld [vmem:[%s4 + $0x2f48] sm:$0xff]
    %v4479 = vld [vmem:[%s4 + $0x2f50] sm:$0xff]
    %v4480 = vld [vmem:[%s4 + $0x2f58] sm:$0xff]
    %v4481 = vld [vmem:[%s4 + $0x2f60] sm:$0xff]
    %v4482 = vld [vmem:[%s4 + $0x2f68] sm:$0xff]
    %v4483 = vld [vmem:[%s4 + $0x2f70] sm:$0xff]
    %v4484 = vld [vmem:[%s4 + $0x2f78] sm:$0xff]
    %v4485 = vld [vmem:[%s4 + $0x2f80] sm:$0xff]
    %v4486 = vld [vmem:[%s4 + $0x2f88] sm:$0xff]
    %v4487 = vld [vmem:[%s4 + $0x2f90] sm:$0xff]
    %v4488 = vld [vmem:[%s4 + $0x2f98] sm:$0xff]
    %v4489 = vld [vmem:[%s4 + $0x2fa0] sm:$0xff]
    %v4490 = vld [vmem:[%s4 + $0x2fa8] sm:$0xff]
    %v4491 = vld [vmem:[%s4 + $0x2fb0] sm:$0xff]
    %v4492 = vld [vmem:[%s4 + $0x2fb8] sm:$0xff]
    %v4493 = vld [vmem:[%s4 + $0x2fc0] sm:$0xff]
    %v4494 = vld [vmem:[%s4 + $0x2fc8] sm:$0xff]
    %v4495 = vld [vmem:[%s4 + $0x2fd0] sm:$0xff]
    %v4496 = vld [vmem:[%s4 + $0x2fd8] sm:$0xff]
    %v4497 = vld [vmem:[%s4 + $0x2fe0] sm:$0xff]
    %v4498 = vld [vmem:[%s4 + $0x2fe8] sm:$0xff]
    %v4499 = vld [vmem:[%s4 + $0x2ff0] sm:$0xff]
    %v4500 = vld [vmem:[%s4 + $0x2ff8] sm:$0xff]
    %v4501 = vld [vmem:[%s4 + $0x3000] sm:$0xff]
    %v4502 = vld [vmem:[%s4 + $0x3008] sm:$0xff]
    %v4503 = vld [vmem:[%s4 + $0x3010] sm:$0xff]
    %v4504 = vld [vmem:[%s4 + $0x3018] sm:$0xff]
    %v4505 = vld [vmem:[%s4 + $0x3020] sm:$0xff]
    %v4506 = vld [vmem:[%s4 + $0x3028] sm:$0xff]
    %v4507 = vld [vmem:[%s4 + $0x3030] sm:$0xff]
    %v4508 = vld [vmem:[%s4 + $0x3038] sm:$0xff]
    %v4509 = vld [vmem:[%s4 + $0x3040] sm:$0xff]
    %v4510 = vld [vmem:[%s4 + $0x3048] sm:$0xff]
    %v4511 = vld [vmem:[%s4 + $0x3050] sm:$0xff]
    %v4512 = vld [vmem:[%s4 + $0x3058] sm:$0xff]
    %v4513 = vld [vmem:[%s4 + $0x3060] sm:$0xff]
    %v4514 = vld [vmem:[%s4 + $0x3068] sm:$0xff]
    %v4515 = vld [vmem:[%s4 + $0x3070] sm:$0xff]
    %v4516 = vld [vmem:[%s4 + $0x3078] sm:$0xff]
    %v4517 = vld [vmem:[%s4 + $0x3080] sm:$0xff]
    %v4518 = vld [vmem:[%s4 + $0x3088] sm:$0xff]
    %v4519 = vld [vmem:[%s4 + $0x3090] sm:$0xff]
    %v4520 = vld [vmem:[%s4 + $0x3098] sm:$0xff]
    %v4521 = vld [vmem:[%s4 + $0x30a0] sm:$0xff]
    %v4522 = vld [vmem:[%s4 + $0x30a8] sm:$0xff]
    %v4523 = vld [vmem:[%s4 + $0x30b0] sm:$0xff]
    %v4524 = vld [vmem:[%s4 + $0x30b8] sm:$0xff]
    %v4525 = vld [vmem:[%s4 + $0x30c0] sm:$0xff]
    %v4526 = vld [vmem:[%s4 + $0x30c8] sm:$0xff]
    %v4527 = vld [vmem:[%s4 + $0x30d0] sm:$0xff]
    %v4528 = vld [vmem:[%s4 + $0x30d8] sm:$0xff]
    %v4529 = vld [vmem:[%s4 + $0x30e0] sm:$0xff]
    %v4530 = vld [vmem:[%s4 + $0x30e8] sm:$0xff]
    %v4531 = vld [vmem:[%s4 + $0x30f0] sm:$0xff]
    %v4532 = vld [vmem:[%s4 + $0x30f8] sm:$0xff]
    %v4533 = vld [vmem:[%s4 + $0x3100] sm:$0xff]
    %v4534 = vld [vmem:[%s4 + $0x3108] sm:$0xff]
    %v4535 = vld [vmem:[%s4 + $0x3110] sm:$0xff]
    %v4536 = vld [vmem:[%s4 + $0x3118] sm:$0xff]
    %v4537 = vld [vmem:[%s4 + $0x3120] sm:$0xff]
    %v4538 = vld [vmem:[%s4 + $0x3128] sm:$0xff]
    %v4539 = vld [vmem:[%s4 + $0x3130] sm:$0xff]
    %v4540 = vld [vmem:[%s4 + $0x3138] sm:$0xff]
    %v4541 = vld [vmem:[%s4 + $0x3140] sm:$0xff]
    %v4542 = vld [vmem:[%s4 + $0x3148] sm:$0xff]
    %v4543 = vld [vmem:[%s4 + $0x3150] sm:$0xff]
    %v4544 = vld [vmem:[%s4 + $0x3158] sm:$0xff]
    %v4545 = vld [vmem:[%s4 + $0x3160] sm:$0xff]
    %v4546 = vld [vmem:[%s4 + $0x3168] sm:$0xff]
    %v4547 = vld [vmem:[%s4 + $0x3170] sm:$0xff]
    %v4548 = vld [vmem:[%s4 + $0x3178] sm:$0xff]
    %v4549 = vld [vmem:[%s4 + $0x3180] sm:$0xff]
    %v4550 = vld [vmem:[%s4 + $0x3188] sm:$0xff]
    %v4551 = vld [vmem:[%s4 + $0x3190] sm:$0xff]
    %v4552 = vld [vmem:[%s4 + $0x3198] sm:$0xff]
    %v4553 = vld [vmem:[%s4 + $0x31a0] sm:$0xff]
    %v4554 = vld [vmem:[%s4 + $0x31a8] sm:$0xff]
    %v4555 = vld [vmem:[%s4 + $0x31b0] sm:$0xff]
    %v4556 = vld [vmem:[%s4 + $0x31b8] sm:$0xff]
    %v4557 = vld [vmem:[%s4 + $0x31c0] sm:$0xff]
    %v4558 = vld [vmem:[%s4 + $0x31c8] sm:$0xff]
    %v4559 = vld [vmem:[%s4 + $0x31d0] sm:$0xff]
    %v4560 = vld [vmem:[%s4 + $0x31d8] sm:$0xff]
    %v4561 = vld [vmem:[%s4 + $0x31e0] sm:$0xff]
    %v4562 = vld [vmem:[%s4 + $0x31e8] sm:$0xff]
    %v4563 = vld [vmem:[%s4 + $0x31f0] sm:$0xff]
    %v4564 = vld [vmem:[%s4 + $0x31f8] sm:$0xff]
    %v4565 = vld [vmem:[%s4 + $0x3200] sm:$0xff]
    %v4566 = vld [vmem:[%s4 + $0x3208] sm:$0xff]
    %v4567 = vld [vmem:[%s4 + $0x3210] sm:$0xff]
    %v4568 = vld [vmem:[%s4 + $0x3218] sm:$0xff]
    %v4569 = vld [vmem:[%s4 + $0x3220] sm:$0xff]
    %v4570 = vld [vmem:[%s4 + $0x3228] sm:$0xff]
    %v4571 = vld [vmem:[%s4 + $0x3230] sm:$0xff]
    %v4572 = vld [vmem:[%s4 + $0x3238] sm:$0xff]
    %v4573 = vld [vmem:[%s4 + $0x3240] sm:$0xff]
    %v4574 = vld [vmem:[%s4 + $0x3248] sm:$0xff]
    %v4575 = vld [vmem:[%s4 + $0x3250] sm:$0xff]
    %v4576 = vld [vmem:[%s4 + $0x3258] sm:$0xff]
    %v4577 = vld [vmem:[%s4 + $0x3260] sm:$0xff]
    %v4578 = vld [vmem:[%s4 + $0x3268] sm:$0xff]
    %v4579 = vld [vmem:[%s4 + $0x3270] sm:$0xff]
    %v4580 = vld [vmem:[%s4 + $0x3278] sm:$0xff]
    %v4581 = vld [vmem:[%s4 + $0x3280] sm:$0xff]
    %v4582 = vld [vmem:[%s4 + $0x3288] sm:$0xff]
    %v4583 = vld [vmem:[%s4 + $0x3290] sm:$0xff]
    %v4584 = vld [vmem:[%s4 + $0x3298] sm:$0xff]
    %v4585 = vld [vmem:[%s4 + $0x32a0] sm:$0xff]
    %v4586 = vld [vmem:[%s4 + $0x32a8] sm:$0xff]
    %v4587 = vld [vmem:[%s4 + $0x32b0] sm:$0xff]
    %v4588 = vld [vmem:[%s4 + $0x32b8] sm:$0xff]
    %v4589 = vld [vmem:[%s4 + $0x32c0] sm:$0xff]
    %v4590 = vld [vmem:[%s4 + $0x32c8] sm:$0xff]
    %v4591 = vld [vmem:[%s4 + $0x32d0] sm:$0xff]
    %v4592 = vld [vmem:[%s4 + $0x32d8] sm:$0xff]
    %v4593 = vld [vmem:[%s4 + $0x32e0] sm:$0xff]
    %v4594 = vld [vmem:[%s4 + $0x32e8] sm:$0xff]
    %v4595 = vld [vmem:[%s4 + $0x32f0] sm:$0xff]
    %v4596 = vld [vmem:[%s4 + $0x32f8] sm:$0xff]
    %v4597 = vld [vmem:[%s4 + $0x3300] sm:$0xff]
    %v4598 = vld [vmem:[%s4 + $0x3308] sm:$0xff]
    %v4599 = vld [vmem:[%s4 + $0x3310] sm:$0xff]
    %v4600 = vld [vmem:[%s4 + $0x3318] sm:$0xff]
    %v4601 = vld [vmem:[%s4 + $0x3320] sm:$0xff]
    %v4602 = vld [vmem:[%s4 + $0x3328] sm:$0xff]
    %v4603 = vld [vmem:[%s4 + $0x3330] sm:$0xff]
    %v4604 = vld [vmem:[%s4 + $0x3338] sm:$0xff]
    %v4605 = vld [vmem:[%s4 + $0x3340] sm:$0xff]
    %v4606 = vld [vmem:[%s4 + $0x3348] sm:$0xff]
    %v4607 = vld [vmem:[%s4 + $0x3350] sm:$0xff]
    %v4608 = vld [vmem:[%s4 + $0x3358] sm:$0xff]
    %v4609 = vld [vmem:[%s4 + $0x3360] sm:$0xff]
    %v4610 = vld [vmem:[%s4 + $0x3368] sm:$0xff]
    %v4611 = vld [vmem:[%s4 + $0x3370] sm:$0xff]
    %v4612 = vld [vmem:[%s4 + $0x3378] sm:$0xff]
    %v4613 = vld [vmem:[%s4 + $0x3380] sm:$0xff]
    %v4614 = vld [vmem:[%s4 + $0x3388] sm:$0xff]
    %v4615 = vld [vmem:[%s4 + $0x3390] sm:$0xff]
    %v4616 = vld [vmem:[%s4 + $0x3398] sm:$0xff]
    %v4617 = vld [vmem:[%s4 + $0x33a0] sm:$0xff]
    %v4618 = vld [vmem:[%s4 + $0x33a8] sm:$0xff]
    %v4619 = vld [vmem:[%s4 + $0x33b0] sm:$0xff]
    %v4620 = vld [vmem:[%s4 + $0x33b8] sm:$0xff]
    %v4621 = vld [vmem:[%s4 + $0x33c0] sm:$0xff]
    %v4622 = vld [vmem:[%s4 + $0x33c8] sm:$0xff]
    %v4623 = vld [vmem:[%s4 + $0x33d0] sm:$0xff]
    %v4624 = vld [vmem:[%s4 + $0x33d8] sm:$0xff]
    %v4625 = vld [vmem:[%s4 + $0x33e0] sm:$0xff]
    %v4626 = vld [vmem:[%s4 + $0x33e8] sm:$0xff]
    %v4627 = vld [vmem:[%s4 + $0x33f0] sm:$0xff]
    %v4628 = vld [vmem:[%s4 + $0x33f8] sm:$0xff]
    %v4629 = vld [vmem:[%s4 + $0x3400] sm:$0xff]
    %v4630 = vld [vmem:[%s4 + $0x3408] sm:$0xff]
    %v4631 = vld [vmem:[%s4 + $0x3410] sm:$0xff]
    %v4632 = vld [vmem:[%s4 + $0x3418] sm:$0xff]
    %v4633 = vld [vmem:[%s4 + $0x3420] sm:$0xff]
    %v4634 = vld [vmem:[%s4 + $0x3428] sm:$0xff]
    %v4635 = vld [vmem:[%s4 + $0x3430] sm:$0xff]
    %v4636 = vld [vmem:[%s4 + $0x3438] sm:$0xff]
    %v4637 = vld [vmem:[%s4 + $0x3440] sm:$0xff]
    %v4638 = vld [vmem:[%s4 + $0x3448] sm:$0xff]
    %v4639 = vld [vmem:[%s4 + $0x3450] sm:$0xff]
    %v4640 = vld [vmem:[%s4 + $0x3458] sm:$0xff]
    %v4641 = vld [vmem:[%s4 + $0x3460] sm:$0xff]
    %v4642 = vld [vmem:[%s4 + $0x3468] sm:$0xff]
    %v4643 = vld [vmem:[%s4 + $0x3470] sm:$0xff]
    %v4644 = vld [vmem:[%s4 + $0x3478] sm:$0xff]
    %v4645 = vld [vmem:[%s4 + $0x3480] sm:$0xff]
    %v4646 = vld [vmem:[%s4 + $0x3488] sm:$0xff]
    %v4647 = vld [vmem:[%s4 + $0x3490] sm:$0xff]
    %v4648 = vld [vmem:[%s4 + $0x3498] sm:$0xff]
    %v4649 = vld [vmem:[%s4 + $0x34a0] sm:$0xff]
    %v4650 = vld [vmem:[%s4 + $0x34a8] sm:$0xff]
    %v4651 = vld [vmem:[%s4 + $0x34b0] sm:$0xff]
    %v4652 = vld [vmem:[%s4 + $0x34b8] sm:$0xff]
    %v4653 = vld [vmem:[%s4 + $0x34c0] sm:$0xff]
    %v4654 = vld [vmem:[%s4 + $0x34c8] sm:$0xff]
    %v4655 = vld [vmem:[%s4 + $0x34d0] sm:$0xff]
    %v4656 = vld [vmem:[%s4 + $0x34d8] sm:$0xff]
    %v4657 = vld [vmem:[%s4 + $0x34e0] sm:$0xff]
    %v4658 = vld [vmem:[%s4 + $0x34e8] sm:$0xff]
    %v4659 = vld [vmem:[%s4 + $0x34f0] sm:$0xff]
    %v4660 = vld [vmem:[%s4 + $0x34f8] sm:$0xff]
    %v4661 = vld [vmem:[%s4 + $0x3500] sm:$0xff]
    %v4662 = vld [vmem:[%s4 + $0x3508] sm:$0xff]
    %v4663 = vld [vmem:[%s4 + $0x3510] sm:$0xff]
    %v4664 = vld [vmem:[%s4 + $0x3518] sm:$0xff]
    %v4665 = vld [vmem:[%s4 + $0x3520] sm:$0xff]
    %v4666 = vld [vmem:[%s4 + $0x3528] sm:$0xff]
    %v4667 = vld [vmem:[%s4 + $0x3530] sm:$0xff]
    %v4668 = vld [vmem:[%s4 + $0x3538] sm:$0xff]
    %v4669 = vld [vmem:[%s4 + $0x3540] sm:$0xff]
    %v4670 = vld [vmem:[%s4 + $0x3548] sm:$0xff]
    %v4671 = vld [vmem:[%s4 + $0x3550] sm:$0xff]
    %v4672 = vld [vmem:[%s4 + $0x3558] sm:$0xff]
    %v4673 = vld [vmem:[%s4 + $0x3560] sm:$0xff]
    %v4674 = vld [vmem:[%s4 + $0x3568] sm:$0xff]
    %v4675 = vld [vmem:[%s4 + $0x3570] sm:$0xff]
    %v4676 = vld [vmem:[%s4 + $0x3578] sm:$0xff]
    %v4677 = vld [vmem:[%s4 + $0x3580] sm:$0xff]
    %v4678 = vld [vmem:[%s4 + $0x3588] sm:$0xff]
    %v4679 = vld [vmem:[%s4 + $0x3590] sm:$0xff]
    %v4680 = vld [vmem:[%s4 + $0x3598] sm:$0xff]
    %v4681 = vld [vmem:[%s4 + $0x35a0] sm:$0xff]
    %v4682 = vld [vmem:[%s4 + $0x35a8] sm:$0xff]
    %v4683 = vld [vmem:[%s4 + $0x35b0] sm:$0xff]
    %v4684 = vld [vmem:[%s4 + $0x35b8] sm:$0xff]
    %v4685 = vld [vmem:[%s4 + $0x35c0] sm:$0xff]
    %v4686 = vld [vmem:[%s4 + $0x35c8] sm:$0xff]
    %v4687 = vld [vmem:[%s4 + $0x35d0] sm:$0xff]
    %v4688 = vld [vmem:[%s4 + $0x35d8] sm:$0xff]
    %v4689 = vld [vmem:[%s4 + $0x35e0] sm:$0xff]
    %v4690 = vld [vmem:[%s4 + $0x35e8] sm:$0xff]
    %v4691 = vld [vmem:[%s4 + $0x35f0] sm:$0xff]
    %v4692 = vld [vmem:[%s4 + $0x35f8] sm:$0xff]
    %v4693 = vld [vmem:[%s4 + $0x3600] sm:$0xff]
    %v4694 = vld [vmem:[%s4 + $0x3608] sm:$0xff]
    %v4695 = vld [vmem:[%s4 + $0x3610] sm:$0xff]
    %v4696 = vld [vmem:[%s4 + $0x3618] sm:$0xff]
    %v4697 = vld [vmem:[%s4 + $0x3620] sm:$0xff]
    %v4698 = vld [vmem:[%s4 + $0x3628] sm:$0xff]
    %v4699 = vld [vmem:[%s4 + $0x3630] sm:$0xff]
    %v4700 = vld [vmem:[%s4 + $0x3638] sm:$0xff]
    %v4701 = vld [vmem:[%s4 + $0x3640] sm:$0xff]
    %v4702 = vld [vmem:[%s4 + $0x3648] sm:$0xff]
    %v4703 = vld [vmem:[%s4 + $0x3650] sm:$0xff]
    %v4704 = vld [vmem:[%s4 + $0x3658] sm:$0xff]
    %v4705 = vld [vmem:[%s4 + $0x3660] sm:$0xff]
    %v4706 = vld [vmem:[%s4 + $0x3668] sm:$0xff]
    %v4707 = vld [vmem:[%s4 + $0x3670] sm:$0xff]
    %v4708 = vld [vmem:[%s4 + $0x3678] sm:$0xff]
    %v4709 = vld [vmem:[%s4 + $0x3680] sm:$0xff]
    %v4710 = vld [vmem:[%s4 + $0x3688] sm:$0xff]
    %v4711 = vld [vmem:[%s4 + $0x3690] sm:$0xff]
    %v4712 = vld [vmem:[%s4 + $0x3698] sm:$0xff]
    %v4713 = vld [vmem:[%s4 + $0x36a0] sm:$0xff]
    %v4714 = vld [vmem:[%s4 + $0x36a8] sm:$0xff]
    %v4715 = vld [vmem:[%s4 + $0x36b0] sm:$0xff]
    %v4716 = vld [vmem:[%s4 + $0x36b8] sm:$0xff]
    %v4717 = vld [vmem:[%s4 + $0x36c0] sm:$0xff]
    %v4718 = vld [vmem:[%s4 + $0x36c8] sm:$0xff]
    %v4719 = vld [vmem:[%s4 + $0x36d0] sm:$0xff]
    %v4720 = vld [vmem:[%s4 + $0x36d8] sm:$0xff]
    %v4721 = vld [vmem:[%s4 + $0x36e0] sm:$0xff]
    %v4722 = vld [vmem:[%s4 + $0x36e8] sm:$0xff]
    %v4723 = vld [vmem:[%s4 + $0x36f0] sm:$0xff]
    %v4724 = vld [vmem:[%s4 + $0x36f8] sm:$0xff]
    %v4725 = vld [vmem:[%s4 + $0x3700] sm:$0xff]
    %v4726 = vld [vmem:[%s4 + $0x3708] sm:$0xff]
    %v4727 = vld [vmem:[%s4 + $0x3710] sm:$0xff]
    %v4728 = vld [vmem:[%s4 + $0x3718] sm:$0xff]
    %v4729 = vld [vmem:[%s4 + $0x3720] sm:$0xff]
    %v4730 = vld [vmem:[%s4 + $0x3728] sm:$0xff]
    %v4731 = vld [vmem:[%s4 + $0x3730] sm:$0xff]
    %v4732 = vld [vmem:[%s4 + $0x3738] sm:$0xff]
    %v4733 = vld [vmem:[%s4 + $0x3740] sm:$0xff]
    %v4734 = vld [vmem:[%s4 + $0x3748] sm:$0xff]
    %v4735 = vld [vmem:[%s4 + $0x3750] sm:$0xff]
    %v4736 = vld [vmem:[%s4 + $0x3758] sm:$0xff]
    %v4737 = vld [vmem:[%s4 + $0x3760] sm:$0xff]
    %v4738 = vld [vmem:[%s4 + $0x3768] sm:$0xff]
    %v4739 = vld [vmem:[%s4 + $0x3770] sm:$0xff]
    %v4740 = vld [vmem:[%s4 + $0x3778] sm:$0xff]
    %v4741 = vld [vmem:[%s4 + $0x3780] sm:$0xff]
    %v4742 = vld [vmem:[%s4 + $0x3788] sm:$0xff]
    %v4743 = vld [vmem:[%s4 + $0x3790] sm:$0xff]
    %v4744 = vld [vmem:[%s4 + $0x3798] sm:$0xff]
    %v4745 = vld [vmem:[%s4 + $0x37a0] sm:$0xff]
    %v4746 = vld [vmem:[%s4 + $0x37a8] sm:$0xff]
    %v4747 = vld [vmem:[%s4 + $0x37b0] sm:$0xff]
    %v4748 = vld [vmem:[%s4 + $0x37b8] sm:$0xff]
    %v4749 = vld [vmem:[%s4 + $0x37c0] sm:$0xff]
    %v4750 = vld [vmem:[%s4 + $0x37c8] sm:$0xff]
    %v4751 = vld [vmem:[%s4 + $0x37d0] sm:$0xff]
    %v4752 = vld [vmem:[%s4 + $0x37d8] sm:$0xff]
    %v4753 = vld [vmem:[%s4 + $0x37e0] sm:$0xff]
    %v4754 = vld [vmem:[%s4 + $0x37e8] sm:$0xff]
    %v4755 = vld [vmem:[%s4 + $0x37f0] sm:$0xff]
    %v4756 = vld [vmem:[%s4 + $0x37f8] sm:$0xff]
    %v4757 = vld [vmem:[%s4 + $0x3800] sm:$0xff]
    %v4758 = vld [vmem:[%s4 + $0x3808] sm:$0xff]
    %v4759 = vld [vmem:[%s4 + $0x3810] sm:$0xff]
    %v4760 = vld [vmem:[%s4 + $0x3818] sm:$0xff]
    %v4761 = vld [vmem:[%s4 + $0x3820] sm:$0xff]
    %v4762 = vld [vmem:[%s4 + $0x3828] sm:$0xff]
    %v4763 = vld [vmem:[%s4 + $0x3830] sm:$0xff]
    %v4764 = vld [vmem:[%s4 + $0x3838] sm:$0xff]
    %v4765 = vld [vmem:[%s4 + $0x3840] sm:$0xff]
    %v4766 = vld [vmem:[%s4 + $0x3848] sm:$0xff]
    %v4767 = vld [vmem:[%s4 + $0x3850] sm:$0xff]
    %v4768 = vld [vmem:[%s4 + $0x3858] sm:$0xff]
    %v4769 = vld [vmem:[%s4 + $0x3860] sm:$0xff]
    %v4770 = vld [vmem:[%s4 + $0x3868] sm:$0xff]
    %v4771 = vld [vmem:[%s4 + $0x3870] sm:$0xff]
    %v4772 = vld [vmem:[%s4 + $0x3878] sm:$0xff]
    %v4773 = vld [vmem:[%s4 + $0x3880] sm:$0xff]
    %v4774 = vld [vmem:[%s4 + $0x3888] sm:$0xff]
    %v4775 = vld [vmem:[%s4 + $0x3890] sm:$0xff]
    %v4776 = vld [vmem:[%s4 + $0x3898] sm:$0xff]
    %v4777 = vld [vmem:[%s4 + $0x38a0] sm:$0xff]
    %v4778 = vld [vmem:[%s4 + $0x38a8] sm:$0xff]
    %v4779 = vld [vmem:[%s4 + $0x38b0] sm:$0xff]
    %v4780 = vld [vmem:[%s4 + $0x38b8] sm:$0xff]
    %v4781 = vld [vmem:[%s4 + $0x38c0] sm:$0xff]
    %v4782 = vld [vmem:[%s4 + $0x38c8] sm:$0xff]
    %v4783 = vld [vmem:[%s4 + $0x38d0] sm:$0xff]
    %v4784 = vld [vmem:[%s4 + $0x38d8] sm:$0xff]
    %v4785 = vld [vmem:[%s4 + $0x38e0] sm:$0xff]
    %v4786 = vld [vmem:[%s4 + $0x38e8] sm:$0xff]
    %v4787 = vld [vmem:[%s4 + $0x38f0] sm:$0xff]
    %v4788 = vld [vmem:[%s4 + $0x38f8] sm:$0xff]
    %v4789 = vld [vmem:[%s4 + $0x3900] sm:$0xff]
    %v4790 = vld [vmem:[%s4 + $0x3908] sm:$0xff]
    %v4791 = vld [vmem:[%s4 + $0x3910] sm:$0xff]
    %v4792 = vld [vmem:[%s4 + $0x3918] sm:$0xff]
    %v4793 = vld [vmem:[%s4 + $0x3920] sm:$0xff]
    %v4794 = vld [vmem:[%s4 + $0x3928] sm:$0xff]
    %v4795 = vld [vmem:[%s4 + $0x3930] sm:$0xff]
    %v4796 = vld [vmem:[%s4 + $0x3938] sm:$0xff]
    %v4797 = vld [vmem:[%s4 + $0x3940] sm:$0xff]
    %v4798 = vld [vmem:[%s4 + $0x3948] sm:$0xff]
    %v4799 = vld [vmem:[%s4 + $0x3950] sm:$0xff]
    %v4800 = vld [vmem:[%s4 + $0x3958] sm:$0xff]
    %v4801 = vld [vmem:[%s4 + $0x3960] sm:$0xff]
    %v4802 = vld [vmem:[%s4 + $0x3968] sm:$0xff]
    %v4803 = vld [vmem:[%s4 + $0x3970] sm:$0xff]
    %v4804 = vld [vmem:[%s4 + $0x3978] sm:$0xff]
    %v4805 = vld [vmem:[%s4 + $0x3980] sm:$0xff]
    %v4806 = vld [vmem:[%s4 + $0x3988] sm:$0xff]
    %v4807 = vld [vmem:[%s4 + $0x3990] sm:$0xff]
    %v4808 = vld [vmem:[%s4 + $0x3998] sm:$0xff]
    %v4809 = vld [vmem:[%s4 + $0x39a0] sm:$0xff]
    %v4810 = vld [vmem:[%s4 + $0x39a8] sm:$0xff]
    %v4811 = vld [vmem:[%s4 + $0x39b0] sm:$0xff]
    %v4812 = vld [vmem:[%s4 + $0x39b8] sm:$0xff]
    %v4813 = vld [vmem:[%s4 + $0x39c0] sm:$0xff]
    %v4814 = vld [vmem:[%s4 + $0x39c8] sm:$0xff]
    %v4815 = vld [vmem:[%s4 + $0x39d0] sm:$0xff]
    %v4816 = vld [vmem:[%s4 + $0x39d8] sm:$0xff]
    %v4817 = vld [vmem:[%s4 + $0x39e0] sm:$0xff]
    %v4818 = vld [vmem:[%s4 + $0x39e8] sm:$0xff]
    %v4819 = vld [vmem:[%s4 + $0x39f0] sm:$0xff]
    %v4820 = vld [vmem:[%s4 + $0x39f8] sm:$0xff]
    %v4821 = vld [vmem:[%s4 + $0x3a00] sm:$0xff]
    %v4822 = vld [vmem:[%s4 + $0x3a08] sm:$0xff]
    %v4823 = vld [vmem:[%s4 + $0x3a10] sm:$0xff]
    %v4824 = vld [vmem:[%s4 + $0x3a18] sm:$0xff]
    %v4825 = vld [vmem:[%s4 + $0x3a20] sm:$0xff]
    %v4826 = vld [vmem:[%s4 + $0x3a28] sm:$0xff]
    %v4827 = vld [vmem:[%s4 + $0x3a30] sm:$0xff]
    %v4828 = vld [vmem:[%s4 + $0x3a38] sm:$0xff]
    %v4829 = vld [vmem:[%s4 + $0x3a40] sm:$0xff]
    %v4830 = vld [vmem:[%s4 + $0x3a48] sm:$0xff]
    %v4831 = vld [vmem:[%s4 + $0x3a50] sm:$0xff]
    %v4832 = vld [vmem:[%s4 + $0x3a58] sm:$0xff]
    %v4833 = vld [vmem:[%s4 + $0x3a60] sm:$0xff]
    %v4834 = vld [vmem:[%s4 + $0x3a68] sm:$0xff]
    %v4835 = vld [vmem:[%s4 + $0x3a70] sm:$0xff]
    %v4836 = vld [vmem:[%s4 + $0x3a78] sm:$0xff]
    %v4837 = vld [vmem:[%s4 + $0x3a80] sm:$0xff]
    %v4838 = vld [vmem:[%s4 + $0x3a88] sm:$0xff]
    %v4839 = vld [vmem:[%s4 + $0x3a90] sm:$0xff]
    %v4840 = vld [vmem:[%s4 + $0x3a98] sm:$0xff]
    %v4841 = vld [vmem:[%s4 + $0x3aa0] sm:$0xff]
    %v4842 = vld [vmem:[%s4 + $0x3aa8] sm:$0xff]
    %v4843 = vld [vmem:[%s4 + $0x3ab0] sm:$0xff]
    %v4844 = vld [vmem:[%s4 + $0x3ab8] sm:$0xff]
    %v4845 = vld [vmem:[%s4 + $0x3ac0] sm:$0xff]
    %v4846 = vld [vmem:[%s4 + $0x3ac8] sm:$0xff]
    %v4847 = vld [vmem:[%s4 + $0x3ad0] sm:$0xff]
    %v4848 = vld [vmem:[%s4 + $0x3ad8] sm:$0xff]
    %v4849 = vld [vmem:[%s4 + $0x3ae0] sm:$0xff]
    %v4850 = vld [vmem:[%s4 + $0x3ae8] sm:$0xff]
    %v4851 = vld [vmem:[%s4 + $0x3af0] sm:$0xff]
    %v4852 = vld [vmem:[%s4 + $0x3af8] sm:$0xff]
    %v4853 = vld [vmem:[%s4 + $0x3b00] sm:$0xff]
    %v4854 = vld [vmem:[%s4 + $0x3b08] sm:$0xff]
    %v4855 = vld [vmem:[%s4 + $0x3b10] sm:$0xff]
    %v4856 = vld [vmem:[%s4 + $0x3b18] sm:$0xff]
    %v4857 = vld [vmem:[%s4 + $0x3b20] sm:$0xff]
    %v4858 = vld [vmem:[%s4 + $0x3b28] sm:$0xff]
    %v4859 = vld [vmem:[%s4 + $0x3b30] sm:$0xff]
    %v4860 = vld [vmem:[%s4 + $0x3b38] sm:$0xff]
    %v4861 = vld [vmem:[%s4 + $0x3b40] sm:$0xff]
    %v4862 = vld [vmem:[%s4 + $0x3b48] sm:$0xff]
    %v4863 = vld [vmem:[%s4 + $0x3b50] sm:$0xff]
    %v4864 = vld [vmem:[%s4 + $0x3b58] sm:$0xff]
    %v4865 = vld [vmem:[%s4 + $0x3b60] sm:$0xff]
    %v4866 = vld [vmem:[%s4 + $0x3b68] sm:$0xff]
    %v4867 = vld [vmem:[%s4 + $0x3b70] sm:$0xff]
    %v4868 = vld [vmem:[%s4 + $0x3b78] sm:$0xff]
    %v4869 = vld [vmem:[%s4 + $0x3b80] sm:$0xff]
    %v4870 = vld [vmem:[%s4 + $0x3b88] sm:$0xff]
    %v4871 = vld [vmem:[%s4 + $0x3b90] sm:$0xff]
    %v4872 = vld [vmem:[%s4 + $0x3b98] sm:$0xff]
    %v4873 = vld [vmem:[%s4 + $0x3ba0] sm:$0xff]
    %v4874 = vld [vmem:[%s4 + $0x3ba8] sm:$0xff]
    %v4875 = vld [vmem:[%s4 + $0x3bb0] sm:$0xff]
    %v4876 = vld [vmem:[%s4 + $0x3bb8] sm:$0xff]
    %v4877 = vld [vmem:[%s4 + $0x3bc0] sm:$0xff]
    %v4878 = vld [vmem:[%s4 + $0x3bc8] sm:$0xff]
    %v4879 = vld [vmem:[%s4 + $0x3bd0] sm:$0xff]
    %v4880 = vld [vmem:[%s4 + $0x3bd8] sm:$0xff]
    %v4881 = vld [vmem:[%s4 + $0x3be0] sm:$0xff]
    %v4882 = vld [vmem:[%s4 + $0x3be8] sm:$0xff]
    %v4883 = vld [vmem:[%s4 + $0x3bf0] sm:$0xff]
    %v4884 = vld [vmem:[%s4 + $0x3bf8] sm:$0xff]
    %v4885 = vld [vmem:[%s4 + $0x3c00] sm:$0xff]
    %v4886 = vld [vmem:[%s4 + $0x3c08] sm:$0xff]
    %v4887 = vld [vmem:[%s4 + $0x3c10] sm:$0xff]
    %v4888 = vld [vmem:[%s4 + $0x3c18] sm:$0xff]
    %v4889 = vld [vmem:[%s4 + $0x3c20] sm:$0xff]
    %v4890 = vld [vmem:[%s4 + $0x3c28] sm:$0xff]
    %v4891 = vld [vmem:[%s4 + $0x3c30] sm:$0xff]
    %v4892 = vld [vmem:[%s4 + $0x3c38] sm:$0xff]
    %v4893 = vld [vmem:[%s4 + $0x3c40] sm:$0xff]
    %v4894 = vld [vmem:[%s4 + $0x3c48] sm:$0xff]
    %v4895 = vld [vmem:[%s4 + $0x3c50] sm:$0xff]
    %v4896 = vld [vmem:[%s4 + $0x3c58] sm:$0xff]
    %v4897 = vld [vmem:[%s4 + $0x3c60] sm:$0xff]
    %v4898 = vld [vmem:[%s4 + $0x3c68] sm:$0xff]
    %v4899 = vld [vmem:[%s4 + $0x3c70] sm:$0xff]
    %v4900 = vld [vmem:[%s4 + $0x3c78] sm:$0xff]
    %v4901 = vld [vmem:[%s4 + $0x3c80] sm:$0xff]
    %v4902 = vld [vmem:[%s4 + $0x3c88] sm:$0xff]
    %v4903 = vld [vmem:[%s4 + $0x3c90] sm:$0xff]
    %v4904 = vld [vmem:[%s4 + $0x3c98] sm:$0xff]
    %v4905 = vld [vmem:[%s4 + $0x3ca0] sm:$0xff]
    %v4906 = vld [vmem:[%s4 + $0x3ca8] sm:$0xff]
    %v4907 = vld [vmem:[%s4 + $0x3cb0] sm:$0xff]
    %v4908 = vld [vmem:[%s4 + $0x3cb8] sm:$0xff]
    %v4909 = vld [vmem:[%s4 + $0x3cc0] sm:$0xff]
    %v4910 = vld [vmem:[%s4 + $0x3cc8] sm:$0xff]
    %v4911 = vld [vmem:[%s4 + $0x3cd0] sm:$0xff]
    %v4912 = vld [vmem:[%s4 + $0x3cd8] sm:$0xff]
    %v4913 = vld [vmem:[%s4 + $0x3ce0] sm:$0xff]
    %v4914 = vld [vmem:[%s4 + $0x3ce8] sm:$0xff]
    %v4915 = vld [vmem:[%s4 + $0x3cf0] sm:$0xff]
    %v4916 = vld [vmem:[%s4 + $0x3cf8] sm:$0xff]
    %v4917 = vld [vmem:[%s4 + $0x3d00] sm:$0xff]
    %v4918 = vld [vmem:[%s4 + $0x3d08] sm:$0xff]
    %v4919 = vld [vmem:[%s4 + $0x3d10] sm:$0xff]
    %v4920 = vld [vmem:[%s4 + $0x3d18] sm:$0xff]
    %v4921 = vld [vmem:[%s4 + $0x3d20] sm:$0xff]
    %v4922 = vld [vmem:[%s4 + $0x3d28] sm:$0xff]
    %v4923 = vld [vmem:[%s4 + $0x3d30] sm:$0xff]
    %v4924 = vld [vmem:[%s4 + $0x3d38] sm:$0xff]
    %v4925 = vld [vmem:[%s4 + $0x3d40] sm:$0xff]
    %v4926 = vld [vmem:[%s4 + $0x3d48] sm:$0xff]
    %v4927 = vld [vmem:[%s4 + $0x3d50] sm:$0xff]
    %v4928 = vld [vmem:[%s4 + $0x3d58] sm:$0xff]
    %v4929 = vld [vmem:[%s4 + $0x3d60] sm:$0xff]
    %v4930 = vld [vmem:[%s4 + $0x3d68] sm:$0xff]
    %v4931 = vld [vmem:[%s4 + $0x3d70] sm:$0xff]
    %v4932 = vld [vmem:[%s4 + $0x3d78] sm:$0xff]
    %v4933 = vld [vmem:[%s4 + $0x3d80] sm:$0xff]
    %v4934 = vld [vmem:[%s4 + $0x3d88] sm:$0xff]
    %v4935 = vld [vmem:[%s4 + $0x3d90] sm:$0xff]
    %v4936 = vld [vmem:[%s4 + $0x3d98] sm:$0xff]
    %v4937 = vld [vmem:[%s4 + $0x3da0] sm:$0xff]
    %v4938 = vld [vmem:[%s4 + $0x3da8] sm:$0xff]
    %v4939 = vld [vmem:[%s4 + $0x3db0] sm:$0xff]
    %v4940 = vld [vmem:[%s4 + $0x3db8] sm:$0xff]
    %v4941 = vld [vmem:[%s4 + $0x3dc0] sm:$0xff]
    %v4942 = vld [vmem:[%s4 + $0x3dc8] sm:$0xff]
    %v4943 = vld [vmem:[%s4 + $0x3dd0] sm:$0xff]
    %v4944 = vld [vmem:[%s4 + $0x3dd8] sm:$0xff]
    %v4945 = vld [vmem:[%s4 + $0x3de0] sm:$0xff]
    %v4946 = vld [vmem:[%s4 + $0x3de8] sm:$0xff]
    %v4947 = vld [vmem:[%s4 + $0x3df0] sm:$0xff]
    %v4948 = vld [vmem:[%s4 + $0x3df8] sm:$0xff]
    %v4949 = vld [vmem:[%s4 + $0x3e00] sm:$0xff]
    %v4950 = vld [vmem:[%s4 + $0x3e08] sm:$0xff]
    %v4951 = vld [vmem:[%s4 + $0x3e10] sm:$0xff]
    %v4952 = vld [vmem:[%s4 + $0x3e18] sm:$0xff]
    %v4953 = vld [vmem:[%s4 + $0x3e20] sm:$0xff]
    %v4954 = vld [vmem:[%s4 + $0x3e28] sm:$0xff]
    %v4955 = vld [vmem:[%s4 + $0x3e30] sm:$0xff]
    %v4956 = vld [vmem:[%s4 + $0x3e38] sm:$0xff]
    %v4957 = vld [vmem:[%s4 + $0x3e40] sm:$0xff]
    %v4958 = vld [vmem:[%s4 + $0x3e48] sm:$0xff]
    %v4959 = vld [vmem:[%s4 + $0x3e50] sm:$0xff]
    %v4960 = vld [vmem:[%s4 + $0x3e58] sm:$0xff]
    %v4961 = vld [vmem:[%s4 + $0x3e60] sm:$0xff]
    %v4962 = vld [vmem:[%s4 + $0x3e68] sm:$0xff]
    %v4963 = vld [vmem:[%s4 + $0x3e70] sm:$0xff]
    %v4964 = vld [vmem:[%s4 + $0x3e78] sm:$0xff]
    %v4965 = vld [vmem:[%s4 + $0x3e80] sm:$0xff]
    %v4966 = vld [vmem:[%s4 + $0x3e88] sm:$0xff]
    %v4967 = vld [vmem:[%s4 + $0x3e90] sm:$0xff]
    %v4968 = vld [vmem:[%s4 + $0x3e98] sm:$0xff]
    %v4969 = vld [vmem:[%s4 + $0x3ea0] sm:$0xff]
    %v4970 = vld [vmem:[%s4 + $0x3ea8] sm:$0xff]
    %v4971 = vld [vmem:[%s4 + $0x3eb0] sm:$0xff]
    %v4972 = vld [vmem:[%s4 + $0x3eb8] sm:$0xff]
    %v4973 = vld [vmem:[%s4 + $0x3ec0] sm:$0xff]
    %v4974 = vld [vmem:[%s4 + $0x3ec8] sm:$0xff]
    %v4975 = vld [vmem:[%s4 + $0x3ed0] sm:$0xff]
    %v4976 = vld [vmem:[%s4 + $0x3ed8] sm:$0xff]
    %v4977 = vld [vmem:[%s4 + $0x3ee0] sm:$0xff]
    %v4978 = vld [vmem:[%s4 + $0x3ee8] sm:$0xff]
    %v4979 = vld [vmem:[%s4 + $0x3ef0] sm:$0xff]
    %v4980 = vld [vmem:[%s4 + $0x3ef8] sm:$0xff]
    %v4981 = vld [vmem:[%s4 + $0x3f00] sm:$0xff]
    %v4982 = vld [vmem:[%s4 + $0x3f08] sm:$0xff]
    %v4983 = vld [vmem:[%s4 + $0x3f10] sm:$0xff]
    %v4984 = vld [vmem:[%s4 + $0x3f18] sm:$0xff]
    %v4985 = vld [vmem:[%s4 + $0x3f20] sm:$0xff]
    %v4986 = vld [vmem:[%s4 + $0x3f28] sm:$0xff]
    %v4987 = vld [vmem:[%s4 + $0x3f30] sm:$0xff]
    %v4988 = vld [vmem:[%s4 + $0x3f38] sm:$0xff]
    %v4989 = vld [vmem:[%s4 + $0x3f40] sm:$0xff]
    %v4990 = vld [vmem:[%s4 + $0x3f48] sm:$0xff]
    %v4991 = vld [vmem:[%s4 + $0x3f50] sm:$0xff]
    %v4992 = vld [vmem:[%s4 + $0x3f58] sm:$0xff]
    %v4993 = vld [vmem:[%s4 + $0x3f60] sm:$0xff]
    %v4994 = vld [vmem:[%s4 + $0x3f68] sm:$0xff]
    %v4995 = vld [vmem:[%s4 + $0x3f70] sm:$0xff]
    %v4996 = vld [vmem:[%s4 + $0x3f78] sm:$0xff]
    %v4997 = vld [vmem:[%s4 + $0x3f80] sm:$0xff]
    %v4998 = vld [vmem:[%s4 + $0x3f88] sm:$0xff]
    %v4999 = vld [vmem:[%s4 + $0x3f90] sm:$0xff]
    %v5000 = vld [vmem:[%s4 + $0x3f98] sm:$0xff]
    %v5001 = vld [vmem:[%s4 + $0x3fa0] sm:$0xff]
    %v5002 = vld [vmem:[%s4 + $0x3fa8] sm:$0xff]
    %v5003 = vld [vmem:[%s4 + $0x3fb0] sm:$0xff]
    %v5004 = vld [vmem:[%s4 + $0x3fb8] sm:$0xff]
    %v5005 = vld [vmem:[%s4 + $0x3fc0] sm:$0xff]
    %v5006 = vld [vmem:[%s4 + $0x3fc8] sm:$0xff]
    %v5007 = vld [vmem:[%s4 + $0x3fd0] sm:$0xff]
    %v5008 = vld [vmem:[%s4 + $0x3fd8] sm:$0xff]
    %v5009 = vld [vmem:[%s4 + $0x3fe0] sm:$0xff]
    %v5010 = vld [vmem:[%s4 + $0x3fe8] sm:$0xff]
    %v5011 = vld [vmem:[%s4 + $0x3ff0] sm:$0xff]
    %v5012 = vld [vmem:[%s4 + $0x3ff8] sm:$0xff]
    %v5013 = vld [vmem:[%s4 + $0x4000] sm:$0xff]
    %v5014 = vld [vmem:[%s4 + $0x4008] sm:$0xff]
    %v5015 = vld [vmem:[%s4 + $0x4010] sm:$0xff]
    %v5016 = vld [vmem:[%s4 + $0x4018] sm:$0xff]
    %v5017 = vld [vmem:[%s4 + $0x4020] sm:$0xff]
    %v5018 = vld [vmem:[%s4 + $0x4028] sm:$0xff]
    %v5019 = vld [vmem:[%s4 + $0x4030] sm:$0xff]
    %v5020 = vld [vmem:[%s4 + $0x4038] sm:$0xff]
    %v5021 = vld [vmem:[%s4 + $0x4040] sm:$0xff]
    %v5022 = vld [vmem:[%s4 + $0x4048] sm:$0xff]
    %v5023 = vld [vmem:[%s4 + $0x4050] sm:$0xff]
    %v5024 = vld [vmem:[%s4 + $0x4058] sm:$0xff]
    %v5025 = vld [vmem:[%s4 + $0x4060] sm:$0xff]
    %v5026 = vld [vmem:[%s4 + $0x4068] sm:$0xff]
    %v5027 = vld [vmem:[%s4 + $0x4070] sm:$0xff]
    %v5028 = vld [vmem:[%s4 + $0x4078] sm:$0xff]
    %v5029 = vld [vmem:[%s4 + $0x4080] sm:$0xff]
    %v5030 = vld [vmem:[%s4 + $0x4088] sm:$0xff]
    %v5031 = vld [vmem:[%s4 + $0x4090] sm:$0xff]
    %v5032 = vld [vmem:[%s4 + $0x4098] sm:$0xff]
    %v5033 = vld [vmem:[%s4 + $0x40a0] sm:$0xff]
    %v5034 = vld [vmem:[%s4 + $0x40a8] sm:$0xff]
    %v5035 = vld [vmem:[%s4 + $0x40b0] sm:$0xff]
    %v5036 = vld [vmem:[%s4 + $0x40b8] sm:$0xff]
    %v5037 = vld [vmem:[%s4 + $0x40c0] sm:$0xff]
    %v5038 = vld [vmem:[%s4 + $0x40c8] sm:$0xff]
    %v5039 = vld [vmem:[%s4 + $0x40d0] sm:$0xff]
    %v5040 = vld [vmem:[%s4 + $0x40d8] sm:$0xff]
    %v5041 = vld [vmem:[%s4 + $0x40e0] sm:$0xff]
    %v5042 = vld [vmem:[%s4 + $0x40e8] sm:$0xff]
    %v5043 = vld [vmem:[%s4 + $0x40f0] sm:$0xff]
    %v5044 = vld [vmem:[%s4 + $0x40f8] sm:$0xff]
    %v5045 = vld [vmem:[%s4 + $0x4100] sm:$0xff]
    %v5046 = vld [vmem:[%s4 + $0x4108] sm:$0xff]
    %v5047 = vld [vmem:[%s4 + $0x4110] sm:$0xff]
    %v5048 = vld [vmem:[%s4 + $0x4118] sm:$0xff]
    %v5049 = vld [vmem:[%s4 + $0x4120] sm:$0xff]
    %v5050 = vld [vmem:[%s4 + $0x4128] sm:$0xff]
    %v5051 = vld [vmem:[%s4 + $0x4130] sm:$0xff]
    %v5052 = vld [vmem:[%s4 + $0x4138] sm:$0xff]
    %v5053 = vld [vmem:[%s4 + $0x4140] sm:$0xff]
    %v5054 = vld [vmem:[%s4 + $0x4148] sm:$0xff]
    %v5055 = vld [vmem:[%s4 + $0x4150] sm:$0xff]
    %v5056 = vld [vmem:[%s4 + $0x4158] sm:$0xff]
    %v5057 = vld [vmem:[%s4 + $0x4160] sm:$0xff]
    %v5058 = vld [vmem:[%s4 + $0x4168] sm:$0xff]
    %v5059 = vld [vmem:[%s4 + $0x4170] sm:$0xff]
    %v5060 = vld [vmem:[%s4 + $0x4178] sm:$0xff]
    %v5061 = vld [vmem:[%s4 + $0x4180] sm:$0xff]
    %v5062 = vld [vmem:[%s4 + $0x4188] sm:$0xff]
    %v5063 = vld [vmem:[%s4 + $0x4190] sm:$0xff]
    %v5064 = vld [vmem:[%s4 + $0x4198] sm:$0xff]
    %v5065 = vld [vmem:[%s5] sm:$0x7f]
    %v5067 = vlaneseq
    %v5068 = vshrl.u32 %v5067, 7
    %v5069 = vsub.s32 0, %v5068
    %v5070 = vrot.slane %v5065, %v5069
    %v5071 = vlaneseq
    %v5072 = vshrl.u32 %v5071, 7
    %v5073 = vsub.s32 1, %v5072
    %v5074 = vrot.slane %v5065, %v5073
    %v5075 = vlaneseq
    %v5076 = vshrl.u32 %v5075, 7
    %v5077 = vsub.s32 2, %v5076
    %v5078 = vrot.slane %v5065, %v5077
    %v5079 = vlaneseq
    %v5080 = vshrl.u32 %v5079, 7
    %v5081 = vsub.s32 3, %v5080
    %v5082 = vrot.slane %v5065, %v5081
    %v5083 = vlaneseq
    %v5084 = vshrl.u32 %v5083, 7
    %v5085 = vsub.s32 4, %v5084
    %v5086 = vrot.slane %v5065, %v5085
    %v5087 = vlaneseq
    %v5088 = vshrl.u32 %v5087, 7
    %v5089 = vsub.s32 5, %v5088
    %v5090 = vrot.slane %v5065, %v5089
    %v5091 = vlaneseq
    %v5092 = vshrl.u32 %v5091, 7
    %v5093 = vsub.s32 6, %v5092
    %v5094 = vrot.slane %v5065, %v5093
    %vm5102 = vcmask 785408
    %v5103 = vsel %vm5102, %v2900, 0
    %v5105 = vsel %vm5102, %v2906, 0
    %v5107 = vsel %vm5102, %v2912, 0
    %v5109 = vsel %vm5102, %v2918, 0
    %v5111 = vsel %vm5102, %v2924, 0
    %5113 = vmatprep.subr.mxu0 %v2966
    %5114 = vmatpush1.msra.mxu0 %v2965
    %5115 = vmatprep.subr.mxu0 %v2973
    %5116 = vmatpush1.msra.mxu0 %v2972
    %5117 = vmatprep.subr.mxu0 %v2980
    %5118 = vmatpush1.msra.mxu0 %v2979
    %5119 = vmatprep.subr.mxu0 %v2987
    %5120 = vmatpush1.msra.mxu0 %v2986
    %5121 = vmatprep.subr.mxu0 %v2994
    %5122 = vmatpush1.msra.mxu0 %v2993
    %5123 = vmatprep.subr.mxu0 %v3001
    %5124 = vmatpush1.msra.mxu0 %v3000
    %5125 = vmatprep.subr.mxu0 %v3008
    %5126 = vmatpush1.msra.mxu0 %v3007
    %5127 = vmatprep.subr.mxu0 %v3015
    %5128 = vmatpush1.msra.mxu0 %v3014
    %5129 = vmatprep.subr.mxu0 %v3022
    %5130 = vmatpush1.msra.mxu0 %v3021
    %5131 = vmatprep.subr.mxu0 %v3029
    %5132 = vmatpush1.msra.mxu0 %v3028
    %5133 = vmatprep.subr.mxu0 %v3036
    %5134 = vmatpush1.msra.mxu0 %v3035
    %5135 = vmatprep.subr.mxu0 %v3043
    %5136 = vmatpush1.msra.mxu0 %v3042
    %5137 = vmatprep.subr.mxu0 %v3050
    %5138 = vmatpush1.msra.mxu0 %v3049
    %5139 = vmatprep.subr.mxu0 %v3057
    %5140 = vmatpush1.msra.mxu0 %v3056
    %5141 = vmatprep.subr.mxu0 %v3064
    %5142 = vmatpush1.msra.mxu0 %v3063
    %5143 = vmatprep.subr.mxu0 %v3071
    %5144 = vmatpush1.msra.mxu0 %v3070
    %5145 = vmatprep.subr.mxu0 %v3078
    %5146 = vmatpush1.msra.mxu0 %v3077
    %5147 = vmatprep.subr.mxu0 %v3085
    %5148 = vmatpush1.msra.mxu0 %v3084
    %5149 = vmatprep.subr.mxu0 %v3092
    %5150 = vmatpush1.msra.mxu0 %v3091
    %5151 = vmatprep.subr.mxu0 %v3099
    %5152 = vmatpush1.msra.mxu0 %v3098
    %5153 = vmatprep.subr.mxu0 %v3106
    %5154 = vmatpush1.msra.mxu0 %v3105
    %5155 = vmatprep.subr.mxu0 %v3113
    %5156 = vmatpush1.msra.mxu0 %v3112
    %5157 = vmatprep.subr.mxu0 %v3120
    %5158 = vmatpush1.msra.mxu0 %v3119
    %5159 = vmatprep.subr.mxu0 %v3127
    %5160 = vmatpush1.msra.mxu0 %v3126
    %5161 = vmatprep.subr.mxu0 %v3134
    %5162 = vmatpush1.msra.mxu0 %v3133
    %5163 = vmatprep.subr.mxu0 %v3141
    %5164 = vmatpush1.msra.mxu0 %v3140
    %5165 = vmatprep.subr.mxu0 %v3148
    %5166 = vmatpush1.msra.mxu0 %v3147
    %5167 = vmatprep.subr.mxu0 %v3155
    %5168 = vmatpush1.msra.mxu0 %v3154
    %5169 = vmatprep.subr.mxu0 %v3162
    %5170 = vmatpush1.msra.mxu0 %v3161
    %5171 = vmatprep.subr.mxu0 %v3169
    %5172 = vmatpush1.msra.mxu0 %v3168
    %5173 = vmatprep.subr.mxu0 %v3176
    %5174 = vmatpush1.msra.mxu0 %v3175
    %5175 = vmatprep.subr.mxu0 %v3183
    %5176 = vmatpush1.msra.mxu0 %v3182
    %5177 = vmatprep.mubr.f32.mxu0 %v2448
    %5178 = vmatmul.mubr.f32.gmra.mrb[0].mxu0 %v2447
    %v5179 = vpop.f32.mrb[0].mxu0
    %v5180 = vadd.f32 %v5070, %v5179
    %v5181 = vpop.f32.mrb[0].mxu0
    %v5182 = vadd.f32 %v5074, %v5181
    %5183 = vmatprep.mubr.f32.mxu0 %v2455
    %5184 = vmatmul.mubr.f32.gmra.mrb[0].mxu0 %v2454
    %v5185 = vpop.f32.mrb[0].mxu0
    %v5186 = vadd.f32 %v5070, %v5185
    %v5187 = vpop.f32.mrb[0].mxu0
    %v5188 = vadd.f32 %v5074, %v5187
    %5189 = vmatprep.mubr.f32.mxu0 %v2462
    %5190 = vmatmul.mubr.f32.gmra.mrb[0].mxu0 %v2461
    %v5191 = vpop.f32.mrb[0].mxu0
    %v5192 = vadd.f32 %v5070, %v5191
    %v5193 = vpop.f32.mrb[0].mxu0
    %v5194 = vadd.f32 %v5074, %v5193
    %5195 = vmatprep.mubr.f32.mxu0 %v2469
    %5196 = vmatmul.mubr.f32.gmra.mrb[0].mxu0 %v2468
    %v5197 = vpop.f32.mrb[0].mxu0
    %v5198 = vadd.f32 %v5070, %v5197
    %v5199 = vpop.f32.mrb[0].mxu0
    %v5200 = vadd.f32 %v5074, %v5199
    %5201 = vmatprep.mubr.f32.mxu0 %v2476
    %5202 = vmatmul.mubr.f32.gmra.mrb[0].mxu0 %v2475
    %v5203 = vpop.f32.mrb[0].mxu0
    %v5204 = vadd.f32 %v5070, %v5203
    %v5205 = vpop.f32.mrb[0].mxu0
    %v5206 = vadd.f32 %v5074, %v5205
    %5207 = vdwg.mxu0
    %5208 = vmatprep.subr.mxu0 %v3190
    %5209 = vmatpush1.msra.mxu0 %v3189
    %5210 = vmatprep.subr.mxu0 %v3197
    %5211 = vmatpush1.msra.mxu0 %v3196
    %5212 = vmatprep.subr.mxu0 %v3204
    %5213 = vmatpush1.msra.mxu0 %v3203
    %5214 = vmatprep.subr.mxu0 %v3211
    %5215 = vmatpush1.msra.mxu0 %v3210
    %5216 = vmatprep.subr.mxu0 %v3218
    %5217 = vmatpush1.msra.mxu0 %v3217
    %5218 = vmatprep.subr.mxu0 %v3225
    %5219 = vmatpush1.msra.mxu0 %v3224
    %5220 = vmatprep.subr.mxu0 %v3232
    %5221 = vmatpush1.msra.mxu0 %v3231
    %5222 = vmatprep.subr.mxu0 %v3239
    %5223 = vmatpush1.msra.mxu0 %v3238
    %5224 = vmatprep.subr.mxu0 %v3246
    %5225 = vmatpush1.msra.mxu0 %v3245
    %5226 = vmatprep.subr.mxu0 %v3253
    %5227 = vmatpush1.msra.mxu0 %v3252
    %5228 = vmatprep.subr.mxu0 %v3260
    %5229 = vmatpush1.msra.mxu0 %v3259
    %5230 = vmatprep.subr.mxu0 %v3267
    %5231 = vmatpush1.msra.mxu0 %v3266
    %5232 = vmatprep.subr.mxu0 %v3274
    %5233 = vmatpush1.msra.mxu0 %v3273
    %5234 = vmatprep.subr.mxu0 %v3281
    %5235 = vmatpush1.msra.mxu0 %v3280
    %5236 = vmatprep.subr.mxu0 %v3288
    %5237 = vmatpush1.msra.mxu0 %v3287
    %5238 = vmatprep.subr.mxu0 %v3295
    %5239 = vmatpush1.msra.mxu0 %v3294
    %5240 = vmatprep.subr.mxu0 %v3302
    %5241 = vmatpush1.msra.mxu0 %v3301
    %5242 = vmatprep.subr.mxu0 %v3309
    %5243 = vmatpush1.msra.mxu0 %v3308
    %5244 = vmatprep.subr.mxu0 %v3316
    %5245 = vmatpush1.msra.mxu0 %v3315
    %5246 = vmatprep.subr.mxu0 %v3323
    %5247 = vmatpush1.msra.mxu0 %v3322
    %5248 = vmatprep.subr.mxu0 %v3330
    %5249 = vmatpush1.msra.mxu0 %v3329
    %5250 = vmatprep.subr.mxu0 %v3337
    %5251 = vmatpush1.msra.mxu0 %v3336
    %5252 = vmatprep.subr.mxu0 %v3344
    %5253 = vmatpush1.msra.mxu0 %v3343
    %5254 = vmatprep.subr.mxu0 %v3351
    %5255 = vmatpush1.msra.mxu0 %v3350
    %5256 = vmatprep.subr.mxu0 %v3358
    %5257 = vmatpush1.msra.mxu0 %v3357
    %5258 = vmatprep.subr.mxu0 %v3365
    %5259 = vmatpush1.msra.mxu0 %v3364
    %5260 = vmatprep.subr.mxu0 %v3372
    %5261 = vmatpush1.msra.mxu0 %v3371
    %5262 = vmatprep.subr.mxu0 %v3379
    %5263 = vmatpush1.msra.mxu0 %v3378
    %5264 = vmatprep.subr.mxu0 %v3386
    %5265 = vmatpush1.msra.mxu0 %v3385
    %5266 = vmatprep.subr.mxu0 %v3393
    %5267 = vmatpush1.msra.mxu0 %v3392
    %5268 = vmatprep.subr.mxu0 %v3400
    %5269 = vmatpush1.msra.mxu0 %v3399
    %5270 = vmatprep.subr.mxu0 %v3407
    %5271 = vmatpush1.msra.mxu0 %v3406
    %5272 = vmatprep.mubr.f32.mxu0 %v2450
    %5273 = vmatmul.mubr.f32.gmra.mrb[0].mxu0 %v2449
    %v5274 = vpop.f32.mrb[0].mxu0
    %v5275 = vadd.f32 %v5180, %v5274
    %v5276 = vpop.f32.mrb[0].mxu0
    %v5277 = vadd.f32 %v5182, %v5276
    %5278 = vmatprep.mubr.f32.mxu0 %v2457
    %5279 = vmatmul.mubr.f32.gmra.mrb[0].mxu0 %v2456
    %v5280 = vpop.f32.mrb[0].mxu0
    %v5281 = vadd.f32 %v5186, %v5280
    %v5282 = vpop.f32.mrb[0].mxu0
    %v5283 = vadd.f32 %v5188, %v5282
    %5284 = vmatprep.mubr.f32.mxu0 %v2464
    %5285 = vmatmul.mubr.f32.gmra.mrb[0].mxu0 %v2463
    %v5286 = vpop.f32.mrb[0].mxu0
    %v5287 = vadd.f32 %v5192, %v5286
    %v5288 = vpop.f32.mrb[0].mxu0
    %v5289 = vadd.f32 %v5194, %v5288
    %5290 = vmatprep.mubr.f32.mxu0 %v2471
    %5291 = vmatmul.mubr.f32.gmra.mrb[0].mxu0 %v2470
    %v5292 = vpop.f32.mrb[0].mxu0
    %v5293 = vadd.f32 %v5198, %v5292
    %v5294 = vpop.f32.mrb[0].mxu0
    %v5295 = vadd.f32 %v5200, %v5294
    %5296 = vmatprep.mubr.f32.mxu0 %v2478
    %5297 = vmatmul.mubr.f32.gmra.mrb[0].mxu0 %v2477
    %v5298 = vpop.f32.mrb[0].mxu0
    %v5299 = vadd.f32 %v5204, %v5298
    %v5300 = vpop.f32.mrb[0].mxu0
    %v5301 = vadd.f32 %v5206, %v5300
    %5302 = vdwg.mxu0
    %5303 = vmatprep.subr.mxu0 %v3414
    %5304 = vmatpush1.msra.mxu0 %v3413
    %5305 = vmatprep.subr.mxu0 %v3421
    %5306 = vmatpush1.msra.mxu0 %v3420
    %5307 = vmatprep.subr.mxu0 %v3428
    %5308 = vmatpush1.msra.mxu0 %v3427
    %5309 = vmatprep.subr.mxu0 %v3435
    %5310 = vmatpush1.msra.mxu0 %v3434
    %5311 = vmatprep.subr.mxu0 %v3442
    %5312 = vmatpush1.msra.mxu0 %v3441
    %5313 = vmatprep.subr.mxu0 %v3449
    %5314 = vmatpush1.msra.mxu0 %v3448
    %5315 = vmatprep.subr.mxu0 %v3456
    %5316 = vmatpush1.msra.mxu0 %v3455
    %5317 = vmatprep.subr.mxu0 %v3463
    %5318 = vmatpush1.msra.mxu0 %v3462
    %5319 = vmatprep.subr.mxu0 %v3470
    %5320 = vmatpush1.msra.mxu0 %v3469
    %5321 = vmatprep.subr.mxu0 %v3477
    %5322 = vmatpush1.msra.mxu0 %v3476
    %5323 = vmatprep.subr.mxu0 %v3484
    %5324 = vmatpush1.msra.mxu0 %v3483
    %5325 = vmatprep.subr.mxu0 %v3491
    %5326 = vmatpush1.msra.mxu0 %v3490
    %5327 = vmatprep.subr.mxu0 %v3498
    %5328 = vmatpush1.msra.mxu0 %v3497
    %5329 = vmatprep.subr.mxu0 %v3505
    %5330 = vmatpush1.msra.mxu0 %v3504
    %5331 = vmatprep.subr.mxu0 %v3512
    %5332 = vmatpush1.msra.mxu0 %v3511
    %5333 = vmatprep.subr.mxu0 %v3519
    %5334 = vmatpush1.msra.mxu0 %v3518
    %5335 = vmatprep.subr.mxu0 %v3526
    %5336 = vmatpush1.msra.mxu0 %v3525
    %5337 = vmatprep.subr.mxu0 %v3533
    %5338 = vmatpush1.msra.mxu0 %v3532
    %5339 = vmatprep.subr.mxu0 %v3540
    %5340 = vmatpush1.msra.mxu0 %v3539
    %5341 = vmatprep.subr.mxu0 %v3547
    %5342 = vmatpush1.msra.mxu0 %v3546
    %5343 = vmatprep.subr.mxu0 %v3554
    %5344 = vmatpush1.msra.mxu0 %v3553
    %5345 = vmatprep.subr.mxu0 %v3561
    %5346 = vmatpush1.msra.mxu0 %v3560
    %5347 = vmatprep.subr.mxu0 %v3568
    %5348 = vmatpush1.msra.mxu0 %v3567
    %5349 = vmatprep.subr.mxu0 %v3575
    %5350 = vmatpush1.msra.mxu0 %v3574
    %5351 = vmatprep.subr.mxu0 %v3582
    %5352 = vmatpush1.msra.mxu0 %v3581
    %5353 = vmatprep.subr.mxu0 %v3589
    %5354 = vmatpush1.msra.mxu0 %v3588
    %5355 = vmatprep.subr.mxu0 %v3596
    %5356 = vmatpush1.msra.mxu0 %v3595
    %5357 = vmatprep.subr.mxu0 %v3603
    %5358 = vmatpush1.msra.mxu0 %v3602
    %5359 = vmatprep.subr.mxu0 %v3610
    %5360 = vmatpush1.msra.mxu0 %v3609
    %5361 = vmatprep.subr.mxu0 %v3617
    %5362 = vmatpush1.msra.mxu0 %v3616
    %5363 = vmatprep.subr.mxu0 %v3624
    %5364 = vmatpush1.msra.mxu0 %v3623
    %5365 = vmatprep.subr.mxu0 %v3631
    %5366 = vmatpush1.msra.mxu0 %v3630
    %5367 = vmatprep.mubr.f32.mxu0 %v2452
    %5368 = vmatmul.mubr.f32.gmra.mrb[0].mxu0 %v2451
    %v5369 = vpop.f32.mrb[0].mxu0
    %v5370 = vadd.f32 %v5275, %v5369
    %v5371 = vpop.f32.mrb[0].mxu0
    %v5372 = vadd.f32 %v5277, %v5371
    %5373 = vmatprep.mubr.f32.mxu0 %v2459
    %5374 = vmatmul.mubr.f32.gmra.mrb[0].mxu0 %v2458
    %v5375 = vpop.f32.mrb[0].mxu0
    %v5376 = vadd.f32 %v5281, %v5375
    %v5377 = vpop.f32.mrb[0].mxu0
    %v5378 = vadd.f32 %v5283, %v5377
    %5379 = vmatprep.mubr.f32.mxu0 %v2466
    %5380 = vmatmul.mubr.f32.gmra.mrb[0].mxu0 %v2465
    %v5381 = vpop.f32.mrb[0].mxu0
    %v5382 = vadd.f32 %v5287, %v5381
    %v5383 = vpop.f32.mrb[0].mxu0
    %v5384 = vadd.f32 %v5289, %v5383
    %5385 = vmatprep.mubr.f32.mxu0 %v2473
    %5386 = vmatmul.mubr.f32.gmra.mrb[0].mxu0 %v2472
    %v5387 = vpop.f32.mrb[0].mxu0
    %v5388 = vadd.f32 %v5293, %v5387
    %v5389 = vpop.f32.mrb[0].mxu0
    %v5390 = vadd.f32 %v5295, %v5389
    %5391 = vmatprep.mubr.f32.mxu0 %v2480
    %5392 = vmatmul.mubr.f32.gmra.mrb[0].mxu0 %v2479
    %v5393 = vpop.f32.mrb[0].mxu0
    %v5394 = vadd.f32 %v5299, %v5393
    %v5395 = vpop.f32.mrb[0].mxu0
    %v5396 = vadd.f32 %v5301, %v5395
    %5397 = vdwg.mxu0
    %5398 = vmatprep.subr.mxu0 %v3638
    %5399 = vmatpush1.msra.mxu0 %v3637
    %5400 = vmatprep.subr.mxu0 %v3645
    %5401 = vmatpush1.msra.mxu0 %v3644
    %5402 = vmatprep.subr.mxu0 %v3652
    %5403 = vmatpush1.msra.mxu0 %v3651
    %5404 = vmatprep.subr.mxu0 %v3659
    %5405 = vmatpush1.msra.mxu0 %v3658
    %5406 = vmatprep.subr.mxu0 %v3666
    %5407 = vmatpush1.msra.mxu0 %v3665
    %5408 = vmatprep.subr.mxu0 %v3673
    %5409 = vmatpush1.msra.mxu0 %v3672
    %5410 = vmatprep.subr.mxu0 %v3680
    %5411 = vmatpush1.msra.mxu0 %v3679
    %5412 = vmatprep.subr.mxu0 %v3687
    %5413 = vmatpush1.msra.mxu0 %v3686
    %5414 = vmatprep.subr.mxu0 %v3694
    %5415 = vmatpush1.msra.mxu0 %v3693
    %5416 = vmatprep.subr.mxu0 %v3701
    %5417 = vmatpush1.msra.mxu0 %v3700
    %5418 = vmatprep.subr.mxu0 %v3708
    %5419 = vmatpush1.msra.mxu0 %v3707
    %5420 = vmatprep.subr.mxu0 %v3715
    %5421 = vmatpush1.msra.mxu0 %v3714
    %5422 = vmatprep.subr.mxu0 %v3722
    %5423 = vmatpush1.msra.mxu0 %v3721
    %5424 = vmatprep.subr.mxu0 %v3729
    %5425 = vmatpush1.msra.mxu0 %v3728
    %5426 = vmatprep.subr.mxu0 %v3736
    %5427 = vmatpush1.msra.mxu0 %v3735
    %5428 = vmatprep.subr.mxu0 %v3743
    %5429 = vmatpush1.msra.mxu0 %v3742
    %5430 = vmatprep.subr.mxu0 %v3750
    %5431 = vmatpush1.msra.mxu0 %v3749
    %5432 = vmatprep.subr.mxu0 %v3757
    %5433 = vmatpush1.msra.mxu0 %v3756
    %5434 = vmatprep.subr.mxu0 %v3764
    %5435 = vmatpush1.msra.mxu0 %v3763
    %5436 = vmatprep.subr.mxu0 %v3771
    %5437 = vmatpush1.msra.mxu0 %v3770
    %5438 = vmatprep.subr.mxu0 %v3778
    %5439 = vmatpush1.msra.mxu0 %v3777
    %5440 = vmatprep.subr.mxu0 %v3785
    %5441 = vmatpush1.msra.mxu0 %v3784
    %5442 = vmatprep.subr.mxu0 %v3792
    %5443 = vmatpush1.msra.mxu0 %v3791
    %5444 = vmatprep.subr.mxu0 %v3799
    %5445 = vmatpush1.msra.mxu0 %v3798
    %5446 = vmatprep.subr.mxu0 %v3806
    %5447 = vmatpush1.msra.mxu0 %v3805
    %5448 = vmatprep.subr.mxu0 %v3813
    %5449 = vmatpush1.msra.mxu0 %v3812
    %5450 = vmatprep.subr.mxu0 %v3820
    %5451 = vmatpush1.msra.mxu0 %v3819
    %5452 = vmatprep.subr.mxu0 %v3827
    %5453 = vmatpush1.msra.mxu0 %v3826
    %5454 = vmatprep.subr.mxu0 %v3834
    %5455 = vmatpush1.msra.mxu0 %v3833
    %5456 = vmatprep.subr.mxu0 %v3841
    %5457 = vmatpush1.msra.mxu0 %v3840
    %5458 = vmatprep.subr.mxu0 %v3848
    %5459 = vmatpush1.msra.mxu0 %v3847
    %5460 = vmatprep.subr.mxu0 %v3855
    %5461 = vmatpush1.msra.mxu0 %v3854
    %5462 = vmatprep.mubr.f32.mxu0 %v2724
    %5463 = vmatmul.mubr.f32.gmra.mrb[0].mxu0 %v2955
    %v5464 = vpop.f32.mrb[0].mxu0
    %v5465 = vadd.f32 %v5370, %v5464
    %v5466 = vpop.f32.mrb[0].mxu0
    %v5467 = vadd.f32 %v5372, %v5466
    %5468 = vmatprep.mubr.f32.mxu0 %v2730
    %5469 = vmatmul.mubr.f32.gmra.mrb[0].mxu0 %v2956
    %v5470 = vpop.f32.mrb[0].mxu0
    %v5471 = vadd.f32 %v5376, %v5470
    %v5472 = vpop.f32.mrb[0].mxu0
    %v5473 = vadd.f32 %v5378, %v5472
    %5474 = vmatprep.mubr.f32.mxu0 %v2736
    %5475 = vmatmul.mubr.f32.gmra.mrb[0].mxu0 %v2957
    %v5476 = vpop.f32.mrb[0].mxu0
    %v5477 = vadd.f32 %v5382, %v5476
    %v5478 = vpop.f32.mrb[0].mxu0
    %v5479 = vadd.f32 %v5384, %v5478
    %5480 = vmatprep.mubr.f32.mxu0 %v2742
    %5481 = vmatmul.mubr.f32.gmra.mrb[0].mxu0 %v2958
    %v5482 = vpop.f32.mrb[0].mxu0
    %v5483 = vadd.f32 %v5388, %v5482
    %v5484 = vpop.f32.mrb[0].mxu0
    %v5485 = vadd.f32 %v5390, %v5484
    %5486 = vmatprep.mubr.f32.mxu0 %v2748
    %5487 = vmatmul.mubr.f32.gmra.mrb[0].mxu0 %v2959
    %v5488 = vpop.f32.mrb[0].mxu0
    %v5489 = vadd.f32 %v5394, %v5488
    %v5490 = vpop.f32.mrb[0].mxu0
    %v5491 = vadd.f32 %v5396, %v5490
    %5492 = vdwg.mxu0
    %5493 = vmatprep.subr.mxu0 %v3862
    %5494 = vmatpush1.msra.mxu0 %v3861
    %5495 = vmatprep.subr.mxu0 %v3869
    %5496 = vmatpush1.msra.mxu0 %v3868
    %5497 = vmatprep.subr.mxu0 %v3876
    %5498 = vmatpush1.msra.mxu0 %v3875
    %5499 = vmatprep.subr.mxu0 %v3883
    %5500 = vmatpush1.msra.mxu0 %v3882
    %5501 = vmatprep.subr.mxu0 %v3890
    %5502 = vmatpush1.msra.mxu0 %v3889
    %5503 = vmatprep.subr.mxu0 %v3897
    %5504 = vmatpush1.msra.mxu0 %v3896
    %5505 = vmatprep.subr.mxu0 %v3904
    %5506 = vmatpush1.msra.mxu0 %v3903
    %5507 = vmatprep.subr.mxu0 %v3911
    %5508 = vmatpush1.msra.mxu0 %v3910
    %5509 = vmatprep.subr.mxu0 %v3918
    %5510 = vmatpush1.msra.mxu0 %v3917
    %5511 = vmatprep.subr.mxu0 %v3925
    %5512 = vmatpush1.msra.mxu0 %v3924
    %5513 = vmatprep.subr.mxu0 %v3932
    %5514 = vmatpush1.msra.mxu0 %v3931
    %5515 = vmatprep.subr.mxu0 %v3939
    %5516 = vmatpush1.msra.mxu0 %v3938
    %5517 = vmatprep.subr.mxu0 %v3946
    %5518 = vmatpush1.msra.mxu0 %v3945
    %5519 = vmatprep.subr.mxu0 %v3953
    %5520 = vmatpush1.msra.mxu0 %v3952
    %5521 = vmatprep.subr.mxu0 %v3960
    %5522 = vmatpush1.msra.mxu0 %v3959
    %5523 = vmatprep.subr.mxu0 %v3967
    %5524 = vmatpush1.msra.mxu0 %v3966
    %5525 = vmatprep.subr.mxu0 %v3974
    %5526 = vmatpush1.msra.mxu0 %v3973
    %5527 = vmatprep.subr.mxu0 %v3981
    %5528 = vmatpush1.msra.mxu0 %v3980
    %5529 = vmatprep.subr.mxu0 %v3988
    %5530 = vmatpush1.msra.mxu0 %v3987
    %5531 = vmatprep.subr.mxu0 %v3995
    %5532 = vmatpush1.msra.mxu0 %v3994
    %5533 = vmatprep.subr.mxu0 %v4002
    %5534 = vmatpush1.msra.mxu0 %v4001
    %5535 = vmatprep.subr.mxu0 %v4009
    %5536 = vmatpush1.msra.mxu0 %v4008
    %5537 = vmatprep.subr.mxu0 %v4016
    %5538 = vmatpush1.msra.mxu0 %v4015
    %5539 = vmatprep.subr.mxu0 %v4023
    %5540 = vmatpush1.msra.mxu0 %v4022
    %5541 = vmatprep.subr.mxu0 %v4030
    %5542 = vmatpush1.msra.mxu0 %v4029
    %5543 = vmatprep.subr.mxu0 %v4037
    %5544 = vmatpush1.msra.mxu0 %v4036
    %5545 = vmatprep.subr.mxu0 %v4044
    %5546 = vmatpush1.msra.mxu0 %v4043
    %5547 = vmatprep.subr.mxu0 %v4051
    %5548 = vmatpush1.msra.mxu0 %v4050
    %5549 = vmatprep.subr.mxu0 %v4058
    %5550 = vmatpush1.msra.mxu0 %v4057
    %5551 = vmatprep.subr.mxu0 %v4065
    %5552 = vmatpush1.msra.mxu0 %v4064
    %5553 = vmatprep.subr.mxu0 %v4072
    %5554 = vmatpush1.msra.mxu0 %v4071
    %5555 = vmatprep.subr.mxu0 %v4079
    %5556 = vmatpush1.msra.mxu0 %v4078
    %5557 = vmatprep.mubr.f32.mxu0 %v2726
    %5558 = vmatmul.mubr.f32.gmra.mrb[0].mxu0 %v2725
    %v5559 = vpop.f32.mrb[0].mxu0
    %v5560 = vadd.f32 %v5465, %v5559
    %v5561 = vpop.f32.mrb[0].mxu0
    %v5562 = vadd.f32 %v5467, %v5561
    %5563 = vmatprep.mubr.f32.mxu0 %v2732
    %5564 = vmatmul.mubr.f32.gmra.mrb[0].mxu0 %v2731
    %v5565 = vpop.f32.mrb[0].mxu0
    %v5566 = vadd.f32 %v5471, %v5565
    %v5567 = vpop.f32.mrb[0].mxu0
    %v5568 = vadd.f32 %v5473, %v5567
    %5569 = vmatprep.mubr.f32.mxu0 %v2738
    %5570 = vmatmul.mubr.f32.gmra.mrb[0].mxu0 %v2737
    %v5571 = vpop.f32.mrb[0].mxu0
    %v5572 = vadd.f32 %v5477, %v5571
    %v5573 = vpop.f32.mrb[0].mxu0
    %v5574 = vadd.f32 %v5479, %v5573
    %5575 = vmatprep.mubr.f32.mxu0 %v2744
    %5576 = vmatmul.mubr.f32.gmra.mrb[0].mxu0 %v2743
    %v5577 = vpop.f32.mrb[0].mxu0
    %v5578 = vadd.f32 %v5483, %v5577
    %v5579 = vpop.f32.mrb[0].mxu0
    %v5580 = vadd.f32 %v5485, %v5579
    %5581 = vmatprep.mubr.f32.mxu0 %v2750
    %5582 = vmatmul.mubr.f32.gmra.mrb[0].mxu0 %v2749
    %v5583 = vpop.f32.mrb[0].mxu0
    %v5584 = vadd.f32 %v5489, %v5583
    %v5585 = vpop.f32.mrb[0].mxu0
    %v5586 = vadd.f32 %v5491, %v5585
    %5587 = vdwg.mxu0
    %5588 = vmatprep.subr.mxu0 %v4086
    %5589 = vmatpush1.msra.mxu0 %v4085
    %5590 = vmatprep.subr.mxu0 %v4093
    %5591 = vmatpush1.msra.mxu0 %v4092
    %5592 = vmatprep.subr.mxu0 %v4100
    %5593 = vmatpush1.msra.mxu0 %v4099
    %5594 = vmatprep.subr.mxu0 %v4107
    %5595 = vmatpush1.msra.mxu0 %v4106
    %5596 = vmatprep.subr.mxu0 %v4114
    %5597 = vmatpush1.msra.mxu0 %v4113
    %5598 = vmatprep.subr.mxu0 %v4121
    %5599 = vmatpush1.msra.mxu0 %v4120
    %5600 = vmatprep.subr.mxu0 %v4128
    %5601 = vmatpush1.msra.mxu0 %v4127
    %5602 = vmatprep.subr.mxu0 %v4135
    %5603 = vmatpush1.msra.mxu0 %v4134
    %5604 = vmatprep.subr.mxu0 %v4142
    %5605 = vmatpush1.msra.mxu0 %v4141
    %5606 = vmatprep.subr.mxu0 %v4149
    %5607 = vmatpush1.msra.mxu0 %v4148
    %5608 = vmatprep.subr.mxu0 %v4156
    %5609 = vmatpush1.msra.mxu0 %v4155
    %5610 = vmatprep.subr.mxu0 %v4163
    %5611 = vmatpush1.msra.mxu0 %v4162
    %5612 = vmatprep.subr.mxu0 %v4170
    %5613 = vmatpush1.msra.mxu0 %v4169
    %5614 = vmatprep.subr.mxu0 %v4177
    %5615 = vmatpush1.msra.mxu0 %v4176
    %5616 = vmatprep.subr.mxu0 %v4184
    %5617 = vmatpush1.msra.mxu0 %v4183
    %5618 = vmatprep.subr.mxu0 %v4191
    %5619 = vmatpush1.msra.mxu0 %v4190
    %5620 = vmatprep.subr.mxu0 %v4198
    %5621 = vmatpush1.msra.mxu0 %v4197
    %5622 = vmatprep.subr.mxu0 %v4205
    %5623 = vmatpush1.msra.mxu0 %v4204
    %5624 = vmatprep.subr.mxu0 %v4212
    %5625 = vmatpush1.msra.mxu0 %v4211
    %5626 = vmatprep.subr.mxu0 %v4219
    %5627 = vmatpush1.msra.mxu0 %v4218
    %5628 = vmatprep.subr.mxu0 %v4226
    %5629 = vmatpush1.msra.mxu0 %v4225
    %5630 = vmatprep.subr.mxu0 %v4233
    %5631 = vmatpush1.msra.mxu0 %v4232
    %5632 = vmatprep.subr.mxu0 %v4240
    %5633 = vmatpush1.msra.mxu0 %v4239
    %5634 = vmatprep.subr.mxu0 %v4247
    %5635 = vmatpush1.msra.mxu0 %v4246
    %5636 = vmatprep.subr.mxu0 %v4254
    %5637 = vmatpush1.msra.mxu0 %v4253
    %5638 = vmatprep.subr.mxu0 %v4261
    %5639 = vmatpush1.msra.mxu0 %v4260
    %5640 = vmatprep.subr.mxu0 %v4268
    %5641 = vmatpush1.msra.mxu0 %v4267
    %5642 = vmatprep.subr.mxu0 %v4275
    %5643 = vmatpush1.msra.mxu0 %v4274
    %5644 = vmatprep.subr.mxu0 %v4282
    %5645 = vmatpush1.msra.mxu0 %v4281
    %5646 = vmatprep.subr.mxu0 %v4289
    %5647 = vmatpush1.msra.mxu0 %v4288
    %5648 = vmatprep.subr.mxu0 %v4296
    %5649 = vmatpush1.msra.mxu0 %v4295
    %5650 = vmatprep.subr.mxu0 %v4303
    %5651 = vmatpush1.msra.mxu0 %v4302
    %5652 = vmatprep.mubr.f32.mxu0 %v2728
    %5653 = vmatmul.mubr.f32.gmra.mrb[0].mxu0 %v2727
    %v5654 = vpop.f32.mrb[0].mxu0
    %v5655 = vadd.f32 %v5560, %v5654
    %v5656 = vpop.f32.mrb[0].mxu0
    %v5657 = vadd.f32 %v5562, %v5656
    %5658 = vmatprep.mubr.f32.mxu0 %v2734
    %5659 = vmatmul.mubr.f32.gmra.mrb[0].mxu0 %v2733
    %v5660 = vpop.f32.mrb[0].mxu0
    %v5661 = vadd.f32 %v5566, %v5660
    %v5662 = vpop.f32.mrb[0].mxu0
    %v5663 = vadd.f32 %v5568, %v5662
    %5664 = vmatprep.mubr.f32.mxu0 %v2740
    %5665 = vmatmul.mubr.f32.gmra.mrb[0].mxu0 %v2739
    %v5666 = vpop.f32.mrb[0].mxu0
    %v5667 = vadd.f32 %v5572, %v5666
    %v5668 = vpop.f32.mrb[0].mxu0
    %v5669 = vadd.f32 %v5574, %v5668
    %5670 = vmatprep.mubr.f32.mxu0 %v2746
    %5671 = vmatmul.mubr.f32.gmra.mrb[0].mxu0 %v2745
    %v5672 = vpop.f32.mrb[0].mxu0
    %v5673 = vadd.f32 %v5578, %v5672
    %v5674 = vpop.f32.mrb[0].mxu0
    %v5675 = vadd.f32 %v5580, %v5674
    %5676 = vmatprep.mubr.f32.mxu0 %v2752
    %5677 = vmatmul.mubr.f32.gmra.mrb[0].mxu0 %v2751
    %v5678 = vpop.f32.mrb[0].mxu0
    %v5679 = vadd.f32 %v5584, %v5678
    %v5680 = vpop.f32.mrb[0].mxu0
    %v5681 = vadd.f32 %v5586, %v5680
    %5682 = vdwg.mxu0
    %5683 = vmatprep.subr.mxu0 %v4310
    %5684 = vmatpush1.msra.mxu0 %v4309
    %5685 = vmatprep.subr.mxu0 %v4317
    %5686 = vmatpush1.msra.mxu0 %v4316
    %5687 = vmatprep.subr.mxu0 %v4324
    %5688 = vmatpush1.msra.mxu0 %v4323
    %5689 = vmatprep.subr.mxu0 %v4331
    %5690 = vmatpush1.msra.mxu0 %v4330
    %5691 = vmatprep.subr.mxu0 %v4338
    %5692 = vmatpush1.msra.mxu0 %v4337
    %5693 = vmatprep.subr.mxu0 %v4345
    %5694 = vmatpush1.msra.mxu0 %v4344
    %5695 = vmatprep.subr.mxu0 %v4352
    %5696 = vmatpush1.msra.mxu0 %v4351
    %5697 = vmatprep.subr.mxu0 %v4359
    %5698 = vmatpush1.msra.mxu0 %v4358
    %5699 = vmatprep.subr.mxu0 %v4366
    %5700 = vmatpush1.msra.mxu0 %v4365
    %5701 = vmatprep.subr.mxu0 %v4373
    %5702 = vmatpush1.msra.mxu0 %v4372
    %5703 = vmatprep.subr.mxu0 %v4380
    %5704 = vmatpush1.msra.mxu0 %v4379
    %5705 = vmatprep.subr.mxu0 %v4387
    %5706 = vmatpush1.msra.mxu0 %v4386
    %5707 = vmatprep.subr.mxu0 %v4394
    %5708 = vmatpush1.msra.mxu0 %v4393
    %5709 = vmatprep.subr.mxu0 %v4401
    %5710 = vmatpush1.msra.mxu0 %v4400
    %5711 = vmatprep.subr.mxu0 %v4408
    %5712 = vmatpush1.msra.mxu0 %v4407
    %5713 = vmatprep.subr.mxu0 %v4415
    %5714 = vmatpush1.msra.mxu0 %v4414
    %5715 = vmatprep.subr.mxu0 %v4422
    %5716 = vmatpush1.msra.mxu0 %v4421
    %5717 = vmatprep.subr.mxu0 %v4429
    %5718 = vmatpush1.msra.mxu0 %v4428
    %5719 = vmatprep.subr.mxu0 %v4436
    %5720 = vmatpush1.msra.mxu0 %v4435
    %5721 = vmatprep.subr.mxu0 %v4443
    %5722 = vmatpush1.msra.mxu0 %v4442
    %5723 = vmatprep.subr.mxu0 %v4450
    %5724 = vmatpush1.msra.mxu0 %v4449
    %5725 = vmatprep.subr.mxu0 %v4457
    %5726 = vmatpush1.msra.mxu0 %v4456
    %5727 = vmatprep.subr.mxu0 %v4464
    %5728 = vmatpush1.msra.mxu0 %v4463
    %5729 = vmatprep.subr.mxu0 %v4471
    %5730 = vmatpush1.msra.mxu0 %v4470
    %5731 = vmatprep.subr.mxu0 %v4478
    %5732 = vmatpush1.msra.mxu0 %v4477
    %5733 = vmatprep.subr.mxu0 %v4485
    %5734 = vmatpush1.msra.mxu0 %v4484
    %5735 = vmatprep.subr.mxu0 %v4492
    %5736 = vmatpush1.msra.mxu0 %v4491
    %5737 = vmatprep.subr.mxu0 %v4499
    %5738 = vmatpush1.msra.mxu0 %v4498
    %5739 = vmatprep.subr.mxu0 %v4506
    %5740 = vmatpush1.msra.mxu0 %v4505
    %5741 = vmatprep.subr.mxu0 %v4513
    %5742 = vmatpush1.msra.mxu0 %v4512
    %5743 = vmatprep.subr.mxu0 %v4520
    %5744 = vmatpush1.msra.mxu0 %v4519
    %5745 = vmatprep.subr.mxu0 %v4527
    %5746 = vmatpush1.msra.mxu0 %v4526
    %5747 = vmatprep.mubr.f32.mxu0 %v2895
    %5748 = vmatmul.mubr.f32.gmra.mrb[0].mxu0 %v2960
    %v5749 = vpop.f32.mrb[0].mxu0
    %v5750 = vadd.f32 %v5655, %v5749
    %v5751 = vpop.f32.mrb[0].mxu0
    %v5752 = vadd.f32 %v5657, %v5751
    %5753 = vmatprep.mubr.f32.mxu0 %v2901
    %5754 = vmatmul.mubr.f32.gmra.mrb[0].mxu0 %v2961
    %v5755 = vpop.f32.mrb[0].mxu0
    %v5756 = vadd.f32 %v5661, %v5755
    %v5757 = vpop.f32.mrb[0].mxu0
    %v5758 = vadd.f32 %v5663, %v5757
    %5759 = vmatprep.mubr.f32.mxu0 %v2907
    %5760 = vmatmul.mubr.f32.gmra.mrb[0].mxu0 %v2962
    %v5761 = vpop.f32.mrb[0].mxu0
    %v5762 = vadd.f32 %v5667, %v5761
    %v5763 = vpop.f32.mrb[0].mxu0
    %v5764 = vadd.f32 %v5669, %v5763
    %5765 = vmatprep.mubr.f32.mxu0 %v2913
    %5766 = vmatmul.mubr.f32.gmra.mrb[0].mxu0 %v2963
    %v5767 = vpop.f32.mrb[0].mxu0
    %v5768 = vadd.f32 %v5673, %v5767
    %v5769 = vpop.f32.mrb[0].mxu0
    %v5770 = vadd.f32 %v5675, %v5769
    %5771 = vmatprep.mubr.f32.mxu0 %v2919
    %5772 = vmatmul.mubr.f32.gmra.mrb[0].mxu0 %v2964
    %v5773 = vpop.f32.mrb[0].mxu0
    %v5774 = vadd.f32 %v5679, %v5773
    %v5775 = vpop.f32.mrb[0].mxu0
    %v5776 = vadd.f32 %v5681, %v5775
    %5777 = vdwg.mxu0
    %5778 = vmatprep.subr.mxu0 %v4534
    %5779 = vmatpush1.msra.mxu0 %v4533
    %5780 = vmatprep.subr.mxu0 %v4541
    %5781 = vmatpush1.msra.mxu0 %v4540
    %5782 = vmatprep.subr.mxu0 %v4548
    %5783 = vmatpush1.msra.mxu0 %v4547
    %5784 = vmatprep.subr.mxu0 %v4555
    %5785 = vmatpush1.msra.mxu0 %v4554
    %5786 = vmatprep.subr.mxu0 %v4562
    %5787 = vmatpush1.msra.mxu0 %v4561
    %5788 = vmatprep.subr.mxu0 %v4569
    %5789 = vmatpush1.msra.mxu0 %v4568
    %5790 = vmatprep.subr.mxu0 %v4576
    %5791 = vmatpush1.msra.mxu0 %v4575
    %5792 = vmatprep.subr.mxu0 %v4583
    %5793 = vmatpush1.msra.mxu0 %v4582
    %5794 = vmatprep.subr.mxu0 %v4590
    %5795 = vmatpush1.msra.mxu0 %v4589
    %5796 = vmatprep.subr.mxu0 %v4597
    %5797 = vmatpush1.msra.mxu0 %v4596
    %5798 = vmatprep.subr.mxu0 %v4604
    %5799 = vmatpush1.msra.mxu0 %v4603
    %5800 = vmatprep.subr.mxu0 %v4611
    %5801 = vmatpush1.msra.mxu0 %v4610
    %5802 = vmatprep.subr.mxu0 %v4618
    %5803 = vmatpush1.msra.mxu0 %v4617
    %5804 = vmatprep.subr.mxu0 %v4625
    %5805 = vmatpush1.msra.mxu0 %v4624
    %5806 = vmatprep.subr.mxu0 %v4632
    %5807 = vmatpush1.msra.mxu0 %v4631
    %5808 = vmatprep.subr.mxu0 %v4639
    %5809 = vmatpush1.msra.mxu0 %v4638
    %5810 = vmatprep.subr.mxu0 %v4646
    %5811 = vmatpush1.msra.mxu0 %v4645
    %5812 = vmatprep.subr.mxu0 %v4653
    %5813 = vmatpush1.msra.mxu0 %v4652
    %5814 = vmatprep.subr.mxu0 %v4660
    %5815 = vmatpush1.msra.mxu0 %v4659
    %5816 = vmatprep.subr.mxu0 %v4667
    %5817 = vmatpush1.msra.mxu0 %v4666
    %5818 = vmatprep.subr.mxu0 %v4674
    %5819 = vmatpush1.msra.mxu0 %v4673
    %5820 = vmatprep.subr.mxu0 %v4681
    %5821 = vmatpush1.msra.mxu0 %v4680
    %5822 = vmatprep.subr.mxu0 %v4688
    %5823 = vmatpush1.msra.mxu0 %v4687
    %5824 = vmatprep.subr.mxu0 %v4695
    %5825 = vmatpush1.msra.mxu0 %v4694
    %5826 = vmatprep.subr.mxu0 %v4702
    %5827 = vmatpush1.msra.mxu0 %v4701
    %5828 = vmatprep.subr.mxu0 %v4709
    %5829 = vmatpush1.msra.mxu0 %v4708
    %5830 = vmatprep.subr.mxu0 %v4716
    %5831 = vmatpush1.msra.mxu0 %v4715
    %5832 = vmatprep.subr.mxu0 %v4723
    %5833 = vmatpush1.msra.mxu0 %v4722
    %5834 = vmatprep.subr.mxu0 %v4730
    %5835 = vmatpush1.msra.mxu0 %v4729
    %5836 = vmatprep.subr.mxu0 %v4737
    %5837 = vmatpush1.msra.mxu0 %v4736
    %5838 = vmatprep.subr.mxu0 %v4744
    %5839 = vmatpush1.msra.mxu0 %v4743
    %5840 = vmatprep.subr.mxu0 %v4751
    %5841 = vmatpush1.msra.mxu0 %v4750
    %5842 = vmatprep.mubr.f32.mxu0 %v2897
    %5843 = vmatmul.mubr.f32.gmra.mrb[0].mxu0 %v2896
    %v5844 = vpop.f32.mrb[0].mxu0
    %v5845 = vadd.f32 %v5750, %v5844
    %v5846 = vpop.f32.mrb[0].mxu0
    %v5847 = vadd.f32 %v5752, %v5846
    %5848 = vmatprep.mubr.f32.mxu0 %v2903
    %5849 = vmatmul.mubr.f32.gmra.mrb[0].mxu0 %v2902
    %v5850 = vpop.f32.mrb[0].mxu0
    %v5851 = vadd.f32 %v5756, %v5850
    %v5852 = vpop.f32.mrb[0].mxu0
    %v5853 = vadd.f32 %v5758, %v5852
    %5854 = vmatprep.mubr.f32.mxu0 %v2909
    %5855 = vmatmul.mubr.f32.gmra.mrb[0].mxu0 %v2908
    %v5856 = vpop.f32.mrb[0].mxu0
    %v5857 = vadd.f32 %v5762, %v5856
    %v5858 = vpop.f32.mrb[0].mxu0
    %v5859 = vadd.f32 %v5764, %v5858
    %5860 = vmatprep.mubr.f32.mxu0 %v2915
    %5861 = vmatmul.mubr.f32.gmra.mrb[0].mxu0 %v2914
    %v5862 = vpop.f32.mrb[0].mxu0
    %v5863 = vadd.f32 %v5768, %v5862
    %v5864 = vpop.f32.mrb[0].mxu0
    %v5865 = vadd.f32 %v5770, %v5864
    %5866 = vmatprep.mubr.f32.mxu0 %v2921
    %5867 = vmatmul.mubr.f32.gmra.mrb[0].mxu0 %v2920
    %v5868 = vpop.f32.mrb[0].mxu0
    %v5869 = vadd.f32 %v5774, %v5868
    %v5870 = vpop.f32.mrb[0].mxu0
    %v5871 = vadd.f32 %v5776, %v5870
    %5872 = vdwg.mxu0
    %5873 = vmatprep.subr.mxu0 %v4758
    %5874 = vmatpush1.msra.mxu0 %v4757
    %5875 = vmatprep.subr.mxu0 %v4765
    %5876 = vmatpush1.msra.mxu0 %v4764
    %5877 = vmatprep.subr.mxu0 %v4772
    %5878 = vmatpush1.msra.mxu0 %v4771
    %5879 = vmatprep.subr.mxu0 %v4779
    %5880 = vmatpush1.msra.mxu0 %v4778
    %5881 = vmatprep.subr.mxu0 %v4786
    %5882 = vmatpush1.msra.mxu0 %v4785
    %5883 = vmatprep.subr.mxu0 %v4793
    %5884 = vmatpush1.msra.mxu0 %v4792
    %5885 = vmatprep.subr.mxu0 %v4800
    %5886 = vmatpush1.msra.mxu0 %v4799
    %5887 = vmatprep.subr.mxu0 %v4807
    %5888 = vmatpush1.msra.mxu0 %v4806
    %5889 = vmatprep.subr.mxu0 %v4814
    %5890 = vmatpush1.msra.mxu0 %v4813
    %5891 = vmatprep.subr.mxu0 %v4821
    %5892 = vmatpush1.msra.mxu0 %v4820
    %5893 = vmatprep.subr.mxu0 %v4828
    %5894 = vmatpush1.msra.mxu0 %v4827
    %5895 = vmatprep.subr.mxu0 %v4835
    %5896 = vmatpush1.msra.mxu0 %v4834
    %5897 = vmatprep.subr.mxu0 %v4842
    %5898 = vmatpush1.msra.mxu0 %v4841
    %5899 = vmatprep.subr.mxu0 %v4849
    %5900 = vmatpush1.msra.mxu0 %v4848
    %5901 = vmatprep.subr.mxu0 %v4856
    %5902 = vmatpush1.msra.mxu0 %v4855
    %5903 = vmatprep.subr.mxu0 %v4863
    %5904 = vmatpush1.msra.mxu0 %v4862
    %5905 = vmatprep.subr.mxu0 %v4870
    %5906 = vmatpush1.msra.mxu0 %v4869
    %5907 = vmatprep.subr.mxu0 %v4877
    %5908 = vmatpush1.msra.mxu0 %v4876
    %5909 = vmatprep.subr.mxu0 %v4884
    %5910 = vmatpush1.msra.mxu0 %v4883
    %5911 = vmatprep.subr.mxu0 %v4891
    %5912 = vmatpush1.msra.mxu0 %v4890
    %5913 = vmatprep.subr.mxu0 %v4898
    %5914 = vmatpush1.msra.mxu0 %v4897
    %5915 = vmatprep.subr.mxu0 %v4905
    %5916 = vmatpush1.msra.mxu0 %v4904
    %5917 = vmatprep.subr.mxu0 %v4912
    %5918 = vmatpush1.msra.mxu0 %v4911
    %5919 = vmatprep.subr.mxu0 %v4919
    %5920 = vmatpush1.msra.mxu0 %v4918
    %5921 = vmatprep.subr.mxu0 %v4926
    %5922 = vmatpush1.msra.mxu0 %v4925
    %5923 = vmatprep.subr.mxu0 %v4933
    %5924 = vmatpush1.msra.mxu0 %v4932
    %5925 = vmatprep.subr.mxu0 %v4940
    %5926 = vmatpush1.msra.mxu0 %v4939
    %5927 = vmatprep.subr.mxu0 %v4947
    %5928 = vmatpush1.msra.mxu0 %v4946
    %5929 = vmatprep.subr.mxu0 %v4954
    %5930 = vmatpush1.msra.mxu0 %v4953
    %5931 = vmatprep.subr.mxu0 %v4961
    %5932 = vmatpush1.msra.mxu0 %v4960
    %5933 = vmatprep.subr.mxu0 %v4968
    %5934 = vmatpush1.msra.mxu0 %v4967
    %5935 = vmatprep.subr.mxu0 %v4975
    %5936 = vmatpush1.msra.mxu0 %v4974
    %5937 = vmatprep.mubr.f32.mxu0 %v2899
    %5938 = vmatmul.mubr.f32.gmra.mrb[0].mxu0 %v2898
    %v5939 = vpop.f32.mrb[0].mxu0
    %v5940 = vadd.f32 %v5845, %v5939
    %v5941 = vpop.f32.mrb[0].mxu0
    %v5942 = vadd.f32 %v5847, %v5941
    %5943 = vmatprep.mubr.f32.mxu0 %v2905
    %5944 = vmatmul.mubr.f32.gmra.mrb[0].mxu0 %v2904
    %v5945 = vpop.f32.mrb[0].mxu0
    %v5946 = vadd.f32 %v5851, %v5945
    %v5947 = vpop.f32.mrb[0].mxu0
    %v5948 = vadd.f32 %v5853, %v5947
    %5949 = vmatprep.mubr.f32.mxu0 %v2911
    %5950 = vmatmul.mubr.f32.gmra.mrb[0].mxu0 %v2910
    %v5951 = vpop.f32.mrb[0].mxu0
    %v5952 = vadd.f32 %v5857, %v5951
    %v5953 = vpop.f32.mrb[0].mxu0
    %v5954 = vadd.f32 %v5859, %v5953
    %5955 = vmatprep.mubr.f32.mxu0 %v2917
    %5956 = vmatmul.mubr.f32.gmra.mrb[0].mxu0 %v2916
    %v5957 = vpop.f32.mrb[0].mxu0
    %v5958 = vadd.f32 %v5863, %v5957
    %v5959 = vpop.f32.mrb[0].mxu0
    %v5960 = vadd.f32 %v5865, %v5959
    %5961 = vmatprep.mubr.f32.mxu0 %v2923
    %5962 = vmatmul.mubr.f32.gmra.mrb[0].mxu0 %v2922
    %v5963 = vpop.f32.mrb[0].mxu0
    %v5964 = vadd.f32 %v5869, %v5963
    %v5965 = vpop.f32.mrb[0].mxu0
    %v5966 = vadd.f32 %v5871, %v5965
    %5967 = vdwg.mxu0
    %5968 = vmatprep.subr.mxu0 %v4982
    %5969 = vmatpush1.msra.mxu0 %v4981
    %5970 = vmatprep.subr.mxu0 %v4989
    %5971 = vmatpush1.msra.mxu0 %v4988
    %5972 = vmatprep.subr.mxu0 %v4996
    %5973 = vmatpush1.msra.mxu0 %v4995
    %5974 = vmatprep.subr.mxu0 %v5003
    %5975 = vmatpush1.msra.mxu0 %v5002
    %5976 = vmatprep.subr.mxu0 %v5010
    %5977 = vmatpush1.msra.mxu0 %v5009
    %5978 = vmatprep.subr.mxu0 %v5017
    %5979 = vmatpush1.msra.mxu0 %v5016
    %5980 = vmatprep.subr.mxu0 %v5024
    %5981 = vmatpush1.msra.mxu0 %v5023
    %5982 = vmatprep.subr.mxu0 %v5031
    %5983 = vmatpush1.msra.mxu0 %v5030
    %5984 = vmatprep.subr.mxu0 %v5038
    %5985 = vmatpush1.msra.mxu0 %v5037
    %5986 = vmatprep.subr.mxu0 %v5045
    %5987 = vmatpush1.msra.mxu0 %v5044
    %5988 = vmatprep.subr.mxu0 %v5052
    %5989 = vmatpush1.msra.mxu0 %v5051
    %5990 = vmatprep.subr.mxu0 %v5059
    %5991 = vmatpush1.msra.mxu0 %v5058
    %5992 = vmatprep.subr.mxu0 0.0
    %5993 = vmatpush1.msra.mxu0 0.0
    %5994 = vmatprep.subr.mxu0 0.0
    %5995 = vmatpush1.msra.mxu0 0.0
    %5996 = vmatprep.subr.mxu0 0.0
    %5997 = vmatpush1.msra.mxu0 0.0
    %5998 = vmatprep.subr.mxu0 0.0
    %5999 = vmatpush1.msra.mxu0 0.0
    %6000 = vmatprep.subr.mxu0 0.0
    %6001 = vmatpush1.msra.mxu0 0.0
    %6002 = vmatprep.subr.mxu0 0.0
    %6003 = vmatpush1.msra.mxu0 0.0
    %6004 = vmatprep.subr.mxu0 0.0
    %6005 = vmatpush1.msra.mxu0 0.0
    %6006 = vmatprep.subr.mxu0 0.0
    %6007 = vmatpush1.msra.mxu0 0.0
    %6008 = vmatprep.subr.mxu0 0.0
    %6009 = vmatpush1.msra.mxu0 0.0
    %6010 = vmatprep.subr.mxu0 0.0
    %6011 = vmatpush1.msra.mxu0 0.0
    %6012 = vmatprep.subr.mxu0 0.0
    %6013 = vmatpush1.msra.mxu0 0.0
    %6014 = vmatprep.subr.mxu0 0.0
    %6015 = vmatpush1.msra.mxu0 0.0
    %6016 = vmatprep.subr.mxu0 0.0
    %6017 = vmatpush1.msra.mxu0 0.0
    %6018 = vmatprep.subr.mxu0 0.0
    %6019 = vmatpush1.msra.mxu0 0.0
    %6020 = vmatprep.subr.mxu0 0.0
    %6021 = vmatpush1.msra.mxu0 0.0
    %6022 = vmatprep.subr.mxu0 0.0
    %6023 = vmatpush1.msra.mxu0 0.0
    %6024 = vmatprep.subr.mxu0 0.0
    %6025 = vmatpush1.msra.mxu0 0.0
    %6026 = vmatprep.subr.mxu0 0.0
    %6027 = vmatpush1.msra.mxu0 0.0
    %6028 = vmatprep.subr.mxu0 0.0
    %6029 = vmatpush1.msra.mxu0 0.0
    %6030 = vmatprep.subr.mxu0 0.0
    %6031 = vmatpush1.msra.mxu0 0.0
    %6032 = vmatprep.mubr.f32.mxu0 0.0
    %6033 = vmatmul.mubr.f32.gmra.mrb[0].mxu0 %v5103
    %v6034 = vpop.f32.mrb[0].mxu0
    %v6035 = vadd.f32 %v5940, %v6034
    %v6036 = vpop.f32.mrb[0].mxu0
    %v6037 = vadd.f32 %v5942, %v6036
    %6038 = vmatprep.mubr.f32.mxu0 0.0
    %6039 = vmatmul.mubr.f32.gmra.mrb[0].mxu0 %v5105
    %v6040 = vpop.f32.mrb[0].mxu0
    %v6041 = vadd.f32 %v5946, %v6040
    %v6042 = vpop.f32.mrb[0].mxu0
    %v6043 = vadd.f32 %v5948, %v6042
    %6044 = vmatprep.mubr.f32.mxu0 0.0
    %6045 = vmatmul.mubr.f32.gmra.mrb[0].mxu0 %v5107
    %v6046 = vpop.f32.mrb[0].mxu0
    %v6047 = vadd.f32 %v5952, %v6046
    %v6048 = vpop.f32.mrb[0].mxu0
    %v6049 = vadd.f32 %v5954, %v6048
    %6050 = vmatprep.mubr.f32.mxu0 0.0
    %6051 = vmatmul.mubr.f32.gmra.mrb[0].mxu0 %v5109
    %v6052 = vpop.f32.mrb[0].mxu0
    %v6053 = vadd.f32 %v5958, %v6052
    %v6054 = vpop.f32.mrb[0].mxu0
    %v6055 = vadd.f32 %v5960, %v6054
    %6056 = vmatprep.mubr.f32.mxu0 0.0
    %6057 = vmatmul.mubr.f32.gmra.mrb[0].mxu0 %v5111
    %v6058 = vpop.f32.mrb[0].mxu0
    %v6059 = vadd.f32 %v5964, %v6058
    %v6060 = vpop.f32.mrb[0].mxu0
    %v6061 = vadd.f32 %v5966, %v6060
    %6062 = vdwg.mxu0
    %6063 = vmatprep.subr.mxu0 %v2968
    %6064 = vmatpush1.msra.mxu0 %v2967
    %6065 = vmatprep.subr.mxu0 %v2975
    %6066 = vmatpush1.msra.mxu0 %v2974
    %6067 = vmatprep.subr.mxu0 %v2982
    %6068 = vmatpush1.msra.mxu0 %v2981
    %6069 = vmatprep.subr.mxu0 %v2989
    %6070 = vmatpush1.msra.mxu0 %v2988
    %6071 = vmatprep.subr.mxu0 %v2996
    %6072 = vmatpush1.msra.mxu0 %v2995
    %6073 = vmatprep.subr.mxu0 %v3003
    %6074 = vmatpush1.msra.mxu0 %v3002
    %6075 = vmatprep.subr.mxu0 %v3010
    %6076 = vmatpush1.msra.mxu0 %v3009
    %6077 = vmatprep.subr.mxu0 %v3017
    %6078 = vmatpush1.msra.mxu0 %v3016
    %6079 = vmatprep.subr.mxu0 %v3024
    %6080 = vmatpush1.msra.mxu0 %v3023
    %6081 = vmatprep.subr.mxu0 %v3031
    %6082 = vmatpush1.msra.mxu0 %v3030
    %6083 = vmatprep.subr.mxu0 %v3038
    %6084 = vmatpush1.msra.mxu0 %v3037
    %6085 = vmatprep.subr.mxu0 %v3045
    %6086 = vmatpush1.msra.mxu0 %v3044
    %6087 = vmatprep.subr.mxu0 %v3052
    %6088 = vmatpush1.msra.mxu0 %v3051
    %6089 = vmatprep.subr.mxu0 %v3059
    %6090 = vmatpush1.msra.mxu0 %v3058
    %6091 = vmatprep.subr.mxu0 %v3066
    %6092 = vmatpush1.msra.mxu0 %v3065
    %6093 = vmatprep.subr.mxu0 %v3073
    %6094 = vmatpush1.msra.mxu0 %v3072
    %6095 = vmatprep.subr.mxu0 %v3080
    %6096 = vmatpush1.msra.mxu0 %v3079
    %6097 = vmatprep.subr.mxu0 %v3087
    %6098 = vmatpush1.msra.mxu0 %v3086
    %6099 = vmatprep.subr.mxu0 %v3094
    %6100 = vmatpush1.msra.mxu0 %v3093
    %6101 = vmatprep.subr.mxu0 %v3101
    %6102 = vmatpush1.msra.mxu0 %v3100
    %6103 = vmatprep.subr.mxu0 %v3108
    %6104 = vmatpush1.msra.mxu0 %v3107
    %6105 = vmatprep.subr.mxu0 %v3115
    %6106 = vmatpush1.msra.mxu0 %v3114
    %6107 = vmatprep.subr.mxu0 %v3122
    %6108 = vmatpush1.msra.mxu0 %v3121
    %6109 = vmatprep.subr.mxu0 %v3129
    %6110 = vmatpush1.msra.mxu0 %v3128
    %6111 = vmatprep.subr.mxu0 %v3136
    %6112 = vmatpush1.msra.mxu0 %v3135
    %6113 = vmatprep.subr.mxu0 %v3143
    %6114 = vmatpush1.msra.mxu0 %v3142
    %6115 = vmatprep.subr.mxu0 %v3150
    %6116 = vmatpush1.msra.mxu0 %v3149
    %6117 = vmatprep.subr.mxu0 %v3157
    %6118 = vmatpush1.msra.mxu0 %v3156
    %6119 = vmatprep.subr.mxu0 %v3164
    %6120 = vmatpush1.msra.mxu0 %v3163
    %6121 = vmatprep.subr.mxu0 %v3171
    %6122 = vmatpush1.msra.mxu0 %v3170
    %6123 = vmatprep.subr.mxu0 %v3178
    %6124 = vmatpush1.msra.mxu0 %v3177
    %6125 = vmatprep.subr.mxu0 %v3185
    %6126 = vmatpush1.msra.mxu0 %v3184
    %6127 = vmatprep.mubr.f32.mxu0 %v2448
    %6128 = vmatmul.mubr.f32.gmra.mrb[0].mxu0 %v2447
    %v6129 = vpop.f32.mrb[0].mxu0
    %v6130 = vadd.f32 %v5078, %v6129
    %v6131 = vpop.f32.mrb[0].mxu0
    %v6132 = vadd.f32 %v5082, %v6131
    %6133 = vmatprep.mubr.f32.mxu0 %v2455
    %6134 = vmatmul.mubr.f32.gmra.mrb[0].mxu0 %v2454
    %v6135 = vpop.f32.mrb[0].mxu0
    %v6136 = vadd.f32 %v5078, %v6135
    %v6137 = vpop.f32.mrb[0].mxu0
    %v6138 = vadd.f32 %v5082, %v6137
    %6139 = vmatprep.mubr.f32.mxu0 %v2462
    %6140 = vmatmul.mubr.f32.gmra.mrb[0].mxu0 %v2461
    %v6141 = vpop.f32.mrb[0].mxu0
    %v6142 = vadd.f32 %v5078, %v6141
    %v6143 = vpop.f32.mrb[0].mxu0
    %v6144 = vadd.f32 %v5082, %v6143
    %6145 = vmatprep.mubr.f32.mxu0 %v2469
    %6146 = vmatmul.mubr.f32.gmra.mrb[0].mxu0 %v2468
    %v6147 = vpop.f32.mrb[0].mxu0
    %v6148 = vadd.f32 %v5078, %v6147
    %v6149 = vpop.f32.mrb[0].mxu0
    %v6150 = vadd.f32 %v5082, %v6149
    %6151 = vmatprep.mubr.f32.mxu0 %v2476
    %6152 = vmatmul.mubr.f32.gmra.mrb[0].mxu0 %v2475
    %v6153 = vpop.f32.mrb[0].mxu0
    %v6154 = vadd.f32 %v5078, %v6153
    %v6155 = vpop.f32.mrb[0].mxu0
    %v6156 = vadd.f32 %v5082, %v6155
    %6157 = vdwg.mxu0
    %6158 = vmatprep.subr.mxu0 %v3192
    %6159 = vmatpush1.msra.mxu0 %v3191
    %6160 = vmatprep.subr.mxu0 %v3199
    %6161 = vmatpush1.msra.mxu0 %v3198
    %6162 = vmatprep.subr.mxu0 %v3206
    %6163 = vmatpush1.msra.mxu0 %v3205
    %6164 = vmatprep.subr.mxu0 %v3213
    %6165 = vmatpush1.msra.mxu0 %v3212
    %6166 = vmatprep.subr.mxu0 %v3220
    %6167 = vmatpush1.msra.mxu0 %v3219
    %6168 = vmatprep.subr.mxu0 %v3227
    %6169 = vmatpush1.msra.mxu0 %v3226
    %6170 = vmatprep.subr.mxu0 %v3234
    %6171 = vmatpush1.msra.mxu0 %v3233
    %6172 = vmatprep.subr.mxu0 %v3241
    %6173 = vmatpush1.msra.mxu0 %v3240
    %6174 = vmatprep.subr.mxu0 %v3248
    %6175 = vmatpush1.msra.mxu0 %v3247
    %6176 = vmatprep.subr.mxu0 %v3255
    %6177 = vmatpush1.msra.mxu0 %v3254
    %6178 = vmatprep.subr.mxu0 %v3262
    %6179 = vmatpush1.msra.mxu0 %v3261
    %6180 = vmatprep.subr.mxu0 %v3269
    %6181 = vmatpush1.msra.mxu0 %v3268
    %6182 = vmatprep.subr.mxu0 %v3276
    %6183 = vmatpush1.msra.mxu0 %v3275
    %6184 = vmatprep.subr.mxu0 %v3283
    %6185 = vmatpush1.msra.mxu0 %v3282
    %6186 = vmatprep.subr.mxu0 %v3290
    %6187 = vmatpush1.msra.mxu0 %v3289
    %6188 = vmatprep.subr.mxu0 %v3297
    %6189 = vmatpush1.msra.mxu0 %v3296
    %6190 = vmatprep.subr.mxu0 %v3304
    %6191 = vmatpush1.msra.mxu0 %v3303
    %6192 = vmatprep.subr.mxu0 %v3311
    %6193 = vmatpush1.msra.mxu0 %v3310
    %6194 = vmatprep.subr.mxu0 %v3318
    %6195 = vmatpush1.msra.mxu0 %v3317
    %6196 = vmatprep.subr.mxu0 %v3325
    %6197 = vmatpush1.msra.mxu0 %v3324
    %6198 = vmatprep.subr.mxu0 %v3332
    %6199 = vmatpush1.msra.mxu0 %v3331
    %6200 = vmatprep.subr.mxu0 %v3339
    %6201 = vmatpush1.msra.mxu0 %v3338
    %6202 = vmatprep.subr.mxu0 %v3346
    %6203 = vmatpush1.msra.mxu0 %v3345
    %6204 = vmatprep.subr.mxu0 %v3353
    %6205 = vmatpush1.msra.mxu0 %v3352
    %6206 = vmatprep.subr.mxu0 %v3360
    %6207 = vmatpush1.msra.mxu0 %v3359
    %6208 = vmatprep.subr.mxu0 %v3367
    %6209 = vmatpush1.msra.mxu0 %v3366
    %6210 = vmatprep.subr.mxu0 %v3374
    %6211 = vmatpush1.msra.mxu0 %v3373
    %6212 = vmatprep.subr.mxu0 %v3381
    %6213 = vmatpush1.msra.mxu0 %v3380
    %6214 = vmatprep.subr.mxu0 %v3388
    %6215 = vmatpush1.msra.mxu0 %v3387
    %6216 = vmatprep.subr.mxu0 %v3395
    %6217 = vmatpush1.msra.mxu0 %v3394
    %6218 = vmatprep.subr.mxu0 %v3402
    %6219 = vmatpush1.msra.mxu0 %v3401
    %6220 = vmatprep.subr.mxu0 %v3409
    %6221 = vmatpush1.msra.mxu0 %v3408
    %6222 = vmatprep.mubr.f32.mxu0 %v2450
    %6223 = vmatmul.mubr.f32.gmra.mrb[0].mxu0 %v2449
    %v6224 = vpop.f32.mrb[0].mxu0
    %v6225 = vadd.f32 %v6130, %v6224
    %v6226 = vpop.f32.mrb[0].mxu0
    %v6227 = vadd.f32 %v6132, %v6226
    %6228 = vmatprep.mubr.f32.mxu0 %v2457
    %6229 = vmatmul.mubr.f32.gmra.mrb[0].mxu0 %v2456
    %v6230 = vpop.f32.mrb[0].mxu0
    %v6231 = vadd.f32 %v6136, %v6230
    %v6232 = vpop.f32.mrb[0].mxu0
    %v6233 = vadd.f32 %v6138, %v6232
    %6234 = vmatprep.mubr.f32.mxu0 %v2464
    %6235 = vmatmul.mubr.f32.gmra.mrb[0].mxu0 %v2463
    %v6236 = vpop.f32.mrb[0].mxu0
    %v6237 = vadd.f32 %v6142, %v6236
    %v6238 = vpop.f32.mrb[0].mxu0
    %v6239 = vadd.f32 %v6144, %v6238
    %6240 = vmatprep.mubr.f32.mxu0 %v2471
    %6241 = vmatmul.mubr.f32.gmra.mrb[0].mxu0 %v2470
    %v6242 = vpop.f32.mrb[0].mxu0
    %v6243 = vadd.f32 %v6148, %v6242
    %v6244 = vpop.f32.mrb[0].mxu0
    %v6245 = vadd.f32 %v6150, %v6244
    %6246 = vmatprep.mubr.f32.mxu0 %v2478
    %6247 = vmatmul.mubr.f32.gmra.mrb[0].mxu0 %v2477
    %v6248 = vpop.f32.mrb[0].mxu0
    %v6249 = vadd.f32 %v6154, %v6248
    %v6250 = vpop.f32.mrb[0].mxu0
    %v6251 = vadd.f32 %v6156, %v6250
    %6252 = vdwg.mxu0
    %6253 = vmatprep.subr.mxu0 %v3416
    %6254 = vmatpush1.msra.mxu0 %v3415
    %6255 = vmatprep.subr.mxu0 %v3423
    %6256 = vmatpush1.msra.mxu0 %v3422
    %6257 = vmatprep.subr.mxu0 %v3430
    %6258 = vmatpush1.msra.mxu0 %v3429
    %6259 = vmatprep.subr.mxu0 %v3437
    %6260 = vmatpush1.msra.mxu0 %v3436
    %6261 = vmatprep.subr.mxu0 %v3444
    %6262 = vmatpush1.msra.mxu0 %v3443
    %6263 = vmatprep.subr.mxu0 %v3451
    %6264 = vmatpush1.msra.mxu0 %v3450
    %6265 = vmatprep.subr.mxu0 %v3458
    %6266 = vmatpush1.msra.mxu0 %v3457
    %6267 = vmatprep.subr.mxu0 %v3465
    %6268 = vmatpush1.msra.mxu0 %v3464
    %6269 = vmatprep.subr.mxu0 %v3472
    %6270 = vmatpush1.msra.mxu0 %v3471
    %6271 = vmatprep.subr.mxu0 %v3479
    %6272 = vmatpush1.msra.mxu0 %v3478
    %6273 = vmatprep.subr.mxu0 %v3486
    %6274 = vmatpush1.msra.mxu0 %v3485
    %6275 = vmatprep.subr.mxu0 %v3493
    %6276 = vmatpush1.msra.mxu0 %v3492
    %6277 = vmatprep.subr.mxu0 %v3500
    %6278 = vmatpush1.msra.mxu0 %v3499
    %6279 = vmatprep.subr.mxu0 %v3507
    %6280 = vmatpush1.msra.mxu0 %v3506
    %6281 = vmatprep.subr.mxu0 %v3514
    %6282 = vmatpush1.msra.mxu0 %v3513
    %6283 = vmatprep.subr.mxu0 %v3521
    %6284 = vmatpush1.msra.mxu0 %v3520
    %6285 = vmatprep.subr.mxu0 %v3528
    %6286 = vmatpush1.msra.mxu0 %v3527
    %6287 = vmatprep.subr.mxu0 %v3535
    %6288 = vmatpush1.msra.mxu0 %v3534
    %6289 = vmatprep.subr.mxu0 %v3542
    %6290 = vmatpush1.msra.mxu0 %v3541
    %6291 = vmatprep.subr.mxu0 %v3549
    %6292 = vmatpush1.msra.mxu0 %v3548
    %6293 = vmatprep.subr.mxu0 %v3556
    %6294 = vmatpush1.msra.mxu0 %v3555
    %6295 = vmatprep.subr.mxu0 %v3563
    %6296 = vmatpush1.msra.mxu0 %v3562
    %6297 = vmatprep.subr.mxu0 %v3570
    %6298 = vmatpush1.msra.mxu0 %v3569
    %6299 = vmatprep.subr.mxu0 %v3577
    %6300 = vmatpush1.msra.mxu0 %v3576
    %6301 = vmatprep.subr.mxu0 %v3584
    %6302 = vmatpush1.msra.mxu0 %v3583
    %6303 = vmatprep.subr.mxu0 %v3591
    %6304 = vmatpush1.msra.mxu0 %v3590
    %6305 = vmatprep.subr.mxu0 %v3598
    %6306 = vmatpush1.msra.mxu0 %v3597
    %6307 = vmatprep.subr.mxu0 %v3605
    %6308 = vmatpush1.msra.mxu0 %v3604
    %6309 = vmatprep.subr.mxu0 %v3612
    %6310 = vmatpush1.msra.mxu0 %v3611
    %6311 = vmatprep.subr.mxu0 %v3619
    %6312 = vmatpush1.msra.mxu0 %v3618
    %6313 = vmatprep.subr.mxu0 %v3626
    %6314 = vmatpush1.msra.mxu0 %v3625
    %6315 = vmatprep.subr.mxu0 %v3633
    %6316 = vmatpush1.msra.mxu0 %v3632
    %6317 = vmatprep.mubr.f32.mxu0 %v2452
    %6318 = vmatmul.mubr.f32.gmra.mrb[0].mxu0 %v2451
    %v6319 = vpop.f32.mrb[0].mxu0
    %v6320 = vadd.f32 %v6225, %v6319
    %v6321 = vpop.f32.mrb[0].mxu0
    %v6322 = vadd.f32 %v6227, %v6321
    %6323 = vmatprep.mubr.f32.mxu0 %v2459
    %6324 = vmatmul.mubr.f32.gmra.mrb[0].mxu0 %v2458
    %v6325 = vpop.f32.mrb[0].mxu0
    %v6326 = vadd.f32 %v6231, %v6325
    %v6327 = vpop.f32.mrb[0].mxu0
    %v6328 = vadd.f32 %v6233, %v6327
    %6329 = vmatprep.mubr.f32.mxu0 %v2466
    %6330 = vmatmul.mubr.f32.gmra.mrb[0].mxu0 %v2465
    %v6331 = vpop.f32.mrb[0].mxu0
    %v6332 = vadd.f32 %v6237, %v6331
    %v6333 = vpop.f32.mrb[0].mxu0
    %v6334 = vadd.f32 %v6239, %v6333
    %6335 = vmatprep.mubr.f32.mxu0 %v2473
    %6336 = vmatmul.mubr.f32.gmra.mrb[0].mxu0 %v2472
    %v6337 = vpop.f32.mrb[0].mxu0
    %v6338 = vadd.f32 %v6243, %v6337
    %v6339 = vpop.f32.mrb[0].mxu0
    %v6340 = vadd.f32 %v6245, %v6339
    %6341 = vmatprep.mubr.f32.mxu0 %v2480
    %6342 = vmatmul.mubr.f32.gmra.mrb[0].mxu0 %v2479
    %v6343 = vpop.f32.mrb[0].mxu0
    %v6344 = vadd.f32 %v6249, %v6343
    %v6345 = vpop.f32.mrb[0].mxu0
    %v6346 = vadd.f32 %v6251, %v6345
    %6347 = vdwg.mxu0
    %6348 = vmatprep.subr.mxu0 %v3640
    %6349 = vmatpush1.msra.mxu0 %v3639
    %6350 = vmatprep.subr.mxu0 %v3647
    %6351 = vmatpush1.msra.mxu0 %v3646
    %6352 = vmatprep.subr.mxu0 %v3654
    %6353 = vmatpush1.msra.mxu0 %v3653
    %6354 = vmatprep.subr.mxu0 %v3661
    %6355 = vmatpush1.msra.mxu0 %v3660
    %6356 = vmatprep.subr.mxu0 %v3668
    %6357 = vmatpush1.msra.mxu0 %v3667
    %6358 = vmatprep.subr.mxu0 %v3675
    %6359 = vmatpush1.msra.mxu0 %v3674
    %6360 = vmatprep.subr.mxu0 %v3682
    %6361 = vmatpush1.msra.mxu0 %v3681
    %6362 = vmatprep.subr.mxu0 %v3689
    %6363 = vmatpush1.msra.mxu0 %v3688
    %6364 = vmatprep.subr.mxu0 %v3696
    %6365 = vmatpush1.msra.mxu0 %v3695
    %6366 = vmatprep.subr.mxu0 %v3703
    %6367 = vmatpush1.msra.mxu0 %v3702
    %6368 = vmatprep.subr.mxu0 %v3710
    %6369 = vmatpush1.msra.mxu0 %v3709
    %6370 = vmatprep.subr.mxu0 %v3717
    %6371 = vmatpush1.msra.mxu0 %v3716
    %6372 = vmatprep.subr.mxu0 %v3724
    %6373 = vmatpush1.msra.mxu0 %v3723
    %6374 = vmatprep.subr.mxu0 %v3731
    %6375 = vmatpush1.msra.mxu0 %v3730
    %6376 = vmatprep.subr.mxu0 %v3738
    %6377 = vmatpush1.msra.mxu0 %v3737
    %6378 = vmatprep.subr.mxu0 %v3745
    %6379 = vmatpush1.msra.mxu0 %v3744
    %6380 = vmatprep.subr.mxu0 %v3752
    %6381 = vmatpush1.msra.mxu0 %v3751
    %6382 = vmatprep.subr.mxu0 %v3759
    %6383 = vmatpush1.msra.mxu0 %v3758
    %6384 = vmatprep.subr.mxu0 %v3766
    %6385 = vmatpush1.msra.mxu0 %v3765
    %6386 = vmatprep.subr.mxu0 %v3773
    %6387 = vmatpush1.msra.mxu0 %v3772
    %6388 = vmatprep.subr.mxu0 %v3780
    %6389 = vmatpush1.msra.mxu0 %v3779
    %6390 = vmatprep.subr.mxu0 %v3787
    %6391 = vmatpush1.msra.mxu0 %v3786
    %6392 = vmatprep.subr.mxu0 %v3794
    %6393 = vmatpush1.msra.mxu0 %v3793
    %6394 = vmatprep.subr.mxu0 %v3801
    %6395 = vmatpush1.msra.mxu0 %v3800
    %6396 = vmatprep.subr.mxu0 %v3808
    %6397 = vmatpush1.msra.mxu0 %v3807
    %6398 = vmatprep.subr.mxu0 %v3815
    %6399 = vmatpush1.msra.mxu0 %v3814
    %6400 = vmatprep.subr.mxu0 %v3822
    %6401 = vmatpush1.msra.mxu0 %v3821
    %6402 = vmatprep.subr.mxu0 %v3829
    %6403 = vmatpush1.msra.mxu0 %v3828
    %6404 = vmatprep.subr.mxu0 %v3836
    %6405 = vmatpush1.msra.mxu0 %v3835
    %6406 = vmatprep.subr.mxu0 %v3843
    %6407 = vmatpush1.msra.mxu0 %v3842
    %6408 = vmatprep.subr.mxu0 %v3850
    %6409 = vmatpush1.msra.mxu0 %v3849
    %6410 = vmatprep.subr.mxu0 %v3857
    %6411 = vmatpush1.msra.mxu0 %v3856
    %6412 = vmatprep.mubr.f32.mxu0 %v2724
    %6413 = vmatmul.mubr.f32.gmra.mrb[0].mxu0 %v2955
    %v6414 = vpop.f32.mrb[0].mxu0
    %v6415 = vadd.f32 %v6320, %v6414
    %v6416 = vpop.f32.mrb[0].mxu0
    %v6417 = vadd.f32 %v6322, %v6416
    %6418 = vmatprep.mubr.f32.mxu0 %v2730
    %6419 = vmatmul.mubr.f32.gmra.mrb[0].mxu0 %v2956
    %v6420 = vpop.f32.mrb[0].mxu0
    %v6421 = vadd.f32 %v6326, %v6420
    %v6422 = vpop.f32.mrb[0].mxu0
    %v6423 = vadd.f32 %v6328, %v6422
    %6424 = vmatprep.mubr.f32.mxu0 %v2736
    %6425 = vmatmul.mubr.f32.gmra.mrb[0].mxu0 %v2957
    %v6426 = vpop.f32.mrb[0].mxu0
    %v6427 = vadd.f32 %v6332, %v6426
    %v6428 = vpop.f32.mrb[0].mxu0
    %v6429 = vadd.f32 %v6334, %v6428
    %6430 = vmatprep.mubr.f32.mxu0 %v2742
    %6431 = vmatmul.mubr.f32.gmra.mrb[0].mxu0 %v2958
    %v6432 = vpop.f32.mrb[0].mxu0
    %v6433 = vadd.f32 %v6338, %v6432
    %v6434 = vpop.f32.mrb[0].mxu0
    %v6435 = vadd.f32 %v6340, %v6434
    %6436 = vmatprep.mubr.f32.mxu0 %v2748
    %6437 = vmatmul.mubr.f32.gmra.mrb[0].mxu0 %v2959
    %v6438 = vpop.f32.mrb[0].mxu0
    %v6439 = vadd.f32 %v6344, %v6438
    %v6440 = vpop.f32.mrb[0].mxu0
    %v6441 = vadd.f32 %v6346, %v6440
    %6442 = vdwg.mxu0
    %6443 = vmatprep.subr.mxu0 %v3864
    %6444 = vmatpush1.msra.mxu0 %v3863
    %6445 = vmatprep.subr.mxu0 %v3871
    %6446 = vmatpush1.msra.mxu0 %v3870
    %6447 = vmatprep.subr.mxu0 %v3878
    %6448 = vmatpush1.msra.mxu0 %v3877
    %6449 = vmatprep.subr.mxu0 %v3885
    %6450 = vmatpush1.msra.mxu0 %v3884
    %6451 = vmatprep.subr.mxu0 %v3892
    %6452 = vmatpush1.msra.mxu0 %v3891
    %6453 = vmatprep.subr.mxu0 %v3899
    %6454 = vmatpush1.msra.mxu0 %v3898
    %6455 = vmatprep.subr.mxu0 %v3906
    %6456 = vmatpush1.msra.mxu0 %v3905
    %6457 = vmatprep.subr.mxu0 %v3913
    %6458 = vmatpush1.msra.mxu0 %v3912
    %6459 = vmatprep.subr.mxu0 %v3920
    %6460 = vmatpush1.msra.mxu0 %v3919
    %6461 = vmatprep.subr.mxu0 %v3927
    %6462 = vmatpush1.msra.mxu0 %v3926
    %6463 = vmatprep.subr.mxu0 %v3934
    %6464 = vmatpush1.msra.mxu0 %v3933
    %6465 = vmatprep.subr.mxu0 %v3941
    %6466 = vmatpush1.msra.mxu0 %v3940
    %6467 = vmatprep.subr.mxu0 %v3948
    %6468 = vmatpush1.msra.mxu0 %v3947
    %6469 = vmatprep.subr.mxu0 %v3955
    %6470 = vmatpush1.msra.mxu0 %v3954
    %6471 = vmatprep.subr.mxu0 %v3962
    %6472 = vmatpush1.msra.mxu0 %v3961
    %6473 = vmatprep.subr.mxu0 %v3969
    %6474 = vmatpush1.msra.mxu0 %v3968
    %6475 = vmatprep.subr.mxu0 %v3976
    %6476 = vmatpush1.msra.mxu0 %v3975
    %6477 = vmatprep.subr.mxu0 %v3983
    %6478 = vmatpush1.msra.mxu0 %v3982
    %6479 = vmatprep.subr.mxu0 %v3990
    %6480 = vmatpush1.msra.mxu0 %v3989
    %6481 = vmatprep.subr.mxu0 %v3997
    %6482 = vmatpush1.msra.mxu0 %v3996
    %6483 = vmatprep.subr.mxu0 %v4004
    %6484 = vmatpush1.msra.mxu0 %v4003
    %6485 = vmatprep.subr.mxu0 %v4011
    %6486 = vmatpush1.msra.mxu0 %v4010
    %6487 = vmatprep.subr.mxu0 %v4018
    %6488 = vmatpush1.msra.mxu0 %v4017
    %6489 = vmatprep.subr.mxu0 %v4025
    %6490 = vmatpush1.msra.mxu0 %v4024
    %6491 = vmatprep.subr.mxu0 %v4032
    %6492 = vmatpush1.msra.mxu0 %v4031
    %6493 = vmatprep.subr.mxu0 %v4039
    %6494 = vmatpush1.msra.mxu0 %v4038
    %6495 = vmatprep.subr.mxu0 %v4046
    %6496 = vmatpush1.msra.mxu0 %v4045
    %6497 = vmatprep.subr.mxu0 %v4053
    %6498 = vmatpush1.msra.mxu0 %v4052
    %6499 = vmatprep.subr.mxu0 %v4060
    %6500 = vmatpush1.msra.mxu0 %v4059
    %6501 = vmatprep.subr.mxu0 %v4067
    %6502 = vmatpush1.msra.mxu0 %v4066
    %6503 = vmatprep.subr.mxu0 %v4074
    %6504 = vmatpush1.msra.mxu0 %v4073
    %6505 = vmatprep.subr.mxu0 %v4081
    %6506 = vmatpush1.msra.mxu0 %v4080
    %6507 = vmatprep.mubr.f32.mxu0 %v2726
    %6508 = vmatmul.mubr.f32.gmra.mrb[0].mxu0 %v2725
    %v6509 = vpop.f32.mrb[0].mxu0
    %v6510 = vadd.f32 %v6415, %v6509
    %v6511 = vpop.f32.mrb[0].mxu0
    %v6512 = vadd.f32 %v6417, %v6511
    %6513 = vmatprep.mubr.f32.mxu0 %v2732
    %6514 = vmatmul.mubr.f32.gmra.mrb[0].mxu0 %v2731
    %v6515 = vpop.f32.mrb[0].mxu0
    %v6516 = vadd.f32 %v6421, %v6515
    %v6517 = vpop.f32.mrb[0].mxu0
    %v6518 = vadd.f32 %v6423, %v6517
    %6519 = vmatprep.mubr.f32.mxu0 %v2738
    %6520 = vmatmul.mubr.f32.gmra.mrb[0].mxu0 %v2737
    %v6521 = vpop.f32.mrb[0].mxu0
    %v6522 = vadd.f32 %v6427, %v6521
    %v6523 = vpop.f32.mrb[0].mxu0
    %v6524 = vadd.f32 %v6429, %v6523
    %6525 = vmatprep.mubr.f32.mxu0 %v2744
    %6526 = vmatmul.mubr.f32.gmra.mrb[0].mxu0 %v2743
    %v6527 = vpop.f32.mrb[0].mxu0
    %v6528 = vadd.f32 %v6433, %v6527
    %v6529 = vpop.f32.mrb[0].mxu0
    %v6530 = vadd.f32 %v6435, %v6529
    %6531 = vmatprep.mubr.f32.mxu0 %v2750
    %6532 = vmatmul.mubr.f32.gmra.mrb[0].mxu0 %v2749
    %v6533 = vpop.f32.mrb[0].mxu0
    %v6534 = vadd.f32 %v6439, %v6533
    %v6535 = vpop.f32.mrb[0].mxu0
    %v6536 = vadd.f32 %v6441, %v6535
    %6537 = vdwg.mxu0
    %6538 = vmatprep.subr.mxu0 %v4088
    %6539 = vmatpush1.msra.mxu0 %v4087
    %6540 = vmatprep.subr.mxu0 %v4095
    %6541 = vmatpush1.msra.mxu0 %v4094
    %6542 = vmatprep.subr.mxu0 %v4102
    %6543 = vmatpush1.msra.mxu0 %v4101
    %6544 = vmatprep.subr.mxu0 %v4109
    %6545 = vmatpush1.msra.mxu0 %v4108
    %6546 = vmatprep.subr.mxu0 %v4116
    %6547 = vmatpush1.msra.mxu0 %v4115
    %6548 = vmatprep.subr.mxu0 %v4123
    %6549 = vmatpush1.msra.mxu0 %v4122
    %6550 = vmatprep.subr.mxu0 %v4130
    %6551 = vmatpush1.msra.mxu0 %v4129
    %6552 = vmatprep.subr.mxu0 %v4137
    %6553 = vmatpush1.msra.mxu0 %v4136
    %6554 = vmatprep.subr.mxu0 %v4144
    %6555 = vmatpush1.msra.mxu0 %v4143
    %6556 = vmatprep.subr.mxu0 %v4151
    %6557 = vmatpush1.msra.mxu0 %v4150
    %6558 = vmatprep.subr.mxu0 %v4158
    %6559 = vmatpush1.msra.mxu0 %v4157
    %6560 = vmatprep.subr.mxu0 %v4165
    %6561 = vmatpush1.msra.mxu0 %v4164
    %6562 = vmatprep.subr.mxu0 %v4172
    %6563 = vmatpush1.msra.mxu0 %v4171
    %6564 = vmatprep.subr.mxu0 %v4179
    %6565 = vmatpush1.msra.mxu0 %v4178
    %6566 = vmatprep.subr.mxu0 %v4186
    %6567 = vmatpush1.msra.mxu0 %v4185
    %6568 = vmatprep.subr.mxu0 %v4193
    %6569 = vmatpush1.msra.mxu0 %v4192
    %6570 = vmatprep.subr.mxu0 %v4200
    %6571 = vmatpush1.msra.mxu0 %v4199
    %6572 = vmatprep.subr.mxu0 %v4207
    %6573 = vmatpush1.msra.mxu0 %v4206
    %6574 = vmatprep.subr.mxu0 %v4214
    %6575 = vmatpush1.msra.mxu0 %v4213
    %6576 = vmatprep.subr.mxu0 %v4221
    %6577 = vmatpush1.msra.mxu0 %v4220
    %6578 = vmatprep.subr.mxu0 %v4228
    %6579 = vmatpush1.msra.mxu0 %v4227
    %6580 = vmatprep.subr.mxu0 %v4235
    %6581 = vmatpush1.msra.mxu0 %v4234
    %6582 = vmatprep.subr.mxu0 %v4242
    %6583 = vmatpush1.msra.mxu0 %v4241
    %6584 = vmatprep.subr.mxu0 %v4249
    %6585 = vmatpush1.msra.mxu0 %v4248
    %6586 = vmatprep.subr.mxu0 %v4256
    %6587 = vmatpush1.msra.mxu0 %v4255
    %6588 = vmatprep.subr.mxu0 %v4263
    %6589 = vmatpush1.msra.mxu0 %v4262
    %6590 = vmatprep.subr.mxu0 %v4270
    %6591 = vmatpush1.msra.mxu0 %v4269
    %6592 = vmatprep.subr.mxu0 %v4277
    %6593 = vmatpush1.msra.mxu0 %v4276
    %6594 = vmatprep.subr.mxu0 %v4284
    %6595 = vmatpush1.msra.mxu0 %v4283
    %6596 = vmatprep.subr.mxu0 %v4291
    %6597 = vmatpush1.msra.mxu0 %v4290
    %6598 = vmatprep.subr.mxu0 %v4298
    %6599 = vmatpush1.msra.mxu0 %v4297
    %6600 = vmatprep.subr.mxu0 %v4305
    %6601 = vmatpush1.msra.mxu0 %v4304
    %6602 = vmatprep.mubr.f32.mxu0 %v2728
    %6603 = vmatmul.mubr.f32.gmra.mrb[0].mxu0 %v2727
    %v6604 = vpop.f32.mrb[0].mxu0
    %v6605 = vadd.f32 %v6510, %v6604
    %v6606 = vpop.f32.mrb[0].mxu0
    %v6607 = vadd.f32 %v6512, %v6606
    %6608 = vmatprep.mubr.f32.mxu0 %v2734
    %6609 = vmatmul.mubr.f32.gmra.mrb[0].mxu0 %v2733
    %v6610 = vpop.f32.mrb[0].mxu0
    %v6611 = vadd.f32 %v6516, %v6610
    %v6612 = vpop.f32.mrb[0].mxu0
    %v6613 = vadd.f32 %v6518, %v6612
    %6614 = vmatprep.mubr.f32.mxu0 %v2740
    %6615 = vmatmul.mubr.f32.gmra.mrb[0].mxu0 %v2739
    %v6616 = vpop.f32.mrb[0].mxu0
    %v6617 = vadd.f32 %v6522, %v6616
    %v6618 = vpop.f32.mrb[0].mxu0
    %v6619 = vadd.f32 %v6524, %v6618
    %6620 = vmatprep.mubr.f32.mxu0 %v2746
    %6621 = vmatmul.mubr.f32.gmra.mrb[0].mxu0 %v2745
    %v6622 = vpop.f32.mrb[0].mxu0
    %v6623 = vadd.f32 %v6528, %v6622
    %v6624 = vpop.f32.mrb[0].mxu0
    %v6625 = vadd.f32 %v6530, %v6624
    %6626 = vmatprep.mubr.f32.mxu0 %v2752
    %6627 = vmatmul.mubr.f32.gmra.mrb[0].mxu0 %v2751
    %v6628 = vpop.f32.mrb[0].mxu0
    %v6629 = vadd.f32 %v6534, %v6628
    %v6630 = vpop.f32.mrb[0].mxu0
    %v6631 = vadd.f32 %v6536, %v6630
    %6632 = vdwg.mxu0
    %6633 = vmatprep.subr.mxu0 %v4312
    %6634 = vmatpush1.msra.mxu0 %v4311
    %6635 = vmatprep.subr.mxu0 %v4319
    %6636 = vmatpush1.msra.mxu0 %v4318
    %6637 = vmatprep.subr.mxu0 %v4326
    %6638 = vmatpush1.msra.mxu0 %v4325
    %6639 = vmatprep.subr.mxu0 %v4333
    %6640 = vmatpush1.msra.mxu0 %v4332
    %6641 = vmatprep.subr.mxu0 %v4340
    %6642 = vmatpush1.msra.mxu0 %v4339
    %6643 = vmatprep.subr.mxu0 %v4347
    %6644 = vmatpush1.msra.mxu0 %v4346
    %6645 = vmatprep.subr.mxu0 %v4354
    %6646 = vmatpush1.msra.mxu0 %v4353
    %6647 = vmatprep.subr.mxu0 %v4361
    %6648 = vmatpush1.msra.mxu0 %v4360
    %6649 = vmatprep.subr.mxu0 %v4368
    %6650 = vmatpush1.msra.mxu0 %v4367
    %6651 = vmatprep.subr.mxu0 %v4375
    %6652 = vmatpush1.msra.mxu0 %v4374
    %6653 = vmatprep.subr.mxu0 %v4382
    %6654 = vmatpush1.msra.mxu0 %v4381
    %6655 = vmatprep.subr.mxu0 %v4389
    %6656 = vmatpush1.msra.mxu0 %v4388
    %6657 = vmatprep.subr.mxu0 %v4396
    %6658 = vmatpush1.msra.mxu0 %v4395
    %6659 = vmatprep.subr.mxu0 %v4403
    %6660 = vmatpush1.msra.mxu0 %v4402
    %6661 = vmatprep.subr.mxu0 %v4410
    %6662 = vmatpush1.msra.mxu0 %v4409
    %6663 = vmatprep.subr.mxu0 %v4417
    %6664 = vmatpush1.msra.mxu0 %v4416
    %6665 = vmatprep.subr.mxu0 %v4424
    %6666 = vmatpush1.msra.mxu0 %v4423
    %6667 = vmatprep.subr.mxu0 %v4431
    %6668 = vmatpush1.msra.mxu0 %v4430
    %6669 = vmatprep.subr.mxu0 %v4438
    %6670 = vmatpush1.msra.mxu0 %v4437
    %6671 = vmatprep.subr.mxu0 %v4445
    %6672 = vmatpush1.msra.mxu0 %v4444
    %6673 = vmatprep.subr.mxu0 %v4452
    %6674 = vmatpush1.msra.mxu0 %v4451
    %6675 = vmatprep.subr.mxu0 %v4459
    %6676 = vmatpush1.msra.mxu0 %v4458
    %6677 = vmatprep.subr.mxu0 %v4466
    %6678 = vmatpush1.msra.mxu0 %v4465
    %6679 = vmatprep.subr.mxu0 %v4473
    %6680 = vmatpush1.msra.mxu0 %v4472
    %6681 = vmatprep.subr.mxu0 %v4480
    %6682 = vmatpush1.msra.mxu0 %v4479
    %6683 = vmatprep.subr.mxu0 %v4487
    %6684 = vmatpush1.msra.mxu0 %v4486
    %6685 = vmatprep.subr.mxu0 %v4494
    %6686 = vmatpush1.msra.mxu0 %v4493
    %6687 = vmatprep.subr.mxu0 %v4501
    %6688 = vmatpush1.msra.mxu0 %v4500
    %6689 = vmatprep.subr.mxu0 %v4508
    %6690 = vmatpush1.msra.mxu0 %v4507
    %6691 = vmatprep.subr.mxu0 %v4515
    %6692 = vmatpush1.msra.mxu0 %v4514
    %6693 = vmatprep.subr.mxu0 %v4522
    %6694 = vmatpush1.msra.mxu0 %v4521
    %6695 = vmatprep.subr.mxu0 %v4529
    %6696 = vmatpush1.msra.mxu0 %v4528
    %6697 = vmatprep.mubr.f32.mxu0 %v2895
    %6698 = vmatmul.mubr.f32.gmra.mrb[0].mxu0 %v2960
    %v6699 = vpop.f32.mrb[0].mxu0
    %v6700 = vadd.f32 %v6605, %v6699
    %v6701 = vpop.f32.mrb[0].mxu0
    %v6702 = vadd.f32 %v6607, %v6701
    %6703 = vmatprep.mubr.f32.mxu0 %v2901
    %6704 = vmatmul.mubr.f32.gmra.mrb[0].mxu0 %v2961
    %v6705 = vpop.f32.mrb[0].mxu0
    %v6706 = vadd.f32 %v6611, %v6705
    %v6707 = vpop.f32.mrb[0].mxu0
    %v6708 = vadd.f32 %v6613, %v6707
    %6709 = vmatprep.mubr.f32.mxu0 %v2907
    %6710 = vmatmul.mubr.f32.gmra.mrb[0].mxu0 %v2962
    %v6711 = vpop.f32.mrb[0].mxu0
    %v6712 = vadd.f32 %v6617, %v6711
    %v6713 = vpop.f32.mrb[0].mxu0
    %v6714 = vadd.f32 %v6619, %v6713
    %6715 = vmatprep.mubr.f32.mxu0 %v2913
    %6716 = vmatmul.mubr.f32.gmra.mrb[0].mxu0 %v2963
    %v6717 = vpop.f32.mrb[0].mxu0
    %v6718 = vadd.f32 %v6623, %v6717
    %v6719 = vpop.f32.mrb[0].mxu0
    %v6720 = vadd.f32 %v6625, %v6719
    %6721 = vmatprep.mubr.f32.mxu0 %v2919
    %6722 = vmatmul.mubr.f32.gmra.mrb[0].mxu0 %v2964
    %v6723 = vpop.f32.mrb[0].mxu0
    %v6724 = vadd.f32 %v6629, %v6723
    %v6725 = vpop.f32.mrb[0].mxu0
    %v6726 = vadd.f32 %v6631, %v6725
    %6727 = vdwg.mxu0
    %6728 = vmatprep.subr.mxu0 %v4536
    %6729 = vmatpush1.msra.mxu0 %v4535
    %6730 = vmatprep.subr.mxu0 %v4543
    %6731 = vmatpush1.msra.mxu0 %v4542
    %6732 = vmatprep.subr.mxu0 %v4550
    %6733 = vmatpush1.msra.mxu0 %v4549
    %6734 = vmatprep.subr.mxu0 %v4557
    %6735 = vmatpush1.msra.mxu0 %v4556
    %6736 = vmatprep.subr.mxu0 %v4564
    %6737 = vmatpush1.msra.mxu0 %v4563
    %6738 = vmatprep.subr.mxu0 %v4571
    %6739 = vmatpush1.msra.mxu0 %v4570
    %6740 = vmatprep.subr.mxu0 %v4578
    %6741 = vmatpush1.msra.mxu0 %v4577
    %6742 = vmatprep.subr.mxu0 %v4585
    %6743 = vmatpush1.msra.mxu0 %v4584
    %6744 = vmatprep.subr.mxu0 %v4592
    %6745 = vmatpush1.msra.mxu0 %v4591
    %6746 = vmatprep.subr.mxu0 %v4599
    %6747 = vmatpush1.msra.mxu0 %v4598
    %6748 = vmatprep.subr.mxu0 %v4606
    %6749 = vmatpush1.msra.mxu0 %v4605
    %6750 = vmatprep.subr.mxu0 %v4613
    %6751 = vmatpush1.msra.mxu0 %v4612
    %6752 = vmatprep.subr.mxu0 %v4620
    %6753 = vmatpush1.msra.mxu0 %v4619
    %6754 = vmatprep.subr.mxu0 %v4627
    %6755 = vmatpush1.msra.mxu0 %v4626
    %6756 = vmatprep.subr.mxu0 %v4634
    %6757 = vmatpush1.msra.mxu0 %v4633
    %6758 = vmatprep.subr.mxu0 %v4641
    %6759 = vmatpush1.msra.mxu0 %v4640
    %6760 = vmatprep.subr.mxu0 %v4648
    %6761 = vmatpush1.msra.mxu0 %v4647
    %6762 = vmatprep.subr.mxu0 %v4655
    %6763 = vmatpush1.msra.mxu0 %v4654
    %6764 = vmatprep.subr.mxu0 %v4662
    %6765 = vmatpush1.msra.mxu0 %v4661
    %6766 = vmatprep.subr.mxu0 %v4669
    %6767 = vmatpush1.msra.mxu0 %v4668
    %6768 = vmatprep.subr.mxu0 %v4676
    %6769 = vmatpush1.msra.mxu0 %v4675
    %6770 = vmatprep.subr.mxu0 %v4683
    %6771 = vmatpush1.msra.mxu0 %v4682
    %6772 = vmatprep.subr.mxu0 %v4690
    %6773 = vmatpush1.msra.mxu0 %v4689
    %6774 = vmatprep.subr.mxu0 %v4697
    %6775 = vmatpush1.msra.mxu0 %v4696
    %6776 = vmatprep.subr.mxu0 %v4704
    %6777 = vmatpush1.msra.mxu0 %v4703
    %6778 = vmatprep.subr.mxu0 %v4711
    %6779 = vmatpush1.msra.mxu0 %v4710
    %6780 = vmatprep.subr.mxu0 %v4718
    %6781 = vmatpush1.msra.mxu0 %v4717
    %6782 = vmatprep.subr.mxu0 %v4725
    %6783 = vmatpush1.msra.mxu0 %v4724
    %6784 = vmatprep.subr.mxu0 %v4732
    %6785 = vmatpush1.msra.mxu0 %v4731
    %6786 = vmatprep.subr.mxu0 %v4739
    %6787 = vmatpush1.msra.mxu0 %v4738
    %6788 = vmatprep.subr.mxu0 %v4746
    %6789 = vmatpush1.msra.mxu0 %v4745
    %6790 = vmatprep.subr.mxu0 %v4753
    %6791 = vmatpush1.msra.mxu0 %v4752
    %6792 = vmatprep.mubr.f32.mxu0 %v2897
    %6793 = vmatmul.mubr.f32.gmra.mrb[0].mxu0 %v2896
    %v6794 = vpop.f32.mrb[0].mxu0
    %v6795 = vadd.f32 %v6700, %v6794
    %v6796 = vpop.f32.mrb[0].mxu0
    %v6797 = vadd.f32 %v6702, %v6796
    %6798 = vmatprep.mubr.f32.mxu0 %v2903
    %6799 = vmatmul.mubr.f32.gmra.mrb[0].mxu0 %v2902
    %v6800 = vpop.f32.mrb[0].mxu0
    %v6801 = vadd.f32 %v6706, %v6800
    %v6802 = vpop.f32.mrb[0].mxu0
    %v6803 = vadd.f32 %v6708, %v6802
    %6804 = vmatprep.mubr.f32.mxu0 %v2909
    %6805 = vmatmul.mubr.f32.gmra.mrb[0].mxu0 %v2908
    %v6806 = vpop.f32.mrb[0].mxu0
    %v6807 = vadd.f32 %v6712, %v6806
    %v6808 = vpop.f32.mrb[0].mxu0
    %v6809 = vadd.f32 %v6714, %v6808
    %6810 = vmatprep.mubr.f32.mxu0 %v2915
    %6811 = vmatmul.mubr.f32.gmra.mrb[0].mxu0 %v2914
    %v6812 = vpop.f32.mrb[0].mxu0
    %v6813 = vadd.f32 %v6718, %v6812
    %v6814 = vpop.f32.mrb[0].mxu0
    %v6815 = vadd.f32 %v6720, %v6814
    %6816 = vmatprep.mubr.f32.mxu0 %v2921
    %6817 = vmatmul.mubr.f32.gmra.mrb[0].mxu0 %v2920
    %v6818 = vpop.f32.mrb[0].mxu0
    %v6819 = vadd.f32 %v6724, %v6818
    %v6820 = vpop.f32.mrb[0].mxu0
    %v6821 = vadd.f32 %v6726, %v6820
    %6822 = vdwg.mxu0
    %6823 = vmatprep.subr.mxu0 %v4760
    %6824 = vmatpush1.msra.mxu0 %v4759
    %6825 = vmatprep.subr.mxu0 %v4767
    %6826 = vmatpush1.msra.mxu0 %v4766
    %6827 = vmatprep.subr.mxu0 %v4774
    %6828 = vmatpush1.msra.mxu0 %v4773
    %6829 = vmatprep.subr.mxu0 %v4781
    %6830 = vmatpush1.msra.mxu0 %v4780
    %6831 = vmatprep.subr.mxu0 %v4788
    %6832 = vmatpush1.msra.mxu0 %v4787
    %6833 = vmatprep.subr.mxu0 %v4795
    %6834 = vmatpush1.msra.mxu0 %v4794
    %6835 = vmatprep.subr.mxu0 %v4802
    %6836 = vmatpush1.msra.mxu0 %v4801
    %6837 = vmatprep.subr.mxu0 %v4809
    %6838 = vmatpush1.msra.mxu0 %v4808
    %6839 = vmatprep.subr.mxu0 %v4816
    %6840 = vmatpush1.msra.mxu0 %v4815
    %6841 = vmatprep.subr.mxu0 %v4823
    %6842 = vmatpush1.msra.mxu0 %v4822
    %6843 = vmatprep.subr.mxu0 %v4830
    %6844 = vmatpush1.msra.mxu0 %v4829
    %6845 = vmatprep.subr.mxu0 %v4837
    %6846 = vmatpush1.msra.mxu0 %v4836
    %6847 = vmatprep.subr.mxu0 %v4844
    %6848 = vmatpush1.msra.mxu0 %v4843
    %6849 = vmatprep.subr.mxu0 %v4851
    %6850 = vmatpush1.msra.mxu0 %v4850
    %6851 = vmatprep.subr.mxu0 %v4858
    %6852 = vmatpush1.msra.mxu0 %v4857
    %6853 = vmatprep.subr.mxu0 %v4865
    %6854 = vmatpush1.msra.mxu0 %v4864
    %6855 = vmatprep.subr.mxu0 %v4872
    %6856 = vmatpush1.msra.mxu0 %v4871
    %6857 = vmatprep.subr.mxu0 %v4879
    %6858 = vmatpush1.msra.mxu0 %v4878
    %6859 = vmatprep.subr.mxu0 %v4886
    %6860 = vmatpush1.msra.mxu0 %v4885
    %6861 = vmatprep.subr.mxu0 %v4893
    %6862 = vmatpush1.msra.mxu0 %v4892
    %6863 = vmatprep.subr.mxu0 %v4900
    %6864 = vmatpush1.msra.mxu0 %v4899
    %6865 = vmatprep.subr.mxu0 %v4907
    %6866 = vmatpush1.msra.mxu0 %v4906
    %6867 = vmatprep.subr.mxu0 %v4914
    %6868 = vmatpush1.msra.mxu0 %v4913
    %6869 = vmatprep.subr.mxu0 %v4921
    %6870 = vmatpush1.msra.mxu0 %v4920
    %6871 = vmatprep.subr.mxu0 %v4928
    %6872 = vmatpush1.msra.mxu0 %v4927
    %6873 = vmatprep.subr.mxu0 %v4935
    %6874 = vmatpush1.msra.mxu0 %v4934
    %6875 = vmatprep.subr.mxu0 %v4942
    %6876 = vmatpush1.msra.mxu0 %v4941
    %6877 = vmatprep.subr.mxu0 %v4949
    %6878 = vmatpush1.msra.mxu0 %v4948
    %6879 = vmatprep.subr.mxu0 %v4956
    %6880 = vmatpush1.msra.mxu0 %v4955
    %6881 = vmatprep.subr.mxu0 %v4963
    %6882 = vmatpush1.msra.mxu0 %v4962
    %6883 = vmatprep.subr.mxu0 %v4970
    %6884 = vmatpush1.msra.mxu0 %v4969
    %6885 = vmatprep.subr.mxu0 %v4977
    %6886 = vmatpush1.msra.mxu0 %v4976
    %6887 = vmatprep.mubr.f32.mxu0 %v2899
    %6888 = vmatmul.mubr.f32.gmra.mrb[0].mxu0 %v2898
    %v6889 = vpop.f32.mrb[0].mxu0
    %v6890 = vadd.f32 %v6795, %v6889
    %v6891 = vpop.f32.mrb[0].mxu0
    %v6892 = vadd.f32 %v6797, %v6891
    %6893 = vmatprep.mubr.f32.mxu0 %v2905
    %6894 = vmatmul.mubr.f32.gmra.mrb[0].mxu0 %v2904
    %v6895 = vpop.f32.mrb[0].mxu0
    %v6896 = vadd.f32 %v6801, %v6895
    %v6897 = vpop.f32.mrb[0].mxu0
    %v6898 = vadd.f32 %v6803, %v6897
    %6899 = vmatprep.mubr.f32.mxu0 %v2911
    %6900 = vmatmul.mubr.f32.gmra.mrb[0].mxu0 %v2910
    %v6901 = vpop.f32.mrb[0].mxu0
    %v6902 = vadd.f32 %v6807, %v6901
    %v6903 = vpop.f32.mrb[0].mxu0
    %v6904 = vadd.f32 %v6809, %v6903
    %6905 = vmatprep.mubr.f32.mxu0 %v2917
    %6906 = vmatmul.mubr.f32.gmra.mrb[0].mxu0 %v2916
    %v6907 = vpop.f32.mrb[0].mxu0
    %v6908 = vadd.f32 %v6813, %v6907
    %v6909 = vpop.f32.mrb[0].mxu0
    %v6910 = vadd.f32 %v6815, %v6909
    %6911 = vmatprep.mubr.f32.mxu0 %v2923
    %6912 = vmatmul.mubr.f32.gmra.mrb[0].mxu0 %v2922
    %v6913 = vpop.f32.mrb[0].mxu0
    %v6914 = vadd.f32 %v6819, %v6913
    %v6915 = vpop.f32.mrb[0].mxu0
    %v6916 = vadd.f32 %v6821, %v6915
    %6917 = vdwg.mxu0
    %6918 = vmatprep.subr.mxu0 %v4984
    %6919 = vmatpush1.msra.mxu0 %v4983
    %6920 = vmatprep.subr.mxu0 %v4991
    %6921 = vmatpush1.msra.mxu0 %v4990
    %6922 = vmatprep.subr.mxu0 %v4998
    %6923 = vmatpush1.msra.mxu0 %v4997
    %6924 = vmatprep.subr.mxu0 %v5005
    %6925 = vmatpush1.msra.mxu0 %v5004
    %6926 = vmatprep.subr.mxu0 %v5012
    %6927 = vmatpush1.msra.mxu0 %v5011
    %6928 = vmatprep.subr.mxu0 %v5019
    %6929 = vmatpush1.msra.mxu0 %v5018
    %6930 = vmatprep.subr.mxu0 %v5026
    %6931 = vmatpush1.msra.mxu0 %v5025
    %6932 = vmatprep.subr.mxu0 %v5033
    %6933 = vmatpush1.msra.mxu0 %v5032
    %6934 = vmatprep.subr.mxu0 %v5040
    %6935 = vmatpush1.msra.mxu0 %v5039
    %6936 = vmatprep.subr.mxu0 %v5047
    %6937 = vmatpush1.msra.mxu0 %v5046
    %6938 = vmatprep.subr.mxu0 %v5054
    %6939 = vmatpush1.msra.mxu0 %v5053
    %6940 = vmatprep.subr.mxu0 %v5061
    %6941 = vmatpush1.msra.mxu0 %v5060
    %6942 = vmatprep.subr.mxu0 0.0
    %6943 = vmatpush1.msra.mxu0 0.0
    %6944 = vmatprep.subr.mxu0 0.0
    %6945 = vmatpush1.msra.mxu0 0.0
    %6946 = vmatprep.subr.mxu0 0.0
    %6947 = vmatpush1.msra.mxu0 0.0
    %6948 = vmatprep.subr.mxu0 0.0
    %6949 = vmatpush1.msra.mxu0 0.0
    %6950 = vmatprep.subr.mxu0 0.0
    %6951 = vmatpush1.msra.mxu0 0.0
    %6952 = vmatprep.subr.mxu0 0.0
    %6953 = vmatpush1.msra.mxu0 0.0
    %6954 = vmatprep.subr.mxu0 0.0
    %6955 = vmatpush1.msra.mxu0 0.0
    %6956 = vmatprep.subr.mxu0 0.0
    %6957 = vmatpush1.msra.mxu0 0.0
    %6958 = vmatprep.subr.mxu0 0.0
    %6959 = vmatpush1.msra.mxu0 0.0
    %6960 = vmatprep.subr.mxu0 0.0
    %6961 = vmatpush1.msra.mxu0 0.0
    %6962 = vmatprep.subr.mxu0 0.0
    %6963 = vmatpush1.msra.mxu0 0.0
    %6964 = vmatprep.subr.mxu0 0.0
    %6965 = vmatpush1.msra.mxu0 0.0
    %6966 = vmatprep.subr.mxu0 0.0
    %6967 = vmatpush1.msra.mxu0 0.0
    %6968 = vmatprep.subr.mxu0 0.0
    %6969 = vmatpush1.msra.mxu0 0.0
    %6970 = vmatprep.subr.mxu0 0.0
    %6971 = vmatpush1.msra.mxu0 0.0
    %6972 = vmatprep.subr.mxu0 0.0
    %6973 = vmatpush1.msra.mxu0 0.0
    %6974 = vmatprep.subr.mxu0 0.0
    %6975 = vmatpush1.msra.mxu0 0.0
    %6976 = vmatprep.subr.mxu0 0.0
    %6977 = vmatpush1.msra.mxu0 0.0
    %6978 = vmatprep.subr.mxu0 0.0
    %6979 = vmatpush1.msra.mxu0 0.0
    %6980 = vmatprep.subr.mxu0 0.0
    %6981 = vmatpush1.msra.mxu0 0.0
    %6982 = vmatprep.mubr.f32.mxu0 0.0
    %6983 = vmatmul.mubr.f32.gmra.mrb[0].mxu0 %v5103
    %v6984 = vpop.f32.mrb[0].mxu0
    %v6985 = vadd.f32 %v6890, %v6984
    %v6986 = vpop.f32.mrb[0].mxu0
    %v6987 = vadd.f32 %v6892, %v6986
    %6988 = vmatprep.mubr.f32.mxu0 0.0
    %6989 = vmatmul.mubr.f32.gmra.mrb[0].mxu0 %v5105
    %v6990 = vpop.f32.mrb[0].mxu0
    %v6991 = vadd.f32 %v6896, %v6990
    %v6992 = vpop.f32.mrb[0].mxu0
    %v6993 = vadd.f32 %v6898, %v6992
    %6994 = vmatprep.mubr.f32.mxu0 0.0
    %6995 = vmatmul.mubr.f32.gmra.mrb[0].mxu0 %v5107
    %v6996 = vpop.f32.mrb[0].mxu0
    %v6997 = vadd.f32 %v6902, %v6996
    %v6998 = vpop.f32.mrb[0].mxu0
    %v6999 = vadd.f32 %v6904, %v6998
    %7000 = vmatprep.mubr.f32.mxu0 0.0
    %7001 = vmatmul.mubr.f32.gmra.mrb[0].mxu0 %v5109
    %v7002 = vpop.f32.mrb[0].mxu0
    %v7003 = vadd.f32 %v6908, %v7002
    %v7004 = vpop.f32.mrb[0].mxu0
    %v7005 = vadd.f32 %v6910, %v7004
    %7006 = vmatprep.mubr.f32.mxu0 0.0
    %7007 = vmatmul.mubr.f32.gmra.mrb[0].mxu0 %v5111
    %v7008 = vpop.f32.mrb[0].mxu0
    %v7009 = vadd.f32 %v6914, %v7008
    %v7010 = vpop.f32.mrb[0].mxu0
    %v7011 = vadd.f32 %v6916, %v7010
    %7012 = vdwg.mxu0
    %7013 = vmatprep.subr.mxu0 %v2970
    %7014 = vmatpush1.msra.mxu0 %v2969
    %7015 = vmatprep.subr.mxu0 %v2977
    %7016 = vmatpush1.msra.mxu0 %v2976
    %7017 = vmatprep.subr.mxu0 %v2984
    %7018 = vmatpush1.msra.mxu0 %v2983
    %7019 = vmatprep.subr.mxu0 %v2991
    %7020 = vmatpush1.msra.mxu0 %v2990
    %7021 = vmatprep.subr.mxu0 %v2998
    %7022 = vmatpush1.msra.mxu0 %v2997
    %7023 = vmatprep.subr.mxu0 %v3005
    %7024 = vmatpush1.msra.mxu0 %v3004
    %7025 = vmatprep.subr.mxu0 %v3012
    %7026 = vmatpush1.msra.mxu0 %v3011
    %7027 = vmatprep.subr.mxu0 %v3019
    %7028 = vmatpush1.msra.mxu0 %v3018
    %7029 = vmatprep.subr.mxu0 %v3026
    %7030 = vmatpush1.msra.mxu0 %v3025
    %7031 = vmatprep.subr.mxu0 %v3033
    %7032 = vmatpush1.msra.mxu0 %v3032
    %7033 = vmatprep.subr.mxu0 %v3040
    %7034 = vmatpush1.msra.mxu0 %v3039
    %7035 = vmatprep.subr.mxu0 %v3047
    %7036 = vmatpush1.msra.mxu0 %v3046
    %7037 = vmatprep.subr.mxu0 %v3054
    %7038 = vmatpush1.msra.mxu0 %v3053
    %7039 = vmatprep.subr.mxu0 %v3061
    %7040 = vmatpush1.msra.mxu0 %v3060
    %7041 = vmatprep.subr.mxu0 %v3068
    %7042 = vmatpush1.msra.mxu0 %v3067
    %7043 = vmatprep.subr.mxu0 %v3075
    %7044 = vmatpush1.msra.mxu0 %v3074
    %7045 = vmatprep.subr.mxu0 %v3082
    %7046 = vmatpush1.msra.mxu0 %v3081
    %7047 = vmatprep.subr.mxu0 %v3089
    %7048 = vmatpush1.msra.mxu0 %v3088
    %7049 = vmatprep.subr.mxu0 %v3096
    %7050 = vmatpush1.msra.mxu0 %v3095
    %7051 = vmatprep.subr.mxu0 %v3103
    %7052 = vmatpush1.msra.mxu0 %v3102
    %7053 = vmatprep.subr.mxu0 %v3110
    %7054 = vmatpush1.msra.mxu0 %v3109
    %7055 = vmatprep.subr.mxu0 %v3117
    %7056 = vmatpush1.msra.mxu0 %v3116
    %7057 = vmatprep.subr.mxu0 %v3124
    %7058 = vmatpush1.msra.mxu0 %v3123
    %7059 = vmatprep.subr.mxu0 %v3131
    %7060 = vmatpush1.msra.mxu0 %v3130
    %7061 = vmatprep.subr.mxu0 %v3138
    %7062 = vmatpush1.msra.mxu0 %v3137
    %7063 = vmatprep.subr.mxu0 %v3145
    %7064 = vmatpush1.msra.mxu0 %v3144
    %7065 = vmatprep.subr.mxu0 %v3152
    %7066 = vmatpush1.msra.mxu0 %v3151
    %7067 = vmatprep.subr.mxu0 %v3159
    %7068 = vmatpush1.msra.mxu0 %v3158
    %7069 = vmatprep.subr.mxu0 %v3166
    %7070 = vmatpush1.msra.mxu0 %v3165
    %7071 = vmatprep.subr.mxu0 %v3173
    %7072 = vmatpush1.msra.mxu0 %v3172
    %7073 = vmatprep.subr.mxu0 %v3180
    %7074 = vmatpush1.msra.mxu0 %v3179
    %7075 = vmatprep.subr.mxu0 %v3187
    %7076 = vmatpush1.msra.mxu0 %v3186
    %7077 = vmatprep.mubr.f32.mxu0 %v2448
    %7078 = vmatmul.mubr.f32.gmra.mrb[0].mxu0 %v2447
    %v7079 = vpop.f32.mrb[0].mxu0
    %v7080 = vadd.f32 %v5086, %v7079
    %v7081 = vpop.f32.mrb[0].mxu0
    %v7082 = vadd.f32 %v5090, %v7081
    %7083 = vmatprep.mubr.f32.mxu0 %v2455
    %7084 = vmatmul.mubr.f32.gmra.mrb[0].mxu0 %v2454
    %v7085 = vpop.f32.mrb[0].mxu0
    %v7086 = vadd.f32 %v5086, %v7085
    %v7087 = vpop.f32.mrb[0].mxu0
    %v7088 = vadd.f32 %v5090, %v7087
    %7089 = vmatprep.mubr.f32.mxu0 %v2462
    %7090 = vmatmul.mubr.f32.gmra.mrb[0].mxu0 %v2461
    %v7091 = vpop.f32.mrb[0].mxu0
    %v7092 = vadd.f32 %v5086, %v7091
    %v7093 = vpop.f32.mrb[0].mxu0
    %v7094 = vadd.f32 %v5090, %v7093
    %7095 = vmatprep.mubr.f32.mxu0 %v2469
    %7096 = vmatmul.mubr.f32.gmra.mrb[0].mxu0 %v2468
    %v7097 = vpop.f32.mrb[0].mxu0
    %v7098 = vadd.f32 %v5086, %v7097
    %v7099 = vpop.f32.mrb[0].mxu0
    %v7100 = vadd.f32 %v5090, %v7099
    %7101 = vmatprep.mubr.f32.mxu0 %v2476
    %7102 = vmatmul.mubr.f32.gmra.mrb[0].mxu0 %v2475
    %v7103 = vpop.f32.mrb[0].mxu0
    %v7104 = vadd.f32 %v5086, %v7103
    %v7105 = vpop.f32.mrb[0].mxu0
    %v7106 = vadd.f32 %v5090, %v7105
    %7107 = vdwg.mxu0
    %7108 = vmatprep.subr.mxu0 %v3194
    %7109 = vmatpush1.msra.mxu0 %v3193
    %7110 = vmatprep.subr.mxu0 %v3201
    %7111 = vmatpush1.msra.mxu0 %v3200
    %7112 = vmatprep.subr.mxu0 %v3208
    %7113 = vmatpush1.msra.mxu0 %v3207
    %7114 = vmatprep.subr.mxu0 %v3215
    %7115 = vmatpush1.msra.mxu0 %v3214
    %7116 = vmatprep.subr.mxu0 %v3222
    %7117 = vmatpush1.msra.mxu0 %v3221
    %7118 = vmatprep.subr.mxu0 %v3229
    %7119 = vmatpush1.msra.mxu0 %v3228
    %7120 = vmatprep.subr.mxu0 %v3236
    %7121 = vmatpush1.msra.mxu0 %v3235
    %7122 = vmatprep.subr.mxu0 %v3243
    %7123 = vmatpush1.msra.mxu0 %v3242
    %7124 = vmatprep.subr.mxu0 %v3250
    %7125 = vmatpush1.msra.mxu0 %v3249
    %7126 = vmatprep.subr.mxu0 %v3257
    %7127 = vmatpush1.msra.mxu0 %v3256
    %7128 = vmatprep.subr.mxu0 %v3264
    %7129 = vmatpush1.msra.mxu0 %v3263
    %7130 = vmatprep.subr.mxu0 %v3271
    %7131 = vmatpush1.msra.mxu0 %v3270
    %7132 = vmatprep.subr.mxu0 %v3278
    %7133 = vmatpush1.msra.mxu0 %v3277
    %7134 = vmatprep.subr.mxu0 %v3285
    %7135 = vmatpush1.msra.mxu0 %v3284
    %7136 = vmatprep.subr.mxu0 %v3292
    %7137 = vmatpush1.msra.mxu0 %v3291
    %7138 = vmatprep.subr.mxu0 %v3299
    %7139 = vmatpush1.msra.mxu0 %v3298
    %7140 = vmatprep.subr.mxu0 %v3306
    %7141 = vmatpush1.msra.mxu0 %v3305
    %7142 = vmatprep.subr.mxu0 %v3313
    %7143 = vmatpush1.msra.mxu0 %v3312
    %7144 = vmatprep.subr.mxu0 %v3320
    %7145 = vmatpush1.msra.mxu0 %v3319
    %7146 = vmatprep.subr.mxu0 %v3327
    %7147 = vmatpush1.msra.mxu0 %v3326
    %7148 = vmatprep.subr.mxu0 %v3334
    %7149 = vmatpush1.msra.mxu0 %v3333
    %7150 = vmatprep.subr.mxu0 %v3341
    %7151 = vmatpush1.msra.mxu0 %v3340
    %7152 = vmatprep.subr.mxu0 %v3348
    %7153 = vmatpush1.msra.mxu0 %v3347
    %7154 = vmatprep.subr.mxu0 %v3355
    %7155 = vmatpush1.msra.mxu0 %v3354
    %7156 = vmatprep.subr.mxu0 %v3362
    %7157 = vmatpush1.msra.mxu0 %v3361
    %7158 = vmatprep.subr.mxu0 %v3369
    %7159 = vmatpush1.msra.mxu0 %v3368
    %7160 = vmatprep.subr.mxu0 %v3376
    %7161 = vmatpush1.msra.mxu0 %v3375
    %7162 = vmatprep.subr.mxu0 %v3383
    %7163 = vmatpush1.msra.mxu0 %v3382
    %7164 = vmatprep.subr.mxu0 %v3390
    %7165 = vmatpush1.msra.mxu0 %v3389
    %7166 = vmatprep.subr.mxu0 %v3397
    %7167 = vmatpush1.msra.mxu0 %v3396
    %7168 = vmatprep.subr.mxu0 %v3404
    %7169 = vmatpush1.msra.mxu0 %v3403
    %7170 = vmatprep.subr.mxu0 %v3411
    %7171 = vmatpush1.msra.mxu0 %v3410
    %7172 = vmatprep.mubr.f32.mxu0 %v2450
    %7173 = vmatmul.mubr.f32.gmra.mrb[0].mxu0 %v2449
    %v7174 = vpop.f32.mrb[0].mxu0
    %v7175 = vadd.f32 %v7080, %v7174
    %v7176 = vpop.f32.mrb[0].mxu0
    %v7177 = vadd.f32 %v7082, %v7176
    %7178 = vmatprep.mubr.f32.mxu0 %v2457
    %7179 = vmatmul.mubr.f32.gmra.mrb[0].mxu0 %v2456
    %v7180 = vpop.f32.mrb[0].mxu0
    %v7181 = vadd.f32 %v7086, %v7180
    %v7182 = vpop.f32.mrb[0].mxu0
    %v7183 = vadd.f32 %v7088, %v7182
    %7184 = vmatprep.mubr.f32.mxu0 %v2464
    %7185 = vmatmul.mubr.f32.gmra.mrb[0].mxu0 %v2463
    %v7186 = vpop.f32.mrb[0].mxu0
    %v7187 = vadd.f32 %v7092, %v7186
    %v7188 = vpop.f32.mrb[0].mxu0
    %v7189 = vadd.f32 %v7094, %v7188
    %7190 = vmatprep.mubr.f32.mxu0 %v2471
    %7191 = vmatmul.mubr.f32.gmra.mrb[0].mxu0 %v2470
    %v7192 = vpop.f32.mrb[0].mxu0
    %v7193 = vadd.f32 %v7098, %v7192
    %v7194 = vpop.f32.mrb[0].mxu0
    %v7195 = vadd.f32 %v7100, %v7194
    %7196 = vmatprep.mubr.f32.mxu0 %v2478
    %7197 = vmatmul.mubr.f32.gmra.mrb[0].mxu0 %v2477
    %v7198 = vpop.f32.mrb[0].mxu0
    %v7199 = vadd.f32 %v7104, %v7198
    %v7200 = vpop.f32.mrb[0].mxu0
    %v7201 = vadd.f32 %v7106, %v7200
    %7202 = vdwg.mxu0
    %7203 = vmatprep.subr.mxu0 %v3418
    %7204 = vmatpush1.msra.mxu0 %v3417
    %7205 = vmatprep.subr.mxu0 %v3425
    %7206 = vmatpush1.msra.mxu0 %v3424
    %7207 = vmatprep.subr.mxu0 %v3432
    %7208 = vmatpush1.msra.mxu0 %v3431
    %7209 = vmatprep.subr.mxu0 %v3439
    %7210 = vmatpush1.msra.mxu0 %v3438
    %7211 = vmatprep.subr.mxu0 %v3446
    %7212 = vmatpush1.msra.mxu0 %v3445
    %7213 = vmatprep.subr.mxu0 %v3453
    %7214 = vmatpush1.msra.mxu0 %v3452
    %7215 = vmatprep.subr.mxu0 %v3460
    %7216 = vmatpush1.msra.mxu0 %v3459
    %7217 = vmatprep.subr.mxu0 %v3467
    %7218 = vmatpush1.msra.mxu0 %v3466
    %7219 = vmatprep.subr.mxu0 %v3474
    %7220 = vmatpush1.msra.mxu0 %v3473
    %7221 = vmatprep.subr.mxu0 %v3481
    %7222 = vmatpush1.msra.mxu0 %v3480
    %7223 = vmatprep.subr.mxu0 %v3488
    %7224 = vmatpush1.msra.mxu0 %v3487
    %7225 = vmatprep.subr.mxu0 %v3495
    %7226 = vmatpush1.msra.mxu0 %v3494
    %7227 = vmatprep.subr.mxu0 %v3502
    %7228 = vmatpush1.msra.mxu0 %v3501
    %7229 = vmatprep.subr.mxu0 %v3509
    %7230 = vmatpush1.msra.mxu0 %v3508
    %7231 = vmatprep.subr.mxu0 %v3516
    %7232 = vmatpush1.msra.mxu0 %v3515
    %7233 = vmatprep.subr.mxu0 %v3523
    %7234 = vmatpush1.msra.mxu0 %v3522
    %7235 = vmatprep.subr.mxu0 %v3530
    %7236 = vmatpush1.msra.mxu0 %v3529
    %7237 = vmatprep.subr.mxu0 %v3537
    %7238 = vmatpush1.msra.mxu0 %v3536
    %7239 = vmatprep.subr.mxu0 %v3544
    %7240 = vmatpush1.msra.mxu0 %v3543
    %7241 = vmatprep.subr.mxu0 %v3551
    %7242 = vmatpush1.msra.mxu0 %v3550
    %7243 = vmatprep.subr.mxu0 %v3558
    %7244 = vmatpush1.msra.mxu0 %v3557
    %7245 = vmatprep.subr.mxu0 %v3565
    %7246 = vmatpush1.msra.mxu0 %v3564
    %7247 = vmatprep.subr.mxu0 %v3572
    %7248 = vmatpush1.msra.mxu0 %v3571
    %7249 = vmatprep.subr.mxu0 %v3579
    %7250 = vmatpush1.msra.mxu0 %v3578
    %7251 = vmatprep.subr.mxu0 %v3586
    %7252 = vmatpush1.msra.mxu0 %v3585
    %7253 = vmatprep.subr.mxu0 %v3593
    %7254 = vmatpush1.msra.mxu0 %v3592
    %7255 = vmatprep.subr.mxu0 %v3600
    %7256 = vmatpush1.msra.mxu0 %v3599
    %7257 = vmatprep.subr.mxu0 %v3607
    %7258 = vmatpush1.msra.mxu0 %v3606
    %7259 = vmatprep.subr.mxu0 %v3614
    %7260 = vmatpush1.msra.mxu0 %v3613
    %7261 = vmatprep.subr.mxu0 %v3621
    %7262 = vmatpush1.msra.mxu0 %v3620
    %7263 = vmatprep.subr.mxu0 %v3628
    %7264 = vmatpush1.msra.mxu0 %v3627
    %7265 = vmatprep.subr.mxu0 %v3635
    %7266 = vmatpush1.msra.mxu0 %v3634
    %7267 = vmatprep.mubr.f32.mxu0 %v2452
    %7268 = vmatmul.mubr.f32.gmra.mrb[0].mxu0 %v2451
    %v7269 = vpop.f32.mrb[0].mxu0
    %v7270 = vadd.f32 %v7175, %v7269
    %v7271 = vpop.f32.mrb[0].mxu0
    %v7272 = vadd.f32 %v7177, %v7271
    %7273 = vmatprep.mubr.f32.mxu0 %v2459
    %7274 = vmatmul.mubr.f32.gmra.mrb[0].mxu0 %v2458
    %v7275 = vpop.f32.mrb[0].mxu0
    %v7276 = vadd.f32 %v7181, %v7275
    %v7277 = vpop.f32.mrb[0].mxu0
    %v7278 = vadd.f32 %v7183, %v7277
    %7279 = vmatprep.mubr.f32.mxu0 %v2466
    %7280 = vmatmul.mubr.f32.gmra.mrb[0].mxu0 %v2465
    %v7281 = vpop.f32.mrb[0].mxu0
    %v7282 = vadd.f32 %v7187, %v7281
    %v7283 = vpop.f32.mrb[0].mxu0
    %v7284 = vadd.f32 %v7189, %v7283
    %7285 = vmatprep.mubr.f32.mxu0 %v2473
    %7286 = vmatmul.mubr.f32.gmra.mrb[0].mxu0 %v2472
    %v7287 = vpop.f32.mrb[0].mxu0
    %v7288 = vadd.f32 %v7193, %v7287
    %v7289 = vpop.f32.mrb[0].mxu0
    %v7290 = vadd.f32 %v7195, %v7289
    %7291 = vmatprep.mubr.f32.mxu0 %v2480
    %7292 = vmatmul.mubr.f32.gmra.mrb[0].mxu0 %v2479
    %v7293 = vpop.f32.mrb[0].mxu0
    %v7294 = vadd.f32 %v7199, %v7293
    %v7295 = vpop.f32.mrb[0].mxu0
    %v7296 = vadd.f32 %v7201, %v7295
    %7297 = vdwg.mxu0
    %7298 = vmatprep.subr.mxu0 %v3642
    %7299 = vmatpush1.msra.mxu0 %v3641
    %7300 = vmatprep.subr.mxu0 %v3649
    %7301 = vmatpush1.msra.mxu0 %v3648
    %7302 = vmatprep.subr.mxu0 %v3656
    %7303 = vmatpush1.msra.mxu0 %v3655
    %7304 = vmatprep.subr.mxu0 %v3663
    %7305 = vmatpush1.msra.mxu0 %v3662
    %7306 = vmatprep.subr.mxu0 %v3670
    %7307 = vmatpush1.msra.mxu0 %v3669
    %7308 = vmatprep.subr.mxu0 %v3677
    %7309 = vmatpush1.msra.mxu0 %v3676
    %7310 = vmatprep.subr.mxu0 %v3684
    %7311 = vmatpush1.msra.mxu0 %v3683
    %7312 = vmatprep.subr.mxu0 %v3691
    %7313 = vmatpush1.msra.mxu0 %v3690
    %7314 = vmatprep.subr.mxu0 %v3698
    %7315 = vmatpush1.msra.mxu0 %v3697
    %7316 = vmatprep.subr.mxu0 %v3705
    %7317 = vmatpush1.msra.mxu0 %v3704
    %7318 = vmatprep.subr.mxu0 %v3712
    %7319 = vmatpush1.msra.mxu0 %v3711
    %7320 = vmatprep.subr.mxu0 %v3719
    %7321 = vmatpush1.msra.mxu0 %v3718
    %7322 = vmatprep.subr.mxu0 %v3726
    %7323 = vmatpush1.msra.mxu0 %v3725
    %7324 = vmatprep.subr.mxu0 %v3733
    %7325 = vmatpush1.msra.mxu0 %v3732
    %7326 = vmatprep.subr.mxu0 %v3740
    %7327 = vmatpush1.msra.mxu0 %v3739
    %7328 = vmatprep.subr.mxu0 %v3747
    %7329 = vmatpush1.msra.mxu0 %v3746
    %7330 = vmatprep.subr.mxu0 %v3754
    %7331 = vmatpush1.msra.mxu0 %v3753
    %7332 = vmatprep.subr.mxu0 %v3761
    %7333 = vmatpush1.msra.mxu0 %v3760
    %7334 = vmatprep.subr.mxu0 %v3768
    %7335 = vmatpush1.msra.mxu0 %v3767
    %7336 = vmatprep.subr.mxu0 %v3775
    %7337 = vmatpush1.msra.mxu0 %v3774
    %7338 = vmatprep.subr.mxu0 %v3782
    %7339 = vmatpush1.msra.mxu0 %v3781
    %7340 = vmatprep.subr.mxu0 %v3789
    %7341 = vmatpush1.msra.mxu0 %v3788
    %7342 = vmatprep.subr.mxu0 %v3796
    %7343 = vmatpush1.msra.mxu0 %v3795
    %7344 = vmatprep.subr.mxu0 %v3803
    %7345 = vmatpush1.msra.mxu0 %v3802
    %7346 = vmatprep.subr.mxu0 %v3810
    %7347 = vmatpush1.msra.mxu0 %v3809
    %7348 = vmatprep.subr.mxu0 %v3817
    %7349 = vmatpush1.msra.mxu0 %v3816
    %7350 = vmatprep.subr.mxu0 %v3824
    %7351 = vmatpush1.msra.mxu0 %v3823
    %7352 = vmatprep.subr.mxu0 %v3831
    %7353 = vmatpush1.msra.mxu0 %v3830
    %7354 = vmatprep.subr.mxu0 %v3838
    %7355 = vmatpush1.msra.mxu0 %v3837
    %7356 = vmatprep.subr.mxu0 %v3845
    %7357 = vmatpush1.msra.mxu0 %v3844
    %7358 = vmatprep.subr.mxu0 %v3852
    %7359 = vmatpush1.msra.mxu0 %v3851
    %7360 = vmatprep.subr.mxu0 %v3859
    %7361 = vmatpush1.msra.mxu0 %v3858
    %7362 = vmatprep.mubr.f32.mxu0 %v2724
    %7363 = vmatmul.mubr.f32.gmra.mrb[0].mxu0 %v2955
    %v7364 = vpop.f32.mrb[0].mxu0
    %v7365 = vadd.f32 %v7270, %v7364
    %v7366 = vpop.f32.mrb[0].mxu0
    %v7367 = vadd.f32 %v7272, %v7366
    %7368 = vmatprep.mubr.f32.mxu0 %v2730
    %7369 = vmatmul.mubr.f32.gmra.mrb[0].mxu0 %v2956
    %v7370 = vpop.f32.mrb[0].mxu0
    %v7371 = vadd.f32 %v7276, %v7370
    %v7372 = vpop.f32.mrb[0].mxu0
    %v7373 = vadd.f32 %v7278, %v7372
    %7374 = vmatprep.mubr.f32.mxu0 %v2736
    %7375 = vmatmul.mubr.f32.gmra.mrb[0].mxu0 %v2957
    %v7376 = vpop.f32.mrb[0].mxu0
    %v7377 = vadd.f32 %v7282, %v7376
    %v7378 = vpop.f32.mrb[0].mxu0
    %v7379 = vadd.f32 %v7284, %v7378
    %7380 = vmatprep.mubr.f32.mxu0 %v2742
    %7381 = vmatmul.mubr.f32.gmra.mrb[0].mxu0 %v2958
    %v7382 = vpop.f32.mrb[0].mxu0
    %v7383 = vadd.f32 %v7288, %v7382
    %v7384 = vpop.f32.mrb[0].mxu0
    %v7385 = vadd.f32 %v7290, %v7384
    %7386 = vmatprep.mubr.f32.mxu0 %v2748
    %7387 = vmatmul.mubr.f32.gmra.mrb[0].mxu0 %v2959
    %v7388 = vpop.f32.mrb[0].mxu0
    %v7389 = vadd.f32 %v7294, %v7388
    %v7390 = vpop.f32.mrb[0].mxu0
    %v7391 = vadd.f32 %v7296, %v7390
    %7392 = vdwg.mxu0
    %7393 = vmatprep.subr.mxu0 %v3866
    %7394 = vmatpush1.msra.mxu0 %v3865
    %7395 = vmatprep.subr.mxu0 %v3873
    %7396 = vmatpush1.msra.mxu0 %v3872
    %7397 = vmatprep.subr.mxu0 %v3880
    %7398 = vmatpush1.msra.mxu0 %v3879
    %7399 = vmatprep.subr.mxu0 %v3887
    %7400 = vmatpush1.msra.mxu0 %v3886
    %7401 = vmatprep.subr.mxu0 %v3894
    %7402 = vmatpush1.msra.mxu0 %v3893
    %7403 = vmatprep.subr.mxu0 %v3901
    %7404 = vmatpush1.msra.mxu0 %v3900
    %7405 = vmatprep.subr.mxu0 %v3908
    %7406 = vmatpush1.msra.mxu0 %v3907
    %7407 = vmatprep.subr.mxu0 %v3915
    %7408 = vmatpush1.msra.mxu0 %v3914
    %7409 = vmatprep.subr.mxu0 %v3922
    %7410 = vmatpush1.msra.mxu0 %v3921
    %7411 = vmatprep.subr.mxu0 %v3929
    %7412 = vmatpush1.msra.mxu0 %v3928
    %7413 = vmatprep.subr.mxu0 %v3936
    %7414 = vmatpush1.msra.mxu0 %v3935
    %7415 = vmatprep.subr.mxu0 %v3943
    %7416 = vmatpush1.msra.mxu0 %v3942
    %7417 = vmatprep.subr.mxu0 %v3950
    %7418 = vmatpush1.msra.mxu0 %v3949
    %7419 = vmatprep.subr.mxu0 %v3957
    %7420 = vmatpush1.msra.mxu0 %v3956
    %7421 = vmatprep.subr.mxu0 %v3964
    %7422 = vmatpush1.msra.mxu0 %v3963
    %7423 = vmatprep.subr.mxu0 %v3971
    %7424 = vmatpush1.msra.mxu0 %v3970
    %7425 = vmatprep.subr.mxu0 %v3978
    %7426 = vmatpush1.msra.mxu0 %v3977
    %7427 = vmatprep.subr.mxu0 %v3985
    %7428 = vmatpush1.msra.mxu0 %v3984
    %7429 = vmatprep.subr.mxu0 %v3992
    %7430 = vmatpush1.msra.mxu0 %v3991
    %7431 = vmatprep.subr.mxu0 %v3999
    %7432 = vmatpush1.msra.mxu0 %v3998
    %7433 = vmatprep.subr.mxu0 %v4006
    %7434 = vmatpush1.msra.mxu0 %v4005
    %7435 = vmatprep.subr.mxu0 %v4013
    %7436 = vmatpush1.msra.mxu0 %v4012
    %7437 = vmatprep.subr.mxu0 %v4020
    %7438 = vmatpush1.msra.mxu0 %v4019
    %7439 = vmatprep.subr.mxu0 %v4027
    %7440 = vmatpush1.msra.mxu0 %v4026
    %7441 = vmatprep.subr.mxu0 %v4034
    %7442 = vmatpush1.msra.mxu0 %v4033
    %7443 = vmatprep.subr.mxu0 %v4041
    %7444 = vmatpush1.msra.mxu0 %v4040
    %7445 = vmatprep.subr.mxu0 %v4048
    %7446 = vmatpush1.msra.mxu0 %v4047
    %7447 = vmatprep.subr.mxu0 %v4055
    %7448 = vmatpush1.msra.mxu0 %v4054
    %7449 = vmatprep.subr.mxu0 %v4062
    %7450 = vmatpush1.msra.mxu0 %v4061
    %7451 = vmatprep.subr.mxu0 %v4069
    %7452 = vmatpush1.msra.mxu0 %v4068
    %7453 = vmatprep.subr.mxu0 %v4076
    %7454 = vmatpush1.msra.mxu0 %v4075
    %7455 = vmatprep.subr.mxu0 %v4083
    %7456 = vmatpush1.msra.mxu0 %v4082
    %7457 = vmatprep.mubr.f32.mxu0 %v2726
    %7458 = vmatmul.mubr.f32.gmra.mrb[0].mxu0 %v2725
    %v7459 = vpop.f32.mrb[0].mxu0
    %v7460 = vadd.f32 %v7365, %v7459
    %v7461 = vpop.f32.mrb[0].mxu0
    %v7462 = vadd.f32 %v7367, %v7461
    %7463 = vmatprep.mubr.f32.mxu0 %v2732
    %7464 = vmatmul.mubr.f32.gmra.mrb[0].mxu0 %v2731
    %v7465 = vpop.f32.mrb[0].mxu0
    %v7466 = vadd.f32 %v7371, %v7465
    %v7467 = vpop.f32.mrb[0].mxu0
    %v7468 = vadd.f32 %v7373, %v7467
    %7469 = vmatprep.mubr.f32.mxu0 %v2738
    %7470 = vmatmul.mubr.f32.gmra.mrb[0].mxu0 %v2737
    %v7471 = vpop.f32.mrb[0].mxu0
    %v7472 = vadd.f32 %v7377, %v7471
    %v7473 = vpop.f32.mrb[0].mxu0
    %v7474 = vadd.f32 %v7379, %v7473
    %7475 = vmatprep.mubr.f32.mxu0 %v2744
    %7476 = vmatmul.mubr.f32.gmra.mrb[0].mxu0 %v2743
    %v7477 = vpop.f32.mrb[0].mxu0
    %v7478 = vadd.f32 %v7383, %v7477
    %v7479 = vpop.f32.mrb[0].mxu0
    %v7480 = vadd.f32 %v7385, %v7479
    %7481 = vmatprep.mubr.f32.mxu0 %v2750
    %7482 = vmatmul.mubr.f32.gmra.mrb[0].mxu0 %v2749
    %v7483 = vpop.f32.mrb[0].mxu0
    %v7484 = vadd.f32 %v7389, %v7483
    %v7485 = vpop.f32.mrb[0].mxu0
    %v7486 = vadd.f32 %v7391, %v7485
    %7487 = vdwg.mxu0
    %7488 = vmatprep.subr.mxu0 %v4090
    %7489 = vmatpush1.msra.mxu0 %v4089
    %7490 = vmatprep.subr.mxu0 %v4097
    %7491 = vmatpush1.msra.mxu0 %v4096
    %7492 = vmatprep.subr.mxu0 %v4104
    %7493 = vmatpush1.msra.mxu0 %v4103
    %7494 = vmatprep.subr.mxu0 %v4111
    %7495 = vmatpush1.msra.mxu0 %v4110
    %7496 = vmatprep.subr.mxu0 %v4118
    %7497 = vmatpush1.msra.mxu0 %v4117
    %7498 = vmatprep.subr.mxu0 %v4125
    %7499 = vmatpush1.msra.mxu0 %v4124
    %7500 = vmatprep.subr.mxu0 %v4132
    %7501 = vmatpush1.msra.mxu0 %v4131
    %7502 = vmatprep.subr.mxu0 %v4139
    %7503 = vmatpush1.msra.mxu0 %v4138
    %7504 = vmatprep.subr.mxu0 %v4146
    %7505 = vmatpush1.msra.mxu0 %v4145
    %7506 = vmatprep.subr.mxu0 %v4153
    %7507 = vmatpush1.msra.mxu0 %v4152
    %7508 = vmatprep.subr.mxu0 %v4160
    %7509 = vmatpush1.msra.mxu0 %v4159
    %7510 = vmatprep.subr.mxu0 %v4167
    %7511 = vmatpush1.msra.mxu0 %v4166
    %7512 = vmatprep.subr.mxu0 %v4174
    %7513 = vmatpush1.msra.mxu0 %v4173
    %7514 = vmatprep.subr.mxu0 %v4181
    %7515 = vmatpush1.msra.mxu0 %v4180
    %7516 = vmatprep.subr.mxu0 %v4188
    %7517 = vmatpush1.msra.mxu0 %v4187
    %7518 = vmatprep.subr.mxu0 %v4195
    %7519 = vmatpush1.msra.mxu0 %v4194
    %7520 = vmatprep.subr.mxu0 %v4202
    %7521 = vmatpush1.msra.mxu0 %v4201
    %7522 = vmatprep.subr.mxu0 %v4209
    %7523 = vmatpush1.msra.mxu0 %v4208
    %7524 = vmatprep.subr.mxu0 %v4216
    %7525 = vmatpush1.msra.mxu0 %v4215
    %7526 = vmatprep.subr.mxu0 %v4223
    %7527 = vmatpush1.msra.mxu0 %v4222
    %7528 = vmatprep.subr.mxu0 %v4230
    %7529 = vmatpush1.msra.mxu0 %v4229
    %7530 = vmatprep.subr.mxu0 %v4237
    %7531 = vmatpush1.msra.mxu0 %v4236
    %7532 = vmatprep.subr.mxu0 %v4244
    %7533 = vmatpush1.msra.mxu0 %v4243
    %7534 = vmatprep.subr.mxu0 %v4251
    %7535 = vmatpush1.msra.mxu0 %v4250
    %7536 = vmatprep.subr.mxu0 %v4258
    %7537 = vmatpush1.msra.mxu0 %v4257
    %7538 = vmatprep.subr.mxu0 %v4265
    %7539 = vmatpush1.msra.mxu0 %v4264
    %7540 = vmatprep.subr.mxu0 %v4272
    %7541 = vmatpush1.msra.mxu0 %v4271
    %7542 = vmatprep.subr.mxu0 %v4279
    %7543 = vmatpush1.msra.mxu0 %v4278
    %7544 = vmatprep.subr.mxu0 %v4286
    %7545 = vmatpush1.msra.mxu0 %v4285
    %7546 = vmatprep.subr.mxu0 %v4293
    %7547 = vmatpush1.msra.mxu0 %v4292
    %7548 = vmatprep.subr.mxu0 %v4300
    %7549 = vmatpush1.msra.mxu0 %v4299
    %7550 = vmatprep.subr.mxu0 %v4307
    %7551 = vmatpush1.msra.mxu0 %v4306
    %7552 = vmatprep.mubr.f32.mxu0 %v2728
    %7553 = vmatmul.mubr.f32.gmra.mrb[0].mxu0 %v2727
    %v7554 = vpop.f32.mrb[0].mxu0
    %v7555 = vadd.f32 %v7460, %v7554
    %v7556 = vpop.f32.mrb[0].mxu0
    %v7557 = vadd.f32 %v7462, %v7556
    %7558 = vmatprep.mubr.f32.mxu0 %v2734
    %7559 = vmatmul.mubr.f32.gmra.mrb[0].mxu0 %v2733
    %v7560 = vpop.f32.mrb[0].mxu0
    %v7561 = vadd.f32 %v7466, %v7560
    %v7562 = vpop.f32.mrb[0].mxu0
    %v7563 = vadd.f32 %v7468, %v7562
    %7564 = vmatprep.mubr.f32.mxu0 %v2740
    %7565 = vmatmul.mubr.f32.gmra.mrb[0].mxu0 %v2739
    %v7566 = vpop.f32.mrb[0].mxu0
    %v7567 = vadd.f32 %v7472, %v7566
    %v7568 = vpop.f32.mrb[0].mxu0
    %v7569 = vadd.f32 %v7474, %v7568
    %7570 = vmatprep.mubr.f32.mxu0 %v2746
    %7571 = vmatmul.mubr.f32.gmra.mrb[0].mxu0 %v2745
    %v7572 = vpop.f32.mrb[0].mxu0
    %v7573 = vadd.f32 %v7478, %v7572
    %v7574 = vpop.f32.mrb[0].mxu0
    %v7575 = vadd.f32 %v7480, %v7574
    %7576 = vmatprep.mubr.f32.mxu0 %v2752
    %7577 = vmatmul.mubr.f32.gmra.mrb[0].mxu0 %v2751
    %v7578 = vpop.f32.mrb[0].mxu0
    %v7579 = vadd.f32 %v7484, %v7578
    %v7580 = vpop.f32.mrb[0].mxu0
    %v7581 = vadd.f32 %v7486, %v7580
    %7582 = vdwg.mxu0
    %7583 = vmatprep.subr.mxu0 %v4314
    %7584 = vmatpush1.msra.mxu0 %v4313
    %7585 = vmatprep.subr.mxu0 %v4321
    %7586 = vmatpush1.msra.mxu0 %v4320
    %7587 = vmatprep.subr.mxu0 %v4328
    %7588 = vmatpush1.msra.mxu0 %v4327
    %7589 = vmatprep.subr.mxu0 %v4335
    %7590 = vmatpush1.msra.mxu0 %v4334
    %7591 = vmatprep.subr.mxu0 %v4342
    %7592 = vmatpush1.msra.mxu0 %v4341
    %7593 = vmatprep.subr.mxu0 %v4349
    %7594 = vmatpush1.msra.mxu0 %v4348
    %7595 = vmatprep.subr.mxu0 %v4356
    %7596 = vmatpush1.msra.mxu0 %v4355
    %7597 = vmatprep.subr.mxu0 %v4363
    %7598 = vmatpush1.msra.mxu0 %v4362
    %7599 = vmatprep.subr.mxu0 %v4370
    %7600 = vmatpush1.msra.mxu0 %v4369
    %7601 = vmatprep.subr.mxu0 %v4377
    %7602 = vmatpush1.msra.mxu0 %v4376
    %7603 = vmatprep.subr.mxu0 %v4384
    %7604 = vmatpush1.msra.mxu0 %v4383
    %7605 = vmatprep.subr.mxu0 %v4391
    %7606 = vmatpush1.msra.mxu0 %v4390
    %7607 = vmatprep.subr.mxu0 %v4398
    %7608 = vmatpush1.msra.mxu0 %v4397
    %7609 = vmatprep.subr.mxu0 %v4405
    %7610 = vmatpush1.msra.mxu0 %v4404
    %7611 = vmatprep.subr.mxu0 %v4412
    %7612 = vmatpush1.msra.mxu0 %v4411
    %7613 = vmatprep.subr.mxu0 %v4419
    %7614 = vmatpush1.msra.mxu0 %v4418
    %7615 = vmatprep.subr.mxu0 %v4426
    %7616 = vmatpush1.msra.mxu0 %v4425
    %7617 = vmatprep.subr.mxu0 %v4433
    %7618 = vmatpush1.msra.mxu0 %v4432
    %7619 = vmatprep.subr.mxu0 %v4440
    %7620 = vmatpush1.msra.mxu0 %v4439
    %7621 = vmatprep.subr.mxu0 %v4447
    %7622 = vmatpush1.msra.mxu0 %v4446
    %7623 = vmatprep.subr.mxu0 %v4454
    %7624 = vmatpush1.msra.mxu0 %v4453
    %7625 = vmatprep.subr.mxu0 %v4461
    %7626 = vmatpush1.msra.mxu0 %v4460
    %7627 = vmatprep.subr.mxu0 %v4468
    %7628 = vmatpush1.msra.mxu0 %v4467
    %7629 = vmatprep.subr.mxu0 %v4475
    %7630 = vmatpush1.msra.mxu0 %v4474
    %7631 = vmatprep.subr.mxu0 %v4482
    %7632 = vmatpush1.msra.mxu0 %v4481
    %7633 = vmatprep.subr.mxu0 %v4489
    %7634 = vmatpush1.msra.mxu0 %v4488
    %7635 = vmatprep.subr.mxu0 %v4496
    %7636 = vmatpush1.msra.mxu0 %v4495
    %7637 = vmatprep.subr.mxu0 %v4503
    %7638 = vmatpush1.msra.mxu0 %v4502
    %7639 = vmatprep.subr.mxu0 %v4510
    %7640 = vmatpush1.msra.mxu0 %v4509
    %7641 = vmatprep.subr.mxu0 %v4517
    %7642 = vmatpush1.msra.mxu0 %v4516
    %7643 = vmatprep.subr.mxu0 %v4524
    %7644 = vmatpush1.msra.mxu0 %v4523
    %7645 = vmatprep.subr.mxu0 %v4531
    %7646 = vmatpush1.msra.mxu0 %v4530
    %7647 = vmatprep.mubr.f32.mxu0 %v2895
    %7648 = vmatmul.mubr.f32.gmra.mrb[0].mxu0 %v2960
    %v7649 = vpop.f32.mrb[0].mxu0
    %v7650 = vadd.f32 %v7555, %v7649
    %v7651 = vpop.f32.mrb[0].mxu0
    %v7652 = vadd.f32 %v7557, %v7651
    %7653 = vmatprep.mubr.f32.mxu0 %v2901
    %7654 = vmatmul.mubr.f32.gmra.mrb[0].mxu0 %v2961
    %v7655 = vpop.f32.mrb[0].mxu0
    %v7656 = vadd.f32 %v7561, %v7655
    %v7657 = vpop.f32.mrb[0].mxu0
    %v7658 = vadd.f32 %v7563, %v7657
    %7659 = vmatprep.mubr.f32.mxu0 %v2907
    %7660 = vmatmul.mubr.f32.gmra.mrb[0].mxu0 %v2962
    %v7661 = vpop.f32.mrb[0].mxu0
    %v7662 = vadd.f32 %v7567, %v7661
    %v7663 = vpop.f32.mrb[0].mxu0
    %v7664 = vadd.f32 %v7569, %v7663
    %7665 = vmatprep.mubr.f32.mxu0 %v2913
    %7666 = vmatmul.mubr.f32.gmra.mrb[0].mxu0 %v2963
    %v7667 = vpop.f32.mrb[0].mxu0
    %v7668 = vadd.f32 %v7573, %v7667
    %v7669 = vpop.f32.mrb[0].mxu0
    %v7670 = vadd.f32 %v7575, %v7669
    %7671 = vmatprep.mubr.f32.mxu0 %v2919
    %7672 = vmatmul.mubr.f32.gmra.mrb[0].mxu0 %v2964
    %v7673 = vpop.f32.mrb[0].mxu0
    %v7674 = vadd.f32 %v7579, %v7673
    %v7675 = vpop.f32.mrb[0].mxu0
    %v7676 = vadd.f32 %v7581, %v7675
    %7677 = vdwg.mxu0
    %7678 = vmatprep.subr.mxu0 %v4538
    %7679 = vmatpush1.msra.mxu0 %v4537
    %7680 = vmatprep.subr.mxu0 %v4545
    %7681 = vmatpush1.msra.mxu0 %v4544
    %7682 = vmatprep.subr.mxu0 %v4552
    %7683 = vmatpush1.msra.mxu0 %v4551
    %7684 = vmatprep.subr.mxu0 %v4559
    %7685 = vmatpush1.msra.mxu0 %v4558
    %7686 = vmatprep.subr.mxu0 %v4566
    %7687 = vmatpush1.msra.mxu0 %v4565
    %7688 = vmatprep.subr.mxu0 %v4573
    %7689 = vmatpush1.msra.mxu0 %v4572
    %7690 = vmatprep.subr.mxu0 %v4580
    %7691 = vmatpush1.msra.mxu0 %v4579
    %7692 = vmatprep.subr.mxu0 %v4587
    %7693 = vmatpush1.msra.mxu0 %v4586
    %7694 = vmatprep.subr.mxu0 %v4594
    %7695 = vmatpush1.msra.mxu0 %v4593
    %7696 = vmatprep.subr.mxu0 %v4601
    %7697 = vmatpush1.msra.mxu0 %v4600
    %7698 = vmatprep.subr.mxu0 %v4608
    %7699 = vmatpush1.msra.mxu0 %v4607
    %7700 = vmatprep.subr.mxu0 %v4615
    %7701 = vmatpush1.msra.mxu0 %v4614
    %7702 = vmatprep.subr.mxu0 %v4622
    %7703 = vmatpush1.msra.mxu0 %v4621
    %7704 = vmatprep.subr.mxu0 %v4629
    %7705 = vmatpush1.msra.mxu0 %v4628
    %7706 = vmatprep.subr.mxu0 %v4636
    %7707 = vmatpush1.msra.mxu0 %v4635
    %7708 = vmatprep.subr.mxu0 %v4643
    %7709 = vmatpush1.msra.mxu0 %v4642
    %7710 = vmatprep.subr.mxu0 %v4650
    %7711 = vmatpush1.msra.mxu0 %v4649
    %7712 = vmatprep.subr.mxu0 %v4657
    %7713 = vmatpush1.msra.mxu0 %v4656
    %7714 = vmatprep.subr.mxu0 %v4664
    %7715 = vmatpush1.msra.mxu0 %v4663
    %7716 = vmatprep.subr.mxu0 %v4671
    %7717 = vmatpush1.msra.mxu0 %v4670
    %7718 = vmatprep.subr.mxu0 %v4678
    %7719 = vmatpush1.msra.mxu0 %v4677
    %7720 = vmatprep.subr.mxu0 %v4685
    %7721 = vmatpush1.msra.mxu0 %v4684
    %7722 = vmatprep.subr.mxu0 %v4692
    %7723 = vmatpush1.msra.mxu0 %v4691
    %7724 = vmatprep.subr.mxu0 %v4699
    %7725 = vmatpush1.msra.mxu0 %v4698
    %7726 = vmatprep.subr.mxu0 %v4706
    %7727 = vmatpush1.msra.mxu0 %v4705
    %7728 = vmatprep.subr.mxu0 %v4713
    %7729 = vmatpush1.msra.mxu0 %v4712
    %7730 = vmatprep.subr.mxu0 %v4720
    %7731 = vmatpush1.msra.mxu0 %v4719
    %7732 = vmatprep.subr.mxu0 %v4727
    %7733 = vmatpush1.msra.mxu0 %v4726
    %7734 = vmatprep.subr.mxu0 %v4734
    %7735 = vmatpush1.msra.mxu0 %v4733
    %7736 = vmatprep.subr.mxu0 %v4741
    %7737 = vmatpush1.msra.mxu0 %v4740
    %7738 = vmatprep.subr.mxu0 %v4748
    %7739 = vmatpush1.msra.mxu0 %v4747
    %7740 = vmatprep.subr.mxu0 %v4755
    %7741 = vmatpush1.msra.mxu0 %v4754
    %7742 = vmatprep.mubr.f32.mxu0 %v2897
    %7743 = vmatmul.mubr.f32.gmra.mrb[0].mxu0 %v2896
    %v7744 = vpop.f32.mrb[0].mxu0
    %v7745 = vadd.f32 %v7650, %v7744
    %v7746 = vpop.f32.mrb[0].mxu0
    %v7747 = vadd.f32 %v7652, %v7746
    %7748 = vmatprep.mubr.f32.mxu0 %v2903
    %7749 = vmatmul.mubr.f32.gmra.mrb[0].mxu0 %v2902
    %v7750 = vpop.f32.mrb[0].mxu0
    %v7751 = vadd.f32 %v7656, %v7750
    %v7752 = vpop.f32.mrb[0].mxu0
    %v7753 = vadd.f32 %v7658, %v7752
    %7754 = vmatprep.mubr.f32.mxu0 %v2909
    %7755 = vmatmul.mubr.f32.gmra.mrb[0].mxu0 %v2908
    %v7756 = vpop.f32.mrb[0].mxu0
    %v7757 = vadd.f32 %v7662, %v7756
    %v7758 = vpop.f32.mrb[0].mxu0
    %v7759 = vadd.f32 %v7664, %v7758
    %7760 = vmatprep.mubr.f32.mxu0 %v2915
    %7761 = vmatmul.mubr.f32.gmra.mrb[0].mxu0 %v2914
    %v7762 = vpop.f32.mrb[0].mxu0
    %v7763 = vadd.f32 %v7668, %v7762
    %v7764 = vpop.f32.mrb[0].mxu0
    %v7765 = vadd.f32 %v7670, %v7764
    %7766 = vmatprep.mubr.f32.mxu0 %v2921
    %7767 = vmatmul.mubr.f32.gmra.mrb[0].mxu0 %v2920
    %v7768 = vpop.f32.mrb[0].mxu0
    %v7769 = vadd.f32 %v7674, %v7768
    %v7770 = vpop.f32.mrb[0].mxu0
    %v7771 = vadd.f32 %v7676, %v7770
    %7772 = vdwg.mxu0
    %7773 = vmatprep.subr.mxu0 %v4762
    %7774 = vmatpush1.msra.mxu0 %v4761
    %7775 = vmatprep.subr.mxu0 %v4769
    %7776 = vmatpush1.msra.mxu0 %v4768
    %7777 = vmatprep.subr.mxu0 %v4776
    %7778 = vmatpush1.msra.mxu0 %v4775
    %7779 = vmatprep.subr.mxu0 %v4783
    %7780 = vmatpush1.msra.mxu0 %v4782
    %7781 = vmatprep.subr.mxu0 %v4790
    %7782 = vmatpush1.msra.mxu0 %v4789
    %7783 = vmatprep.subr.mxu0 %v4797
    %7784 = vmatpush1.msra.mxu0 %v4796
    %7785 = vmatprep.subr.mxu0 %v4804
    %7786 = vmatpush1.msra.mxu0 %v4803
    %7787 = vmatprep.subr.mxu0 %v4811
    %7788 = vmatpush1.msra.mxu0 %v4810
    %7789 = vmatprep.subr.mxu0 %v4818
    %7790 = vmatpush1.msra.mxu0 %v4817
    %7791 = vmatprep.subr.mxu0 %v4825
    %7792 = vmatpush1.msra.mxu0 %v4824
    %7793 = vmatprep.subr.mxu0 %v4832
    %7794 = vmatpush1.msra.mxu0 %v4831
    %7795 = vmatprep.subr.mxu0 %v4839
    %7796 = vmatpush1.msra.mxu0 %v4838
    %7797 = vmatprep.subr.mxu0 %v4846
    %7798 = vmatpush1.msra.mxu0 %v4845
    %7799 = vmatprep.subr.mxu0 %v4853
    %7800 = vmatpush1.msra.mxu0 %v4852
    %7801 = vmatprep.subr.mxu0 %v4860
    %7802 = vmatpush1.msra.mxu0 %v4859
    %7803 = vmatprep.subr.mxu0 %v4867
    %7804 = vmatpush1.msra.mxu0 %v4866
    %7805 = vmatprep.subr.mxu0 %v4874
    %7806 = vmatpush1.msra.mxu0 %v4873
    %7807 = vmatprep.subr.mxu0 %v4881
    %7808 = vmatpush1.msra.mxu0 %v4880
    %7809 = vmatprep.subr.mxu0 %v4888
    %7810 = vmatpush1.msra.mxu0 %v4887
    %7811 = vmatprep.subr.mxu0 %v4895
    %7812 = vmatpush1.msra.mxu0 %v4894
    %7813 = vmatprep.subr.mxu0 %v4902
    %7814 = vmatpush1.msra.mxu0 %v4901
    %7815 = vmatprep.subr.mxu0 %v4909
    %7816 = vmatpush1.msra.mxu0 %v4908
    %7817 = vmatprep.subr.mxu0 %v4916
    %7818 = vmatpush1.msra.mxu0 %v4915
    %7819 = vmatprep.subr.mxu0 %v4923
    %7820 = vmatpush1.msra.mxu0 %v4922
    %7821 = vmatprep.subr.mxu0 %v4930
    %7822 = vmatpush1.msra.mxu0 %v4929
    %7823 = vmatprep.subr.mxu0 %v4937
    %7824 = vmatpush1.msra.mxu0 %v4936
    %7825 = vmatprep.subr.mxu0 %v4944
    %7826 = vmatpush1.msra.mxu0 %v4943
    %7827 = vmatprep.subr.mxu0 %v4951
    %7828 = vmatpush1.msra.mxu0 %v4950
    %7829 = vmatprep.subr.mxu0 %v4958
    %7830 = vmatpush1.msra.mxu0 %v4957
    %7831 = vmatprep.subr.mxu0 %v4965
    %7832 = vmatpush1.msra.mxu0 %v4964
    %7833 = vmatprep.subr.mxu0 %v4972
    %7834 = vmatpush1.msra.mxu0 %v4971
    %7835 = vmatprep.subr.mxu0 %v4979
    %7836 = vmatpush1.msra.mxu0 %v4978
    %7837 = vmatprep.mubr.f32.mxu0 %v2899
    %7838 = vmatmul.mubr.f32.gmra.mrb[0].mxu0 %v2898
    %v7839 = vpop.f32.mrb[0].mxu0
    %v7840 = vadd.f32 %v7745, %v7839
    %v7841 = vpop.f32.mrb[0].mxu0
    %v7842 = vadd.f32 %v7747, %v7841
    %7843 = vmatprep.mubr.f32.mxu0 %v2905
    %7844 = vmatmul.mubr.f32.gmra.mrb[0].mxu0 %v2904
    %v7845 = vpop.f32.mrb[0].mxu0
    %v7846 = vadd.f32 %v7751, %v7845
    %v7847 = vpop.f32.mrb[0].mxu0
    %v7848 = vadd.f32 %v7753, %v7847
    %7849 = vmatprep.mubr.f32.mxu0 %v2911
    %7850 = vmatmul.mubr.f32.gmra.mrb[0].mxu0 %v2910
    %v7851 = vpop.f32.mrb[0].mxu0
    %v7852 = vadd.f32 %v7757, %v7851
    %v7853 = vpop.f32.mrb[0].mxu0
    %v7854 = vadd.f32 %v7759, %v7853
    %7855 = vmatprep.mubr.f32.mxu0 %v2917
    %7856 = vmatmul.mubr.f32.gmra.mrb[0].mxu0 %v2916
    %v7857 = vpop.f32.mrb[0].mxu0
    %v7858 = vadd.f32 %v7763, %v7857
    %v7859 = vpop.f32.mrb[0].mxu0
    %v7860 = vadd.f32 %v7765, %v7859
    %7861 = vmatprep.mubr.f32.mxu0 %v2923
    %7862 = vmatmul.mubr.f32.gmra.mrb[0].mxu0 %v2922
    %v7863 = vpop.f32.mrb[0].mxu0
    %v7864 = vadd.f32 %v7769, %v7863
    %v7865 = vpop.f32.mrb[0].mxu0
    %v7866 = vadd.f32 %v7771, %v7865
    %7867 = vdwg.mxu0
    %7868 = vmatprep.subr.mxu0 %v4986
    %7869 = vmatpush1.msra.mxu0 %v4985
    %7870 = vmatprep.subr.mxu0 %v4993
    %7871 = vmatpush1.msra.mxu0 %v4992
    %7872 = vmatprep.subr.mxu0 %v5000
    %7873 = vmatpush1.msra.mxu0 %v4999
    %7874 = vmatprep.subr.mxu0 %v5007
    %7875 = vmatpush1.msra.mxu0 %v5006
    %7876 = vmatprep.subr.mxu0 %v5014
    %7877 = vmatpush1.msra.mxu0 %v5013
    %7878 = vmatprep.subr.mxu0 %v5021
    %7879 = vmatpush1.msra.mxu0 %v5020
    %7880 = vmatprep.subr.mxu0 %v5028
    %7881 = vmatpush1.msra.mxu0 %v5027
    %7882 = vmatprep.subr.mxu0 %v5035
    %7883 = vmatpush1.msra.mxu0 %v5034
    %7884 = vmatprep.subr.mxu0 %v5042
    %7885 = vmatpush1.msra.mxu0 %v5041
    %7886 = vmatprep.subr.mxu0 %v5049
    %7887 = vmatpush1.msra.mxu0 %v5048
    %7888 = vmatprep.subr.mxu0 %v5056
    %7889 = vmatpush1.msra.mxu0 %v5055
    %7890 = vmatprep.subr.mxu0 %v5063
    %7891 = vmatpush1.msra.mxu0 %v5062
    %7892 = vmatprep.subr.mxu0 0.0
    %7893 = vmatpush1.msra.mxu0 0.0
    %7894 = vmatprep.subr.mxu0 0.0
    %7895 = vmatpush1.msra.mxu0 0.0
    %7896 = vmatprep.subr.mxu0 0.0
    %7897 = vmatpush1.msra.mxu0 0.0
    %7898 = vmatprep.subr.mxu0 0.0
    %7899 = vmatpush1.msra.mxu0 0.0
    %7900 = vmatprep.subr.mxu0 0.0
    %7901 = vmatpush1.msra.mxu0 0.0
    %7902 = vmatprep.subr.mxu0 0.0
    %7903 = vmatpush1.msra.mxu0 0.0
    %7904 = vmatprep.subr.mxu0 0.0
    %7905 = vmatpush1.msra.mxu0 0.0
    %7906 = vmatprep.subr.mxu0 0.0
    %7907 = vmatpush1.msra.mxu0 0.0
    %7908 = vmatprep.subr.mxu0 0.0
    %7909 = vmatpush1.msra.mxu0 0.0
    %7910 = vmatprep.subr.mxu0 0.0
    %7911 = vmatpush1.msra.mxu0 0.0
    %7912 = vmatprep.subr.mxu0 0.0
    %7913 = vmatpush1.msra.mxu0 0.0
    %7914 = vmatprep.subr.mxu0 0.0
    %7915 = vmatpush1.msra.mxu0 0.0
    %7916 = vmatprep.subr.mxu0 0.0
    %7917 = vmatpush1.msra.mxu0 0.0
    %7918 = vmatprep.subr.mxu0 0.0
    %7919 = vmatpush1.msra.mxu0 0.0
    %7920 = vmatprep.subr.mxu0 0.0
    %7921 = vmatpush1.msra.mxu0 0.0
    %7922 = vmatprep.subr.mxu0 0.0
    %7923 = vmatpush1.msra.mxu0 0.0
    %7924 = vmatprep.subr.mxu0 0.0
    %7925 = vmatpush1.msra.mxu0 0.0
    %7926 = vmatprep.subr.mxu0 0.0
    %7927 = vmatpush1.msra.mxu0 0.0
    %7928 = vmatprep.subr.mxu0 0.0
    %7929 = vmatpush1.msra.mxu0 0.0
    %7930 = vmatprep.subr.mxu0 0.0
    %7931 = vmatpush1.msra.mxu0 0.0
    %7932 = vmatprep.mubr.f32.mxu0 0.0
    %7933 = vmatmul.mubr.f32.gmra.mrb[0].mxu0 %v5103
    %v7934 = vpop.f32.mrb[0].mxu0
    %v7935 = vadd.f32 %v7840, %v7934
    %v7936 = vpop.f32.mrb[0].mxu0
    %v7937 = vadd.f32 %v7842, %v7936
    %7938 = vmatprep.mubr.f32.mxu0 0.0
    %7939 = vmatmul.mubr.f32.gmra.mrb[0].mxu0 %v5105
    %v7940 = vpop.f32.mrb[0].mxu0
    %v7941 = vadd.f32 %v7846, %v7940
    %v7942 = vpop.f32.mrb[0].mxu0
    %v7943 = vadd.f32 %v7848, %v7942
    %7944 = vmatprep.mubr.f32.mxu0 0.0
    %7945 = vmatmul.mubr.f32.gmra.mrb[0].mxu0 %v5107
    %v7946 = vpop.f32.mrb[0].mxu0
    %v7947 = vadd.f32 %v7852, %v7946
    %v7948 = vpop.f32.mrb[0].mxu0
    %v7949 = vadd.f32 %v7854, %v7948
    %7950 = vmatprep.mubr.f32.mxu0 0.0
    %7951 = vmatmul.mubr.f32.gmra.mrb[0].mxu0 %v5109
    %v7952 = vpop.f32.mrb[0].mxu0
    %v7953 = vadd.f32 %v7858, %v7952
    %v7954 = vpop.f32.mrb[0].mxu0
    %v7955 = vadd.f32 %v7860, %v7954
    %7956 = vmatprep.mubr.f32.mxu0 0.0
    %7957 = vmatmul.mubr.f32.gmra.mrb[0].mxu0 %v5111
    %v7958 = vpop.f32.mrb[0].mxu0
    %v7959 = vadd.f32 %v7864, %v7958
    %v7960 = vpop.f32.mrb[0].mxu0
    %v7961 = vadd.f32 %v7866, %v7960
    %7962 = vdwg.mxu0
    %7963 = vmatprep.subr.mxu0 0.0
    %7964 = vmatpush1.msra.mxu0 %v2971
    %7965 = vmatprep.subr.mxu0 0.0
    %7966 = vmatpush1.msra.mxu0 %v2978
    %7967 = vmatprep.subr.mxu0 0.0
    %7968 = vmatpush1.msra.mxu0 %v2985
    %7969 = vmatprep.subr.mxu0 0.0
    %7970 = vmatpush1.msra.mxu0 %v2992
    %7971 = vmatprep.subr.mxu0 0.0
    %7972 = vmatpush1.msra.mxu0 %v2999
    %7973 = vmatprep.subr.mxu0 0.0
    %7974 = vmatpush1.msra.mxu0 %v3006
    %7975 = vmatprep.subr.mxu0 0.0
    %7976 = vmatpush1.msra.mxu0 %v3013
    %7977 = vmatprep.subr.mxu0 0.0
    %7978 = vmatpush1.msra.mxu0 %v3020
    %7979 = vmatprep.subr.mxu0 0.0
    %7980 = vmatpush1.msra.mxu0 %v3027
    %7981 = vmatprep.subr.mxu0 0.0
    %7982 = vmatpush1.msra.mxu0 %v3034
    %7983 = vmatprep.subr.mxu0 0.0
    %7984 = vmatpush1.msra.mxu0 %v3041
    %7985 = vmatprep.subr.mxu0 0.0
    %7986 = vmatpush1.msra.mxu0 %v3048
    %7987 = vmatprep.subr.mxu0 0.0
    %7988 = vmatpush1.msra.mxu0 %v3055
    %7989 = vmatprep.subr.mxu0 0.0
    %7990 = vmatpush1.msra.mxu0 %v3062
    %7991 = vmatprep.subr.mxu0 0.0
    %7992 = vmatpush1.msra.mxu0 %v3069
    %7993 = vmatprep.subr.mxu0 0.0
    %7994 = vmatpush1.msra.mxu0 %v3076
    %7995 = vmatprep.subr.mxu0 0.0
    %7996 = vmatpush1.msra.mxu0 %v3083
    %7997 = vmatprep.subr.mxu0 0.0
    %7998 = vmatpush1.msra.mxu0 %v3090
    %7999 = vmatprep.subr.mxu0 0.0
    %8000 = vmatpush1.msra.mxu0 %v3097
    %8001 = vmatprep.subr.mxu0 0.0
    %8002 = vmatpush1.msra.mxu0 %v3104
    %8003 = vmatprep.subr.mxu0 0.0
    %8004 = vmatpush1.msra.mxu0 %v3111
    %8005 = vmatprep.subr.mxu0 0.0
    %8006 = vmatpush1.msra.mxu0 %v3118
    %8007 = vmatprep.subr.mxu0 0.0
    %8008 = vmatpush1.msra.mxu0 %v3125
    %8009 = vmatprep.subr.mxu0 0.0
    %8010 = vmatpush1.msra.mxu0 %v3132
    %8011 = vmatprep.subr.mxu0 0.0
    %8012 = vmatpush1.msra.mxu0 %v3139
    %8013 = vmatprep.subr.mxu0 0.0
    %8014 = vmatpush1.msra.mxu0 %v3146
    %8015 = vmatprep.subr.mxu0 0.0
    %8016 = vmatpush1.msra.mxu0 %v3153
    %8017 = vmatprep.subr.mxu0 0.0
    %8018 = vmatpush1.msra.mxu0 %v3160
    %8019 = vmatprep.subr.mxu0 0.0
    %8020 = vmatpush1.msra.mxu0 %v3167
    %8021 = vmatprep.subr.mxu0 0.0
    %8022 = vmatpush1.msra.mxu0 %v3174
    %8023 = vmatprep.subr.mxu0 0.0
    %8024 = vmatpush1.msra.mxu0 %v3181
    %8025 = vmatprep.subr.mxu0 0.0
    %8026 = vmatpush1.msra.mxu0 %v3188
    %8027 = vmatprep.mubr.f32.mxu0 %v2448
    %8028 = vmatmul.mubr.f32.gmra.mrb[0].mxu0 %v2447
    %v8029 = vpop.f32.mrb[0].mxu0
    %v8030 = vadd.f32 %v5094, %v8029
    %v8031 = vpop.f32.mrb[0].mxu0
    %8032 = vmatprep.mubr.f32.mxu0 %v2455
    %8033 = vmatmul.mubr.f32.gmra.mrb[0].mxu0 %v2454
    %v8034 = vpop.f32.mrb[0].mxu0
    %v8035 = vadd.f32 %v5094, %v8034
    %v8036 = vpop.f32.mrb[0].mxu0
    %8037 = vmatprep.mubr.f32.mxu0 %v2462
    %8038 = vmatmul.mubr.f32.gmra.mrb[0].mxu0 %v2461
    %v8039 = vpop.f32.mrb[0].mxu0
    %v8040 = vadd.f32 %v5094, %v8039
    %v8041 = vpop.f32.mrb[0].mxu0
    %8042 = vmatprep.mubr.f32.mxu0 %v2469
    %8043 = vmatmul.mubr.f32.gmra.mrb[0].mxu0 %v2468
    %v8044 = vpop.f32.mrb[0].mxu0
    %v8045 = vadd.f32 %v5094, %v8044
    %v8046 = vpop.f32.mrb[0].mxu0
    %8047 = vmatprep.mubr.f32.mxu0 %v2476
    %8048 = vmatmul.mubr.f32.gmra.mrb[0].mxu0 %v2475
    %v8049 = vpop.f32.mrb[0].mxu0
    %v8050 = vadd.f32 %v5094, %v8049
    %v8051 = vpop.f32.mrb[0].mxu0
    %8052 = vdwg.mxu0
    %8053 = vmatprep.subr.mxu0 0.0
    %8054 = vmatpush1.msra.mxu0 %v3195
    %8055 = vmatprep.subr.mxu0 0.0
    %8056 = vmatpush1.msra.mxu0 %v3202
    %8057 = vmatprep.subr.mxu0 0.0
    %8058 = vmatpush1.msra.mxu0 %v3209
    %8059 = vmatprep.subr.mxu0 0.0
    %8060 = vmatpush1.msra.mxu0 %v3216
    %8061 = vmatprep.subr.mxu0 0.0
    %8062 = vmatpush1.msra.mxu0 %v3223
    %8063 = vmatprep.subr.mxu0 0.0
    %8064 = vmatpush1.msra.mxu0 %v3230
    %8065 = vmatprep.subr.mxu0 0.0
    %8066 = vmatpush1.msra.mxu0 %v3237
    %8067 = vmatprep.subr.mxu0 0.0
    %8068 = vmatpush1.msra.mxu0 %v3244
    %8069 = vmatprep.subr.mxu0 0.0
    %8070 = vmatpush1.msra.mxu0 %v3251
    %8071 = vmatprep.subr.mxu0 0.0
    %8072 = vmatpush1.msra.mxu0 %v3258
    %8073 = vmatprep.subr.mxu0 0.0
    %8074 = vmatpush1.msra.mxu0 %v3265
    %8075 = vmatprep.subr.mxu0 0.0
    %8076 = vmatpush1.msra.mxu0 %v3272
    %8077 = vmatprep.subr.mxu0 0.0
    %8078 = vmatpush1.msra.mxu0 %v3279
    %8079 = vmatprep.subr.mxu0 0.0
    %8080 = vmatpush1.msra.mxu0 %v3286
    %8081 = vmatprep.subr.mxu0 0.0
    %8082 = vmatpush1.msra.mxu0 %v3293
    %8083 = vmatprep.subr.mxu0 0.0
    %8084 = vmatpush1.msra.mxu0 %v3300
    %8085 = vmatprep.subr.mxu0 0.0
    %8086 = vmatpush1.msra.mxu0 %v3307
    %8087 = vmatprep.subr.mxu0 0.0
    %8088 = vmatpush1.msra.mxu0 %v3314
    %8089 = vmatprep.subr.mxu0 0.0
    %8090 = vmatpush1.msra.mxu0 %v3321
    %8091 = vmatprep.subr.mxu0 0.0
    %8092 = vmatpush1.msra.mxu0 %v3328
    %8093 = vmatprep.subr.mxu0 0.0
    %8094 = vmatpush1.msra.mxu0 %v3335
    %8095 = vmatprep.subr.mxu0 0.0
    %8096 = vmatpush1.msra.mxu0 %v3342
    %8097 = vmatprep.subr.mxu0 0.0
    %8098 = vmatpush1.msra.mxu0 %v3349
    %8099 = vmatprep.subr.mxu0 0.0
    %8100 = vmatpush1.msra.mxu0 %v3356
    %8101 = vmatprep.subr.mxu0 0.0
    %8102 = vmatpush1.msra.mxu0 %v3363
    %8103 = vmatprep.subr.mxu0 0.0
    %8104 = vmatpush1.msra.mxu0 %v3370
    %8105 = vmatprep.subr.mxu0 0.0
    %8106 = vmatpush1.msra.mxu0 %v3377
    %8107 = vmatprep.subr.mxu0 0.0
    %8108 = vmatpush1.msra.mxu0 %v3384
    %8109 = vmatprep.subr.mxu0 0.0
    %8110 = vmatpush1.msra.mxu0 %v3391
    %8111 = vmatprep.subr.mxu0 0.0
    %8112 = vmatpush1.msra.mxu0 %v3398
    %8113 = vmatprep.subr.mxu0 0.0
    %8114 = vmatpush1.msra.mxu0 %v3405
    %8115 = vmatprep.subr.mxu0 0.0
    %8116 = vmatpush1.msra.mxu0 %v3412
    %8117 = vmatprep.mubr.f32.mxu0 %v2450
    %8118 = vmatmul.mubr.f32.gmra.mrb[0].mxu0 %v2449
    %v8119 = vpop.f32.mrb[0].mxu0
    %v8120 = vadd.f32 %v8030, %v8119
    %v8121 = vpop.f32.mrb[0].mxu0
    %8122 = vmatprep.mubr.f32.mxu0 %v2457
    %8123 = vmatmul.mubr.f32.gmra.mrb[0].mxu0 %v2456
    %v8124 = vpop.f32.mrb[0].mxu0
    %v8125 = vadd.f32 %v8035, %v8124
    %v8126 = vpop.f32.mrb[0].mxu0
    %8127 = vmatprep.mubr.f32.mxu0 %v2464
    %8128 = vmatmul.mubr.f32.gmra.mrb[0].mxu0 %v2463
    %v8129 = vpop.f32.mrb[0].mxu0
    %v8130 = vadd.f32 %v8040, %v8129
    %v8131 = vpop.f32.mrb[0].mxu0
    %8132 = vmatprep.mubr.f32.mxu0 %v2471
    %8133 = vmatmul.mubr.f32.gmra.mrb[0].mxu0 %v2470
    %v8134 = vpop.f32.mrb[0].mxu0
    %v8135 = vadd.f32 %v8045, %v8134
    %v8136 = vpop.f32.mrb[0].mxu0
    %8137 = vmatprep.mubr.f32.mxu0 %v2478
    %8138 = vmatmul.mubr.f32.gmra.mrb[0].mxu0 %v2477
    %v8139 = vpop.f32.mrb[0].mxu0
    %v8140 = vadd.f32 %v8050, %v8139
    %v8141 = vpop.f32.mrb[0].mxu0
    %8142 = vdwg.mxu0
    %8143 = vmatprep.subr.mxu0 0.0
    %8144 = vmatpush1.msra.mxu0 %v3419
    %8145 = vmatprep.subr.mxu0 0.0
    %8146 = vmatpush1.msra.mxu0 %v3426
    %8147 = vmatprep.subr.mxu0 0.0
    %8148 = vmatpush1.msra.mxu0 %v3433
    %8149 = vmatprep.subr.mxu0 0.0
    %8150 = vmatpush1.msra.mxu0 %v3440
    %8151 = vmatprep.subr.mxu0 0.0
    %8152 = vmatpush1.msra.mxu0 %v3447
    %8153 = vmatprep.subr.mxu0 0.0
    %8154 = vmatpush1.msra.mxu0 %v3454
    %8155 = vmatprep.subr.mxu0 0.0
    %8156 = vmatpush1.msra.mxu0 %v3461
    %8157 = vmatprep.subr.mxu0 0.0
    %8158 = vmatpush1.msra.mxu0 %v3468
    %8159 = vmatprep.subr.mxu0 0.0
    %8160 = vmatpush1.msra.mxu0 %v3475
    %8161 = vmatprep.subr.mxu0 0.0
    %8162 = vmatpush1.msra.mxu0 %v3482
    %8163 = vmatprep.subr.mxu0 0.0
    %8164 = vmatpush1.msra.mxu0 %v3489
    %8165 = vmatprep.subr.mxu0 0.0
    %8166 = vmatpush1.msra.mxu0 %v3496
    %8167 = vmatprep.subr.mxu0 0.0
    %8168 = vmatpush1.msra.mxu0 %v3503
    %8169 = vmatprep.subr.mxu0 0.0
    %8170 = vmatpush1.msra.mxu0 %v3510
    %8171 = vmatprep.subr.mxu0 0.0
    %8172 = vmatpush1.msra.mxu0 %v3517
    %8173 = vmatprep.subr.mxu0 0.0
    %8174 = vmatpush1.msra.mxu0 %v3524
    %8175 = vmatprep.subr.mxu0 0.0
    %8176 = vmatpush1.msra.mxu0 %v3531
    %8177 = vmatprep.subr.mxu0 0.0
    %8178 = vmatpush1.msra.mxu0 %v3538
    %8179 = vmatprep.subr.mxu0 0.0
    %8180 = vmatpush1.msra.mxu0 %v3545
    %8181 = vmatprep.subr.mxu0 0.0
    %8182 = vmatpush1.msra.mxu0 %v3552
    %8183 = vmatprep.subr.mxu0 0.0
    %8184 = vmatpush1.msra.mxu0 %v3559
    %8185 = vmatprep.subr.mxu0 0.0
    %8186 = vmatpush1.msra.mxu0 %v3566
    %8187 = vmatprep.subr.mxu0 0.0
    %8188 = vmatpush1.msra.mxu0 %v3573
    %8189 = vmatprep.subr.mxu0 0.0
    %8190 = vmatpush1.msra.mxu0 %v3580
    %8191 = vmatprep.subr.mxu0 0.0
    %8192 = vmatpush1.msra.mxu0 %v3587
    %8193 = vmatprep.subr.mxu0 0.0
    %8194 = vmatpush1.msra.mxu0 %v3594
    %8195 = vmatprep.subr.mxu0 0.0
    %8196 = vmatpush1.msra.mxu0 %v3601
    %8197 = vmatprep.subr.mxu0 0.0
    %8198 = vmatpush1.msra.mxu0 %v3608
    %8199 = vmatprep.subr.mxu0 0.0
    %8200 = vmatpush1.msra.mxu0 %v3615
    %8201 = vmatprep.subr.mxu0 0.0
    %8202 = vmatpush1.msra.mxu0 %v3622
    %8203 = vmatprep.subr.mxu0 0.0
    %8204 = vmatpush1.msra.mxu0 %v3629
    %8205 = vmatprep.subr.mxu0 0.0
    %8206 = vmatpush1.msra.mxu0 %v3636
    %8207 = vmatprep.mubr.f32.mxu0 %v2452
    %8208 = vmatmul.mubr.f32.gmra.mrb[0].mxu0 %v2451
    %v8209 = vpop.f32.mrb[0].mxu0
    %v8210 = vadd.f32 %v8120, %v8209
    %v8211 = vpop.f32.mrb[0].mxu0
    %8212 = vmatprep.mubr.f32.mxu0 %v2459
    %8213 = vmatmul.mubr.f32.gmra.mrb[0].mxu0 %v2458
    %v8214 = vpop.f32.mrb[0].mxu0
    %v8215 = vadd.f32 %v8125, %v8214
    %v8216 = vpop.f32.mrb[0].mxu0
    %8217 = vmatprep.mubr.f32.mxu0 %v2466
    %8218 = vmatmul.mubr.f32.gmra.mrb[0].mxu0 %v2465
    %v8219 = vpop.f32.mrb[0].mxu0
    %v8220 = vadd.f32 %v8130, %v8219
    %v8221 = vpop.f32.mrb[0].mxu0
    %8222 = vmatprep.mubr.f32.mxu0 %v2473
    %8223 = vmatmul.mubr.f32.gmra.mrb[0].mxu0 %v2472
    %v8224 = vpop.f32.mrb[0].mxu0
    %v8225 = vadd.f32 %v8135, %v8224
    %v8226 = vpop.f32.mrb[0].mxu0
    %8227 = vmatprep.mubr.f32.mxu0 %v2480
    %8228 = vmatmul.mubr.f32.gmra.mrb[0].mxu0 %v2479
    %v8229 = vpop.f32.mrb[0].mxu0
    %v8230 = vadd.f32 %v8140, %v8229
    %v8231 = vpop.f32.mrb[0].mxu0
    %8232 = vdwg.mxu0
    %8233 = vmatprep.subr.mxu0 0.0
    %8234 = vmatpush1.msra.mxu0 %v3643
    %8235 = vmatprep.subr.mxu0 0.0
    %8236 = vmatpush1.msra.mxu0 %v3650
    %8237 = vmatprep.subr.mxu0 0.0
    %8238 = vmatpush1.msra.mxu0 %v3657
    %8239 = vmatprep.subr.mxu0 0.0
    %8240 = vmatpush1.msra.mxu0 %v3664
    %8241 = vmatprep.subr.mxu0 0.0
    %8242 = vmatpush1.msra.mxu0 %v3671
    %8243 = vmatprep.subr.mxu0 0.0
    %8244 = vmatpush1.msra.mxu0 %v3678
    %8245 = vmatprep.subr.mxu0 0.0
    %8246 = vmatpush1.msra.mxu0 %v3685
    %8247 = vmatprep.subr.mxu0 0.0
    %8248 = vmatpush1.msra.mxu0 %v3692
    %8249 = vmatprep.subr.mxu0 0.0
    %8250 = vmatpush1.msra.mxu0 %v3699
    %8251 = vmatprep.subr.mxu0 0.0
    %8252 = vmatpush1.msra.mxu0 %v3706
    %8253 = vmatprep.subr.mxu0 0.0
    %8254 = vmatpush1.msra.mxu0 %v3713
    %8255 = vmatprep.subr.mxu0 0.0
    %8256 = vmatpush1.msra.mxu0 %v3720
    %8257 = vmatprep.subr.mxu0 0.0
    %8258 = vmatpush1.msra.mxu0 %v3727
    %8259 = vmatprep.subr.mxu0 0.0
    %8260 = vmatpush1.msra.mxu0 %v3734
    %8261 = vmatprep.subr.mxu0 0.0
    %8262 = vmatpush1.msra.mxu0 %v3741
    %8263 = vmatprep.subr.mxu0 0.0
    %8264 = vmatpush1.msra.mxu0 %v3748
    %8265 = vmatprep.subr.mxu0 0.0
    %8266 = vmatpush1.msra.mxu0 %v3755
    %8267 = vmatprep.subr.mxu0 0.0
    %8268 = vmatpush1.msra.mxu0 %v3762
    %8269 = vmatprep.subr.mxu0 0.0
    %8270 = vmatpush1.msra.mxu0 %v3769
    %8271 = vmatprep.subr.mxu0 0.0
    %8272 = vmatpush1.msra.mxu0 %v3776
    %8273 = vmatprep.subr.mxu0 0.0
    %8274 = vmatpush1.msra.mxu0 %v3783
    %8275 = vmatprep.subr.mxu0 0.0
    %8276 = vmatpush1.msra.mxu0 %v3790
    %8277 = vmatprep.subr.mxu0 0.0
    %8278 = vmatpush1.msra.mxu0 %v3797
    %8279 = vmatprep.subr.mxu0 0.0
    %8280 = vmatpush1.msra.mxu0 %v3804
    %8281 = vmatprep.subr.mxu0 0.0
    %8282 = vmatpush1.msra.mxu0 %v3811
    %8283 = vmatprep.subr.mxu0 0.0
    %8284 = vmatpush1.msra.mxu0 %v3818
    %8285 = vmatprep.subr.mxu0 0.0
    %8286 = vmatpush1.msra.mxu0 %v3825
    %8287 = vmatprep.subr.mxu0 0.0
    %8288 = vmatpush1.msra.mxu0 %v3832
    %8289 = vmatprep.subr.mxu0 0.0
    %8290 = vmatpush1.msra.mxu0 %v3839
    %8291 = vmatprep.subr.mxu0 0.0
    %8292 = vmatpush1.msra.mxu0 %v3846
    %8293 = vmatprep.subr.mxu0 0.0
    %8294 = vmatpush1.msra.mxu0 %v3853
    %8295 = vmatprep.subr.mxu0 0.0
    %8296 = vmatpush1.msra.mxu0 %v3860
    %8297 = vmatprep.mubr.f32.mxu0 %v2724
    %8298 = vmatmul.mubr.f32.gmra.mrb[0].mxu0 %v2955
    %v8299 = vpop.f32.mrb[0].mxu0
    %v8300 = vadd.f32 %v8210, %v8299
    %v8301 = vpop.f32.mrb[0].mxu0
    %8302 = vmatprep.mubr.f32.mxu0 %v2730
    %8303 = vmatmul.mubr.f32.gmra.mrb[0].mxu0 %v2956
    %v8304 = vpop.f32.mrb[0].mxu0
    %v8305 = vadd.f32 %v8215, %v8304
    %v8306 = vpop.f32.mrb[0].mxu0
    %8307 = vmatprep.mubr.f32.mxu0 %v2736
    %8308 = vmatmul.mubr.f32.gmra.mrb[0].mxu0 %v2957
    %v8309 = vpop.f32.mrb[0].mxu0
    %v8310 = vadd.f32 %v8220, %v8309
    %v8311 = vpop.f32.mrb[0].mxu0
    %8312 = vmatprep.mubr.f32.mxu0 %v2742
    %8313 = vmatmul.mubr.f32.gmra.mrb[0].mxu0 %v2958
    %v8314 = vpop.f32.mrb[0].mxu0
    %v8315 = vadd.f32 %v8225, %v8314
    %v8316 = vpop.f32.mrb[0].mxu0
    %8317 = vmatprep.mubr.f32.mxu0 %v2748
    %8318 = vmatmul.mubr.f32.gmra.mrb[0].mxu0 %v2959
    %v8319 = vpop.f32.mrb[0].mxu0
    %v8320 = vadd.f32 %v8230, %v8319
    %v8321 = vpop.f32.mrb[0].mxu0
    %8322 = vdwg.mxu0
    %8323 = vmatprep.subr.mxu0 0.0
    %8324 = vmatpush1.msra.mxu0 %v3867
    %8325 = vmatprep.subr.mxu0 0.0
    %8326 = vmatpush1.msra.mxu0 %v3874
    %8327 = vmatprep.subr.mxu0 0.0
    %8328 = vmatpush1.msra.mxu0 %v3881
    %8329 = vmatprep.subr.mxu0 0.0
    %8330 = vmatpush1.msra.mxu0 %v3888
    %8331 = vmatprep.subr.mxu0 0.0
    %8332 = vmatpush1.msra.mxu0 %v3895
    %8333 = vmatprep.subr.mxu0 0.0
    %8334 = vmatpush1.msra.mxu0 %v3902
    %8335 = vmatprep.subr.mxu0 0.0
    %8336 = vmatpush1.msra.mxu0 %v3909
    %8337 = vmatprep.subr.mxu0 0.0
    %8338 = vmatpush1.msra.mxu0 %v3916
    %8339 = vmatprep.subr.mxu0 0.0
    %8340 = vmatpush1.msra.mxu0 %v3923
    %8341 = vmatprep.subr.mxu0 0.0
    %8342 = vmatpush1.msra.mxu0 %v3930
    %8343 = vmatprep.subr.mxu0 0.0
    %8344 = vmatpush1.msra.mxu0 %v3937
    %8345 = vmatprep.subr.mxu0 0.0
    %8346 = vmatpush1.msra.mxu0 %v3944
    %8347 = vmatprep.subr.mxu0 0.0
    %8348 = vmatpush1.msra.mxu0 %v3951
    %8349 = vmatprep.subr.mxu0 0.0
    %8350 = vmatpush1.msra.mxu0 %v3958
    %8351 = vmatprep.subr.mxu0 0.0
    %8352 = vmatpush1.msra.mxu0 %v3965
    %8353 = vmatprep.subr.mxu0 0.0
    %8354 = vmatpush1.msra.mxu0 %v3972
    %8355 = vmatprep.subr.mxu0 0.0
    %8356 = vmatpush1.msra.mxu0 %v3979
    %8357 = vmatprep.subr.mxu0 0.0
    %8358 = vmatpush1.msra.mxu0 %v3986
    %8359 = vmatprep.subr.mxu0 0.0
    %8360 = vmatpush1.msra.mxu0 %v3993
    %8361 = vmatprep.subr.mxu0 0.0
    %8362 = vmatpush1.msra.mxu0 %v4000
    %8363 = vmatprep.subr.mxu0 0.0
    %8364 = vmatpush1.msra.mxu0 %v4007
    %8365 = vmatprep.subr.mxu0 0.0
    %8366 = vmatpush1.msra.mxu0 %v4014
    %8367 = vmatprep.subr.mxu0 0.0
    %8368 = vmatpush1.msra.mxu0 %v4021
    %8369 = vmatprep.subr.mxu0 0.0
    %8370 = vmatpush1.msra.mxu0 %v4028
    %8371 = vmatprep.subr.mxu0 0.0
    %8372 = vmatpush1.msra.mxu0 %v4035
    %8373 = vmatprep.subr.mxu0 0.0
    %8374 = vmatpush1.msra.mxu0 %v4042
    %8375 = vmatprep.subr.mxu0 0.0
    %8376 = vmatpush1.msra.mxu0 %v4049
    %8377 = vmatprep.subr.mxu0 0.0
    %8378 = vmatpush1.msra.mxu0 %v4056
    %8379 = vmatprep.subr.mxu0 0.0
    %8380 = vmatpush1.msra.mxu0 %v4063
    %8381 = vmatprep.subr.mxu0 0.0
    %8382 = vmatpush1.msra.mxu0 %v4070
    %8383 = vmatprep.subr.mxu0 0.0
    %8384 = vmatpush1.msra.mxu0 %v4077
    %8385 = vmatprep.subr.mxu0 0.0
    %8386 = vmatpush1.msra.mxu0 %v4084
    %8387 = vmatprep.mubr.f32.mxu0 %v2726
    %8388 = vmatmul.mubr.f32.gmra.mrb[0].mxu0 %v2725
    %v8389 = vpop.f32.mrb[0].mxu0
    %v8390 = vadd.f32 %v8300, %v8389
    %v8391 = vpop.f32.mrb[0].mxu0
    %8392 = vmatprep.mubr.f32.mxu0 %v2732
    %8393 = vmatmul.mubr.f32.gmra.mrb[0].mxu0 %v2731
    %v8394 = vpop.f32.mrb[0].mxu0
    %v8395 = vadd.f32 %v8305, %v8394
    %v8396 = vpop.f32.mrb[0].mxu0
    %8397 = vmatprep.mubr.f32.mxu0 %v2738
    %8398 = vmatmul.mubr.f32.gmra.mrb[0].mxu0 %v2737
    %v8399 = vpop.f32.mrb[0].mxu0
    %v8400 = vadd.f32 %v8310, %v8399
    %v8401 = vpop.f32.mrb[0].mxu0
    %8402 = vmatprep.mubr.f32.mxu0 %v2744
    %8403 = vmatmul.mubr.f32.gmra.mrb[0].mxu0 %v2743
    %v8404 = vpop.f32.mrb[0].mxu0
    %v8405 = vadd.f32 %v8315, %v8404
    %v8406 = vpop.f32.mrb[0].mxu0
    %8407 = vmatprep.mubr.f32.mxu0 %v2750
    %8408 = vmatmul.mubr.f32.gmra.mrb[0].mxu0 %v2749
    %v8409 = vpop.f32.mrb[0].mxu0
    %v8410 = vadd.f32 %v8320, %v8409
    %v8411 = vpop.f32.mrb[0].mxu0
    %8412 = vdwg.mxu0
    %8413 = vmatprep.subr.mxu0 0.0
    %8414 = vmatpush1.msra.mxu0 %v4091
    %8415 = vmatprep.subr.mxu0 0.0
    %8416 = vmatpush1.msra.mxu0 %v4098
    %8417 = vmatprep.subr.mxu0 0.0
    %8418 = vmatpush1.msra.mxu0 %v4105
    %8419 = vmatprep.subr.mxu0 0.0
    %8420 = vmatpush1.msra.mxu0 %v4112
    %8421 = vmatprep.subr.mxu0 0.0
    %8422 = vmatpush1.msra.mxu0 %v4119
    %8423 = vmatprep.subr.mxu0 0.0
    %8424 = vmatpush1.msra.mxu0 %v4126
    %8425 = vmatprep.subr.mxu0 0.0
    %8426 = vmatpush1.msra.mxu0 %v4133
    %8427 = vmatprep.subr.mxu0 0.0
    %8428 = vmatpush1.msra.mxu0 %v4140
    %8429 = vmatprep.subr.mxu0 0.0
    %8430 = vmatpush1.msra.mxu0 %v4147
    %8431 = vmatprep.subr.mxu0 0.0
    %8432 = vmatpush1.msra.mxu0 %v4154
    %8433 = vmatprep.subr.mxu0 0.0
    %8434 = vmatpush1.msra.mxu0 %v4161
    %8435 = vmatprep.subr.mxu0 0.0
    %8436 = vmatpush1.msra.mxu0 %v4168
    %8437 = vmatprep.subr.mxu0 0.0
    %8438 = vmatpush1.msra.mxu0 %v4175
    %8439 = vmatprep.subr.mxu0 0.0
    %8440 = vmatpush1.msra.mxu0 %v4182
    %8441 = vmatprep.subr.mxu0 0.0
    %8442 = vmatpush1.msra.mxu0 %v4189
    %8443 = vmatprep.subr.mxu0 0.0
    %8444 = vmatpush1.msra.mxu0 %v4196
    %8445 = vmatprep.subr.mxu0 0.0
    %8446 = vmatpush1.msra.mxu0 %v4203
    %8447 = vmatprep.subr.mxu0 0.0
    %8448 = vmatpush1.msra.mxu0 %v4210
    %8449 = vmatprep.subr.mxu0 0.0
    %8450 = vmatpush1.msra.mxu0 %v4217
    %8451 = vmatprep.subr.mxu0 0.0
    %8452 = vmatpush1.msra.mxu0 %v4224
    %8453 = vmatprep.subr.mxu0 0.0
    %8454 = vmatpush1.msra.mxu0 %v4231
    %8455 = vmatprep.subr.mxu0 0.0
    %8456 = vmatpush1.msra.mxu0 %v4238
    %8457 = vmatprep.subr.mxu0 0.0
    %8458 = vmatpush1.msra.mxu0 %v4245
    %8459 = vmatprep.subr.mxu0 0.0
    %8460 = vmatpush1.msra.mxu0 %v4252
    %8461 = vmatprep.subr.mxu0 0.0
    %8462 = vmatpush1.msra.mxu0 %v4259
    %8463 = vmatprep.subr.mxu0 0.0
    %8464 = vmatpush1.msra.mxu0 %v4266
    %8465 = vmatprep.subr.mxu0 0.0
    %8466 = vmatpush1.msra.mxu0 %v4273
    %8467 = vmatprep.subr.mxu0 0.0
    %8468 = vmatpush1.msra.mxu0 %v4280
    %8469 = vmatprep.subr.mxu0 0.0
    %8470 = vmatpush1.msra.mxu0 %v4287
    %8471 = vmatprep.subr.mxu0 0.0
    %8472 = vmatpush1.msra.mxu0 %v4294
    %8473 = vmatprep.subr.mxu0 0.0
    %8474 = vmatpush1.msra.mxu0 %v4301
    %8475 = vmatprep.subr.mxu0 0.0
    %8476 = vmatpush1.msra.mxu0 %v4308
    %8477 = vmatprep.mubr.f32.mxu0 %v2728
    %8478 = vmatmul.mubr.f32.gmra.mrb[0].mxu0 %v2727
    %v8479 = vpop.f32.mrb[0].mxu0
    %v8480 = vadd.f32 %v8390, %v8479
    %v8481 = vpop.f32.mrb[0].mxu0
    %8482 = vmatprep.mubr.f32.mxu0 %v2734
    %8483 = vmatmul.mubr.f32.gmra.mrb[0].mxu0 %v2733
    %v8484 = vpop.f32.mrb[0].mxu0
    %v8485 = vadd.f32 %v8395, %v8484
    %v8486 = vpop.f32.mrb[0].mxu0
    %8487 = vmatprep.mubr.f32.mxu0 %v2740
    %8488 = vmatmul.mubr.f32.gmra.mrb[0].mxu0 %v2739
    %v8489 = vpop.f32.mrb[0].mxu0
    %v8490 = vadd.f32 %v8400, %v8489
    %v8491 = vpop.f32.mrb[0].mxu0
    %8492 = vmatprep.mubr.f32.mxu0 %v2746
    %8493 = vmatmul.mubr.f32.gmra.mrb[0].mxu0 %v2745
    %v8494 = vpop.f32.mrb[0].mxu0
    %v8495 = vadd.f32 %v8405, %v8494
    %v8496 = vpop.f32.mrb[0].mxu0
    %8497 = vmatprep.mubr.f32.mxu0 %v2752
    %8498 = vmatmul.mubr.f32.gmra.mrb[0].mxu0 %v2751
    %v8499 = vpop.f32.mrb[0].mxu0
    %v8500 = vadd.f32 %v8410, %v8499
    %v8501 = vpop.f32.mrb[0].mxu0
    %8502 = vdwg.mxu0
    %8503 = vmatprep.subr.mxu0 0.0
    %8504 = vmatpush1.msra.mxu0 %v4315
    %8505 = vmatprep.subr.mxu0 0.0
    %8506 = vmatpush1.msra.mxu0 %v4322
    %8507 = vmatprep.subr.mxu0 0.0
    %8508 = vmatpush1.msra.mxu0 %v4329
    %8509 = vmatprep.subr.mxu0 0.0
    %8510 = vmatpush1.msra.mxu0 %v4336
    %8511 = vmatprep.subr.mxu0 0.0
    %8512 = vmatpush1.msra.mxu0 %v4343
    %8513 = vmatprep.subr.mxu0 0.0
    %8514 = vmatpush1.msra.mxu0 %v4350
    %8515 = vmatprep.subr.mxu0 0.0
    %8516 = vmatpush1.msra.mxu0 %v4357
    %8517 = vmatprep.subr.mxu0 0.0
    %8518 = vmatpush1.msra.mxu0 %v4364
    %8519 = vmatprep.subr.mxu0 0.0
    %8520 = vmatpush1.msra.mxu0 %v4371
    %8521 = vmatprep.subr.mxu0 0.0
    %8522 = vmatpush1.msra.mxu0 %v4378
    %8523 = vmatprep.subr.mxu0 0.0
    %8524 = vmatpush1.msra.mxu0 %v4385
    %8525 = vmatprep.subr.mxu0 0.0
    %8526 = vmatpush1.msra.mxu0 %v4392
    %8527 = vmatprep.subr.mxu0 0.0
    %8528 = vmatpush1.msra.mxu0 %v4399
    %8529 = vmatprep.subr.mxu0 0.0
    %8530 = vmatpush1.msra.mxu0 %v4406
    %8531 = vmatprep.subr.mxu0 0.0
    %8532 = vmatpush1.msra.mxu0 %v4413
    %8533 = vmatprep.subr.mxu0 0.0
    %8534 = vmatpush1.msra.mxu0 %v4420
    %8535 = vmatprep.subr.mxu0 0.0
    %8536 = vmatpush1.msra.mxu0 %v4427
    %8537 = vmatprep.subr.mxu0 0.0
    %8538 = vmatpush1.msra.mxu0 %v4434
    %8539 = vmatprep.subr.mxu0 0.0
    %8540 = vmatpush1.msra.mxu0 %v4441
    %8541 = vmatprep.subr.mxu0 0.0
    %8542 = vmatpush1.msra.mxu0 %v4448
    %8543 = vmatprep.subr.mxu0 0.0
    %8544 = vmatpush1.msra.mxu0 %v4455
    %8545 = vmatprep.subr.mxu0 0.0
    %8546 = vmatpush1.msra.mxu0 %v4462
    %8547 = vmatprep.subr.mxu0 0.0
    %8548 = vmatpush1.msra.mxu0 %v4469
    %8549 = vmatprep.subr.mxu0 0.0
    %8550 = vmatpush1.msra.mxu0 %v4476
    %8551 = vmatprep.subr.mxu0 0.0
    %8552 = vmatpush1.msra.mxu0 %v4483
    %8553 = vmatprep.subr.mxu0 0.0
    %8554 = vmatpush1.msra.mxu0 %v4490
    %8555 = vmatprep.subr.mxu0 0.0
    %8556 = vmatpush1.msra.mxu0 %v4497
    %8557 = vmatprep.subr.mxu0 0.0
    %8558 = vmatpush1.msra.mxu0 %v4504
    %8559 = vmatprep.subr.mxu0 0.0
    %8560 = vmatpush1.msra.mxu0 %v4511
    %8561 = vmatprep.subr.mxu0 0.0
    %8562 = vmatpush1.msra.mxu0 %v4518
    %8563 = vmatprep.subr.mxu0 0.0
    %8564 = vmatpush1.msra.mxu0 %v4525
    %8565 = vmatprep.subr.mxu0 0.0
    %8566 = vmatpush1.msra.mxu0 %v4532
    %8567 = vmatprep.mubr.f32.mxu0 %v2895
    %8568 = vmatmul.mubr.f32.gmra.mrb[0].mxu0 %v2960
    %v8569 = vpop.f32.mrb[0].mxu0
    %v8570 = vadd.f32 %v8480, %v8569
    %v8571 = vpop.f32.mrb[0].mxu0
    %8572 = vmatprep.mubr.f32.mxu0 %v2901
    %8573 = vmatmul.mubr.f32.gmra.mrb[0].mxu0 %v2961
    %v8574 = vpop.f32.mrb[0].mxu0
    %v8575 = vadd.f32 %v8485, %v8574
    %v8576 = vpop.f32.mrb[0].mxu0
    %8577 = vmatprep.mubr.f32.mxu0 %v2907
    %8578 = vmatmul.mubr.f32.gmra.mrb[0].mxu0 %v2962
    %v8579 = vpop.f32.mrb[0].mxu0
    %v8580 = vadd.f32 %v8490, %v8579
    %v8581 = vpop.f32.mrb[0].mxu0
    %8582 = vmatprep.mubr.f32.mxu0 %v2913
    %8583 = vmatmul.mubr.f32.gmra.mrb[0].mxu0 %v2963
    %v8584 = vpop.f32.mrb[0].mxu0
    %v8585 = vadd.f32 %v8495, %v8584
    %v8586 = vpop.f32.mrb[0].mxu0
    %8587 = vmatprep.mubr.f32.mxu0 %v2919
    %8588 = vmatmul.mubr.f32.gmra.mrb[0].mxu0 %v2964
    %v8589 = vpop.f32.mrb[0].mxu0
    %v8590 = vadd.f32 %v8500, %v8589
    %v8591 = vpop.f32.mrb[0].mxu0
    %8592 = vdwg.mxu0
    %8593 = vmatprep.subr.mxu0 0.0
    %8594 = vmatpush1.msra.mxu0 %v4539
    %8595 = vmatprep.subr.mxu0 0.0
    %8596 = vmatpush1.msra.mxu0 %v4546
    %8597 = vmatprep.subr.mxu0 0.0
    %8598 = vmatpush1.msra.mxu0 %v4553
    %8599 = vmatprep.subr.mxu0 0.0
    %8600 = vmatpush1.msra.mxu0 %v4560
    %8601 = vmatprep.subr.mxu0 0.0
    %8602 = vmatpush1.msra.mxu0 %v4567
    %8603 = vmatprep.subr.mxu0 0.0
    %8604 = vmatpush1.msra.mxu0 %v4574
    %8605 = vmatprep.subr.mxu0 0.0
    %8606 = vmatpush1.msra.mxu0 %v4581
    %8607 = vmatprep.subr.mxu0 0.0
    %8608 = vmatpush1.msra.mxu0 %v4588
    %8609 = vmatprep.subr.mxu0 0.0
    %8610 = vmatpush1.msra.mxu0 %v4595
    %8611 = vmatprep.subr.mxu0 0.0
    %8612 = vmatpush1.msra.mxu0 %v4602
    %8613 = vmatprep.subr.mxu0 0.0
    %8614 = vmatpush1.msra.mxu0 %v4609
    %8615 = vmatprep.subr.mxu0 0.0
    %8616 = vmatpush1.msra.mxu0 %v4616
    %8617 = vmatprep.subr.mxu0 0.0
    %8618 = vmatpush1.msra.mxu0 %v4623
    %8619 = vmatprep.subr.mxu0 0.0
    %8620 = vmatpush1.msra.mxu0 %v4630
    %8621 = vmatprep.subr.mxu0 0.0
    %8622 = vmatpush1.msra.mxu0 %v4637
    %8623 = vmatprep.subr.mxu0 0.0
    %8624 = vmatpush1.msra.mxu0 %v4644
    %8625 = vmatprep.subr.mxu0 0.0
    %8626 = vmatpush1.msra.mxu0 %v4651
    %8627 = vmatprep.subr.mxu0 0.0
    %8628 = vmatpush1.msra.mxu0 %v4658
    %8629 = vmatprep.subr.mxu0 0.0
    %8630 = vmatpush1.msra.mxu0 %v4665
    %8631 = vmatprep.subr.mxu0 0.0
    %8632 = vmatpush1.msra.mxu0 %v4672
    %8633 = vmatprep.subr.mxu0 0.0
    %8634 = vmatpush1.msra.mxu0 %v4679
    %8635 = vmatprep.subr.mxu0 0.0
    %8636 = vmatpush1.msra.mxu0 %v4686
    %8637 = vmatprep.subr.mxu0 0.0
    %8638 = vmatpush1.msra.mxu0 %v4693
    %8639 = vmatprep.subr.mxu0 0.0
    %8640 = vmatpush1.msra.mxu0 %v4700
    %8641 = vmatprep.subr.mxu0 0.0
    %8642 = vmatpush1.msra.mxu0 %v4707
    %8643 = vmatprep.subr.mxu0 0.0
    %8644 = vmatpush1.msra.mxu0 %v4714
    %8645 = vmatprep.subr.mxu0 0.0
    %8646 = vmatpush1.msra.mxu0 %v4721
    %8647 = vmatprep.subr.mxu0 0.0
    %8648 = vmatpush1.msra.mxu0 %v4728
    %8649 = vmatprep.subr.mxu0 0.0
    %8650 = vmatpush1.msra.mxu0 %v4735
    %8651 = vmatprep.subr.mxu0 0.0
    %8652 = vmatpush1.msra.mxu0 %v4742
    %8653 = vmatprep.subr.mxu0 0.0
    %8654 = vmatpush1.msra.mxu0 %v4749
    %8655 = vmatprep.subr.mxu0 0.0
    %8656 = vmatpush1.msra.mxu0 %v4756
    %8657 = vmatprep.mubr.f32.mxu0 %v2897
    %8658 = vmatmul.mubr.f32.gmra.mrb[0].mxu0 %v2896
    %v8659 = vpop.f32.mrb[0].mxu0
    %v8660 = vadd.f32 %v8570, %v8659
    %v8661 = vpop.f32.mrb[0].mxu0
    %8662 = vmatprep.mubr.f32.mxu0 %v2903
    %8663 = vmatmul.mubr.f32.gmra.mrb[0].mxu0 %v2902
    %v8664 = vpop.f32.mrb[0].mxu0
    %v8665 = vadd.f32 %v8575, %v8664
    %v8666 = vpop.f32.mrb[0].mxu0
    %8667 = vmatprep.mubr.f32.mxu0 %v2909
    %8668 = vmatmul.mubr.f32.gmra.mrb[0].mxu0 %v2908
    %v8669 = vpop.f32.mrb[0].mxu0
    %v8670 = vadd.f32 %v8580, %v8669
    %v8671 = vpop.f32.mrb[0].mxu0
    %8672 = vmatprep.mubr.f32.mxu0 %v2915
    %8673 = vmatmul.mubr.f32.gmra.mrb[0].mxu0 %v2914
    %v8674 = vpop.f32.mrb[0].mxu0
    %v8675 = vadd.f32 %v8585, %v8674
    %v8676 = vpop.f32.mrb[0].mxu0
    %8677 = vmatprep.mubr.f32.mxu0 %v2921
    %8678 = vmatmul.mubr.f32.gmra.mrb[0].mxu0 %v2920
    %v8679 = vpop.f32.mrb[0].mxu0
    %v8680 = vadd.f32 %v8590, %v8679
    %v8681 = vpop.f32.mrb[0].mxu0
    %8682 = vdwg.mxu0
    %8683 = vmatprep.subr.mxu0 0.0
    %8684 = vmatpush1.msra.mxu0 %v4763
    %8685 = vmatprep.subr.mxu0 0.0
    %8686 = vmatpush1.msra.mxu0 %v4770
    %8687 = vmatprep.subr.mxu0 0.0
    %8688 = vmatpush1.msra.mxu0 %v4777
    %8689 = vmatprep.subr.mxu0 0.0
    %8690 = vmatpush1.msra.mxu0 %v4784
    %8691 = vmatprep.subr.mxu0 0.0
    %8692 = vmatpush1.msra.mxu0 %v4791
    %8693 = vmatprep.subr.mxu0 0.0
    %8694 = vmatpush1.msra.mxu0 %v4798
    %8695 = vmatprep.subr.mxu0 0.0
    %8696 = vmatpush1.msra.mxu0 %v4805
    %8697 = vmatprep.subr.mxu0 0.0
    %8698 = vmatpush1.msra.mxu0 %v4812
    %8699 = vmatprep.subr.mxu0 0.0
    %8700 = vmatpush1.msra.mxu0 %v4819
    %8701 = vmatprep.subr.mxu0 0.0
    %8702 = vmatpush1.msra.mxu0 %v4826
    %8703 = vmatprep.subr.mxu0 0.0
    %8704 = vmatpush1.msra.mxu0 %v4833
    %8705 = vmatprep.subr.mxu0 0.0
    %8706 = vmatpush1.msra.mxu0 %v4840
    %8707 = vmatprep.subr.mxu0 0.0
    %8708 = vmatpush1.msra.mxu0 %v4847
    %8709 = vmatprep.subr.mxu0 0.0
    %8710 = vmatpush1.msra.mxu0 %v4854
    %8711 = vmatprep.subr.mxu0 0.0
    %8712 = vmatpush1.msra.mxu0 %v4861
    %8713 = vmatprep.subr.mxu0 0.0
    %8714 = vmatpush1.msra.mxu0 %v4868
    %8715 = vmatprep.subr.mxu0 0.0
    %8716 = vmatpush1.msra.mxu0 %v4875
    %8717 = vmatprep.subr.mxu0 0.0
    %8718 = vmatpush1.msra.mxu0 %v4882
    %8719 = vmatprep.subr.mxu0 0.0
    %8720 = vmatpush1.msra.mxu0 %v4889
    %8721 = vmatprep.subr.mxu0 0.0
    %8722 = vmatpush1.msra.mxu0 %v4896
    %8723 = vmatprep.subr.mxu0 0.0
    %8724 = vmatpush1.msra.mxu0 %v4903
    %8725 = vmatprep.subr.mxu0 0.0
    %8726 = vmatpush1.msra.mxu0 %v4910
    %8727 = vmatprep.subr.mxu0 0.0
    %8728 = vmatpush1.msra.mxu0 %v4917
    %8729 = vmatprep.subr.mxu0 0.0
    %8730 = vmatpush1.msra.mxu0 %v4924
    %8731 = vmatprep.subr.mxu0 0.0
    %8732 = vmatpush1.msra.mxu0 %v4931
    %8733 = vmatprep.subr.mxu0 0.0
    %8734 = vmatpush1.msra.mxu0 %v4938
    %8735 = vmatprep.subr.mxu0 0.0
    %8736 = vmatpush1.msra.mxu0 %v4945
    %8737 = vmatprep.subr.mxu0 0.0
    %8738 = vmatpush1.msra.mxu0 %v4952
    %8739 = vmatprep.subr.mxu0 0.0
    %8740 = vmatpush1.msra.mxu0 %v4959
    %8741 = vmatprep.subr.mxu0 0.0
    %8742 = vmatpush1.msra.mxu0 %v4966
    %8743 = vmatprep.subr.mxu0 0.0
    %8744 = vmatpush1.msra.mxu0 %v4973
    %8745 = vmatprep.subr.mxu0 0.0
    %8746 = vmatpush1.msra.mxu0 %v4980
    %8747 = vmatprep.mubr.f32.mxu0 %v2899
    %8748 = vmatmul.mubr.f32.gmra.mrb[0].mxu0 %v2898
    %v8749 = vpop.f32.mrb[0].mxu0
    %v8750 = vadd.f32 %v8660, %v8749
    %v8751 = vpop.f32.mrb[0].mxu0
    %8752 = vmatprep.mubr.f32.mxu0 %v2905
    %8753 = vmatmul.mubr.f32.gmra.mrb[0].mxu0 %v2904
    %v8754 = vpop.f32.mrb[0].mxu0
    %v8755 = vadd.f32 %v8665, %v8754
    %v8756 = vpop.f32.mrb[0].mxu0
    %8757 = vmatprep.mubr.f32.mxu0 %v2911
    %8758 = vmatmul.mubr.f32.gmra.mrb[0].mxu0 %v2910
    %v8759 = vpop.f32.mrb[0].mxu0
    %v8760 = vadd.f32 %v8670, %v8759
    %v8761 = vpop.f32.mrb[0].mxu0
    %8762 = vmatprep.mubr.f32.mxu0 %v2917
    %8763 = vmatmul.mubr.f32.gmra.mrb[0].mxu0 %v2916
    %v8764 = vpop.f32.mrb[0].mxu0
    %v8765 = vadd.f32 %v8675, %v8764
    %v8766 = vpop.f32.mrb[0].mxu0
    %8767 = vmatprep.mubr.f32.mxu0 %v2923
    %8768 = vmatmul.mubr.f32.gmra.mrb[0].mxu0 %v2922
    %v8769 = vpop.f32.mrb[0].mxu0
    %v8770 = vadd.f32 %v8680, %v8769
    %v8771 = vpop.f32.mrb[0].mxu0
    %8772 = vdwg.mxu0
    %8773 = vmatprep.subr.mxu0 0.0
    %8774 = vmatpush1.msra.mxu0 %v4987
    %8775 = vmatprep.subr.mxu0 0.0
    %8776 = vmatpush1.msra.mxu0 %v4994
    %8777 = vmatprep.subr.mxu0 0.0
    %8778 = vmatpush1.msra.mxu0 %v5001
    %8779 = vmatprep.subr.mxu0 0.0
    %8780 = vmatpush1.msra.mxu0 %v5008
    %8781 = vmatprep.subr.mxu0 0.0
    %8782 = vmatpush1.msra.mxu0 %v5015
    %8783 = vmatprep.subr.mxu0 0.0
    %8784 = vmatpush1.msra.mxu0 %v5022
    %8785 = vmatprep.subr.mxu0 0.0
    %8786 = vmatpush1.msra.mxu0 %v5029
    %8787 = vmatprep.subr.mxu0 0.0
    %8788 = vmatpush1.msra.mxu0 %v5036
    %8789 = vmatprep.subr.mxu0 0.0
    %8790 = vmatpush1.msra.mxu0 %v5043
    %8791 = vmatprep.subr.mxu0 0.0
    %8792 = vmatpush1.msra.mxu0 %v5050
    %8793 = vmatprep.subr.mxu0 0.0
    %8794 = vmatpush1.msra.mxu0 %v5057
    %8795 = vmatprep.subr.mxu0 0.0
    %8796 = vmatpush1.msra.mxu0 %v5064
    %8797 = vmatprep.subr.mxu0 0.0
    %8798 = vmatpush1.msra.mxu0 0.0
    %8799 = vmatprep.subr.mxu0 0.0
    %8800 = vmatpush1.msra.mxu0 0.0
    %8801 = vmatprep.subr.mxu0 0.0
    %8802 = vmatpush1.msra.mxu0 0.0
    %8803 = vmatprep.subr.mxu0 0.0
    %8804 = vmatpush1.msra.mxu0 0.0
    %8805 = vmatprep.subr.mxu0 0.0
    %8806 = vmatpush1.msra.mxu0 0.0
    %8807 = vmatprep.subr.mxu0 0.0
    %8808 = vmatpush1.msra.mxu0 0.0
    %8809 = vmatprep.subr.mxu0 0.0
    %8810 = vmatpush1.msra.mxu0 0.0
    %8811 = vmatprep.subr.mxu0 0.0
    %8812 = vmatpush1.msra.mxu0 0.0
    %8813 = vmatprep.subr.mxu0 0.0
    %8814 = vmatpush1.msra.mxu0 0.0
    %8815 = vmatprep.subr.mxu0 0.0
    %8816 = vmatpush1.msra.mxu0 0.0
    %8817 = vmatprep.subr.mxu0 0.0
    %8818 = vmatpush1.msra.mxu0 0.0
    %8819 = vmatprep.subr.mxu0 0.0
    %8820 = vmatpush1.msra.mxu0 0.0
    %8821 = vmatprep.subr.mxu0 0.0
    %8822 = vmatpush1.msra.mxu0 0.0
    %8823 = vmatprep.subr.mxu0 0.0
    %8824 = vmatpush1.msra.mxu0 0.0
    %8825 = vmatprep.subr.mxu0 0.0
    %8826 = vmatpush1.msra.mxu0 0.0
    %8827 = vmatprep.subr.mxu0 0.0
    %8828 = vmatpush1.msra.mxu0 0.0
    %8829 = vmatprep.subr.mxu0 0.0
    %8830 = vmatpush1.msra.mxu0 0.0
    %8831 = vmatprep.subr.mxu0 0.0
    %8832 = vmatpush1.msra.mxu0 0.0
    %8833 = vmatprep.subr.mxu0 0.0
    %8834 = vmatpush1.msra.mxu0 0.0
    %8835 = vmatprep.subr.mxu0 0.0
    %8836 = vmatpush1.msra.mxu0 0.0
    %8837 = vmatprep.mubr.f32.mxu0 0.0
    %8838 = vmatmul.mubr.f32.gmra.mrb[0].mxu0 %v5103
    %v8839 = vpop.f32.mrb[0].mxu0
    %v8840 = vadd.f32 %v8750, %v8839
    %v8841 = vpop.f32.mrb[0].mxu0
    %8842 = vmatprep.mubr.f32.mxu0 0.0
    %8843 = vmatmul.mubr.f32.gmra.mrb[0].mxu0 %v5105
    %v8844 = vpop.f32.mrb[0].mxu0
    %v8845 = vadd.f32 %v8755, %v8844
    %v8846 = vpop.f32.mrb[0].mxu0
    %8847 = vmatprep.mubr.f32.mxu0 0.0
    %8848 = vmatmul.mubr.f32.gmra.mrb[0].mxu0 %v5107
    %v8849 = vpop.f32.mrb[0].mxu0
    %v8850 = vadd.f32 %v8760, %v8849
    %v8851 = vpop.f32.mrb[0].mxu0
    %8852 = vmatprep.mubr.f32.mxu0 0.0
    %8853 = vmatmul.mubr.f32.gmra.mrb[0].mxu0 %v5109
    %v8854 = vpop.f32.mrb[0].mxu0
    %v8855 = vadd.f32 %v8765, %v8854
    %v8856 = vpop.f32.mrb[0].mxu0
    %8857 = vmatprep.mubr.f32.mxu0 0.0
    %8858 = vmatmul.mubr.f32.gmra.mrb[0].mxu0 %v5111
    %v8859 = vpop.f32.mrb[0].mxu0
    %v8860 = vadd.f32 %v8770, %v8859
    %v8861 = vpop.f32.mrb[0].mxu0
    %8862 = vdwg.mxu0
    %v8863 = vmax.f32 %v6035, 0.0
    %v8864 = vmax.f32 %v6037, 0.0
    %v8865 = vmax.f32 %v6985, 0.0
    %v8866 = vmax.f32 %v6987, 0.0
    %v8867 = vmax.f32 %v7935, 0.0
    %v8868 = vmax.f32 %v7937, 0.0
    %v8869 = vmax.f32 %v8840, 0.0
    %v8870 = vmax.f32 %v6041, 0.0
    %v8871 = vmax.f32 %v6043, 0.0
    %v8872 = vmax.f32 %v6991, 0.0
    %v8873 = vmax.f32 %v6993, 0.0
    %v8874 = vmax.f32 %v7941, 0.0
    %v8875 = vmax.f32 %v7943, 0.0
    %v8876 = vmax.f32 %v8845, 0.0
    %v8877 = vmax.f32 %v6047, 0.0
    %v8878 = vmax.f32 %v6049, 0.0
    %v8879 = vmax.f32 %v6997, 0.0
    %v8880 = vmax.f32 %v6999, 0.0
    %v8881 = vmax.f32 %v7947, 0.0
    %v8882 = vmax.f32 %v7949, 0.0
    %v8883 = vmax.f32 %v8850, 0.0
    %v8884 = vmax.f32 %v6053, 0.0
    %v8885 = vmax.f32 %v6055, 0.0
    %v8886 = vmax.f32 %v7003, 0.0
    %v8887 = vmax.f32 %v7005, 0.0
    %v8888 = vmax.f32 %v7953, 0.0
    %v8889 = vmax.f32 %v7955, 0.0
    %v8890 = vmax.f32 %v8855, 0.0
    %v8891 = vmax.f32 %v6059, 0.0
    %v8892 = vmax.f32 %v6061, 0.0
    %v8893 = vmax.f32 %v7009, 0.0
    %v8894 = vmax.f32 %v7011, 0.0
    %v8895 = vmax.f32 %v7959, 0.0
    %v8896 = vmax.f32 %v7961, 0.0
    %v8897 = vmax.f32 %v8860, 0.0
    %8933 = vrot.lane.b32.xlu0 %v8863, 127
    %v8934 = vpop.permute.xlu0 %8933
    %8935 = vrot.lane.b32.xlu0 %v8864, 127
    %v8936 = vpop.permute.xlu0 %8935
    %8937 = vrot.lane.b32.xlu0 %v8865, 127
    %v8938 = vpop.permute.xlu0 %8937
    %8939 = vrot.lane.b32.xlu0 %v8866, 127
    %v8940 = vpop.permute.xlu0 %8939
    %8941 = vrot.lane.b32.xlu0 %v8867, 127
    %v8942 = vpop.permute.xlu0 %8941
    %8943 = vrot.lane.b32.xlu0 %v8868, 127
    %v8944 = vpop.permute.xlu0 %8943
    %8945 = vrot.lane.b32.xlu0 %v8869, 127
    %v8946 = vpop.permute.xlu0 %8945
    %8947 = vrot.lane.b32.xlu0 %v8870, 127
    %v8948 = vpop.permute.xlu0 %8947
    %8949 = vrot.lane.b32.xlu0 %v8871, 127
    %v8950 = vpop.permute.xlu0 %8949
    %8951 = vrot.lane.b32.xlu0 %v8872, 127
    %v8952 = vpop.permute.xlu0 %8951
    %8953 = vrot.lane.b32.xlu0 %v8873, 127
    %v8954 = vpop.permute.xlu0 %8953
    %8955 = vrot.lane.b32.xlu0 %v8874, 127
    %v8956 = vpop.permute.xlu0 %8955
    %8957 = vrot.lane.b32.xlu0 %v8875, 127
    %v8958 = vpop.permute.xlu0 %8957
    %8959 = vrot.lane.b32.xlu0 %v8876, 127
    %v8960 = vpop.permute.xlu0 %8959
    %8961 = vrot.lane.b32.xlu0 %v8877, 127
    %v8962 = vpop.permute.xlu0 %8961
    %8963 = vrot.lane.b32.xlu0 %v8878, 127
    %v8964 = vpop.permute.xlu0 %8963
    %8965 = vrot.lane.b32.xlu0 %v8879, 127
    %v8966 = vpop.permute.xlu0 %8965
    %8967 = vrot.lane.b32.xlu0 %v8880, 127
    %v8968 = vpop.permute.xlu0 %8967
    %8969 = vrot.lane.b32.xlu0 %v8881, 127
    %v8970 = vpop.permute.xlu0 %8969
    %8971 = vrot.lane.b32.xlu0 %v8882, 127
    %v8972 = vpop.permute.xlu0 %8971
    %8973 = vrot.lane.b32.xlu0 %v8883, 127
    %v8974 = vpop.permute.xlu0 %8973
    %8975 = vrot.lane.b32.xlu0 %v8884, 127
    %v8976 = vpop.permute.xlu0 %8975
    %8977 = vrot.lane.b32.xlu0 %v8885, 127
    %v8978 = vpop.permute.xlu0 %8977
    %8979 = vrot.lane.b32.xlu0 %v8886, 127
    %v8980 = vpop.permute.xlu0 %8979
    %8981 = vrot.lane.b32.xlu0 %v8887, 127
    %v8982 = vpop.permute.xlu0 %8981
    %8983 = vrot.lane.b32.xlu0 %v8888, 127
    %v8984 = vpop.permute.xlu0 %8983
    %8985 = vrot.lane.b32.xlu0 %v8889, 127
    %v8986 = vpop.permute.xlu0 %8985
    %8987 = vrot.lane.b32.xlu0 %v8890, 127
    %v8988 = vpop.permute.xlu0 %8987
    %8989 = vrot.lane.b32.xlu0 %v8891, 127
    %v8990 = vpop.permute.xlu0 %8989
    %8991 = vrot.lane.b32.xlu0 %v8892, 127
    %v8992 = vpop.permute.xlu0 %8991
    %8993 = vrot.lane.b32.xlu0 %v8893, 127
    %v8994 = vpop.permute.xlu0 %8993
    %8995 = vrot.lane.b32.xlu0 %v8894, 127
    %v8996 = vpop.permute.xlu0 %8995
    %8997 = vrot.lane.b32.xlu0 %v8895, 127
    %v8998 = vpop.permute.xlu0 %8997
    %8999 = vrot.lane.b32.xlu0 %v8896, 127
    %v9000 = vpop.permute.xlu0 %8999
    %9001 = vrot.lane.b32.xlu0 %v8897, 127
    %v9002 = vpop.permute.xlu0 %9001
    %v9003 = vsel %vm2154, %v8934, %v8936
    %v9004 = vsel %vm2154, %v8936, %v8938
    %v9005 = vsel %vm2154, %v8938, %v8940
    %v9006 = vsel %vm2154, %v8940, %v8942
    %v9007 = vsel %vm2154, %v8942, %v8944
    %v9008 = vsel %vm2154, %v8944, %v8946
    %v9009 = vsel %vm2154, %v8948, %v8950
    %v9010 = vsel %vm2154, %v8950, %v8952
    %v9011 = vsel %vm2154, %v8952, %v8954
    %v9012 = vsel %vm2154, %v8954, %v8956
    %v9013 = vsel %vm2154, %v8956, %v8958
    %v9014 = vsel %vm2154, %v8958, %v8960
    %v9015 = vsel %vm2154, %v8962, %v8964
    %v9016 = vsel %vm2154, %v8964, %v8966
    %v9017 = vsel %vm2154, %v8966, %v8968
    %v9018 = vsel %vm2154, %v8968, %v8970
    %v9019 = vsel %vm2154, %v8970, %v8972
    %v9020 = vsel %vm2154, %v8972, %v8974
    %v9021 = vsel %vm2154, %v8976, %v8978
    %v9022 = vsel %vm2154, %v8978, %v8980
    %v9023 = vsel %vm2154, %v8980, %v8982
    %v9024 = vsel %vm2154, %v8982, %v8984
    %v9025 = vsel %vm2154, %v8984, %v8986
    %v9026 = vsel %vm2154, %v8986, %v8988
    %v9027 = vsel %vm2154, %v8990, %v8992
    %v9028 = vsel %vm2154, %v8992, %v8994
    %v9029 = vsel %vm2154, %v8994, %v8996
    %v9030 = vsel %vm2154, %v8996, %v8998
    %v9031 = vsel %vm2154, %v8998, %v9000
    %v9032 = vsel %vm2154, %v9000, %v9002
    %9068 = vrot.lane.b32.xlu0 %v8863, 31
    %v9069 = vpop.permute.xlu0 %9068
    %9070 = vrot.lane.b32.xlu0 %v8870, 31
    %v9071 = vpop.permute.xlu0 %9070
    %9072 = vrot.lane.b32.xlu0 %v8877, 31
    %v9073 = vpop.permute.xlu0 %9072
    %9074 = vrot.lane.b32.xlu0 %v8884, 31
    %v9075 = vpop.permute.xlu0 %9074
    %9076 = vrot.lane.b32.xlu0 %v8891, 31
    %v9077 = vpop.permute.xlu0 %9076
    %v9083 = vsel %vm2235, %v8946, %v9069
    %v9084 = vsel %vm2235, %v8960, %v9071
    %v9085 = vsel %vm2235, %v8974, %v9073
    %v9086 = vsel %vm2235, %v8988, %v9075
    %v9087 = vsel %vm2235, %v9002, %v9077
    %v9088 = vmax.f32 %v8863, %v9003
    %v9089 = vmax.f32 %v8864, %v9004
    %v9090 = vmax.f32 %v8865, %v9005
    %v9091 = vmax.f32 %v8866, %v9006
    %v9092 = vmax.f32 %v8867, %v9007
    %v9093 = vmax.f32 %v8868, %v9008
    %v9094 = vmax.f32 %v8869, %v9083
    %v9095 = vmax.f32 %v8870, %v9009
    %v9096 = vmax.f32 %v8871, %v9010
    %v9097 = vmax.f32 %v8872, %v9011
    %v9098 = vmax.f32 %v8873, %v9012
    %v9099 = vmax.f32 %v8874, %v9013
    %v9100 = vmax.f32 %v8875, %v9014
    %v9101 = vmax.f32 %v8876, %v9084
    %v9102 = vmax.f32 %v8877, %v9015
    %v9103 = vmax.f32 %v8878, %v9016
    %v9104 = vmax.f32 %v8879, %v9017
    %v9105 = vmax.f32 %v8880, %v9018
    %v9106 = vmax.f32 %v8881, %v9019
    %v9107 = vmax.f32 %v8882, %v9020
    %v9108 = vmax.f32 %v8883, %v9085
    %v9109 = vmax.f32 %v8884, %v9021
    %v9110 = vmax.f32 %v8885, %v9022
    %v9111 = vmax.f32 %v8886, %v9023
    %v9112 = vmax.f32 %v8887, %v9024
    %v9113 = vmax.f32 %v8888, %v9025
    %v9114 = vmax.f32 %v8889, %v9026
    %v9115 = vmax.f32 %v8890, %v9086
    %v9116 = vmax.f32 %v8891, %v9027
    %v9117 = vmax.f32 %v8892, %v9028
    %v9118 = vmax.f32 %v8893, %v9029
    %v9119 = vmax.f32 %v8894, %v9030
    %v9120 = vmax.f32 %v8895, %v9031
    %v9121 = vmax.f32 %v8896, %v9032
    %v9122 = vmax.f32 %v8897, %v9087
    %v9158 = vrot.slane %v9088, 1
    %v9159 = vrot.slane %v9095, 1
    %v9160 = vsel %vm2482, %v9158, %v9159
    %v9161 = vrot.slane %v9089, 1
    %v9162 = vrot.slane %v9096, 1
    %v9163 = vsel %vm2482, %v9161, %v9162
    %v9164 = vrot.slane %v9090, 1
    %v9165 = vrot.slane %v9097, 1
    %v9166 = vsel %vm2482, %v9164, %v9165
    %v9167 = vrot.slane %v9091, 1
    %v9168 = vrot.slane %v9098, 1
    %v9169 = vsel %vm2482, %v9167, %v9168
    %v9170 = vrot.slane %v9092, 1
    %v9171 = vrot.slane %v9099, 1
    %v9172 = vsel %vm2482, %v9170, %v9171
    %v9173 = vrot.slane %v9093, 1
    %v9174 = vrot.slane %v9100, 1
    %v9175 = vsel %vm2482, %v9173, %v9174
    %v9176 = vrot.slane %v9094, 1
    %v9177 = vrot.slane %v9101, 1
    %v9178 = vsel %vm2482, %v9176, %v9177
    %v9179 = vrot.slane %v9102, 1
    %v9180 = vsel %vm2482, %v9159, %v9179
    %v9181 = vrot.slane %v9103, 1
    %v9182 = vsel %vm2482, %v9162, %v9181
    %v9183 = vrot.slane %v9104, 1
    %v9184 = vsel %vm2482, %v9165, %v9183
    %v9185 = vrot.slane %v9105, 1
    %v9186 = vsel %vm2482, %v9168, %v9185
    %v9187 = vrot.slane %v9106, 1
    %v9188 = vsel %vm2482, %v9171, %v9187
    %v9189 = vrot.slane %v9107, 1
    %v9190 = vsel %vm2482, %v9174, %v9189
    %v9191 = vrot.slane %v9108, 1
    %v9192 = vsel %vm2482, %v9177, %v9191
    %v9193 = vrot.slane %v9109, 1
    %v9194 = vsel %vm2482, %v9179, %v9193
    %v9195 = vrot.slane %v9110, 1
    %v9196 = vsel %vm2482, %v9181, %v9195
    %v9197 = vrot.slane %v9111, 1
    %v9198 = vsel %vm2482, %v9183, %v9197
    %v9199 = vrot.slane %v9112, 1
    %v9200 = vsel %vm2482, %v9185, %v9199
    %v9201 = vrot.slane %v9113, 1
    %v9202 = vsel %vm2482, %v9187, %v9201
    %v9203 = vrot.slane %v9114, 1
    %v9204 = vsel %vm2482, %v9189, %v9203
    %v9205 = vrot.slane %v9115, 1
    %v9206 = vsel %vm2482, %v9191, %v9205
    %v9207 = vrot.slane %v9116, 1
    %v9208 = vsel %vm2482, %v9193, %v9207
    %v9209 = vrot.slane %v9117, 1
    %v9210 = vsel %vm2482, %v9195, %v9209
    %v9211 = vrot.slane %v9118, 1
    %v9212 = vsel %vm2482, %v9197, %v9211
    %v9213 = vrot.slane %v9119, 1
    %v9214 = vsel %vm2482, %v9199, %v9213
    %v9215 = vrot.slane %v9120, 1
    %v9216 = vsel %vm2482, %v9201, %v9215
    %v9217 = vrot.slane %v9121, 1
    %v9218 = vsel %vm2482, %v9203, %v9217
    %v9219 = vrot.slane %v9122, 1
    %v9220 = vsel %vm2482, %v9205, %v9219
    %v9263 = vsel %vm2482, %v9207, %v9158
    %v9264 = vsel %vm2482, %v9209, %v9161
    %v9265 = vsel %vm2482, %v9211, %v9164
    %v9266 = vsel %vm2482, %v9213, %v9167
    %v9267 = vsel %vm2482, %v9215, %v9170
    %v9268 = vsel %vm2482, %v9217, %v9173
    %v9269 = vsel %vm2482, %v9219, %v9176
    %v9270 = vmax.f32 %v9088, %v9160
    %v9271 = vmax.f32 %v9089, %v9163
    %v9272 = vmax.f32 %v9090, %v9166
    %v9273 = vmax.f32 %v9091, %v9169
    %v9274 = vmax.f32 %v9092, %v9172
    %v9275 = vmax.f32 %v9093, %v9175
    %v9276 = vmax.f32 %v9094, %v9178
    %v9277 = vmax.f32 %v9095, %v9180
    %v9278 = vmax.f32 %v9096, %v9182
    %v9279 = vmax.f32 %v9097, %v9184
    %v9280 = vmax.f32 %v9098, %v9186
    %v9281 = vmax.f32 %v9099, %v9188
    %v9282 = vmax.f32 %v9100, %v9190
    %v9283 = vmax.f32 %v9101, %v9192
    %v9284 = vmax.f32 %v9102, %v9194
    %v9285 = vmax.f32 %v9103, %v9196
    %v9286 = vmax.f32 %v9104, %v9198
    %v9287 = vmax.f32 %v9105, %v9200
    %v9288 = vmax.f32 %v9106, %v9202
    %v9289 = vmax.f32 %v9107, %v9204
    %v9290 = vmax.f32 %v9108, %v9206
    %v9291 = vmax.f32 %v9109, %v9208
    %v9292 = vmax.f32 %v9110, %v9210
    %v9293 = vmax.f32 %v9111, %v9212
    %v9294 = vmax.f32 %v9112, %v9214
    %v9295 = vmax.f32 %v9113, %v9216
    %v9296 = vmax.f32 %v9114, %v9218
    %v9297 = vmax.f32 %v9115, %v9220
    %v9298 = vmax.f32 %v9116, %v9263
    %v9299 = vmax.f32 %v9117, %v9264
    %v9300 = vmax.f32 %v9118, %v9265
    %v9301 = vmax.f32 %v9119, %v9266
    %v9302 = vmax.f32 %v9120, %v9267
    %v9303 = vmax.f32 %v9121, %v9268
    %v9304 = vmax.f32 %v9122, %v9269
    %v9305 = vld [vmem:[%s8] sm:$0xff]
    %v9306 = vld [vmem:[%s8 + $0x8] sm:$0xff]
    %v9307 = vld [vmem:[%s8 + $0x10] sm:$0xff]
    %v9308 = vld [vmem:[%s8 + $0x18] sm:$0xff]
    %v9309 = vld [vmem:[%s8 + $0x20] sm:$0xff]
    %v9310 = vld [vmem:[%s8 + $0x28] sm:$0xff]
    %v9311 = vld [vmem:[%s8 + $0x30] sm:$0xff]
    %v9312 = vld [vmem:[%s8 + $0x38] sm:$0xff]
    %v9313 = vld [vmem:[%s8 + $0x40] sm:$0xff]
    %v9314 = vld [vmem:[%s8 + $0x48] sm:$0xff]
    %v9315 = vld [vmem:[%s8 + $0x50] sm:$0xff]
    %v9316 = vld [vmem:[%s8 + $0x58] sm:$0xff]
    %v9317 = vld [vmem:[%s8 + $0x60] sm:$0xff]
    %v9318 = vld [vmem:[%s8 + $0x68] sm:$0xff]
    %v9319 = vld [vmem:[%s8 + $0x70] sm:$0xff]
    %v9320 = vld [vmem:[%s8 + $0x78] sm:$0xff]
    %v9321 = vld [vmem:[%s8 + $0x80] sm:$0xff]
    %v9322 = vld [vmem:[%s8 + $0x88] sm:$0xff]
    %v9323 = vld [vmem:[%s8 + $0x90] sm:$0xff]
    %v9324 = vld [vmem:[%s8 + $0x98] sm:$0xff]
    %v9325 = vld [vmem:[%s8 + $0xa0] sm:$0xff]
    %v9326 = vld [vmem:[%s8 + $0xa8] sm:$0xff]
    %v9327 = vld [vmem:[%s8 + $0xb0] sm:$0xff]
    %v9328 = vld [vmem:[%s8 + $0xb8] sm:$0xff]
    %v9329 = vld [vmem:[%s8 + $0xc0] sm:$0xff]
    %v9330 = vld [vmem:[%s8 + $0xc8] sm:$0xff]
    %v9331 = vld [vmem:[%s8 + $0xd0] sm:$0xff]
    %v9332 = vld [vmem:[%s8 + $0xd8] sm:$0xff]
    %v9333 = vld [vmem:[%s8 + $0xe0] sm:$0xff]
    %v9334 = vld [vmem:[%s8 + $0xe8] sm:$0xff]
    %v9335 = vld [vmem:[%s8 + $0xf0] sm:$0xff]
    %v9336 = vld [vmem:[%s8 + $0xf8] sm:$0xff]
    %v9337 = vld [vmem:[%s8 + $0x100] sm:$0xff]
    %v9338 = vld [vmem:[%s8 + $0x108] sm:$0xff]
    %v9339 = vld [vmem:[%s8 + $0x110] sm:$0xff]
    %v9340 = vld [vmem:[%s8 + $0x118] sm:$0xff]
    %v9341 = vld [vmem:[%s8 + $0x120] sm:$0xff]
    %v9342 = vld [vmem:[%s8 + $0x128] sm:$0xff]
    %v9343 = vld [vmem:[%s8 + $0x130] sm:$0xff]
    %v9344 = vld [vmem:[%s8 + $0x138] sm:$0xff]
    %v9345 = vld [vmem:[%s8 + $0x140] sm:$0xff]
    %v9346 = vld [vmem:[%s8 + $0x148] sm:$0xff]
    %v9347 = vld [vmem:[%s8 + $0x150] sm:$0xff]
    %v9348 = vld [vmem:[%s8 + $0x158] sm:$0xff]
    %v9349 = vld [vmem:[%s8 + $0x160] sm:$0xff]
    %v9350 = vld [vmem:[%s8 + $0x168] sm:$0xff]
    %v9351 = vld [vmem:[%s8 + $0x170] sm:$0xff]
    %v9352 = vld [vmem:[%s8 + $0x178] sm:$0xff]
    %v9353 = vld [vmem:[%s8 + $0x180] sm:$0xff]
    %v9354 = vld [vmem:[%s8 + $0x188] sm:$0xff]
    %v9355 = vld [vmem:[%s8 + $0x190] sm:$0xff]
    %v9356 = vld [vmem:[%s8 + $0x198] sm:$0xff]
    %v9357 = vld [vmem:[%s8 + $0x1a0] sm:$0xff]
    %v9358 = vld [vmem:[%s8 + $0x1a8] sm:$0xff]
    %v9359 = vld [vmem:[%s8 + $0x1b0] sm:$0xff]
    %v9360 = vld [vmem:[%s8 + $0x1b8] sm:$0xff]
    %v9361 = vld [vmem:[%s8 + $0x1c0] sm:$0xff]
    %v9362 = vld [vmem:[%s8 + $0x1c8] sm:$0xff]
    %v9363 = vld [vmem:[%s8 + $0x1d0] sm:$0xff]
    %v9364 = vld [vmem:[%s8 + $0x1d8] sm:$0xff]
    %v9365 = vld [vmem:[%s8 + $0x1e0] sm:$0xff]
    %v9366 = vld [vmem:[%s8 + $0x1e8] sm:$0xff]
    %v9367 = vld [vmem:[%s8 + $0x1f0] sm:$0xff]
    %v9368 = vld [vmem:[%s8 + $0x1f8] sm:$0xff]
    %v9369 = vld [vmem:[%s8 + $0x200] sm:$0xff]
    %v9370 = vld [vmem:[%s8 + $0x208] sm:$0xff]
    %v9371 = vld [vmem:[%s8 + $0x210] sm:$0xff]
    %v9372 = vld [vmem:[%s8 + $0x218] sm:$0xff]
    %v9373 = vld [vmem:[%s8 + $0x220] sm:$0xff]
    %v9374 = vld [vmem:[%s8 + $0x228] sm:$0xff]
    %v9375 = vld [vmem:[%s8 + $0x230] sm:$0xff]
    %v9376 = vld [vmem:[%s8 + $0x238] sm:$0xff]
    %v9377 = vld [vmem:[%s8 + $0x240] sm:$0xff]
    %v9378 = vld [vmem:[%s8 + $0x248] sm:$0xff]
    %v9379 = vld [vmem:[%s8 + $0x250] sm:$0xff]
    %v9380 = vld [vmem:[%s8 + $0x258] sm:$0xff]
    %v9381 = vld [vmem:[%s8 + $0x260] sm:$0xff]
    %v9382 = vld [vmem:[%s8 + $0x268] sm:$0xff]
    %v9383 = vld [vmem:[%s8 + $0x270] sm:$0xff]
    %v9384 = vld [vmem:[%s8 + $0x278] sm:$0xff]
    %v9385 = vld [vmem:[%s8 + $0x280] sm:$0xff]
    %v9386 = vld [vmem:[%s8 + $0x288] sm:$0xff]
    %v9387 = vld [vmem:[%s8 + $0x290] sm:$0xff]
    %v9388 = vld [vmem:[%s8 + $0x298] sm:$0xff]
    %v9389 = vld [vmem:[%s8 + $0x2a0] sm:$0xff]
    %v9390 = vld [vmem:[%s8 + $0x2a8] sm:$0xff]
    %v9391 = vld [vmem:[%s8 + $0x2b0] sm:$0xff]
    %v9392 = vld [vmem:[%s8 + $0x2b8] sm:$0xff]
    %v9393 = vld [vmem:[%s8 + $0x2c0] sm:$0xff]
    %v9394 = vld [vmem:[%s8 + $0x2c8] sm:$0xff]
    %v9395 = vld [vmem:[%s8 + $0x2d0] sm:$0xff]
    %v9396 = vld [vmem:[%s8 + $0x2d8] sm:$0xff]
    %v9397 = vld [vmem:[%s8 + $0x2e0] sm:$0xff]
    %v9398 = vld [vmem:[%s8 + $0x2e8] sm:$0xff]
    %v9399 = vld [vmem:[%s8 + $0x2f0] sm:$0xff]
    %v9400 = vld [vmem:[%s8 + $0x2f8] sm:$0xff]
    %v9401 = vld [vmem:[%s8 + $0x300] sm:$0xff]
    %v9402 = vld [vmem:[%s8 + $0x308] sm:$0xff]
    %v9403 = vld [vmem:[%s8 + $0x310] sm:$0xff]
    %v9404 = vld [vmem:[%s8 + $0x318] sm:$0xff]
    %v9405 = vld [vmem:[%s8 + $0x320] sm:$0xff]
    %v9406 = vld [vmem:[%s8 + $0x328] sm:$0xff]
    %v9407 = vld [vmem:[%s8 + $0x330] sm:$0xff]
    %v9408 = vld [vmem:[%s8 + $0x338] sm:$0xff]
    %v9409 = vld [vmem:[%s8 + $0x340] sm:$0xff]
    %v9410 = vld [vmem:[%s8 + $0x348] sm:$0xff]
    %v9411 = vld [vmem:[%s8 + $0x350] sm:$0xff]
    %v9412 = vld [vmem:[%s8 + $0x358] sm:$0xff]
    %v9413 = vld [vmem:[%s8 + $0x360] sm:$0xff]
    %v9414 = vld [vmem:[%s8 + $0x368] sm:$0xff]
    %v9415 = vld [vmem:[%s8 + $0x370] sm:$0xff]
    %v9416 = vld [vmem:[%s8 + $0x378] sm:$0xff]
    %v9417 = vld [vmem:[%s8 + $0x380] sm:$0xff]
    %v9418 = vld [vmem:[%s8 + $0x388] sm:$0xff]
    %v9419 = vld [vmem:[%s8 + $0x390] sm:$0xff]
    %v9420 = vld [vmem:[%s8 + $0x398] sm:$0xff]
    %v9421 = vld [vmem:[%s8 + $0x3a0] sm:$0xff]
    %v9422 = vld [vmem:[%s8 + $0x3a8] sm:$0xff]
    %v9423 = vld [vmem:[%s8 + $0x3b0] sm:$0xff]
    %v9424 = vld [vmem:[%s8 + $0x3b8] sm:$0xff]
    %v9425 = vld [vmem:[%s8 + $0x3c0] sm:$0xff]
    %v9426 = vld [vmem:[%s8 + $0x3c8] sm:$0xff]
    %v9427 = vld [vmem:[%s8 + $0x3d0] sm:$0xff]
    %v9428 = vld [vmem:[%s8 + $0x3d8] sm:$0xff]
    %v9429 = vld [vmem:[%s8 + $0x3e0] sm:$0xff]
    %v9430 = vld [vmem:[%s8 + $0x3e8] sm:$0xff]
    %v9431 = vld [vmem:[%s8 + $0x3f0] sm:$0xff]
    %v9432 = vld [vmem:[%s8 + $0x3f8] sm:$0xff]
    %v9433 = vld [vmem:[%s8 + $0x400] sm:$0xff]
    %v9434 = vld [vmem:[%s8 + $0x408] sm:$0xff]
    %v9435 = vld [vmem:[%s8 + $0x410] sm:$0xff]
    %v9436 = vld [vmem:[%s8 + $0x418] sm:$0xff]
    %v9437 = vld [vmem:[%s8 + $0x420] sm:$0xff]
    %v9438 = vld [vmem:[%s8 + $0x428] sm:$0xff]
    %v9439 = vld [vmem:[%s8 + $0x430] sm:$0xff]
    %v9440 = vld [vmem:[%s8 + $0x438] sm:$0xff]
    %v9441 = vld [vmem:[%s8 + $0x440] sm:$0xff]
    %v9442 = vld [vmem:[%s8 + $0x448] sm:$0xff]
    %v9443 = vld [vmem:[%s8 + $0x450] sm:$0xff]
    %v9444 = vld [vmem:[%s8 + $0x458] sm:$0xff]
    %v9445 = vld [vmem:[%s8 + $0x460] sm:$0xff]
    %v9446 = vld [vmem:[%s8 + $0x468] sm:$0xff]
    %v9447 = vld [vmem:[%s8 + $0x470] sm:$0xff]
    %v9448 = vld [vmem:[%s8 + $0x478] sm:$0xff]
    %v9449 = vld [vmem:[%s8 + $0x480] sm:$0xff]
    %v9450 = vld [vmem:[%s8 + $0x488] sm:$0xff]
    %v9451 = vld [vmem:[%s8 + $0x490] sm:$0xff]
    %v9452 = vld [vmem:[%s8 + $0x498] sm:$0xff]
    %v9453 = vld [vmem:[%s8 + $0x4a0] sm:$0xff]
    %v9454 = vld [vmem:[%s8 + $0x4a8] sm:$0xff]
    %v9455 = vld [vmem:[%s8 + $0x4b0] sm:$0xff]
    %v9456 = vld [vmem:[%s8 + $0x4b8] sm:$0xff]
    %v9457 = vld [vmem:[%s8 + $0x4c0] sm:$0xff]
    %v9458 = vld [vmem:[%s8 + $0x4c8] sm:$0xff]
    %v9459 = vld [vmem:[%s8 + $0x4d0] sm:$0xff]
    %v9460 = vld [vmem:[%s8 + $0x4d8] sm:$0xff]
    %v9461 = vld [vmem:[%s8 + $0x4e0] sm:$0xff]
    %v9462 = vld [vmem:[%s8 + $0x4e8] sm:$0xff]
    %v9463 = vld [vmem:[%s8 + $0x4f0] sm:$0xff]
    %v9464 = vld [vmem:[%s8 + $0x4f8] sm:$0xff]
    %v9465 = vld [vmem:[%s8 + $0x500] sm:$0xff]
    %v9466 = vld [vmem:[%s8 + $0x508] sm:$0xff]
    %v9467 = vld [vmem:[%s8 + $0x510] sm:$0xff]
    %v9468 = vld [vmem:[%s8 + $0x518] sm:$0xff]
    %v9469 = vld [vmem:[%s8 + $0x520] sm:$0xff]
    %v9470 = vld [vmem:[%s8 + $0x528] sm:$0xff]
    %v9471 = vld [vmem:[%s8 + $0x530] sm:$0xff]
    %v9472 = vld [vmem:[%s8 + $0x538] sm:$0xff]
    %v9473 = vld [vmem:[%s8 + $0x540] sm:$0xff]
    %v9474 = vld [vmem:[%s8 + $0x548] sm:$0xff]
    %v9475 = vld [vmem:[%s8 + $0x550] sm:$0xff]
    %v9476 = vld [vmem:[%s8 + $0x558] sm:$0xff]
    %v9477 = vld [vmem:[%s8 + $0x560] sm:$0xff]
    %v9478 = vld [vmem:[%s8 + $0x568] sm:$0xff]
    %v9479 = vld [vmem:[%s8 + $0x570] sm:$0xff]
    %v9480 = vld [vmem:[%s8 + $0x578] sm:$0xff]
    %v9481 = vld [vmem:[%s8 + $0x580] sm:$0xff]
    %v9482 = vld [vmem:[%s8 + $0x588] sm:$0xff]
    %v9483 = vld [vmem:[%s8 + $0x590] sm:$0xff]
    %v9484 = vld [vmem:[%s8 + $0x598] sm:$0xff]
    %v9485 = vld [vmem:[%s8 + $0x5a0] sm:$0xff]
    %v9486 = vld [vmem:[%s8 + $0x5a8] sm:$0xff]
    %v9487 = vld [vmem:[%s8 + $0x5b0] sm:$0xff]
    %v9488 = vld [vmem:[%s8 + $0x5b8] sm:$0xff]
    %v9489 = vld [vmem:[%s8 + $0x5c0] sm:$0xff]
    %v9490 = vld [vmem:[%s8 + $0x5c8] sm:$0xff]
    %v9491 = vld [vmem:[%s8 + $0x5d0] sm:$0xff]
    %v9492 = vld [vmem:[%s8 + $0x5d8] sm:$0xff]
    %v9493 = vld [vmem:[%s8 + $0x5e0] sm:$0xff]
    %v9494 = vld [vmem:[%s8 + $0x5e8] sm:$0xff]
    %v9495 = vld [vmem:[%s8 + $0x5f0] sm:$0xff]
    %v9496 = vld [vmem:[%s8 + $0x5f8] sm:$0xff]
    %v9497 = vld [vmem:[%s8 + $0x600] sm:$0xff]
    %v9498 = vld [vmem:[%s8 + $0x608] sm:$0xff]
    %v9499 = vld [vmem:[%s8 + $0x610] sm:$0xff]
    %v9500 = vld [vmem:[%s8 + $0x618] sm:$0xff]
    %v9501 = vld [vmem:[%s8 + $0x620] sm:$0xff]
    %v9502 = vld [vmem:[%s8 + $0x628] sm:$0xff]
    %v9503 = vld [vmem:[%s8 + $0x630] sm:$0xff]
    %v9504 = vld [vmem:[%s8 + $0x638] sm:$0xff]
    %v9505 = vld [vmem:[%s8 + $0x640] sm:$0xff]
    %v9506 = vld [vmem:[%s8 + $0x648] sm:$0xff]
    %v9507 = vld [vmem:[%s8 + $0x650] sm:$0xff]
    %v9508 = vld [vmem:[%s8 + $0x658] sm:$0xff]
    %v9509 = vld [vmem:[%s8 + $0x660] sm:$0xff]
    %v9510 = vld [vmem:[%s8 + $0x668] sm:$0xff]
    %v9511 = vld [vmem:[%s8 + $0x670] sm:$0xff]
    %v9512 = vld [vmem:[%s8 + $0x678] sm:$0xff]
    %v9513 = vld [vmem:[%s8 + $0x680] sm:$0xff]
    %v9514 = vld [vmem:[%s8 + $0x688] sm:$0xff]
    %v9515 = vld [vmem:[%s8 + $0x690] sm:$0xff]
    %v9516 = vld [vmem:[%s8 + $0x698] sm:$0xff]
    %v9517 = vld [vmem:[%s8 + $0x6a0] sm:$0xff]
    %v9518 = vld [vmem:[%s8 + $0x6a8] sm:$0xff]
    %v9519 = vld [vmem:[%s8 + $0x6b0] sm:$0xff]
    %v9520 = vld [vmem:[%s8 + $0x6b8] sm:$0xff]
    %v9521 = vld [vmem:[%s8 + $0x6c0] sm:$0xff]
    %v9522 = vld [vmem:[%s8 + $0x6c8] sm:$0xff]
    %v9523 = vld [vmem:[%s8 + $0x6d0] sm:$0xff]
    %v9524 = vld [vmem:[%s8 + $0x6d8] sm:$0xff]
    %v9525 = vld [vmem:[%s8 + $0x6e0] sm:$0xff]
    %v9526 = vld [vmem:[%s8 + $0x6e8] sm:$0xff]
    %v9527 = vld [vmem:[%s8 + $0x6f0] sm:$0xff]
    %v9528 = vld [vmem:[%s8 + $0x6f8] sm:$0xff]
    %v9529 = vld [vmem:[%s8 + $0x700] sm:$0xff]
    %v9530 = vld [vmem:[%s8 + $0x708] sm:$0xff]
    %v9531 = vld [vmem:[%s8 + $0x710] sm:$0xff]
    %v9532 = vld [vmem:[%s8 + $0x718] sm:$0xff]
    %v9533 = vld [vmem:[%s8 + $0x720] sm:$0xff]
    %v9534 = vld [vmem:[%s8 + $0x728] sm:$0xff]
    %v9535 = vld [vmem:[%s8 + $0x730] sm:$0xff]
    %v9536 = vld [vmem:[%s8 + $0x738] sm:$0xff]
    %v9537 = vld [vmem:[%s8 + $0x740] sm:$0xff]
    %v9538 = vld [vmem:[%s8 + $0x748] sm:$0xff]
    %v9539 = vld [vmem:[%s8 + $0x750] sm:$0xff]
    %v9540 = vld [vmem:[%s8 + $0x758] sm:$0xff]
    %v9541 = vld [vmem:[%s8 + $0x760] sm:$0xff]
    %v9542 = vld [vmem:[%s8 + $0x768] sm:$0xff]
    %v9543 = vld [vmem:[%s8 + $0x770] sm:$0xff]
    %v9544 = vld [vmem:[%s8 + $0x778] sm:$0xff]
    %v9545 = vld [vmem:[%s8 + $0x780] sm:$0xff]
    %v9546 = vld [vmem:[%s8 + $0x788] sm:$0xff]
    %v9547 = vld [vmem:[%s8 + $0x790] sm:$0xff]
    %v9548 = vld [vmem:[%s8 + $0x798] sm:$0xff]
    %v9549 = vld [vmem:[%s8 + $0x7a0] sm:$0xff]
    %v9550 = vld [vmem:[%s8 + $0x7a8] sm:$0xff]
    %v9551 = vld [vmem:[%s8 + $0x7b0] sm:$0xff]
    %v9552 = vld [vmem:[%s8 + $0x7b8] sm:$0xff]
    %v9553 = vld [vmem:[%s8 + $0x7c0] sm:$0xff]
    %v9554 = vld [vmem:[%s8 + $0x7c8] sm:$0xff]
    %v9555 = vld [vmem:[%s8 + $0x7d0] sm:$0xff]
    %v9556 = vld [vmem:[%s8 + $0x7d8] sm:$0xff]
    %v9557 = vld [vmem:[%s8 + $0x7e0] sm:$0xff]
    %v9558 = vld [vmem:[%s8 + $0x7e8] sm:$0xff]
    %v9559 = vld [vmem:[%s8 + $0x7f0] sm:$0xff]
    %v9560 = vld [vmem:[%s8 + $0x7f8] sm:$0xff]
    %v9561 = vld [vmem:[%s8 + $0x800] sm:$0xff]
    %v9562 = vld [vmem:[%s8 + $0x808] sm:$0xff]
    %v9563 = vld [vmem:[%s8 + $0x810] sm:$0xff]
    %v9564 = vld [vmem:[%s8 + $0x818] sm:$0xff]
    %v9565 = vld [vmem:[%s8 + $0x820] sm:$0xff]
    %v9566 = vld [vmem:[%s8 + $0x828] sm:$0xff]
    %v9567 = vld [vmem:[%s8 + $0x830] sm:$0xff]
    %v9568 = vld [vmem:[%s8 + $0x838] sm:$0xff]
    %v9569 = vld [vmem:[%s8 + $0x840] sm:$0xff]
    %v9570 = vld [vmem:[%s8 + $0x848] sm:$0xff]
    %v9571 = vld [vmem:[%s8 + $0x850] sm:$0xff]
    %v9572 = vld [vmem:[%s8 + $0x858] sm:$0xff]
    %v9573 = vld [vmem:[%s8 + $0x860] sm:$0xff]
    %v9574 = vld [vmem:[%s8 + $0x868] sm:$0xff]
    %v9575 = vld [vmem:[%s8 + $0x870] sm:$0xff]
    %v9576 = vld [vmem:[%s8 + $0x878] sm:$0xff]
    %v9577 = vld [vmem:[%s8 + $0x880] sm:$0xff]
    %v9578 = vld [vmem:[%s8 + $0x888] sm:$0xff]
    %v9579 = vld [vmem:[%s8 + $0x890] sm:$0xff]
    %v9580 = vld [vmem:[%s8 + $0x898] sm:$0xff]
    %v9581 = vld [vmem:[%s8 + $0x8a0] sm:$0xff]
    %v9582 = vld [vmem:[%s8 + $0x8a8] sm:$0xff]
    %v9583 = vld [vmem:[%s8 + $0x8b0] sm:$0xff]
    %v9584 = vld [vmem:[%s8 + $0x8b8] sm:$0xff]
    %v9585 = vld [vmem:[%s8 + $0x8c0] sm:$0xff]
    %v9586 = vld [vmem:[%s8 + $0x8c8] sm:$0xff]
    %v9587 = vld [vmem:[%s8 + $0x8d0] sm:$0xff]
    %v9588 = vld [vmem:[%s8 + $0x8d8] sm:$0xff]
    %v9589 = vld [vmem:[%s8 + $0x8e0] sm:$0xff]
    %v9590 = vld [vmem:[%s8 + $0x8e8] sm:$0xff]
    %v9591 = vld [vmem:[%s8 + $0x8f0] sm:$0xff]
    %v9592 = vld [vmem:[%s8 + $0x8f8] sm:$0xff]
    %v9593 = vld [vmem:[%s8 + $0x900] sm:$0xff]
    %v9594 = vld [vmem:[%s8 + $0x908] sm:$0xff]
    %v9595 = vld [vmem:[%s8 + $0x910] sm:$0xff]
    %v9596 = vld [vmem:[%s8 + $0x918] sm:$0xff]
    %v9597 = vld [vmem:[%s8 + $0x920] sm:$0xff]
    %v9598 = vld [vmem:[%s8 + $0x928] sm:$0xff]
    %v9599 = vld [vmem:[%s8 + $0x930] sm:$0xff]
    %v9600 = vld [vmem:[%s8 + $0x938] sm:$0xff]
    %v9601 = vld [vmem:[%s8 + $0x940] sm:$0xff]
    %v9602 = vld [vmem:[%s8 + $0x948] sm:$0xff]
    %v9603 = vld [vmem:[%s8 + $0x950] sm:$0xff]
    %v9604 = vld [vmem:[%s8 + $0x958] sm:$0xff]
    %v9605 = vld [vmem:[%s8 + $0x960] sm:$0xff]
    %v9606 = vld [vmem:[%s8 + $0x968] sm:$0xff]
    %v9607 = vld [vmem:[%s8 + $0x970] sm:$0xff]
    %v9608 = vld [vmem:[%s8 + $0x978] sm:$0xff]
    %v9609 = vld [vmem:[%s8 + $0x980] sm:$0xff]
    %v9610 = vld [vmem:[%s8 + $0x988] sm:$0xff]
    %v9611 = vld [vmem:[%s8 + $0x990] sm:$0xff]
    %v9612 = vld [vmem:[%s8 + $0x998] sm:$0xff]
    %v9613 = vld [vmem:[%s8 + $0x9a0] sm:$0xff]
    %v9614 = vld [vmem:[%s8 + $0x9a8] sm:$0xff]
    %v9615 = vld [vmem:[%s8 + $0x9b0] sm:$0xff]
    %v9616 = vld [vmem:[%s8 + $0x9b8] sm:$0xff]
    %v9617 = vld [vmem:[%s8 + $0x9c0] sm:$0xff]
    %v9618 = vld [vmem:[%s8 + $0x9c8] sm:$0xff]
    %v9619 = vld [vmem:[%s8 + $0x9d0] sm:$0xff]
    %v9620 = vld [vmem:[%s8 + $0x9d8] sm:$0xff]
    %v9621 = vld [vmem:[%s8 + $0x9e0] sm:$0xff]
    %v9622 = vld [vmem:[%s8 + $0x9e8] sm:$0xff]
    %v9623 = vld [vmem:[%s8 + $0x9f0] sm:$0xff]
    %v9624 = vld [vmem:[%s8 + $0x9f8] sm:$0xff]
    %v9625 = vld [vmem:[%s8 + $0xa00] sm:$0xff]
    %v9626 = vld [vmem:[%s8 + $0xa08] sm:$0xff]
    %v9627 = vld [vmem:[%s8 + $0xa10] sm:$0xff]
    %v9628 = vld [vmem:[%s8 + $0xa18] sm:$0xff]
    %v9629 = vld [vmem:[%s8 + $0xa20] sm:$0xff]
    %v9630 = vld [vmem:[%s8 + $0xa28] sm:$0xff]
    %v9631 = vld [vmem:[%s8 + $0xa30] sm:$0xff]
    %v9632 = vld [vmem:[%s8 + $0xa38] sm:$0xff]
    %v9633 = vld [vmem:[%s8 + $0xa40] sm:$0xff]
    %v9634 = vld [vmem:[%s8 + $0xa48] sm:$0xff]
    %v9635 = vld [vmem:[%s8 + $0xa50] sm:$0xff]
    %v9636 = vld [vmem:[%s8 + $0xa58] sm:$0xff]
    %v9637 = vld [vmem:[%s8 + $0xa60] sm:$0xff]
    %v9638 = vld [vmem:[%s8 + $0xa68] sm:$0xff]
    %v9639 = vld [vmem:[%s8 + $0xa70] sm:$0xff]
    %v9640 = vld [vmem:[%s8 + $0xa78] sm:$0xff]
    %v9641 = vld [vmem:[%s8 + $0xa80] sm:$0xff]
    %v9642 = vld [vmem:[%s8 + $0xa88] sm:$0xff]
    %v9643 = vld [vmem:[%s8 + $0xa90] sm:$0xff]
    %v9644 = vld [vmem:[%s8 + $0xa98] sm:$0xff]
    %v9645 = vld [vmem:[%s8 + $0xaa0] sm:$0xff]
    %v9646 = vld [vmem:[%s8 + $0xaa8] sm:$0xff]
    %v9647 = vld [vmem:[%s8 + $0xab0] sm:$0xff]
    %v9648 = vld [vmem:[%s8 + $0xab8] sm:$0xff]
    %v9649 = vld [vmem:[%s8 + $0xac0] sm:$0xff]
    %v9650 = vld [vmem:[%s8 + $0xac8] sm:$0xff]
    %v9651 = vld [vmem:[%s8 + $0xad0] sm:$0xff]
    %v9652 = vld [vmem:[%s8 + $0xad8] sm:$0xff]
    %v9653 = vld [vmem:[%s8 + $0xae0] sm:$0xff]
    %v9654 = vld [vmem:[%s8 + $0xae8] sm:$0xff]
    %v9655 = vld [vmem:[%s8 + $0xaf0] sm:$0xff]
    %v9656 = vld [vmem:[%s8 + $0xaf8] sm:$0xff]
    %v9657 = vld [vmem:[%s8 + $0xb00] sm:$0xff]
    %v9658 = vld [vmem:[%s8 + $0xb08] sm:$0xff]
    %v9659 = vld [vmem:[%s8 + $0xb10] sm:$0xff]
    %v9660 = vld [vmem:[%s8 + $0xb18] sm:$0xff]
    %v9661 = vld [vmem:[%s8 + $0xb20] sm:$0xff]
    %v9662 = vld [vmem:[%s8 + $0xb28] sm:$0xff]
    %v9663 = vld [vmem:[%s8 + $0xb30] sm:$0xff]
    %v9664 = vld [vmem:[%s8 + $0xb38] sm:$0xff]
    %v9665 = vld [vmem:[%s8 + $0xb40] sm:$0xff]
    %v9666 = vld [vmem:[%s8 + $0xb48] sm:$0xff]
    %v9667 = vld [vmem:[%s8 + $0xb50] sm:$0xff]
    %v9668 = vld [vmem:[%s8 + $0xb58] sm:$0xff]
    %v9669 = vld [vmem:[%s8 + $0xb60] sm:$0xff]
    %v9670 = vld [vmem:[%s8 + $0xb68] sm:$0xff]
    %v9671 = vld [vmem:[%s8 + $0xb70] sm:$0xff]
    %v9672 = vld [vmem:[%s8 + $0xb78] sm:$0xff]
    %v9673 = vld [vmem:[%s8 + $0xb80] sm:$0xff]
    %v9674 = vld [vmem:[%s8 + $0xb88] sm:$0xff]
    %v9675 = vld [vmem:[%s8 + $0xb90] sm:$0xff]
    %v9676 = vld [vmem:[%s8 + $0xb98] sm:$0xff]
    %v9677 = vld [vmem:[%s8 + $0xba0] sm:$0xff]
    %v9678 = vld [vmem:[%s8 + $0xba8] sm:$0xff]
    %v9679 = vld [vmem:[%s8 + $0xbb0] sm:$0xff]
    %v9680 = vld [vmem:[%s8 + $0xbb8] sm:$0xff]
    %v9681 = vld [vmem:[%s8 + $0xbc0] sm:$0xff]
    %v9682 = vld [vmem:[%s8 + $0xbc8] sm:$0xff]
    %v9683 = vld [vmem:[%s8 + $0xbd0] sm:$0xff]
    %v9684 = vld [vmem:[%s8 + $0xbd8] sm:$0xff]
    %v9685 = vld [vmem:[%s8 + $0xbe0] sm:$0xff]
    %v9686 = vld [vmem:[%s8 + $0xbe8] sm:$0xff]
    %v9687 = vld [vmem:[%s8 + $0xbf0] sm:$0xff]
    %v9688 = vld [vmem:[%s8 + $0xbf8] sm:$0xff]
    %v9689 = vld [vmem:[%s8 + $0xc00] sm:$0xff]
    %v9690 = vld [vmem:[%s8 + $0xc08] sm:$0xff]
    %v9691 = vld [vmem:[%s8 + $0xc10] sm:$0xff]
    %v9692 = vld [vmem:[%s8 + $0xc18] sm:$0xff]
    %v9693 = vld [vmem:[%s8 + $0xc20] sm:$0xff]
    %v9694 = vld [vmem:[%s8 + $0xc28] sm:$0xff]
    %v9695 = vld [vmem:[%s8 + $0xc30] sm:$0xff]
    %v9696 = vld [vmem:[%s8 + $0xc38] sm:$0xff]
    %v9697 = vld [vmem:[%s8 + $0xc40] sm:$0xff]
    %v9698 = vld [vmem:[%s8 + $0xc48] sm:$0xff]
    %v9699 = vld [vmem:[%s8 + $0xc50] sm:$0xff]
    %v9700 = vld [vmem:[%s8 + $0xc58] sm:$0xff]
    %v9701 = vld [vmem:[%s8 + $0xc60] sm:$0xff]
    %v9702 = vld [vmem:[%s8 + $0xc68] sm:$0xff]
    %v9703 = vld [vmem:[%s8 + $0xc70] sm:$0xff]
    %v9704 = vld [vmem:[%s8 + $0xc78] sm:$0xff]
    %v9705 = vld [vmem:[%s8 + $0xc80] sm:$0xff]
    %v9706 = vld [vmem:[%s8 + $0xc88] sm:$0xff]
    %v9707 = vld [vmem:[%s8 + $0xc90] sm:$0xff]
    %v9708 = vld [vmem:[%s8 + $0xc98] sm:$0xff]
    %v9709 = vld [vmem:[%s8 + $0xca0] sm:$0xff]
    %v9710 = vld [vmem:[%s8 + $0xca8] sm:$0xff]
    %v9711 = vld [vmem:[%s8 + $0xcb0] sm:$0xff]
    %v9712 = vld [vmem:[%s8 + $0xcb8] sm:$0xff]
    %v9713 = vld [vmem:[%s8 + $0xcc0] sm:$0xff]
    %v9714 = vld [vmem:[%s8 + $0xcc8] sm:$0xff]
    %v9715 = vld [vmem:[%s8 + $0xcd0] sm:$0xff]
    %v9716 = vld [vmem:[%s8 + $0xcd8] sm:$0xff]
    %v9717 = vld [vmem:[%s8 + $0xce0] sm:$0xff]
    %v9718 = vld [vmem:[%s8 + $0xce8] sm:$0xff]
    %v9719 = vld [vmem:[%s8 + $0xcf0] sm:$0xff]
    %v9720 = vld [vmem:[%s8 + $0xcf8] sm:$0xff]
    %v9721 = vld [vmem:[%s8 + $0xd00] sm:$0xff]
    %v9722 = vld [vmem:[%s8 + $0xd08] sm:$0xff]
    %v9723 = vld [vmem:[%s8 + $0xd10] sm:$0xff]
    %v9724 = vld [vmem:[%s8 + $0xd18] sm:$0xff]
    %v9725 = vld [vmem:[%s8 + $0xd20] sm:$0xff]
    %v9726 = vld [vmem:[%s8 + $0xd28] sm:$0xff]
    %v9727 = vld [vmem:[%s8 + $0xd30] sm:$0xff]
    %v9728 = vld [vmem:[%s8 + $0xd38] sm:$0xff]
    %v9729 = vld [vmem:[%s8 + $0xd40] sm:$0xff]
    %v9730 = vld [vmem:[%s8 + $0xd48] sm:$0xff]
    %v9731 = vld [vmem:[%s8 + $0xd50] sm:$0xff]
    %v9732 = vld [vmem:[%s8 + $0xd58] sm:$0xff]
    %v9733 = vld [vmem:[%s8 + $0xd60] sm:$0xff]
    %v9734 = vld [vmem:[%s8 + $0xd68] sm:$0xff]
    %v9735 = vld [vmem:[%s8 + $0xd70] sm:$0xff]
    %v9736 = vld [vmem:[%s8 + $0xd78] sm:$0xff]
    %v9737 = vld [vmem:[%s8 + $0xd80] sm:$0xff]
    %v9738 = vld [vmem:[%s8 + $0xd88] sm:$0xff]
    %v9739 = vld [vmem:[%s8 + $0xd90] sm:$0xff]
    %v9740 = vld [vmem:[%s8 + $0xd98] sm:$0xff]
    %v9741 = vld [vmem:[%s8 + $0xda0] sm:$0xff]
    %v9742 = vld [vmem:[%s8 + $0xda8] sm:$0xff]
    %v9743 = vld [vmem:[%s8 + $0xdb0] sm:$0xff]
    %v9744 = vld [vmem:[%s8 + $0xdb8] sm:$0xff]
    %v9745 = vld [vmem:[%s8 + $0xdc0] sm:$0xff]
    %v9746 = vld [vmem:[%s8 + $0xdc8] sm:$0xff]
    %v9747 = vld [vmem:[%s8 + $0xdd0] sm:$0xff]
    %v9748 = vld [vmem:[%s8 + $0xdd8] sm:$0xff]
    %v9749 = vld [vmem:[%s8 + $0xde0] sm:$0xff]
    %v9750 = vld [vmem:[%s8 + $0xde8] sm:$0xff]
    %v9751 = vld [vmem:[%s8 + $0xdf0] sm:$0xff]
    %v9752 = vld [vmem:[%s8 + $0xdf8] sm:$0xff]
    %v9753 = vld [vmem:[%s8 + $0xe00] sm:$0xff]
    %v9754 = vld [vmem:[%s8 + $0xe08] sm:$0xff]
    %v9755 = vld [vmem:[%s8 + $0xe10] sm:$0xff]
    %v9756 = vld [vmem:[%s8 + $0xe18] sm:$0xff]
    %v9757 = vld [vmem:[%s8 + $0xe20] sm:$0xff]
    %v9758 = vld [vmem:[%s8 + $0xe28] sm:$0xff]
    %v9759 = vld [vmem:[%s8 + $0xe30] sm:$0xff]
    %v9760 = vld [vmem:[%s8 + $0xe38] sm:$0xff]
    %v9761 = vld [vmem:[%s8 + $0xe40] sm:$0xff]
    %v9762 = vld [vmem:[%s8 + $0xe48] sm:$0xff]
    %v9763 = vld [vmem:[%s8 + $0xe50] sm:$0xff]
    %v9764 = vld [vmem:[%s8 + $0xe58] sm:$0xff]
    %v9765 = vld [vmem:[%s8 + $0xe60] sm:$0xff]
    %v9766 = vld [vmem:[%s8 + $0xe68] sm:$0xff]
    %v9767 = vld [vmem:[%s8 + $0xe70] sm:$0xff]
    %v9768 = vld [vmem:[%s8 + $0xe78] sm:$0xff]
    %v9769 = vld [vmem:[%s8 + $0xe80] sm:$0xff]
    %v9770 = vld [vmem:[%s8 + $0xe88] sm:$0xff]
    %v9771 = vld [vmem:[%s8 + $0xe90] sm:$0xff]
    %v9772 = vld [vmem:[%s8 + $0xe98] sm:$0xff]
    %v9773 = vld [vmem:[%s8 + $0xea0] sm:$0xff]
    %v9774 = vld [vmem:[%s8 + $0xea8] sm:$0xff]
    %v9775 = vld [vmem:[%s8 + $0xeb0] sm:$0xff]
    %v9776 = vld [vmem:[%s8 + $0xeb8] sm:$0xff]
    %v9777 = vld [vmem:[%s8 + $0xec0] sm:$0xff]
    %v9778 = vld [vmem:[%s8 + $0xec8] sm:$0xff]
    %v9779 = vld [vmem:[%s8 + $0xed0] sm:$0xff]
    %v9780 = vld [vmem:[%s8 + $0xed8] sm:$0xff]
    %v9781 = vld [vmem:[%s8 + $0xee0] sm:$0xff]
    %v9782 = vld [vmem:[%s8 + $0xee8] sm:$0xff]
    %v9783 = vld [vmem:[%s8 + $0xef0] sm:$0xff]
    %v9784 = vld [vmem:[%s8 + $0xef8] sm:$0xff]
    %v9785 = vld [vmem:[%s8 + $0xf00] sm:$0xff]
    %v9786 = vld [vmem:[%s8 + $0xf08] sm:$0xff]
    %v9787 = vld [vmem:[%s8 + $0xf10] sm:$0xff]
    %v9788 = vld [vmem:[%s8 + $0xf18] sm:$0xff]
    %v9789 = vld [vmem:[%s8 + $0xf20] sm:$0xff]
    %v9790 = vld [vmem:[%s8 + $0xf28] sm:$0xff]
    %v9791 = vld [vmem:[%s8 + $0xf30] sm:$0xff]
    %v9792 = vld [vmem:[%s8 + $0xf38] sm:$0xff]
    %v9793 = vld [vmem:[%s8 + $0xf40] sm:$0xff]
    %v9794 = vld [vmem:[%s8 + $0xf48] sm:$0xff]
    %v9795 = vld [vmem:[%s8 + $0xf50] sm:$0xff]
    %v9796 = vld [vmem:[%s8 + $0xf58] sm:$0xff]
    %v9797 = vld [vmem:[%s8 + $0xf60] sm:$0xff]
    %v9798 = vld [vmem:[%s8 + $0xf68] sm:$0xff]
    %v9799 = vld [vmem:[%s8 + $0xf70] sm:$0xff]
    %v9800 = vld [vmem:[%s8 + $0xf78] sm:$0xff]
    %v9801 = vld [vmem:[%s8 + $0xf80] sm:$0xff]
    %v9802 = vld [vmem:[%s8 + $0xf88] sm:$0xff]
    %v9803 = vld [vmem:[%s8 + $0xf90] sm:$0xff]
    %v9804 = vld [vmem:[%s8 + $0xf98] sm:$0xff]
    %v9806 = vsel %vm2723, %v9276, 0
    %v9809 = vsel %vm2723, %v9283, 0
    %v9812 = vsel %vm2723, %v9290, 0
    %v9815 = vsel %vm2723, %v9297, 0
    %v9818 = vsel %vm2723, %v9304, 0
    %9820 = vmatprep.subr.mxu0 %v9306
    %9821 = vmatpush1.msra.mxu0 %v9305
    %9822 = vmatprep.subr.mxu0 %v9311
    %9823 = vmatpush1.msra.mxu0 %v9310
    %9824 = vmatprep.subr.mxu0 %v9316
    %9825 = vmatpush1.msra.mxu0 %v9315
    %9826 = vmatprep.subr.mxu0 %v9321
    %9827 = vmatpush1.msra.mxu0 %v9320
    %9828 = vmatprep.subr.mxu0 %v9326
    %9829 = vmatpush1.msra.mxu0 %v9325
    %9830 = vmatprep.subr.mxu0 %v9331
    %9831 = vmatpush1.msra.mxu0 %v9330
    %9832 = vmatprep.subr.mxu0 %v9336
    %9833 = vmatpush1.msra.mxu0 %v9335
    %9834 = vmatprep.subr.mxu0 %v9341
    %9835 = vmatpush1.msra.mxu0 %v9340
    %9836 = vmatprep.subr.mxu0 %v9346
    %9837 = vmatpush1.msra.mxu0 %v9345
    %9838 = vmatprep.subr.mxu0 %v9351
    %9839 = vmatpush1.msra.mxu0 %v9350
    %9840 = vmatprep.subr.mxu0 %v9356
    %9841 = vmatpush1.msra.mxu0 %v9355
    %9842 = vmatprep.subr.mxu0 %v9361
    %9843 = vmatpush1.msra.mxu0 %v9360
    %9844 = vmatprep.subr.mxu0 %v9366
    %9845 = vmatpush1.msra.mxu0 %v9365
    %9846 = vmatprep.subr.mxu0 %v9371
    %9847 = vmatpush1.msra.mxu0 %v9370
    %9848 = vmatprep.subr.mxu0 %v9376
    %9849 = vmatpush1.msra.mxu0 %v9375
    %9850 = vmatprep.subr.mxu0 %v9381
    %9851 = vmatpush1.msra.mxu0 %v9380
    %9852 = vmatprep.subr.mxu0 %v9386
    %9853 = vmatpush1.msra.mxu0 %v9385
    %9854 = vmatprep.subr.mxu0 %v9391
    %9855 = vmatpush1.msra.mxu0 %v9390
    %9856 = vmatprep.subr.mxu0 %v9396
    %9857 = vmatpush1.msra.mxu0 %v9395
    %9858 = vmatprep.subr.mxu0 %v9401
    %9859 = vmatpush1.msra.mxu0 %v9400
    %9860 = vmatprep.subr.mxu0 %v9406
    %9861 = vmatpush1.msra.mxu0 %v9405
    %9862 = vmatprep.subr.mxu0 %v9411
    %9863 = vmatpush1.msra.mxu0 %v9410
    %9864 = vmatprep.subr.mxu0 %v9416
    %9865 = vmatpush1.msra.mxu0 %v9415
    %9866 = vmatprep.subr.mxu0 %v9421
    %9867 = vmatpush1.msra.mxu0 %v9420
    %9868 = vmatprep.subr.mxu0 %v9426
    %9869 = vmatpush1.msra.mxu0 %v9425
    %9870 = vmatprep.subr.mxu0 %v9431
    %9871 = vmatpush1.msra.mxu0 %v9430
    %9872 = vmatprep.subr.mxu0 %v9436
    %9873 = vmatpush1.msra.mxu0 %v9435
    %9874 = vmatprep.subr.mxu0 %v9441
    %9875 = vmatpush1.msra.mxu0 %v9440
    %9876 = vmatprep.subr.mxu0 %v9446
    %9877 = vmatpush1.msra.mxu0 %v9445
    %9878 = vmatprep.subr.mxu0 %v9451
    %9879 = vmatpush1.msra.mxu0 %v9450
    %9880 = vmatprep.subr.mxu0 %v9456
    %9881 = vmatpush1.msra.mxu0 %v9455
    %9882 = vmatprep.subr.mxu0 %v9461
    %9883 = vmatpush1.msra.mxu0 %v9460
    %9884 = vmatprep.mubr.f32.mxu0 %v9271
    %9885 = vmatmul.mubr.f32.gmra.mrb[0].mxu0 %v9270
    %v9886 = vpop.f32.mrb[0].mxu0
    %v9887 = vadd.f32 0.0, %v9886
    %v9888 = vpop.f32.mrb[0].mxu0
    %v9889 = vadd.f32 0.0, %v9888
    %9890 = vmatprep.mubr.f32.mxu0 %v9278
    %9891 = vmatmul.mubr.f32.gmra.mrb[0].mxu0 %v9277
    %v9892 = vpop.f32.mrb[0].mxu0
    %v9893 = vadd.f32 0.0, %v9892
    %v9894 = vpop.f32.mrb[0].mxu0
    %v9895 = vadd.f32 0.0, %v9894
    %9896 = vmatprep.mubr.f32.mxu0 %v9285
    %9897 = vmatmul.mubr.f32.gmra.mrb[0].mxu0 %v9284
    %v9898 = vpop.f32.mrb[0].mxu0
    %v9899 = vadd.f32 0.0, %v9898
    %v9900 = vpop.f32.mrb[0].mxu0
    %v9901 = vadd.f32 0.0, %v9900
    %9902 = vmatprep.mubr.f32.mxu0 %v9292
    %9903 = vmatmul.mubr.f32.gmra.mrb[0].mxu0 %v9291
    %v9904 = vpop.f32.mrb[0].mxu0
    %v9905 = vadd.f32 0.0, %v9904
    %v9906 = vpop.f32.mrb[0].mxu0
    %v9907 = vadd.f32 0.0, %v9906
    %9908 = vmatprep.mubr.f32.mxu0 %v9299
    %9909 = vmatmul.mubr.f32.gmra.mrb[0].mxu0 %v9298
    %v9910 = vpop.f32.mrb[0].mxu0
    %v9911 = vadd.f32 0.0, %v9910
    %v9912 = vpop.f32.mrb[0].mxu0
    %v9913 = vadd.f32 0.0, %v9912
    %9914 = vdwg.mxu0
    %9915 = vmatprep.subr.mxu0 %v9466
    %9916 = vmatpush1.msra.mxu0 %v9465
    %9917 = vmatprep.subr.mxu0 %v9471
    %9918 = vmatpush1.msra.mxu0 %v9470
    %9919 = vmatprep.subr.mxu0 %v9476
    %9920 = vmatpush1.msra.mxu0 %v9475
    %9921 = vmatprep.subr.mxu0 %v9481
    %9922 = vmatpush1.msra.mxu0 %v9480
    %9923 = vmatprep.subr.mxu0 %v9486
    %9924 = vmatpush1.msra.mxu0 %v9485
    %9925 = vmatprep.subr.mxu0 %v9491
    %9926 = vmatpush1.msra.mxu0 %v9490
    %9927 = vmatprep.subr.mxu0 %v9496
    %9928 = vmatpush1.msra.mxu0 %v9495
    %9929 = vmatprep.subr.mxu0 %v9501
    %9930 = vmatpush1.msra.mxu0 %v9500
    %9931 = vmatprep.subr.mxu0 %v9506
    %9932 = vmatpush1.msra.mxu0 %v9505
    %9933 = vmatprep.subr.mxu0 %v9511
    %9934 = vmatpush1.msra.mxu0 %v9510
    %9935 = vmatprep.subr.mxu0 %v9516
    %9936 = vmatpush1.msra.mxu0 %v9515
    %9937 = vmatprep.subr.mxu0 %v9521
    %9938 = vmatpush1.msra.mxu0 %v9520
    %9939 = vmatprep.subr.mxu0 %v9526
    %9940 = vmatpush1.msra.mxu0 %v9525
    %9941 = vmatprep.subr.mxu0 %v9531
    %9942 = vmatpush1.msra.mxu0 %v9530
    %9943 = vmatprep.subr.mxu0 %v9536
    %9944 = vmatpush1.msra.mxu0 %v9535
    %9945 = vmatprep.subr.mxu0 %v9541
    %9946 = vmatpush1.msra.mxu0 %v9540
    %9947 = vmatprep.subr.mxu0 %v9546
    %9948 = vmatpush1.msra.mxu0 %v9545
    %9949 = vmatprep.subr.mxu0 %v9551
    %9950 = vmatpush1.msra.mxu0 %v9550
    %9951 = vmatprep.subr.mxu0 %v9556
    %9952 = vmatpush1.msra.mxu0 %v9555
    %9953 = vmatprep.subr.mxu0 %v9561
    %9954 = vmatpush1.msra.mxu0 %v9560
    %9955 = vmatprep.subr.mxu0 %v9566
    %9956 = vmatpush1.msra.mxu0 %v9565
    %9957 = vmatprep.subr.mxu0 %v9571
    %9958 = vmatpush1.msra.mxu0 %v9570
    %9959 = vmatprep.subr.mxu0 %v9576
    %9960 = vmatpush1.msra.mxu0 %v9575
    %9961 = vmatprep.subr.mxu0 %v9581
    %9962 = vmatpush1.msra.mxu0 %v9580
    %9963 = vmatprep.subr.mxu0 %v9586
    %9964 = vmatpush1.msra.mxu0 %v9585
    %9965 = vmatprep.subr.mxu0 %v9591
    %9966 = vmatpush1.msra.mxu0 %v9590
    %9967 = vmatprep.subr.mxu0 %v9596
    %9968 = vmatpush1.msra.mxu0 %v9595
    %9969 = vmatprep.subr.mxu0 %v9601
    %9970 = vmatpush1.msra.mxu0 %v9600
    %9971 = vmatprep.subr.mxu0 %v9606
    %9972 = vmatpush1.msra.mxu0 %v9605
    %9973 = vmatprep.subr.mxu0 %v9611
    %9974 = vmatpush1.msra.mxu0 %v9610
    %9975 = vmatprep.subr.mxu0 %v9616
    %9976 = vmatpush1.msra.mxu0 %v9615
    %9977 = vmatprep.subr.mxu0 %v9621
    %9978 = vmatpush1.msra.mxu0 %v9620
    %9979 = vmatprep.mubr.f32.mxu0 %v9273
    %9980 = vmatmul.mubr.f32.gmra.mrb[0].mxu0 %v9272
    %v9981 = vpop.f32.mrb[0].mxu0
    %v9982 = vadd.f32 %v9887, %v9981
    %v9983 = vpop.f32.mrb[0].mxu0
    %v9984 = vadd.f32 %v9889, %v9983
    %9985 = vmatprep.mubr.f32.mxu0 %v9280
    %9986 = vmatmul.mubr.f32.gmra.mrb[0].mxu0 %v9279
    %v9987 = vpop.f32.mrb[0].mxu0
    %v9988 = vadd.f32 %v9893, %v9987
    %v9989 = vpop.f32.mrb[0].mxu0
    %v9990 = vadd.f32 %v9895, %v9989
    %9991 = vmatprep.mubr.f32.mxu0 %v9287
    %9992 = vmatmul.mubr.f32.gmra.mrb[0].mxu0 %v9286
    %v9993 = vpop.f32.mrb[0].mxu0
    %v9994 = vadd.f32 %v9899, %v9993
    %v9995 = vpop.f32.mrb[0].mxu0
    %v9996 = vadd.f32 %v9901, %v9995
    %9997 = vmatprep.mubr.f32.mxu0 %v9294
    %9998 = vmatmul.mubr.f32.gmra.mrb[0].mxu0 %v9293
    %v9999 = vpop.f32.mrb[0].mxu0
    %v10000 = vadd.f32 %v9905, %v9999
    %v10001 = vpop.f32.mrb[0].mxu0
    %v10002 = vadd.f32 %v9907, %v10001
    %10003 = vmatprep.mubr.f32.mxu0 %v9301
    %10004 = vmatmul.mubr.f32.gmra.mrb[0].mxu0 %v9300
    %v10005 = vpop.f32.mrb[0].mxu0
    %v10006 = vadd.f32 %v9911, %v10005
    %v10007 = vpop.f32.mrb[0].mxu0
    %v10008 = vadd.f32 %v9913, %v10007
    %10009 = vdwg.mxu0
    %10010 = vmatprep.subr.mxu0 %v9626
    %10011 = vmatpush1.msra.mxu0 %v9625
    %10012 = vmatprep.subr.mxu0 %v9631
    %10013 = vmatpush1.msra.mxu0 %v9630
    %10014 = vmatprep.subr.mxu0 %v9636
    %10015 = vmatpush1.msra.mxu0 %v9635
    %10016 = vmatprep.subr.mxu0 %v9641
    %10017 = vmatpush1.msra.mxu0 %v9640
    %10018 = vmatprep.subr.mxu0 %v9646
    %10019 = vmatpush1.msra.mxu0 %v9645
    %10020 = vmatprep.subr.mxu0 %v9651
    %10021 = vmatpush1.msra.mxu0 %v9650
    %10022 = vmatprep.subr.mxu0 %v9656
    %10023 = vmatpush1.msra.mxu0 %v9655
    %10024 = vmatprep.subr.mxu0 %v9661
    %10025 = vmatpush1.msra.mxu0 %v9660
    %10026 = vmatprep.subr.mxu0 %v9666
    %10027 = vmatpush1.msra.mxu0 %v9665
    %10028 = vmatprep.subr.mxu0 %v9671
    %10029 = vmatpush1.msra.mxu0 %v9670
    %10030 = vmatprep.subr.mxu0 %v9676
    %10031 = vmatpush1.msra.mxu0 %v9675
    %10032 = vmatprep.subr.mxu0 %v9681
    %10033 = vmatpush1.msra.mxu0 %v9680
    %10034 = vmatprep.subr.mxu0 %v9686
    %10035 = vmatpush1.msra.mxu0 %v9685
    %10036 = vmatprep.subr.mxu0 %v9691
    %10037 = vmatpush1.msra.mxu0 %v9690
    %10038 = vmatprep.subr.mxu0 %v9696
    %10039 = vmatpush1.msra.mxu0 %v9695
    %10040 = vmatprep.subr.mxu0 %v9701
    %10041 = vmatpush1.msra.mxu0 %v9700
    %10042 = vmatprep.subr.mxu0 %v9706
    %10043 = vmatpush1.msra.mxu0 %v9705
    %10044 = vmatprep.subr.mxu0 %v9711
    %10045 = vmatpush1.msra.mxu0 %v9710
    %10046 = vmatprep.subr.mxu0 %v9716
    %10047 = vmatpush1.msra.mxu0 %v9715
    %10048 = vmatprep.subr.mxu0 %v9721
    %10049 = vmatpush1.msra.mxu0 %v9720
    %10050 = vmatprep.subr.mxu0 %v9726
    %10051 = vmatpush1.msra.mxu0 %v9725
    %10052 = vmatprep.subr.mxu0 %v9731
    %10053 = vmatpush1.msra.mxu0 %v9730
    %10054 = vmatprep.subr.mxu0 %v9736
    %10055 = vmatpush1.msra.mxu0 %v9735
    %10056 = vmatprep.subr.mxu0 %v9741
    %10057 = vmatpush1.msra.mxu0 %v9740
    %10058 = vmatprep.subr.mxu0 %v9746
    %10059 = vmatpush1.msra.mxu0 %v9745
    %10060 = vmatprep.subr.mxu0 %v9751
    %10061 = vmatpush1.msra.mxu0 %v9750
    %10062 = vmatprep.subr.mxu0 %v9756
    %10063 = vmatpush1.msra.mxu0 %v9755
    %10064 = vmatprep.subr.mxu0 %v9761
    %10065 = vmatpush1.msra.mxu0 %v9760
    %10066 = vmatprep.subr.mxu0 %v9766
    %10067 = vmatpush1.msra.mxu0 %v9765
    %10068 = vmatprep.subr.mxu0 %v9771
    %10069 = vmatpush1.msra.mxu0 %v9770
    %10070 = vmatprep.subr.mxu0 %v9776
    %10071 = vmatpush1.msra.mxu0 %v9775
    %10072 = vmatprep.subr.mxu0 %v9781
    %10073 = vmatpush1.msra.mxu0 %v9780
    %10074 = vmatprep.mubr.f32.mxu0 %v9275
    %10075 = vmatmul.mubr.f32.gmra.mrb[0].mxu0 %v9274
    %v10076 = vpop.f32.mrb[0].mxu0
    %v10077 = vadd.f32 %v9982, %v10076
    %v10078 = vpop.f32.mrb[0].mxu0
    %v10079 = vadd.f32 %v9984, %v10078
    %10080 = vmatprep.mubr.f32.mxu0 %v9282
    %10081 = vmatmul.mubr.f32.gmra.mrb[0].mxu0 %v9281
    %v10082 = vpop.f32.mrb[0].mxu0
    %v10083 = vadd.f32 %v9988, %v10082
    %v10084 = vpop.f32.mrb[0].mxu0
    %v10085 = vadd.f32 %v9990, %v10084
    %10086 = vmatprep.mubr.f32.mxu0 %v9289
    %10087 = vmatmul.mubr.f32.gmra.mrb[0].mxu0 %v9288
    %v10088 = vpop.f32.mrb[0].mxu0
    %v10089 = vadd.f32 %v9994, %v10088
    %v10090 = vpop.f32.mrb[0].mxu0
    %v10091 = vadd.f32 %v9996, %v10090
    %10092 = vmatprep.mubr.f32.mxu0 %v9296
    %10093 = vmatmul.mubr.f32.gmra.mrb[0].mxu0 %v9295
    %v10094 = vpop.f32.mrb[0].mxu0
    %v10095 = vadd.f32 %v10000, %v10094
    %v10096 = vpop.f32.mrb[0].mxu0
    %v10097 = vadd.f32 %v10002, %v10096
    %10098 = vmatprep.mubr.f32.mxu0 %v9303
    %10099 = vmatmul.mubr.f32.gmra.mrb[0].mxu0 %v9302
    %v10100 = vpop.f32.mrb[0].mxu0
    %v10101 = vadd.f32 %v10006, %v10100
    %v10102 = vpop.f32.mrb[0].mxu0
    %v10103 = vadd.f32 %v10008, %v10102
    %10104 = vdwg.mxu0
    %10105 = vmatprep.subr.mxu0 %v9786
    %10106 = vmatpush1.msra.mxu0 %v9785
    %10107 = vmatprep.subr.mxu0 %v9791
    %10108 = vmatpush1.msra.mxu0 %v9790
    %10109 = vmatprep.subr.mxu0 %v9796
    %10110 = vmatpush1.msra.mxu0 %v9795
    %10111 = vmatprep.subr.mxu0 %v9801
    %10112 = vmatpush1.msra.mxu0 %v9800
    %10113 = vmatprep.subr.mxu0 0.0
    %10114 = vmatpush1.msra.mxu0 0.0
    %10115 = vmatprep.subr.mxu0 0.0
    %10116 = vmatpush1.msra.mxu0 0.0
    %10117 = vmatprep.subr.mxu0 0.0
    %10118 = vmatpush1.msra.mxu0 0.0
    %10119 = vmatprep.subr.mxu0 0.0
    %10120 = vmatpush1.msra.mxu0 0.0
    %10121 = vmatprep.subr.mxu0 0.0
    %10122 = vmatpush1.msra.mxu0 0.0
    %10123 = vmatprep.subr.mxu0 0.0
    %10124 = vmatpush1.msra.mxu0 0.0
    %10125 = vmatprep.subr.mxu0 0.0
    %10126 = vmatpush1.msra.mxu0 0.0
    %10127 = vmatprep.subr.mxu0 0.0
    %10128 = vmatpush1.msra.mxu0 0.0
    %10129 = vmatprep.subr.mxu0 0.0
    %10130 = vmatpush1.msra.mxu0 0.0
    %10131 = vmatprep.subr.mxu0 0.0
    %10132 = vmatpush1.msra.mxu0 0.0
    %10133 = vmatprep.subr.mxu0 0.0
    %10134 = vmatpush1.msra.mxu0 0.0
    %10135 = vmatprep.subr.mxu0 0.0
    %10136 = vmatpush1.msra.mxu0 0.0
    %10137 = vmatprep.subr.mxu0 0.0
    %10138 = vmatpush1.msra.mxu0 0.0
    %10139 = vmatprep.subr.mxu0 0.0
    %10140 = vmatpush1.msra.mxu0 0.0
    %10141 = vmatprep.subr.mxu0 0.0
    %10142 = vmatpush1.msra.mxu0 0.0
    %10143 = vmatprep.subr.mxu0 0.0
    %10144 = vmatpush1.msra.mxu0 0.0
    %10145 = vmatprep.subr.mxu0 0.0
    %10146 = vmatpush1.msra.mxu0 0.0
    %10147 = vmatprep.subr.mxu0 0.0
    %10148 = vmatpush1.msra.mxu0 0.0
    %10149 = vmatprep.subr.mxu0 0.0
    %10150 = vmatpush1.msra.mxu0 0.0
    %10151 = vmatprep.subr.mxu0 0.0
    %10152 = vmatpush1.msra.mxu0 0.0
    %10153 = vmatprep.subr.mxu0 0.0
    %10154 = vmatpush1.msra.mxu0 0.0
    %10155 = vmatprep.subr.mxu0 0.0
    %10156 = vmatpush1.msra.mxu0 0.0
    %10157 = vmatprep.subr.mxu0 0.0
    %10158 = vmatpush1.msra.mxu0 0.0
    %10159 = vmatprep.subr.mxu0 0.0
    %10160 = vmatpush1.msra.mxu0 0.0
    %10161 = vmatprep.subr.mxu0 0.0
    %10162 = vmatpush1.msra.mxu0 0.0
    %10163 = vmatprep.subr.mxu0 0.0
    %10164 = vmatpush1.msra.mxu0 0.0
    %10165 = vmatprep.subr.mxu0 0.0
    %10166 = vmatpush1.msra.mxu0 0.0
    %10167 = vmatprep.subr.mxu0 0.0
    %10168 = vmatpush1.msra.mxu0 0.0
    %10169 = vmatprep.mubr.f32.mxu0 0.0
    %10170 = vmatmul.mubr.f32.gmra.mrb[0].mxu0 %v9806
    %v10171 = vpop.f32.mrb[0].mxu0
    %v10172 = vadd.f32 %v10077, %v10171
    %v10173 = vpop.f32.mrb[0].mxu0
    %v10174 = vadd.f32 %v10079, %v10173
    %10175 = vmatprep.mubr.f32.mxu0 0.0
    %10176 = vmatmul.mubr.f32.gmra.mrb[0].mxu0 %v9809
    %v10177 = vpop.f32.mrb[0].mxu0
    %v10178 = vadd.f32 %v10083, %v10177
    %v10179 = vpop.f32.mrb[0].mxu0
    %v10180 = vadd.f32 %v10085, %v10179
    %10181 = vmatprep.mubr.f32.mxu0 0.0
    %10182 = vmatmul.mubr.f32.gmra.mrb[0].mxu0 %v9812
    %v10183 = vpop.f32.mrb[0].mxu0
    %v10184 = vadd.f32 %v10089, %v10183
    %v10185 = vpop.f32.mrb[0].mxu0
    %v10186 = vadd.f32 %v10091, %v10185
    %10187 = vmatprep.mubr.f32.mxu0 0.0
    %10188 = vmatmul.mubr.f32.gmra.mrb[0].mxu0 %v9815
    %v10189 = vpop.f32.mrb[0].mxu0
    %v10190 = vadd.f32 %v10095, %v10189
    %v10191 = vpop.f32.mrb[0].mxu0
    %v10192 = vadd.f32 %v10097, %v10191
    %10193 = vmatprep.mubr.f32.mxu0 0.0
    %10194 = vmatmul.mubr.f32.gmra.mrb[0].mxu0 %v9818
    %v10195 = vpop.f32.mrb[0].mxu0
    %v10196 = vadd.f32 %v10101, %v10195
    %v10197 = vpop.f32.mrb[0].mxu0
    %v10198 = vadd.f32 %v10103, %v10197
    %10199 = vdwg.mxu0
    %10200 = vmatprep.subr.mxu0 %v9308
    %10201 = vmatpush1.msra.mxu0 %v9307
    %10202 = vmatprep.subr.mxu0 %v9313
    %10203 = vmatpush1.msra.mxu0 %v9312
    %10204 = vmatprep.subr.mxu0 %v9318
    %10205 = vmatpush1.msra.mxu0 %v9317
    %10206 = vmatprep.subr.mxu0 %v9323
    %10207 = vmatpush1.msra.mxu0 %v9322
    %10208 = vmatprep.subr.mxu0 %v9328
    %10209 = vmatpush1.msra.mxu0 %v9327
    %10210 = vmatprep.subr.mxu0 %v9333
    %10211 = vmatpush1.msra.mxu0 %v9332
    %10212 = vmatprep.subr.mxu0 %v9338
    %10213 = vmatpush1.msra.mxu0 %v9337
    %10214 = vmatprep.subr.mxu0 %v9343
    %10215 = vmatpush1.msra.mxu0 %v9342
    %10216 = vmatprep.subr.mxu0 %v9348
    %10217 = vmatpush1.msra.mxu0 %v9347
    %10218 = vmatprep.subr.mxu0 %v9353
    %10219 = vmatpush1.msra.mxu0 %v9352
    %10220 = vmatprep.subr.mxu0 %v9358
    %10221 = vmatpush1.msra.mxu0 %v9357
    %10222 = vmatprep.subr.mxu0 %v9363
    %10223 = vmatpush1.msra.mxu0 %v9362
    %10224 = vmatprep.subr.mxu0 %v9368
    %10225 = vmatpush1.msra.mxu0 %v9367
    %10226 = vmatprep.subr.mxu0 %v9373
    %10227 = vmatpush1.msra.mxu0 %v9372
    %10228 = vmatprep.subr.mxu0 %v9378
    %10229 = vmatpush1.msra.mxu0 %v9377
    %10230 = vmatprep.subr.mxu0 %v9383
    %10231 = vmatpush1.msra.mxu0 %v9382
    %10232 = vmatprep.subr.mxu0 %v9388
    %10233 = vmatpush1.msra.mxu0 %v9387
    %10234 = vmatprep.subr.mxu0 %v9393
    %10235 = vmatpush1.msra.mxu0 %v9392
    %10236 = vmatprep.subr.mxu0 %v9398
    %10237 = vmatpush1.msra.mxu0 %v9397
    %10238 = vmatprep.subr.mxu0 %v9403
    %10239 = vmatpush1.msra.mxu0 %v9402
    %10240 = vmatprep.subr.mxu0 %v9408
    %10241 = vmatpush1.msra.mxu0 %v9407
    %10242 = vmatprep.subr.mxu0 %v9413
    %10243 = vmatpush1.msra.mxu0 %v9412
    %10244 = vmatprep.subr.mxu0 %v9418
    %10245 = vmatpush1.msra.mxu0 %v9417
    %10246 = vmatprep.subr.mxu0 %v9423
    %10247 = vmatpush1.msra.mxu0 %v9422
    %10248 = vmatprep.subr.mxu0 %v9428
    %10249 = vmatpush1.msra.mxu0 %v9427
    %10250 = vmatprep.subr.mxu0 %v9433
    %10251 = vmatpush1.msra.mxu0 %v9432
    %10252 = vmatprep.subr.mxu0 %v9438
    %10253 = vmatpush1.msra.mxu0 %v9437
    %10254 = vmatprep.subr.mxu0 %v9443
    %10255 = vmatpush1.msra.mxu0 %v9442
    %10256 = vmatprep.subr.mxu0 %v9448
    %10257 = vmatpush1.msra.mxu0 %v9447
    %10258 = vmatprep.subr.mxu0 %v9453
    %10259 = vmatpush1.msra.mxu0 %v9452
    %10260 = vmatprep.subr.mxu0 %v9458
    %10261 = vmatpush1.msra.mxu0 %v9457
    %10262 = vmatprep.subr.mxu0 %v9463
    %10263 = vmatpush1.msra.mxu0 %v9462
    %10264 = vmatprep.mubr.f32.mxu0 %v9271
    %10265 = vmatmul.mubr.f32.gmra.mrb[0].mxu0 %v9270
    %v10266 = vpop.f32.mrb[0].mxu0
    %v10267 = vadd.f32 0.0, %v10266
    %v10268 = vpop.f32.mrb[0].mxu0
    %v10269 = vadd.f32 0.0, %v10268
    %10270 = vmatprep.mubr.f32.mxu0 %v9278
    %10271 = vmatmul.mubr.f32.gmra.mrb[0].mxu0 %v9277
    %v10272 = vpop.f32.mrb[0].mxu0
    %v10273 = vadd.f32 0.0, %v10272
    %v10274 = vpop.f32.mrb[0].mxu0
    %v10275 = vadd.f32 0.0, %v10274
    %10276 = vmatprep.mubr.f32.mxu0 %v9285
    %10277 = vmatmul.mubr.f32.gmra.mrb[0].mxu0 %v9284
    %v10278 = vpop.f32.mrb[0].mxu0
    %v10279 = vadd.f32 0.0, %v10278
    %v10280 = vpop.f32.mrb[0].mxu0
    %v10281 = vadd.f32 0.0, %v10280
    %10282 = vmatprep.mubr.f32.mxu0 %v9292
    %10283 = vmatmul.mubr.f32.gmra.mrb[0].mxu0 %v9291
    %v10284 = vpop.f32.mrb[0].mxu0
    %v10285 = vadd.f32 0.0, %v10284
    %v10286 = vpop.f32.mrb[0].mxu0
    %v10287 = vadd.f32 0.0, %v10286
    %10288 = vmatprep.mubr.f32.mxu0 %v9299
    %10289 = vmatmul.mubr.f32.gmra.mrb[0].mxu0 %v9298
    %v10290 = vpop.f32.mrb[0].mxu0
    %v10291 = vadd.f32 0.0, %v10290
    %v10292 = vpop.f32.mrb[0].mxu0
    %v10293 = vadd.f32 0.0, %v10292
    %10294 = vdwg.mxu0
    %10295 = vmatprep.subr.mxu0 %v9468
    %10296 = vmatpush1.msra.mxu0 %v9467
    %10297 = vmatprep.subr.mxu0 %v9473
    %10298 = vmatpush1.msra.mxu0 %v9472
    %10299 = vmatprep.subr.mxu0 %v9478
    %10300 = vmatpush1.msra.mxu0 %v9477
    %10301 = vmatprep.subr.mxu0 %v9483
    %10302 = vmatpush1.msra.mxu0 %v9482
    %10303 = vmatprep.subr.mxu0 %v9488
    %10304 = vmatpush1.msra.mxu0 %v9487
    %10305 = vmatprep.subr.mxu0 %v9493
    %10306 = vmatpush1.msra.mxu0 %v9492
    %10307 = vmatprep.subr.mxu0 %v9498
    %10308 = vmatpush1.msra.mxu0 %v9497
    %10309 = vmatprep.subr.mxu0 %v9503
    %10310 = vmatpush1.msra.mxu0 %v9502
    %10311 = vmatprep.subr.mxu0 %v9508
    %10312 = vmatpush1.msra.mxu0 %v9507
    %10313 = vmatprep.subr.mxu0 %v9513
    %10314 = vmatpush1.msra.mxu0 %v9512
    %10315 = vmatprep.subr.mxu0 %v9518
    %10316 = vmatpush1.msra.mxu0 %v9517
    %10317 = vmatprep.subr.mxu0 %v9523
    %10318 = vmatpush1.msra.mxu0 %v9522
    %10319 = vmatprep.subr.mxu0 %v9528
    %10320 = vmatpush1.msra.mxu0 %v9527
    %10321 = vmatprep.subr.mxu0 %v9533
    %10322 = vmatpush1.msra.mxu0 %v9532
    %10323 = vmatprep.subr.mxu0 %v9538
    %10324 = vmatpush1.msra.mxu0 %v9537
    %10325 = vmatprep.subr.mxu0 %v9543
    %10326 = vmatpush1.msra.mxu0 %v9542
    %10327 = vmatprep.subr.mxu0 %v9548
    %10328 = vmatpush1.msra.mxu0 %v9547
    %10329 = vmatprep.subr.mxu0 %v9553
    %10330 = vmatpush1.msra.mxu0 %v9552
    %10331 = vmatprep.subr.mxu0 %v9558
    %10332 = vmatpush1.msra.mxu0 %v9557
    %10333 = vmatprep.subr.mxu0 %v9563
    %10334 = vmatpush1.msra.mxu0 %v9562
    %10335 = vmatprep.subr.mxu0 %v9568
    %10336 = vmatpush1.msra.mxu0 %v9567
    %10337 = vmatprep.subr.mxu0 %v9573
    %10338 = vmatpush1.msra.mxu0 %v9572
    %10339 = vmatprep.subr.mxu0 %v9578
    %10340 = vmatpush1.msra.mxu0 %v9577
    %10341 = vmatprep.subr.mxu0 %v9583
    %10342 = vmatpush1.msra.mxu0 %v9582
    %10343 = vmatprep.subr.mxu0 %v9588
    %10344 = vmatpush1.msra.mxu0 %v9587
    %10345 = vmatprep.subr.mxu0 %v9593
    %10346 = vmatpush1.msra.mxu0 %v9592
    %10347 = vmatprep.subr.mxu0 %v9598
    %10348 = vmatpush1.msra.mxu0 %v9597
    %10349 = vmatprep.subr.mxu0 %v9603
    %10350 = vmatpush1.msra.mxu0 %v9602
    %10351 = vmatprep.subr.mxu0 %v9608
    %10352 = vmatpush1.msra.mxu0 %v9607
    %10353 = vmatprep.subr.mxu0 %v9613
    %10354 = vmatpush1.msra.mxu0 %v9612
    %10355 = vmatprep.subr.mxu0 %v9618
    %10356 = vmatpush1.msra.mxu0 %v9617
    %10357 = vmatprep.subr.mxu0 %v9623
    %10358 = vmatpush1.msra.mxu0 %v9622
    %10359 = vmatprep.mubr.f32.mxu0 %v9273
    %10360 = vmatmul.mubr.f32.gmra.mrb[0].mxu0 %v9272
    %v10361 = vpop.f32.mrb[0].mxu0
    %v10362 = vadd.f32 %v10267, %v10361
    %v10363 = vpop.f32.mrb[0].mxu0
    %v10364 = vadd.f32 %v10269, %v10363
    %10365 = vmatprep.mubr.f32.mxu0 %v9280
    %10366 = vmatmul.mubr.f32.gmra.mrb[0].mxu0 %v9279
    %v10367 = vpop.f32.mrb[0].mxu0
    %v10368 = vadd.f32 %v10273, %v10367
    %v10369 = vpop.f32.mrb[0].mxu0
    %v10370 = vadd.f32 %v10275, %v10369
    %10371 = vmatprep.mubr.f32.mxu0 %v9287
    %10372 = vmatmul.mubr.f32.gmra.mrb[0].mxu0 %v9286
    %v10373 = vpop.f32.mrb[0].mxu0
    %v10374 = vadd.f32 %v10279, %v10373
    %v10375 = vpop.f32.mrb[0].mxu0
    %v10376 = vadd.f32 %v10281, %v10375
    %10377 = vmatprep.mubr.f32.mxu0 %v9294
    %10378 = vmatmul.mubr.f32.gmra.mrb[0].mxu0 %v9293
    %v10379 = vpop.f32.mrb[0].mxu0
    %v10380 = vadd.f32 %v10285, %v10379
    %v10381 = vpop.f32.mrb[0].mxu0
    %v10382 = vadd.f32 %v10287, %v10381
    %10383 = vmatprep.mubr.f32.mxu0 %v9301
    %10384 = vmatmul.mubr.f32.gmra.mrb[0].mxu0 %v9300
    %v10385 = vpop.f32.mrb[0].mxu0
    %v10386 = vadd.f32 %v10291, %v10385
    %v10387 = vpop.f32.mrb[0].mxu0
    %v10388 = vadd.f32 %v10293, %v10387
    %10389 = vdwg.mxu0
    %10390 = vmatprep.subr.mxu0 %v9628
    %10391 = vmatpush1.msra.mxu0 %v9627
    %10392 = vmatprep.subr.mxu0 %v9633
    %10393 = vmatpush1.msra.mxu0 %v9632
    %10394 = vmatprep.subr.mxu0 %v9638
    %10395 = vmatpush1.msra.mxu0 %v9637
    %10396 = vmatprep.subr.mxu0 %v9643
    %10397 = vmatpush1.msra.mxu0 %v9642
    %10398 = vmatprep.subr.mxu0 %v9648
    %10399 = vmatpush1.msra.mxu0 %v9647
    %10400 = vmatprep.subr.mxu0 %v9653
    %10401 = vmatpush1.msra.mxu0 %v9652
    %10402 = vmatprep.subr.mxu0 %v9658
    %10403 = vmatpush1.msra.mxu0 %v9657
    %10404 = vmatprep.subr.mxu0 %v9663
    %10405 = vmatpush1.msra.mxu0 %v9662
    %10406 = vmatprep.subr.mxu0 %v9668
    %10407 = vmatpush1.msra.mxu0 %v9667
    %10408 = vmatprep.subr.mxu0 %v9673
    %10409 = vmatpush1.msra.mxu0 %v9672
    %10410 = vmatprep.subr.mxu0 %v9678
    %10411 = vmatpush1.msra.mxu0 %v9677
    %10412 = vmatprep.subr.mxu0 %v9683
    %10413 = vmatpush1.msra.mxu0 %v9682
    %10414 = vmatprep.subr.mxu0 %v9688
    %10415 = vmatpush1.msra.mxu0 %v9687
    %10416 = vmatprep.subr.mxu0 %v9693
    %10417 = vmatpush1.msra.mxu0 %v9692
    %10418 = vmatprep.subr.mxu0 %v9698
    %10419 = vmatpush1.msra.mxu0 %v9697
    %10420 = vmatprep.subr.mxu0 %v9703
    %10421 = vmatpush1.msra.mxu0 %v9702
    %10422 = vmatprep.subr.mxu0 %v9708
    %10423 = vmatpush1.msra.mxu0 %v9707
    %10424 = vmatprep.subr.mxu0 %v9713
    %10425 = vmatpush1.msra.mxu0 %v9712
    %10426 = vmatprep.subr.mxu0 %v9718
    %10427 = vmatpush1.msra.mxu0 %v9717
    %10428 = vmatprep.subr.mxu0 %v9723
    %10429 = vmatpush1.msra.mxu0 %v9722
    %10430 = vmatprep.subr.mxu0 %v9728
    %10431 = vmatpush1.msra.mxu0 %v9727
    %10432 = vmatprep.subr.mxu0 %v9733
    %10433 = vmatpush1.msra.mxu0 %v9732
    %10434 = vmatprep.subr.mxu0 %v9738
    %10435 = vmatpush1.msra.mxu0 %v9737
    %10436 = vmatprep.subr.mxu0 %v9743
    %10437 = vmatpush1.msra.mxu0 %v9742
    %10438 = vmatprep.subr.mxu0 %v9748
    %10439 = vmatpush1.msra.mxu0 %v9747
    %10440 = vmatprep.subr.mxu0 %v9753
    %10441 = vmatpush1.msra.mxu0 %v9752
    %10442 = vmatprep.subr.mxu0 %v9758
    %10443 = vmatpush1.msra.mxu0 %v9757
    %10444 = vmatprep.subr.mxu0 %v9763
    %10445 = vmatpush1.msra.mxu0 %v9762
    %10446 = vmatprep.subr.mxu0 %v9768
    %10447 = vmatpush1.msra.mxu0 %v9767
    %10448 = vmatprep.subr.mxu0 %v9773
    %10449 = vmatpush1.msra.mxu0 %v9772
    %10450 = vmatprep.subr.mxu0 %v9778
    %10451 = vmatpush1.msra.mxu0 %v9777
    %10452 = vmatprep.subr.mxu0 %v9783
    %10453 = vmatpush1.msra.mxu0 %v9782
    %10454 = vmatprep.mubr.f32.mxu0 %v9275
    %10455 = vmatmul.mubr.f32.gmra.mrb[0].mxu0 %v9274
    %v10456 = vpop.f32.mrb[0].mxu0
    %v10457 = vadd.f32 %v10362, %v10456
    %v10458 = vpop.f32.mrb[0].mxu0
    %v10459 = vadd.f32 %v10364, %v10458
    %10460 = vmatprep.mubr.f32.mxu0 %v9282
    %10461 = vmatmul.mubr.f32.gmra.mrb[0].mxu0 %v9281
    %v10462 = vpop.f32.mrb[0].mxu0
    %v10463 = vadd.f32 %v10368, %v10462
    %v10464 = vpop.f32.mrb[0].mxu0
    %v10465 = vadd.f32 %v10370, %v10464
    %10466 = vmatprep.mubr.f32.mxu0 %v9289
    %10467 = vmatmul.mubr.f32.gmra.mrb[0].mxu0 %v9288
    %v10468 = vpop.f32.mrb[0].mxu0
    %v10469 = vadd.f32 %v10374, %v10468
    %v10470 = vpop.f32.mrb[0].mxu0
    %v10471 = vadd.f32 %v10376, %v10470
    %10472 = vmatprep.mubr.f32.mxu0 %v9296
    %10473 = vmatmul.mubr.f32.gmra.mrb[0].mxu0 %v9295
    %v10474 = vpop.f32.mrb[0].mxu0
    %v10475 = vadd.f32 %v10380, %v10474
    %v10476 = vpop.f32.mrb[0].mxu0
    %v10477 = vadd.f32 %v10382, %v10476
    %10478 = vmatprep.mubr.f32.mxu0 %v9303
    %10479 = vmatmul.mubr.f32.gmra.mrb[0].mxu0 %v9302
    %v10480 = vpop.f32.mrb[0].mxu0
    %v10481 = vadd.f32 %v10386, %v10480
    %v10482 = vpop.f32.mrb[0].mxu0
    %v10483 = vadd.f32 %v10388, %v10482
    %10484 = vdwg.mxu0
    %10485 = vmatprep.subr.mxu0 %v9788
    %10486 = vmatpush1.msra.mxu0 %v9787
    %10487 = vmatprep.subr.mxu0 %v9793
    %10488 = vmatpush1.msra.mxu0 %v9792
    %10489 = vmatprep.subr.mxu0 %v9798
    %10490 = vmatpush1.msra.mxu0 %v9797
    %10491 = vmatprep.subr.mxu0 %v9803
    %10492 = vmatpush1.msra.mxu0 %v9802
    %10493 = vmatprep.subr.mxu0 0.0
    %10494 = vmatpush1.msra.mxu0 0.0
    %10495 = vmatprep.subr.mxu0 0.0
    %10496 = vmatpush1.msra.mxu0 0.0
    %10497 = vmatprep.subr.mxu0 0.0
    %10498 = vmatpush1.msra.mxu0 0.0
    %10499 = vmatprep.subr.mxu0 0.0
    %10500 = vmatpush1.msra.mxu0 0.0
    %10501 = vmatprep.subr.mxu0 0.0
    %10502 = vmatpush1.msra.mxu0 0.0
    %10503 = vmatprep.subr.mxu0 0.0
    %10504 = vmatpush1.msra.mxu0 0.0
    %10505 = vmatprep.subr.mxu0 0.0
    %10506 = vmatpush1.msra.mxu0 0.0
    %10507 = vmatprep.subr.mxu0 0.0
    %10508 = vmatpush1.msra.mxu0 0.0
    %10509 = vmatprep.subr.mxu0 0.0
    %10510 = vmatpush1.msra.mxu0 0.0
    %10511 = vmatprep.subr.mxu0 0.0
    %10512 = vmatpush1.msra.mxu0 0.0
    %10513 = vmatprep.subr.mxu0 0.0
    %10514 = vmatpush1.msra.mxu0 0.0
    %10515 = vmatprep.subr.mxu0 0.0
    %10516 = vmatpush1.msra.mxu0 0.0
    %10517 = vmatprep.subr.mxu0 0.0
    %10518 = vmatpush1.msra.mxu0 0.0
    %10519 = vmatprep.subr.mxu0 0.0
    %10520 = vmatpush1.msra.mxu0 0.0
    %10521 = vmatprep.subr.mxu0 0.0
    %10522 = vmatpush1.msra.mxu0 0.0
    %10523 = vmatprep.subr.mxu0 0.0
    %10524 = vmatpush1.msra.mxu0 0.0
    %10525 = vmatprep.subr.mxu0 0.0
    %10526 = vmatpush1.msra.mxu0 0.0
    %10527 = vmatprep.subr.mxu0 0.0
    %10528 = vmatpush1.msra.mxu0 0.0
    %10529 = vmatprep.subr.mxu0 0.0
    %10530 = vmatpush1.msra.mxu0 0.0
    %10531 = vmatprep.subr.mxu0 0.0
    %10532 = vmatpush1.msra.mxu0 0.0
    %10533 = vmatprep.subr.mxu0 0.0
    %10534 = vmatpush1.msra.mxu0 0.0
    %10535 = vmatprep.subr.mxu0 0.0
    %10536 = vmatpush1.msra.mxu0 0.0
    %10537 = vmatprep.subr.mxu0 0.0
    %10538 = vmatpush1.msra.mxu0 0.0
    %10539 = vmatprep.subr.mxu0 0.0
    %10540 = vmatpush1.msra.mxu0 0.0
    %10541 = vmatprep.subr.mxu0 0.0
    %10542 = vmatpush1.msra.mxu0 0.0
    %10543 = vmatprep.subr.mxu0 0.0
    %10544 = vmatpush1.msra.mxu0 0.0
    %10545 = vmatprep.subr.mxu0 0.0
    %10546 = vmatpush1.msra.mxu0 0.0
    %10547 = vmatprep.subr.mxu0 0.0
    %10548 = vmatpush1.msra.mxu0 0.0
    %10549 = vmatprep.mubr.f32.mxu0 0.0
    %10550 = vmatmul.mubr.f32.gmra.mrb[0].mxu0 %v9806
    %v10551 = vpop.f32.mrb[0].mxu0
    %v10552 = vadd.f32 %v10457, %v10551
    %v10553 = vpop.f32.mrb[0].mxu0
    %v10554 = vadd.f32 %v10459, %v10553
    %10555 = vmatprep.mubr.f32.mxu0 0.0
    %10556 = vmatmul.mubr.f32.gmra.mrb[0].mxu0 %v9809
    %v10557 = vpop.f32.mrb[0].mxu0
    %v10558 = vadd.f32 %v10463, %v10557
    %v10559 = vpop.f32.mrb[0].mxu0
    %v10560 = vadd.f32 %v10465, %v10559
    %10561 = vmatprep.mubr.f32.mxu0 0.0
    %10562 = vmatmul.mubr.f32.gmra.mrb[0].mxu0 %v9812
    %v10563 = vpop.f32.mrb[0].mxu0
    %v10564 = vadd.f32 %v10469, %v10563
    %v10565 = vpop.f32.mrb[0].mxu0
    %v10566 = vadd.f32 %v10471, %v10565
    %10567 = vmatprep.mubr.f32.mxu0 0.0
    %10568 = vmatmul.mubr.f32.gmra.mrb[0].mxu0 %v9815
    %v10569 = vpop.f32.mrb[0].mxu0
    %v10570 = vadd.f32 %v10475, %v10569
    %v10571 = vpop.f32.mrb[0].mxu0
    %v10572 = vadd.f32 %v10477, %v10571
    %10573 = vmatprep.mubr.f32.mxu0 0.0
    %10574 = vmatmul.mubr.f32.gmra.mrb[0].mxu0 %v9818
    %v10575 = vpop.f32.mrb[0].mxu0
    %v10576 = vadd.f32 %v10481, %v10575
    %v10577 = vpop.f32.mrb[0].mxu0
    %v10578 = vadd.f32 %v10483, %v10577
    %10579 = vdwg.mxu0
    %10580 = vmatprep.subr.mxu0 0.0
    %10581 = vmatpush1.msra.mxu0 %v9309
    %10582 = vmatprep.subr.mxu0 0.0
    %10583 = vmatpush1.msra.mxu0 %v9314
    %10584 = vmatprep.subr.mxu0 0.0
    %10585 = vmatpush1.msra.mxu0 %v9319
    %10586 = vmatprep.subr.mxu0 0.0
    %10587 = vmatpush1.msra.mxu0 %v9324
    %10588 = vmatprep.subr.mxu0 0.0
    %10589 = vmatpush1.msra.mxu0 %v9329
    %10590 = vmatprep.subr.mxu0 0.0
    %10591 = vmatpush1.msra.mxu0 %v9334
    %10592 = vmatprep.subr.mxu0 0.0
    %10593 = vmatpush1.msra.mxu0 %v9339
    %10594 = vmatprep.subr.mxu0 0.0
    %10595 = vmatpush1.msra.mxu0 %v9344
    %10596 = vmatprep.subr.mxu0 0.0
    %10597 = vmatpush1.msra.mxu0 %v9349
    %10598 = vmatprep.subr.mxu0 0.0
    %10599 = vmatpush1.msra.mxu0 %v9354
    %10600 = vmatprep.subr.mxu0 0.0
    %10601 = vmatpush1.msra.mxu0 %v9359
    %10602 = vmatprep.subr.mxu0 0.0
    %10603 = vmatpush1.msra.mxu0 %v9364
    %10604 = vmatprep.subr.mxu0 0.0
    %10605 = vmatpush1.msra.mxu0 %v9369
    %10606 = vmatprep.subr.mxu0 0.0
    %10607 = vmatpush1.msra.mxu0 %v9374
    %10608 = vmatprep.subr.mxu0 0.0
    %10609 = vmatpush1.msra.mxu0 %v9379
    %10610 = vmatprep.subr.mxu0 0.0
    %10611 = vmatpush1.msra.mxu0 %v9384
    %10612 = vmatprep.subr.mxu0 0.0
    %10613 = vmatpush1.msra.mxu0 %v9389
    %10614 = vmatprep.subr.mxu0 0.0
    %10615 = vmatpush1.msra.mxu0 %v9394
    %10616 = vmatprep.subr.mxu0 0.0
    %10617 = vmatpush1.msra.mxu0 %v9399
    %10618 = vmatprep.subr.mxu0 0.0
    %10619 = vmatpush1.msra.mxu0 %v9404
    %10620 = vmatprep.subr.mxu0 0.0
    %10621 = vmatpush1.msra.mxu0 %v9409
    %10622 = vmatprep.subr.mxu0 0.0
    %10623 = vmatpush1.msra.mxu0 %v9414
    %10624 = vmatprep.subr.mxu0 0.0
    %10625 = vmatpush1.msra.mxu0 %v9419
    %10626 = vmatprep.subr.mxu0 0.0
    %10627 = vmatpush1.msra.mxu0 %v9424
    %10628 = vmatprep.subr.mxu0 0.0
    %10629 = vmatpush1.msra.mxu0 %v9429
    %10630 = vmatprep.subr.mxu0 0.0
    %10631 = vmatpush1.msra.mxu0 %v9434
    %10632 = vmatprep.subr.mxu0 0.0
    %10633 = vmatpush1.msra.mxu0 %v9439
    %10634 = vmatprep.subr.mxu0 0.0
    %10635 = vmatpush1.msra.mxu0 %v9444
    %10636 = vmatprep.subr.mxu0 0.0
    %10637 = vmatpush1.msra.mxu0 %v9449
    %10638 = vmatprep.subr.mxu0 0.0
    %10639 = vmatpush1.msra.mxu0 %v9454
    %10640 = vmatprep.subr.mxu0 0.0
    %10641 = vmatpush1.msra.mxu0 %v9459
    %10642 = vmatprep.subr.mxu0 0.0
    %10643 = vmatpush1.msra.mxu0 %v9464
    %10644 = vmatprep.mubr.f32.mxu0 %v9271
    %10645 = vmatmul.mubr.f32.gmra.mrb[0].mxu0 %v9270
    %v10646 = vpop.f32.mrb[0].mxu0
    %v10647 = vadd.f32 0.0, %v10646
    %v10648 = vpop.f32.mrb[0].mxu0
    %10649 = vmatprep.mubr.f32.mxu0 %v9278
    %10650 = vmatmul.mubr.f32.gmra.mrb[0].mxu0 %v9277
    %v10651 = vpop.f32.mrb[0].mxu0
    %v10652 = vadd.f32 0.0, %v10651
    %v10653 = vpop.f32.mrb[0].mxu0
    %10654 = vmatprep.mubr.f32.mxu0 %v9285
    %10655 = vmatmul.mubr.f32.gmra.mrb[0].mxu0 %v9284
    %v10656 = vpop.f32.mrb[0].mxu0
    %v10657 = vadd.f32 0.0, %v10656
    %v10658 = vpop.f32.mrb[0].mxu0
    %10659 = vmatprep.mubr.f32.mxu0 %v9292
    %10660 = vmatmul.mubr.f32.gmra.mrb[0].mxu0 %v9291
    %v10661 = vpop.f32.mrb[0].mxu0
    %v10662 = vadd.f32 0.0, %v10661
    %v10663 = vpop.f32.mrb[0].mxu0
    %10664 = vmatprep.mubr.f32.mxu0 %v9299
    %10665 = vmatmul.mubr.f32.gmra.mrb[0].mxu0 %v9298
    %v10666 = vpop.f32.mrb[0].mxu0
    %v10667 = vadd.f32 0.0, %v10666
    %v10668 = vpop.f32.mrb[0].mxu0
    %10669 = vdwg.mxu0
    %10670 = vmatprep.subr.mxu0 0.0
    %10671 = vmatpush1.msra.mxu0 %v9469
    %10672 = vmatprep.subr.mxu0 0.0
    %10673 = vmatpush1.msra.mxu0 %v9474
    %10674 = vmatprep.subr.mxu0 0.0
    %10675 = vmatpush1.msra.mxu0 %v9479
    %10676 = vmatprep.subr.mxu0 0.0
    %10677 = vmatpush1.msra.mxu0 %v9484
    %10678 = vmatprep.subr.mxu0 0.0
    %10679 = vmatpush1.msra.mxu0 %v9489
    %10680 = vmatprep.subr.mxu0 0.0
    %10681 = vmatpush1.msra.mxu0 %v9494
    %10682 = vmatprep.subr.mxu0 0.0
    %10683 = vmatpush1.msra.mxu0 %v9499
    %10684 = vmatprep.subr.mxu0 0.0
    %10685 = vmatpush1.msra.mxu0 %v9504
    %10686 = vmatprep.subr.mxu0 0.0
    %10687 = vmatpush1.msra.mxu0 %v9509
    %10688 = vmatprep.subr.mxu0 0.0
    %10689 = vmatpush1.msra.mxu0 %v9514
    %10690 = vmatprep.subr.mxu0 0.0
    %10691 = vmatpush1.msra.mxu0 %v9519
    %10692 = vmatprep.subr.mxu0 0.0
    %10693 = vmatpush1.msra.mxu0 %v9524
    %10694 = vmatprep.subr.mxu0 0.0
    %10695 = vmatpush1.msra.mxu0 %v9529
    %10696 = vmatprep.subr.mxu0 0.0
    %10697 = vmatpush1.msra.mxu0 %v9534
    %10698 = vmatprep.subr.mxu0 0.0
    %10699 = vmatpush1.msra.mxu0 %v9539
    %10700 = vmatprep.subr.mxu0 0.0
    %10701 = vmatpush1.msra.mxu0 %v9544
    %10702 = vmatprep.subr.mxu0 0.0
    %10703 = vmatpush1.msra.mxu0 %v9549
    %10704 = vmatprep.subr.mxu0 0.0
    %10705 = vmatpush1.msra.mxu0 %v9554
    %10706 = vmatprep.subr.mxu0 0.0
    %10707 = vmatpush1.msra.mxu0 %v9559
    %10708 = vmatprep.subr.mxu0 0.0
    %10709 = vmatpush1.msra.mxu0 %v9564
    %10710 = vmatprep.subr.mxu0 0.0
    %10711 = vmatpush1.msra.mxu0 %v9569
    %10712 = vmatprep.subr.mxu0 0.0
    %10713 = vmatpush1.msra.mxu0 %v9574
    %10714 = vmatprep.subr.mxu0 0.0
    %10715 = vmatpush1.msra.mxu0 %v9579
    %10716 = vmatprep.subr.mxu0 0.0
    %10717 = vmatpush1.msra.mxu0 %v9584
    %10718 = vmatprep.subr.mxu0 0.0
    %10719 = vmatpush1.msra.mxu0 %v9589
    %10720 = vmatprep.subr.mxu0 0.0
    %10721 = vmatpush1.msra.mxu0 %v9594
    %10722 = vmatprep.subr.mxu0 0.0
    %10723 = vmatpush1.msra.mxu0 %v9599
    %10724 = vmatprep.subr.mxu0 0.0
    %10725 = vmatpush1.msra.mxu0 %v9604
    %10726 = vmatprep.subr.mxu0 0.0
    %10727 = vmatpush1.msra.mxu0 %v9609
    %10728 = vmatprep.subr.mxu0 0.0
    %10729 = vmatpush1.msra.mxu0 %v9614
    %10730 = vmatprep.subr.mxu0 0.0
    %10731 = vmatpush1.msra.mxu0 %v9619
    %10732 = vmatprep.subr.mxu0 0.0
    %10733 = vmatpush1.msra.mxu0 %v9624
    %10734 = vmatprep.mubr.f32.mxu0 %v9273
    %10735 = vmatmul.mubr.f32.gmra.mrb[0].mxu0 %v9272
    %v10736 = vpop.f32.mrb[0].mxu0
    %v10737 = vadd.f32 %v10647, %v10736
    %v10738 = vpop.f32.mrb[0].mxu0
    %10739 = vmatprep.mubr.f32.mxu0 %v9280
    %10740 = vmatmul.mubr.f32.gmra.mrb[0].mxu0 %v9279
    %v10741 = vpop.f32.mrb[0].mxu0
    %v10742 = vadd.f32 %v10652, %v10741
    %v10743 = vpop.f32.mrb[0].mxu0
    %10744 = vmatprep.mubr.f32.mxu0 %v9287
    %10745 = vmatmul.mubr.f32.gmra.mrb[0].mxu0 %v9286
    %v10746 = vpop.f32.mrb[0].mxu0
    %v10747 = vadd.f32 %v10657, %v10746
    %v10748 = vpop.f32.mrb[0].mxu0
    %10749 = vmatprep.mubr.f32.mxu0 %v9294
    %10750 = vmatmul.mubr.f32.gmra.mrb[0].mxu0 %v9293
    %v10751 = vpop.f32.mrb[0].mxu0
    %v10752 = vadd.f32 %v10662, %v10751
    %v10753 = vpop.f32.mrb[0].mxu0
    %10754 = vmatprep.mubr.f32.mxu0 %v9301
    %10755 = vmatmul.mubr.f32.gmra.mrb[0].mxu0 %v9300
    %v10756 = vpop.f32.mrb[0].mxu0
    %v10757 = vadd.f32 %v10667, %v10756
    %v10758 = vpop.f32.mrb[0].mxu0
    %10759 = vdwg.mxu0
    %10760 = vmatprep.subr.mxu0 0.0
    %10761 = vmatpush1.msra.mxu0 %v9629
    %10762 = vmatprep.subr.mxu0 0.0
    %10763 = vmatpush1.msra.mxu0 %v9634
    %10764 = vmatprep.subr.mxu0 0.0
    %10765 = vmatpush1.msra.mxu0 %v9639
    %10766 = vmatprep.subr.mxu0 0.0
    %10767 = vmatpush1.msra.mxu0 %v9644
    %10768 = vmatprep.subr.mxu0 0.0
    %10769 = vmatpush1.msra.mxu0 %v9649
    %10770 = vmatprep.subr.mxu0 0.0
    %10771 = vmatpush1.msra.mxu0 %v9654
    %10772 = vmatprep.subr.mxu0 0.0
    %10773 = vmatpush1.msra.mxu0 %v9659
    %10774 = vmatprep.subr.mxu0 0.0
    %10775 = vmatpush1.msra.mxu0 %v9664
    %10776 = vmatprep.subr.mxu0 0.0
    %10777 = vmatpush1.msra.mxu0 %v9669
    %10778 = vmatprep.subr.mxu0 0.0
    %10779 = vmatpush1.msra.mxu0 %v9674
    %10780 = vmatprep.subr.mxu0 0.0
    %10781 = vmatpush1.msra.mxu0 %v9679
    %10782 = vmatprep.subr.mxu0 0.0
    %10783 = vmatpush1.msra.mxu0 %v9684
    %10784 = vmatprep.subr.mxu0 0.0
    %10785 = vmatpush1.msra.mxu0 %v9689
    %10786 = vmatprep.subr.mxu0 0.0
    %10787 = vmatpush1.msra.mxu0 %v9694
    %10788 = vmatprep.subr.mxu0 0.0
    %10789 = vmatpush1.msra.mxu0 %v9699
    %10790 = vmatprep.subr.mxu0 0.0
    %10791 = vmatpush1.msra.mxu0 %v9704
    %10792 = vmatprep.subr.mxu0 0.0
    %10793 = vmatpush1.msra.mxu0 %v9709
    %10794 = vmatprep.subr.mxu0 0.0
    %10795 = vmatpush1.msra.mxu0 %v9714
    %10796 = vmatprep.subr.mxu0 0.0
    %10797 = vmatpush1.msra.mxu0 %v9719
    %10798 = vmatprep.subr.mxu0 0.0
    %10799 = vmatpush1.msra.mxu0 %v9724
    %10800 = vmatprep.subr.mxu0 0.0
    %10801 = vmatpush1.msra.mxu0 %v9729
    %10802 = vmatprep.subr.mxu0 0.0
    %10803 = vmatpush1.msra.mxu0 %v9734
    %10804 = vmatprep.subr.mxu0 0.0
    %10805 = vmatpush1.msra.mxu0 %v9739
    %10806 = vmatprep.subr.mxu0 0.0
    %10807 = vmatpush1.msra.mxu0 %v9744
    %10808 = vmatprep.subr.mxu0 0.0
    %10809 = vmatpush1.msra.mxu0 %v9749
    %10810 = vmatprep.subr.mxu0 0.0
    %10811 = vmatpush1.msra.mxu0 %v9754
    %10812 = vmatprep.subr.mxu0 0.0
    %10813 = vmatpush1.msra.mxu0 %v9759
    %10814 = vmatprep.subr.mxu0 0.0
    %10815 = vmatpush1.msra.mxu0 %v9764
    %10816 = vmatprep.subr.mxu0 0.0
    %10817 = vmatpush1.msra.mxu0 %v9769
    %10818 = vmatprep.subr.mxu0 0.0
    %10819 = vmatpush1.msra.mxu0 %v9774
    %10820 = vmatprep.subr.mxu0 0.0
    %10821 = vmatpush1.msra.mxu0 %v9779
    %10822 = vmatprep.subr.mxu0 0.0
    %10823 = vmatpush1.msra.mxu0 %v9784
    %10824 = vmatprep.mubr.f32.mxu0 %v9275
    %10825 = vmatmul.mubr.f32.gmra.mrb[0].mxu0 %v9274
    %v10826 = vpop.f32.mrb[0].mxu0
    %v10827 = vadd.f32 %v10737, %v10826
    %v10828 = vpop.f32.mrb[0].mxu0
    %10829 = vmatprep.mubr.f32.mxu0 %v9282
    %10830 = vmatmul.mubr.f32.gmra.mrb[0].mxu0 %v9281
    %v10831 = vpop.f32.mrb[0].mxu0
    %v10832 = vadd.f32 %v10742, %v10831
    %v10833 = vpop.f32.mrb[0].mxu0
    %10834 = vmatprep.mubr.f32.mxu0 %v9289
    %10835 = vmatmul.mubr.f32.gmra.mrb[0].mxu0 %v9288
    %v10836 = vpop.f32.mrb[0].mxu0
    %v10837 = vadd.f32 %v10747, %v10836
    %v10838 = vpop.f32.mrb[0].mxu0
    %10839 = vmatprep.mubr.f32.mxu0 %v9296
    %10840 = vmatmul.mubr.f32.gmra.mrb[0].mxu0 %v9295
    %v10841 = vpop.f32.mrb[0].mxu0
    %v10842 = vadd.f32 %v10752, %v10841
    %v10843 = vpop.f32.mrb[0].mxu0
    %10844 = vmatprep.mubr.f32.mxu0 %v9303
    %10845 = vmatmul.mubr.f32.gmra.mrb[0].mxu0 %v9302
    %v10846 = vpop.f32.mrb[0].mxu0
    %v10847 = vadd.f32 %v10757, %v10846
    %v10848 = vpop.f32.mrb[0].mxu0
    %10849 = vdwg.mxu0
    %10850 = vmatprep.subr.mxu0 0.0
    %10851 = vmatpush1.msra.mxu0 %v9789
    %10852 = vmatprep.subr.mxu0 0.0
    %10853 = vmatpush1.msra.mxu0 %v9794
    %10854 = vmatprep.subr.mxu0 0.0
    %10855 = vmatpush1.msra.mxu0 %v9799
    %10856 = vmatprep.subr.mxu0 0.0
    %10857 = vmatpush1.msra.mxu0 %v9804
    %10858 = vmatprep.subr.mxu0 0.0
    %10859 = vmatpush1.msra.mxu0 0.0
    %10860 = vmatprep.subr.mxu0 0.0
    %10861 = vmatpush1.msra.mxu0 0.0
    %10862 = vmatprep.subr.mxu0 0.0
    %10863 = vmatpush1.msra.mxu0 0.0
    %10864 = vmatprep.subr.mxu0 0.0
    %10865 = vmatpush1.msra.mxu0 0.0
    %10866 = vmatprep.subr.mxu0 0.0
    %10867 = vmatpush1.msra.mxu0 0.0
    %10868 = vmatprep.subr.mxu0 0.0
    %10869 = vmatpush1.msra.mxu0 0.0
    %10870 = vmatprep.subr.mxu0 0.0
    %10871 = vmatpush1.msra.mxu0 0.0
    %10872 = vmatprep.subr.mxu0 0.0
    %10873 = vmatpush1.msra.mxu0 0.0
    %10874 = vmatprep.subr.mxu0 0.0
    %10875 = vmatpush1.msra.mxu0 0.0
    %10876 = vmatprep.subr.mxu0 0.0
    %10877 = vmatpush1.msra.mxu0 0.0
    %10878 = vmatprep.subr.mxu0 0.0
    %10879 = vmatpush1.msra.mxu0 0.0
    %10880 = vmatprep.subr.mxu0 0.0
    %10881 = vmatpush1.msra.mxu0 0.0
    %10882 = vmatprep.subr.mxu0 0.0
    %10883 = vmatpush1.msra.mxu0 0.0
    %10884 = vmatprep.subr.mxu0 0.0
    %10885 = vmatpush1.msra.mxu0 0.0
    %10886 = vmatprep.subr.mxu0 0.0
    %10887 = vmatpush1.msra.mxu0 0.0
    %10888 = vmatprep.subr.mxu0 0.0
    %10889 = vmatpush1.msra.mxu0 0.0
    %10890 = vmatprep.subr.mxu0 0.0
    %10891 = vmatpush1.msra.mxu0 0.0
    %10892 = vmatprep.subr.mxu0 0.0
    %10893 = vmatpush1.msra.mxu0 0.0
    %10894 = vmatprep.subr.mxu0 0.0
    %10895 = vmatpush1.msra.mxu0 0.0
    %10896 = vmatprep.subr.mxu0 0.0
    %10897 = vmatpush1.msra.mxu0 0.0
    %10898 = vmatprep.subr.mxu0 0.0
    %10899 = vmatpush1.msra.mxu0 0.0
    %10900 = vmatprep.subr.mxu0 0.0
    %10901 = vmatpush1.msra.mxu0 0.0
    %10902 = vmatprep.subr.mxu0 0.0
    %10903 = vmatpush1.msra.mxu0 0.0
    %10904 = vmatprep.subr.mxu0 0.0
    %10905 = vmatpush1.msra.mxu0 0.0
    %10906 = vmatprep.subr.mxu0 0.0
    %10907 = vmatpush1.msra.mxu0 0.0
    %10908 = vmatprep.subr.mxu0 0.0
    %10909 = vmatpush1.msra.mxu0 0.0
    %10910 = vmatprep.subr.mxu0 0.0
    %10911 = vmatpush1.msra.mxu0 0.0
    %10912 = vmatprep.subr.mxu0 0.0
    %10913 = vmatpush1.msra.mxu0 0.0
    %10914 = vmatprep.mubr.f32.mxu0 0.0
    %10915 = vmatmul.mubr.f32.gmra.mrb[0].mxu0 %v9806
    %v10916 = vpop.f32.mrb[0].mxu0
    %v10917 = vadd.f32 %v10827, %v10916
    %v10918 = vpop.f32.mrb[0].mxu0
    %10919 = vmatprep.mubr.f32.mxu0 0.0
    %10920 = vmatmul.mubr.f32.gmra.mrb[0].mxu0 %v9809
    %v10921 = vpop.f32.mrb[0].mxu0
    %v10922 = vadd.f32 %v10832, %v10921
    %v10923 = vpop.f32.mrb[0].mxu0
    %10924 = vmatprep.mubr.f32.mxu0 0.0
    %10925 = vmatmul.mubr.f32.gmra.mrb[0].mxu0 %v9812
    %v10926 = vpop.f32.mrb[0].mxu0
    %v10927 = vadd.f32 %v10837, %v10926
    %v10928 = vpop.f32.mrb[0].mxu0
    %10929 = vmatprep.mubr.f32.mxu0 0.0
    %10930 = vmatmul.mubr.f32.gmra.mrb[0].mxu0 %v9815
    %v10931 = vpop.f32.mrb[0].mxu0
    %v10932 = vadd.f32 %v10842, %v10931
    %v10933 = vpop.f32.mrb[0].mxu0
    %10934 = vmatprep.mubr.f32.mxu0 0.0
    %10935 = vmatmul.mubr.f32.gmra.mrb[0].mxu0 %v9818
    %v10936 = vpop.f32.mrb[0].mxu0
    %v10937 = vadd.f32 %v10847, %v10936
    %v10938 = vpop.f32.mrb[0].mxu0
    %10939 = vdwg.mxu0
    %v10940 = vld [vmem:[%s9] sm:$0xff]
    %v10941 = vld [vmem:[%s9 + $0x8] sm:$0xff]
    %v10942 = vld [vmem:[%s9 + $0x10] sm:$0xff]
    %v10943 = vld [vmem:[%s9 + $0x18] sm:$0xff]
    %v10944 = vld [vmem:[%s9 + $0x20] sm:$0xff]
    %v10945 = vld [vmem:[%s9 + $0x28] sm:$0xff]
    %v10946 = vld [vmem:[%s9 + $0x30] sm:$0xff]
    %v10947 = vld [vmem:[%s9 + $0x38] sm:$0xff]
    %v10948 = vld [vmem:[%s9 + $0x40] sm:$0xff]
    %v10949 = vld [vmem:[%s9 + $0x48] sm:$0xff]
    %v10950 = vld [vmem:[%s9 + $0x50] sm:$0xff]
    %v10951 = vld [vmem:[%s9 + $0x58] sm:$0xff]
    %v10952 = vld [vmem:[%s9 + $0x60] sm:$0xff]
    %v10953 = vld [vmem:[%s9 + $0x68] sm:$0xff]
    %v10954 = vld [vmem:[%s9 + $0x70] sm:$0xff]
    %v10955 = vld [vmem:[%s9 + $0x78] sm:$0xff]
    %v10956 = vld [vmem:[%s9 + $0x80] sm:$0xff]
    %v10957 = vld [vmem:[%s9 + $0x88] sm:$0xff]
    %v10958 = vld [vmem:[%s9 + $0x90] sm:$0xff]
    %v10959 = vld [vmem:[%s9 + $0x98] sm:$0xff]
    %v10960 = vld [vmem:[%s9 + $0xa0] sm:$0xff]
    %v10961 = vld [vmem:[%s9 + $0xa8] sm:$0xff]
    %v10962 = vld [vmem:[%s9 + $0xb0] sm:$0xff]
    %v10963 = vld [vmem:[%s9 + $0xb8] sm:$0xff]
    %v10964 = vld [vmem:[%s9 + $0xc0] sm:$0xff]
    %v10965 = vmul.f32 %v10172, %v10940
    %v10966 = vmul.f32 %v10174, %v10941
    %v10967 = vmul.f32 %v10552, %v10942
    %v10968 = vmul.f32 %v10554, %v10943
    %v10969 = vmul.f32 %v10917, %v10944
    %v10970 = vmul.f32 %v10178, %v10945
    %v10971 = vmul.f32 %v10180, %v10946
    %v10972 = vmul.f32 %v10558, %v10947
    %v10973 = vmul.f32 %v10560, %v10948
    %v10974 = vmul.f32 %v10922, %v10949
    %v10975 = vmul.f32 %v10184, %v10950
    %v10976 = vmul.f32 %v10186, %v10951
    %v10977 = vmul.f32 %v10564, %v10952
    %v10978 = vmul.f32 %v10566, %v10953
    %v10979 = vmul.f32 %v10927, %v10954
    %v10980 = vmul.f32 %v10190, %v10955
    %v10981 = vmul.f32 %v10192, %v10956
    %v10982 = vmul.f32 %v10570, %v10957
    %v10983 = vmul.f32 %v10572, %v10958
    %v10984 = vmul.f32 %v10932, %v10959
    %v10985 = vmul.f32 %v10196, %v10960
    %v10986 = vmul.f32 %v10198, %v10961
    %v10987 = vmul.f32 %v10576, %v10962
    %v10988 = vmul.f32 %v10578, %v10963
    %v10989 = vmul.f32 %v10937, %v10964
    %v10990 = vld [vmem:[%s10] sm:$0x3]
    %vm10991 = vcmask 326656
    %v10993 = vsel %vm10991, %v10990, 0
    %10995 = vmatprep.subr.mxu0 %v10966
    %10996 = vmatpush1.msra.mxu0 %v10965
    %10997 = vmatprep.subr.mxu0 %v10971
    %10998 = vmatpush1.msra.mxu0 %v10970
    %10999 = vmatprep.subr.mxu0 %v10976
    %11000 = vmatpush1.msra.mxu0 %v10975
    %11001 = vmatprep.subr.mxu0 %v10981
    %11002 = vmatpush1.msra.mxu0 %v10980
    %11003 = vmatprep.subr.mxu0 %v10986
    %11004 = vmatpush1.msra.mxu0 %v10985
    %11005 = vmatprep.subr.mxu0 0.0
    %11006 = vmatpush1.msra.mxu0 0.0
    %11007 = vmatprep.subr.mxu0 0.0
    %11008 = vmatpush1.msra.mxu0 0.0
    %11009 = vmatprep.subr.mxu0 0.0
    %11010 = vmatpush1.msra.mxu0 0.0
    %11011 = vmatprep.subr.mxu0 0.0
    %11012 = vmatpush1.msra.mxu0 0.0
    %11013 = vmatprep.subr.mxu0 0.0
    %11014 = vmatpush1.msra.mxu0 0.0
    %11015 = vmatprep.subr.mxu0 0.0
    %11016 = vmatpush1.msra.mxu0 0.0
    %11017 = vmatprep.subr.mxu0 0.0
    %11018 = vmatpush1.msra.mxu0 0.0
    %11019 = vmatprep.subr.mxu0 0.0
    %11020 = vmatpush1.msra.mxu0 0.0
    %11021 = vmatprep.subr.mxu0 0.0
    %11022 = vmatpush1.msra.mxu0 0.0
    %11023 = vmatprep.subr.mxu0 0.0
    %11024 = vmatpush1.msra.mxu0 0.0
    %11025 = vmatprep.subr.mxu0 0.0
    %11026 = vmatpush1.msra.mxu0 0.0
    %11027 = vmatprep.subr.mxu0 0.0
    %11028 = vmatpush1.msra.mxu0 0.0
    %11029 = vmatprep.subr.mxu0 0.0
    %11030 = vmatpush1.msra.mxu0 0.0
    %11031 = vmatprep.subr.mxu0 0.0
    %11032 = vmatpush1.msra.mxu0 0.0
    %11033 = vmatprep.subr.mxu0 0.0
    %11034 = vmatpush1.msra.mxu0 0.0
    %11035 = vmatprep.subr.mxu0 0.0
    %11036 = vmatpush1.msra.mxu0 0.0
    %11037 = vmatprep.subr.mxu0 0.0
    %11038 = vmatpush1.msra.mxu0 0.0
    %11039 = vmatprep.subr.mxu0 0.0
    %11040 = vmatpush1.msra.mxu0 0.0
    %11041 = vmatprep.subr.mxu0 0.0
    %11042 = vmatpush1.msra.mxu0 0.0
    %11043 = vmatprep.subr.mxu0 0.0
    %11044 = vmatpush1.msra.mxu0 0.0
    %11045 = vmatprep.subr.mxu0 0.0
    %11046 = vmatpush1.msra.mxu0 0.0
    %11047 = vmatprep.subr.mxu0 0.0
    %11048 = vmatpush1.msra.mxu0 0.0
    %11049 = vmatprep.subr.mxu0 0.0
    %11050 = vmatpush1.msra.mxu0 0.0
    %11051 = vmatprep.subr.mxu0 0.0
    %11052 = vmatpush1.msra.mxu0 0.0
    %11053 = vmatprep.subr.mxu0 0.0
    %11054 = vmatpush1.msra.mxu0 0.0
    %11055 = vmatprep.subr.mxu0 0.0
    %11056 = vmatpush1.msra.mxu0 0.0
    %11057 = vmatprep.subr.mxu0 0.0
    %11058 = vmatpush1.msra.mxu0 0.0
    %11059 = vmatprep.mubr.f32.mxu0 0.0
    %11060 = vmatmul.mubr.f32.gmra.mrb[0].mxu0 %v10993
    %v11061 = vpop.f32.mrb[0].mxu0
    %v11062 = vadd.f32 0.0, %v11061
    %v11063 = vpop.f32.mrb[0].mxu0
    %v11064 = vadd.f32 0.0, %v11063
    %11065 = vdwg.mxu0
    %11066 = vmatprep.subr.mxu0 %v10968
    %11067 = vmatpush1.msra.mxu0 %v10967
    %11068 = vmatprep.subr.mxu0 %v10973
    %11069 = vmatpush1.msra.mxu0 %v10972
    %11070 = vmatprep.subr.mxu0 %v10978
    %11071 = vmatpush1.msra.mxu0 %v10977
    %11072 = vmatprep.subr.mxu0 %v10983
    %11073 = vmatpush1.msra.mxu0 %v10982
    %11074 = vmatprep.subr.mxu0 %v10988
    %11075 = vmatpush1.msra.mxu0 %v10987
    %11076 = vmatprep.subr.mxu0 0.0
    %11077 = vmatpush1.msra.mxu0 0.0
    %11078 = vmatprep.subr.mxu0 0.0
    %11079 = vmatpush1.msra.mxu0 0.0
    %11080 = vmatprep.subr.mxu0 0.0
    %11081 = vmatpush1.msra.mxu0 0.0
    %11082 = vmatprep.subr.mxu0 0.0
    %11083 = vmatpush1.msra.mxu0 0.0
    %11084 = vmatprep.subr.mxu0 0.0
    %11085 = vmatpush1.msra.mxu0 0.0
    %11086 = vmatprep.subr.mxu0 0.0
    %11087 = vmatpush1.msra.mxu0 0.0
    %11088 = vmatprep.subr.mxu0 0.0
    %11089 = vmatpush1.msra.mxu0 0.0
    %11090 = vmatprep.subr.mxu0 0.0
    %11091 = vmatpush1.msra.mxu0 0.0
    %11092 = vmatprep.subr.mxu0 0.0
    %11093 = vmatpush1.msra.mxu0 0.0
    %11094 = vmatprep.subr.mxu0 0.0
    %11095 = vmatpush1.msra.mxu0 0.0
    %11096 = vmatprep.subr.mxu0 0.0
    %11097 = vmatpush1.msra.mxu0 0.0
    %11098 = vmatprep.subr.mxu0 0.0
    %11099 = vmatpush1.msra.mxu0 0.0
    %11100 = vmatprep.subr.mxu0 0.0
    %11101 = vmatpush1.msra.mxu0 0.0
    %11102 = vmatprep.subr.mxu0 0.0
    %11103 = vmatpush1.msra.mxu0 0.0
    %11104 = vmatprep.subr.mxu0 0.0
    %11105 = vmatpush1.msra.mxu0 0.0
    %11106 = vmatprep.subr.mxu0 0.0
    %11107 = vmatpush1.msra.mxu0 0.0
    %11108 = vmatprep.subr.mxu0 0.0
    %11109 = vmatpush1.msra.mxu0 0.0
    %11110 = vmatprep.subr.mxu0 0.0
    %11111 = vmatpush1.msra.mxu0 0.0
    %11112 = vmatprep.subr.mxu0 0.0
    %11113 = vmatpush1.msra.mxu0 0.0
    %11114 = vmatprep.subr.mxu0 0.0
    %11115 = vmatpush1.msra.mxu0 0.0
    %11116 = vmatprep.subr.mxu0 0.0
    %11117 = vmatpush1.msra.mxu0 0.0
    %11118 = vmatprep.subr.mxu0 0.0
    %11119 = vmatpush1.msra.mxu0 0.0
    %11120 = vmatprep.subr.mxu0 0.0
    %11121 = vmatpush1.msra.mxu0 0.0
    %11122 = vmatprep.subr.mxu0 0.0
    %11123 = vmatpush1.msra.mxu0 0.0
    %11124 = vmatprep.subr.mxu0 0.0
    %11125 = vmatpush1.msra.mxu0 0.0
    %11126 = vmatprep.subr.mxu0 0.0
    %11127 = vmatpush1.msra.mxu0 0.0
    %11128 = vmatprep.subr.mxu0 0.0
    %11129 = vmatpush1.msra.mxu0 0.0
    %11130 = vmatprep.mubr.f32.mxu0 0.0
    %11131 = vmatmul.mubr.f32.gmra.mrb[0].mxu0 %v10993
    %v11132 = vpop.f32.mrb[0].mxu0
    %v11133 = vadd.f32 0.0, %v11132
    %v11134 = vpop.f32.mrb[0].mxu0
    %v11135 = vadd.f32 0.0, %v11134
    %11136 = vdwg.mxu0
    %11137 = vmatprep.subr.mxu0 0.0
    %11138 = vmatpush1.msra.mxu0 %v10969
    %11139 = vmatprep.subr.mxu0 0.0
    %11140 = vmatpush1.msra.mxu0 %v10974
    %11141 = vmatprep.subr.mxu0 0.0
    %11142 = vmatpush1.msra.mxu0 %v10979
    %11143 = vmatprep.subr.mxu0 0.0
    %11144 = vmatpush1.msra.mxu0 %v10984
    %11145 = vmatprep.subr.mxu0 0.0
    %11146 = vmatpush1.msra.mxu0 %v10989
    %11147 = vmatprep.subr.mxu0 0.0
    %11148 = vmatpush1.msra.mxu0 0.0
    %11149 = vmatprep.subr.mxu0 0.0
    %11150 = vmatpush1.msra.mxu0 0.0
    %11151 = vmatprep.subr.mxu0 0.0
    %11152 = vmatpush1.msra.mxu0 0.0
    %11153 = vmatprep.subr.mxu0 0.0
    %11154 = vmatpush1.msra.mxu0 0.0
    %11155 = vmatprep.subr.mxu0 0.0
    %11156 = vmatpush1.msra.mxu0 0.0
    %11157 = vmatprep.subr.mxu0 0.0
    %11158 = vmatpush1.msra.mxu0 0.0
    %11159 = vmatprep.subr.mxu0 0.0
    %11160 = vmatpush1.msra.mxu0 0.0
    %11161 = vmatprep.subr.mxu0 0.0
    %11162 = vmatpush1.msra.mxu0 0.0
    %11163 = vmatprep.subr.mxu0 0.0
    %11164 = vmatpush1.msra.mxu0 0.0
    %11165 = vmatprep.subr.mxu0 0.0
    %11166 = vmatpush1.msra.mxu0 0.0
    %11167 = vmatprep.subr.mxu0 0.0
    %11168 = vmatpush1.msra.mxu0 0.0
    %11169 = vmatprep.subr.mxu0 0.0
    %11170 = vmatpush1.msra.mxu0 0.0
    %11171 = vmatprep.subr.mxu0 0.0
    %11172 = vmatpush1.msra.mxu0 0.0
    %11173 = vmatprep.subr.mxu0 0.0
    %11174 = vmatpush1.msra.mxu0 0.0
    %11175 = vmatprep.subr.mxu0 0.0
    %11176 = vmatpush1.msra.mxu0 0.0
    %11177 = vmatprep.subr.mxu0 0.0
    %11178 = vmatpush1.msra.mxu0 0.0
    %11179 = vmatprep.subr.mxu0 0.0
    %11180 = vmatpush1.msra.mxu0 0.0
    %11181 = vmatprep.subr.mxu0 0.0
    %11182 = vmatpush1.msra.mxu0 0.0
    %11183 = vmatprep.subr.mxu0 0.0
    %11184 = vmatpush1.msra.mxu0 0.0
    %11185 = vmatprep.subr.mxu0 0.0
    %11186 = vmatpush1.msra.mxu0 0.0
    %11187 = vmatprep.subr.mxu0 0.0
    %11188 = vmatpush1.msra.mxu0 0.0
    %11189 = vmatprep.subr.mxu0 0.0
    %11190 = vmatpush1.msra.mxu0 0.0
    %11191 = vmatprep.subr.mxu0 0.0
    %11192 = vmatpush1.msra.mxu0 0.0
    %11193 = vmatprep.subr.mxu0 0.0
    %11194 = vmatpush1.msra.mxu0 0.0
    %11195 = vmatprep.subr.mxu0 0.0
    %11196 = vmatpush1.msra.mxu0 0.0
    %11197 = vmatprep.subr.mxu0 0.0
    %11198 = vmatpush1.msra.mxu0 0.0
    %11199 = vmatprep.subr.mxu0 0.0
    %11200 = vmatpush1.msra.mxu0 0.0
    %11201 = vmatprep.mubr.f32.mxu0 0.0
    %11202 = vmatmul.mubr.f32.gmra.mrb[0].mxu0 %v10993
    %v11203 = vpop.f32.mrb[0].mxu0
    %v11204 = vadd.f32 0.0, %v11203
    %v11205 = vpop.f32.mrb[0].mxu0
    %11206 = vdwg.mxu0
    %v11207 = vld [vmem:[%s11] sm:$0xff]
    %v11208 = vld [vmem:[%s11 + $0x8] sm:$0xff]
    %v11209 = vld [vmem:[%s11 + $0x10] sm:$0xff]
    %v11210 = vld [vmem:[%s11 + $0x18] sm:$0xff]
    %v11211 = vld [vmem:[%s11 + $0x20] sm:$0xff]
    %v11212 = vld [vmem:[%s11 + $0x28] sm:$0xff]
    %v11213 = vld [vmem:[%s11 + $0x30] sm:$0xff]
    %v11214 = vld [vmem:[%s11 + $0x38] sm:$0xff]
    %v11215 = vld [vmem:[%s11 + $0x40] sm:$0xff]
    %v11216 = vld [vmem:[%s11 + $0x48] sm:$0xff]
    %v11217 = vld [vmem:[%s11 + $0x50] sm:$0xff]
    %v11218 = vld [vmem:[%s11 + $0x58] sm:$0xff]
    %v11219 = vld [vmem:[%s11 + $0x60] sm:$0xff]
    %v11220 = vld [vmem:[%s11 + $0x68] sm:$0xff]
    %v11221 = vld [vmem:[%s11 + $0x70] sm:$0xff]
    %v11222 = vld [vmem:[%s11 + $0x78] sm:$0xff]
    %v11223 = vld [vmem:[%s11 + $0x80] sm:$0xff]
    %v11224 = vld [vmem:[%s11 + $0x88] sm:$0xff]
    %v11225 = vld [vmem:[%s11 + $0x90] sm:$0xff]
    %v11226 = vld [vmem:[%s11 + $0x98] sm:$0xff]
    %v11227 = vld [vmem:[%s11 + $0xa0] sm:$0xff]
    %v11228 = vld [vmem:[%s11 + $0xa8] sm:$0xff]
    %v11229 = vld [vmem:[%s11 + $0xb0] sm:$0xff]
    %v11230 = vld [vmem:[%s11 + $0xb8] sm:$0xff]
    %v11231 = vld [vmem:[%s11 + $0xc0] sm:$0xff]
    %v11232 = vld [vmem:[%s11 + $0xc8] sm:$0xff]
    %v11233 = vld [vmem:[%s11 + $0xd0] sm:$0xff]
    %v11234 = vld [vmem:[%s11 + $0xd8] sm:$0xff]
    %v11235 = vld [vmem:[%s11 + $0xe0] sm:$0xff]
    %v11236 = vld [vmem:[%s11 + $0xe8] sm:$0xff]
    %v11237 = vld [vmem:[%s11 + $0xf0] sm:$0xff]
    %v11238 = vld [vmem:[%s11 + $0xf8] sm:$0xff]
    %v11239 = vld [vmem:[%s11 + $0x100] sm:$0xff]
    %v11240 = vld [vmem:[%s11 + $0x108] sm:$0xff]
    %v11241 = vld [vmem:[%s11 + $0x110] sm:$0xff]
    %v11242 = vld [vmem:[%s11 + $0x118] sm:$0xff]
    %v11243 = vld [vmem:[%s11 + $0x120] sm:$0xff]
    %v11244 = vld [vmem:[%s11 + $0x128] sm:$0xff]
    %v11245 = vld [vmem:[%s11 + $0x130] sm:$0xff]
    %v11246 = vld [vmem:[%s11 + $0x138] sm:$0xff]
    %v11247 = vld [vmem:[%s11 + $0x140] sm:$0xff]
    %v11248 = vld [vmem:[%s11 + $0x148] sm:$0xff]
    %v11249 = vld [vmem:[%s11 + $0x150] sm:$0xff]
    %v11250 = vld [vmem:[%s11 + $0x158] sm:$0xff]
    %v11251 = vld [vmem:[%s11 + $0x160] sm:$0xff]
    %v11252 = vld [vmem:[%s11 + $0x168] sm:$0xff]
    %v11253 = vld [vmem:[%s11 + $0x170] sm:$0xff]
    %v11254 = vld [vmem:[%s11 + $0x178] sm:$0xff]
    %v11255 = vld [vmem:[%s11 + $0x180] sm:$0xff]
    %v11256 = vld [vmem:[%s11 + $0x188] sm:$0xff]
    %v11257 = vld [vmem:[%s11 + $0x190] sm:$0xff]
    %v11258 = vld [vmem:[%s11 + $0x198] sm:$0xff]
    %v11259 = vld [vmem:[%s11 + $0x1a0] sm:$0xff]
    %v11260 = vld [vmem:[%s11 + $0x1a8] sm:$0xff]
    %v11261 = vld [vmem:[%s11 + $0x1b0] sm:$0xff]
    %v11262 = vld [vmem:[%s11 + $0x1b8] sm:$0xff]
    %v11263 = vld [vmem:[%s11 + $0x1c0] sm:$0xff]
    %v11264 = vld [vmem:[%s11 + $0x1c8] sm:$0xff]
    %v11265 = vld [vmem:[%s11 + $0x1d0] sm:$0xff]
    %v11266 = vld [vmem:[%s11 + $0x1d8] sm:$0xff]
    %v11267 = vld [vmem:[%s11 + $0x1e0] sm:$0xff]
    %v11268 = vld [vmem:[%s11 + $0x1e8] sm:$0xff]
    %v11269 = vld [vmem:[%s11 + $0x1f0] sm:$0xff]
    %v11270 = vld [vmem:[%s11 + $0x1f8] sm:$0xff]
    %v11271 = vld [vmem:[%s11 + $0x200] sm:$0xff]
    %v11272 = vld [vmem:[%s11 + $0x208] sm:$0xff]
    %v11273 = vld [vmem:[%s11 + $0x210] sm:$0xff]
    %v11274 = vld [vmem:[%s11 + $0x218] sm:$0xff]
    %v11275 = vld [vmem:[%s11 + $0x220] sm:$0xff]
    %v11276 = vld [vmem:[%s11 + $0x228] sm:$0xff]
    %v11277 = vld [vmem:[%s11 + $0x230] sm:$0xff]
    %v11278 = vld [vmem:[%s11 + $0x238] sm:$0xff]
    %v11279 = vld [vmem:[%s11 + $0x240] sm:$0xff]
    %v11280 = vld [vmem:[%s11 + $0x248] sm:$0xff]
    %v11281 = vld [vmem:[%s11 + $0x250] sm:$0xff]
    %v11282 = vld [vmem:[%s11 + $0x258] sm:$0xff]
    %v11283 = vld [vmem:[%s11 + $0x260] sm:$0xff]
    %v11284 = vld [vmem:[%s11 + $0x268] sm:$0xff]
    %v11285 = vld [vmem:[%s11 + $0x270] sm:$0xff]
    %v11286 = vld [vmem:[%s11 + $0x278] sm:$0xff]
    %v11287 = vld [vmem:[%s12] sm:$0x1]
    %v11289 = vlaneseq
    %v11290 = vshrl.u32 %v11289, 7
    %v11291 = vsub.s32 0, %v11290
    %v11292 = vrot.slane %v11287, %v11291
    %11294 = vmatprep.subr.mxu0 0.0
    %11295 = vmatpush1.msra.mxu0 %v11207
    %11296 = vmatprep.subr.mxu0 0.0
    %11297 = vmatpush1.msra.mxu0 %v11208
    %11298 = vmatprep.subr.mxu0 0.0
    %11299 = vmatpush1.msra.mxu0 %v11209
    %11300 = vmatprep.subr.mxu0 0.0
    %11301 = vmatpush1.msra.mxu0 %v11210
    %11302 = vmatprep.subr.mxu0 0.0
    %11303 = vmatpush1.msra.mxu0 %v11211
    %11304 = vmatprep.subr.mxu0 0.0
    %11305 = vmatpush1.msra.mxu0 %v11212
    %11306 = vmatprep.subr.mxu0 0.0
    %11307 = vmatpush1.msra.mxu0 %v11213
    %11308 = vmatprep.subr.mxu0 0.0
    %11309 = vmatpush1.msra.mxu0 %v11214
    %11310 = vmatprep.subr.mxu0 0.0
    %11311 = vmatpush1.msra.mxu0 %v11215
    %11312 = vmatprep.subr.mxu0 0.0
    %11313 = vmatpush1.msra.mxu0 %v11216
    %11314 = vmatprep.subr.mxu0 0.0
    %11315 = vmatpush1.msra.mxu0 %v11217
    %11316 = vmatprep.subr.mxu0 0.0
    %11317 = vmatpush1.msra.mxu0 %v11218
    %11318 = vmatprep.subr.mxu0 0.0
    %11319 = vmatpush1.msra.mxu0 %v11219
    %11320 = vmatprep.subr.mxu0 0.0
    %11321 = vmatpush1.msra.mxu0 %v11220
    %11322 = vmatprep.subr.mxu0 0.0
    %11323 = vmatpush1.msra.mxu0 %v11221
    %11324 = vmatprep.subr.mxu0 0.0
    %11325 = vmatpush1.msra.mxu0 %v11222
    %11326 = vmatprep.subr.mxu0 0.0
    %11327 = vmatpush1.msra.mxu0 %v11223
    %11328 = vmatprep.subr.mxu0 0.0
    %11329 = vmatpush1.msra.mxu0 %v11224
    %11330 = vmatprep.subr.mxu0 0.0
    %11331 = vmatpush1.msra.mxu0 %v11225
    %11332 = vmatprep.subr.mxu0 0.0
    %11333 = vmatpush1.msra.mxu0 %v11226
    %11334 = vmatprep.subr.mxu0 0.0
    %11335 = vmatpush1.msra.mxu0 %v11227
    %11336 = vmatprep.subr.mxu0 0.0
    %11337 = vmatpush1.msra.mxu0 %v11228
    %11338 = vmatprep.subr.mxu0 0.0
    %11339 = vmatpush1.msra.mxu0 %v11229
    %11340 = vmatprep.subr.mxu0 0.0
    %11341 = vmatpush1.msra.mxu0 %v11230
    %11342 = vmatprep.subr.mxu0 0.0
    %11343 = vmatpush1.msra.mxu0 %v11231
    %11344 = vmatprep.subr.mxu0 0.0
    %11345 = vmatpush1.msra.mxu0 %v11232
    %11346 = vmatprep.subr.mxu0 0.0
    %11347 = vmatpush1.msra.mxu0 %v11233
    %11348 = vmatprep.subr.mxu0 0.0
    %11349 = vmatpush1.msra.mxu0 %v11234
    %11350 = vmatprep.subr.mxu0 0.0
    %11351 = vmatpush1.msra.mxu0 %v11235
    %11352 = vmatprep.subr.mxu0 0.0
    %11353 = vmatpush1.msra.mxu0 %v11236
    %11354 = vmatprep.subr.mxu0 0.0
    %11355 = vmatpush1.msra.mxu0 %v11237
    %11356 = vmatprep.subr.mxu0 0.0
    %11357 = vmatpush1.msra.mxu0 %v11238
    %11358 = vmatprep.mubr.f32.mxu0 %v11064
    %11359 = vmatmul.mubr.f32.gmra.mrb[0].mxu0 %v11062
    %v11360 = vpop.f32.mrb[0].mxu0
    %v11361 = vadd.f32 %v11292, %v11360
    %v11362 = vpop.f32.mrb[0].mxu0
    %11363 = vdwg.mxu0
    %11364 = vmatprep.subr.mxu0 0.0
    %11365 = vmatpush1.msra.mxu0 %v11239
    %11366 = vmatprep.subr.mxu0 0.0
    %11367 = vmatpush1.msra.mxu0 %v11240
    %11368 = vmatprep.subr.mxu0 0.0
    %11369 = vmatpush1.msra.mxu0 %v11241
    %11370 = vmatprep.subr.mxu0 0.0
    %11371 = vmatpush1.msra.mxu0 %v11242
    %11372 = vmatprep.subr.mxu0 0.0
    %11373 = vmatpush1.msra.mxu0 %v11243
    %11374 = vmatprep.subr.mxu0 0.0
    %11375 = vmatpush1.msra.mxu0 %v11244
    %11376 = vmatprep.subr.mxu0 0.0
    %11377 = vmatpush1.msra.mxu0 %v11245
    %11378 = vmatprep.subr.mxu0 0.0
    %11379 = vmatpush1.msra.mxu0 %v11246
    %11380 = vmatprep.subr.mxu0 0.0
    %11381 = vmatpush1.msra.mxu0 %v11247
    %11382 = vmatprep.subr.mxu0 0.0
    %11383 = vmatpush1.msra.mxu0 %v11248
    %11384 = vmatprep.subr.mxu0 0.0
    %11385 = vmatpush1.msra.mxu0 %v11249
    %11386 = vmatprep.subr.mxu0 0.0
    %11387 = vmatpush1.msra.mxu0 %v11250
    %11388 = vmatprep.subr.mxu0 0.0
    %11389 = vmatpush1.msra.mxu0 %v11251
    %11390 = vmatprep.subr.mxu0 0.0
    %11391 = vmatpush1.msra.mxu0 %v11252
    %11392 = vmatprep.subr.mxu0 0.0
    %11393 = vmatpush1.msra.mxu0 %v11253
    %11394 = vmatprep.subr.mxu0 0.0
    %11395 = vmatpush1.msra.mxu0 %v11254
    %11396 = vmatprep.subr.mxu0 0.0
    %11397 = vmatpush1.msra.mxu0 %v11255
    %11398 = vmatprep.subr.mxu0 0.0
    %11399 = vmatpush1.msra.mxu0 %v11256
    %11400 = vmatprep.subr.mxu0 0.0
    %11401 = vmatpush1.msra.mxu0 %v11257
    %11402 = vmatprep.subr.mxu0 0.0
    %11403 = vmatpush1.msra.mxu0 %v11258
    %11404 = vmatprep.subr.mxu0 0.0
    %11405 = vmatpush1.msra.mxu0 %v11259
    %11406 = vmatprep.subr.mxu0 0.0
    %11407 = vmatpush1.msra.mxu0 %v11260
    %11408 = vmatprep.subr.mxu0 0.0
    %11409 = vmatpush1.msra.mxu0 %v11261
    %11410 = vmatprep.subr.mxu0 0.0
    %11411 = vmatpush1.msra.mxu0 %v11262
    %11412 = vmatprep.subr.mxu0 0.0
    %11413 = vmatpush1.msra.mxu0 %v11263
    %11414 = vmatprep.subr.mxu0 0.0
    %11415 = vmatpush1.msra.mxu0 %v11264
    %11416 = vmatprep.subr.mxu0 0.0
    %11417 = vmatpush1.msra.mxu0 %v11265
    %11418 = vmatprep.subr.mxu0 0.0
    %11419 = vmatpush1.msra.mxu0 %v11266
    %11420 = vmatprep.subr.mxu0 0.0
    %11421 = vmatpush1.msra.mxu0 %v11267
    %11422 = vmatprep.subr.mxu0 0.0
    %11423 = vmatpush1.msra.mxu0 %v11268
    %11424 = vmatprep.subr.mxu0 0.0
    %11425 = vmatpush1.msra.mxu0 %v11269
    %11426 = vmatprep.subr.mxu0 0.0
    %11427 = vmatpush1.msra.mxu0 %v11270
    %11428 = vmatprep.mubr.f32.mxu0 %v11135
    %11429 = vmatmul.mubr.f32.gmra.mrb[0].mxu0 %v11133
    %v11430 = vpop.f32.mrb[0].mxu0
    %v11431 = vadd.f32 %v11361, %v11430
    %v11432 = vpop.f32.mrb[0].mxu0
    %11433 = vdwg.mxu0
    %11434 = vmatprep.subr.mxu0 0.0
    %11435 = vmatpush1.msra.mxu0 %v11271
    %11436 = vmatprep.subr.mxu0 0.0
    %11437 = vmatpush1.msra.mxu0 %v11272
    %11438 = vmatprep.subr.mxu0 0.0
    %11439 = vmatpush1.msra.mxu0 %v11273
    %11440 = vmatprep.subr.mxu0 0.0
    %11441 = vmatpush1.msra.mxu0 %v11274
    %11442 = vmatprep.subr.mxu0 0.0
    %11443 = vmatpush1.msra.mxu0 %v11275
    %11444 = vmatprep.subr.mxu0 0.0
    %11445 = vmatpush1.msra.mxu0 %v11276
    %11446 = vmatprep.subr.mxu0 0.0
    %11447 = vmatpush1.msra.mxu0 %v11277
    %11448 = vmatprep.subr.mxu0 0.0
    %11449 = vmatpush1.msra.mxu0 %v11278
    %11450 = vmatprep.subr.mxu0 0.0
    %11451 = vmatpush1.msra.mxu0 %v11279
    %11452 = vmatprep.subr.mxu0 0.0
    %11453 = vmatpush1.msra.mxu0 %v11280
    %11454 = vmatprep.subr.mxu0 0.0
    %11455 = vmatpush1.msra.mxu0 %v11281
    %11456 = vmatprep.subr.mxu0 0.0
    %11457 = vmatpush1.msra.mxu0 %v11282
    %11458 = vmatprep.subr.mxu0 0.0
    %11459 = vmatpush1.msra.mxu0 %v11283
    %11460 = vmatprep.subr.mxu0 0.0
    %11461 = vmatpush1.msra.mxu0 %v11284
    %11462 = vmatprep.subr.mxu0 0.0
    %11463 = vmatpush1.msra.mxu0 %v11285
    %11464 = vmatprep.subr.mxu0 0.0
    %11465 = vmatpush1.msra.mxu0 %v11286
    %11466 = vmatprep.subr.mxu0 0.0
    %11467 = vmatpush1.msra.mxu0 0.0
    %11468 = vmatprep.subr.mxu0 0.0
    %11469 = vmatpush1.msra.mxu0 0.0
    %11470 = vmatprep.subr.mxu0 0.0
    %11471 = vmatpush1.msra.mxu0 0.0
    %11472 = vmatprep.subr.mxu0 0.0
    %11473 = vmatpush1.msra.mxu0 0.0
    %11474 = vmatprep.subr.mxu0 0.0
    %11475 = vmatpush1.msra.mxu0 0.0
    %11476 = vmatprep.subr.mxu0 0.0
    %11477 = vmatpush1.msra.mxu0 0.0
    %11478 = vmatprep.subr.mxu0 0.0
    %11479 = vmatpush1.msra.mxu0 0.0
    %11480 = vmatprep.subr.mxu0 0.0
    %11481 = vmatpush1.msra.mxu0 0.0
    %11482 = vmatprep.subr.mxu0 0.0
    %11483 = vmatpush1.msra.mxu0 0.0
    %11484 = vmatprep.subr.mxu0 0.0
    %11485 = vmatpush1.msra.mxu0 0.0
    %11486 = vmatprep.subr.mxu0 0.0
    %11487 = vmatpush1.msra.mxu0 0.0
    %11488 = vmatprep.subr.mxu0 0.0
    %11489 = vmatpush1.msra.mxu0 0.0
    %11490 = vmatprep.subr.mxu0 0.0
    %11491 = vmatpush1.msra.mxu0 0.0
    %11492 = vmatprep.subr.mxu0 0.0
    %11493 = vmatpush1.msra.mxu0 0.0
    %11494 = vmatprep.subr.mxu0 0.0
    %11495 = vmatpush1.msra.mxu0 0.0
    %11496 = vmatprep.subr.mxu0 0.0
    %11497 = vmatpush1.msra.mxu0 0.0
    %11498 = vmatprep.mubr.f32.mxu0 0.0
    %11499 = vmatmul.mubr.f32.gmra.mrb[0].mxu0 %v11204
    %v11500 = vpop.f32.mrb[0].mxu0
    %v11501 = vadd.f32 %v11431, %v11500
    %v11502 = vpop.f32.mrb[0].mxu0
    %11503 = vdwg.mxu0
    %v11504 = vmax.f32 %v11501, 0.0
    %v11505 = vld [vmem:[%s13] sm:$0xff]
    %v11506 = vld [vmem:[%s13 + $0x8] sm:$0xff]
    %v11507 = vld [vmem:[%s13 + $0x10] sm:$0xff]
    %v11508 = vld [vmem:[%s13 + $0x18] sm:$0xff]
    %v11509 = vld [vmem:[%s13 + $0x20] sm:$0xff]
    %v11510 = vld [vmem:[%s13 + $0x28] sm:$0xff]
    %v11511 = vld [vmem:[%s13 + $0x30] sm:$0xff]
    %v11512 = vld [vmem:[%s13 + $0x38] sm:$0xff]
    %v11513 = vld [vmem:[%s14] sm:$0x1]
    %v11515 = vlaneseq
    %v11516 = vshrl.u32 %v11515, 7
    %v11517 = vsub.s32 0, %v11516
    %v11518 = vrot.slane %v11513, %v11517
    %v11521 = vsel %vm2894, %v11504, 0
    %11523 = vmatprep.subr.mxu0 0.0
    %11524 = vmatpush1.msra.mxu0 %v11505
    %11525 = vmatprep.subr.mxu0 0.0
    %11526 = vmatpush1.msra.mxu0 %v11506
    %11527 = vmatprep.subr.mxu0 0.0
    %11528 = vmatpush1.msra.mxu0 %v11507
    %11529 = vmatprep.subr.mxu0 0.0
    %11530 = vmatpush1.msra.mxu0 %v11508
    %11531 = vmatprep.subr.mxu0 0.0
    %11532 = vmatpush1.msra.mxu0 %v11509
    %11533 = vmatprep.subr.mxu0 0.0
    %11534 = vmatpush1.msra.mxu0 %v11510
    %11535 = vmatprep.subr.mxu0 0.0
    %11536 = vmatpush1.msra.mxu0 %v11511
    %11537 = vmatprep.subr.mxu0 0.0
    %11538 = vmatpush1.msra.mxu0 %v11512
    %11539 = vmatprep.subr.mxu0 0.0
    %11540 = vmatpush1.msra.mxu0 0.0
    %11541 = vmatprep.subr.mxu0 0.0
    %11542 = vmatpush1.msra.mxu0 0.0
    %11543 = vmatprep.subr.mxu0 0.0
    %11544 = vmatpush1.msra.mxu0 0.0
    %11545 = vmatprep.subr.mxu0 0.0
    %11546 = vmatpush1.msra.mxu0 0.0
    %11547 = vmatprep.subr.mxu0 0.0
    %11548 = vmatpush1.msra.mxu0 0.0
    %11549 = vmatprep.subr.mxu0 0.0
    %11550 = vmatpush1.msra.mxu0 0.0
    %11551 = vmatprep.subr.mxu0 0.0
    %11552 = vmatpush1.msra.mxu0 0.0
    %11553 = vmatprep.subr.mxu0 0.0
    %11554 = vmatpush1.msra.mxu0 0.0
    %11555 = vmatprep.subr.mxu0 0.0
    %11556 = vmatpush1.msra.mxu0 0.0
    %11557 = vmatprep.subr.mxu0 0.0
    %11558 = vmatpush1.msra.mxu0 0.0
    %11559 = vmatprep.subr.mxu0 0.0
    %11560 = vmatpush1.msra.mxu0 0.0
    %11561 = vmatprep.subr.mxu0 0.0
    %11562 = vmatpush1.msra.mxu0 0.0
    %11563 = vmatprep.subr.mxu0 0.0
    %11564 = vmatpush1.msra.mxu0 0.0
    %11565 = vmatprep.subr.mxu0 0.0
    %11566 = vmatpush1.msra.mxu0 0.0
    %11567 = vmatprep.subr.mxu0 0.0
    %11568 = vmatpush1.msra.mxu0 0.0
    %11569 = vmatprep.subr.mxu0 0.0
    %11570 = vmatpush1.msra.mxu0 0.0
    %11571 = vmatprep.subr.mxu0 0.0
    %11572 = vmatpush1.msra.mxu0 0.0
    %11573 = vmatprep.subr.mxu0 0.0
    %11574 = vmatpush1.msra.mxu0 0.0
    %11575 = vmatprep.subr.mxu0 0.0
    %11576 = vmatpush1.msra.mxu0 0.0
    %11577 = vmatprep.subr.mxu0 0.0
    %11578 = vmatpush1.msra.mxu0 0.0
    %11579 = vmatprep.subr.mxu0 0.0
    %11580 = vmatpush1.msra.mxu0 0.0
    %11581 = vmatprep.subr.mxu0 0.0
    %11582 = vmatpush1.msra.mxu0 0.0
    %11583 = vmatprep.subr.mxu0 0.0
    %11584 = vmatpush1.msra.mxu0 0.0
    %11585 = vmatprep.subr.mxu0 0.0
    %11586 = vmatpush1.msra.mxu0 0.0
    %11587 = vmatprep.mubr.f32.mxu0 0.0
    %11588 = vmatmul.mubr.f32.gmra.mrb[0].mxu0 %v11521
    %v11589 = vpop.f32.mrb[0].mxu0
    %v11590 = vadd.f32 %v11518, %v11589
    %v11591 = vpop.f32.mrb[0].mxu0
    %11592 = vdwg.mxu0
    %11593 = vst [vmem:[#allocation2] sm:$0x3] %v11590
    // Predicated region
    $region62: #{tpu_custom_call.1} parent=1 // pred_check
      _
    $region63: #{tpu_custom_call.1} parent=1 // pred_check_branch
      %11595 = sbr.rel (0) target = $region65
    $region64: #{tpu_custom_call.1} parent=1 // pred_region
      %s11597 = ssub.s32 32, 32
      %11598 = vsyncadd [#allocation3], %s11597
      %s11600 = sshll.u32 [#allocation2], 4
      %s11601 = int_to_ptr.vmem [resolvable:$true] %s11600
      %11603 = dma.vmem_to_hbm [thread:$0]  %s11601, 32, %s15, [#allocation3]
    $region65: #{tpu_custom_call.1} parent=1 // pred_fallthru
      _
    // Predicated region
    $region66: #{tpu_custom_call.1} parent=1 // pred_check
      _
    $region67: #{tpu_custom_call.1} parent=1 // pred_check_branch
      %11605 = sbr.rel (0) target = $region69
    $region68: #{tpu_custom_call.1} parent=1 // pred_region
      %11606 = dma.done [#allocation3], 32
    $region69: #{tpu_custom_call.1} parent=1 // pred_fallthru
      _
    %11607 = vsyncpa [#allocation3], 1

</llo_original>
